<compile_context>
chip_gen: v7x
topology: tpu7x:2x2x1
jax: 0.10.0
libtpu: 0.0.40
codegen_flags: <defaults>
</compile_context>

<pallas_src>
import jax
import jax.numpy as jnp
from jax.experimental import pallas as pl
from jax.experimental.pallas import tpu as pltpu

LANE = 128  # TPU lane width; all packed channel/feature dims are padded to this.


# ---------------------------------------------------------------------------
# Fused kernel: whole generator DAG for one tile of pixels.
# All operands are lane-dense (last dim == 128).
# ---------------------------------------------------------------------------
def _fused_generator_kernel(x_ref, y_ref,
                            wf_ref, bf_ref,
                            wxy_ref, bxy_ref,
                            wyx_ref, byx_ref,
                            wr_ref, br_ref,
                            o_ref):
    x = x_ref[...]                     # (tm, 128)  lanes >= C are zero
    y = y_ref[...]
    wf, bf = wf_ref[...], bf_ref[...]
    wxy, bxy = wxy_ref[...], bxy_ref[...]
    wyx, byx = wyx_ref[...], byx_ref[...]
    wr, br = wr_ref[...], br_ref[...]

    def lin(t, w, b):
        return jnp.dot(t, w, preferred_element_type=jnp.float32) + b

    def feat(t):                       # feature_model: linear + ReLU
        return jnp.maximum(lin(t, wf, bf), 0.0)

    fx = feat(x)                       # (tm, 128) lanes >= F are zero
    fy = feat(y)

    mx2y = lin(fx, wxy, bxy)
    my2x = lin(fy, wyx, byx)
    my2y = lin(fy, wxy, bxy)
    mx2x = lin(fx, wyx, byx)

    rx2y = lin(mx2y, wr, br)           # (tm, 128) lanes >= C are zero
    ry2x = lin(my2x, wr, br)

    # cycle paths: feature(recon(.)) -> mapping -> recon
    frx2y = feat(rx2y)
    fry2x = feat(ry2x)
    mx2y2x = lin(frx2y, wyx, byx)
    my2x2y = lin(fry2x, wxy, bxy)

    od = o_ref.dtype
    # Output order matches the PyTorch return tuple:
    # (rx2y, ry2x, rx2x, ry2y, rx2y2x, ry2x2y, idx2x, idy2y)
    o_ref[0, :, :] = rx2y.astype(od)
    o_ref[1, :, :] = ry2x.astype(od)
    o_ref[2, :, :] = lin(mx2x, wr, br).astype(od)
    o_ref[3, :, :] = lin(my2y, wr, br).astype(od)
    o_ref[4, :, :] = lin(mx2y2x, wr, br).astype(od)
    o_ref[5, :, :] = lin(my2x2y, wr, br).astype(od)
    o_ref[6, :, :] = lin(fx, wr, br).astype(od)      # identity: recon(feature(x))
    o_ref[7, :, :] = lin(fy, wr, br).astype(od)      # identity: recon(feature(y))


# ---------------------------------------------------------------------------
# Parameter packing: zero-pad every weight to (128, 128) and bias to (1, 128).
# Zero padding keeps the math exact (padded lanes stay exactly zero).
# ---------------------------------------------------------------------------
def _pack_params(params):
    def padw(w):
        r, c = w.shape
        return jnp.zeros((LANE, LANE), jnp.float32).at[:r, :c].set(w)

    def padb(b):
        return jnp.zeros((1, LANE), jnp.float32).at[:, : b.shape[1]].set(b)

    return (
        padw(params["feat_w"]), padb(params["feat_b"]),
        padw(params["x2y_w"]), padb(params["x2y_b"]),
        padw(params["y2x_w"]), padb(params["y2x_b"]),
        padw(params["rec_w"]), padb(params["rec_b"]),
    )


# ---------------------------------------------------------------------------
# generator_model.forward
# ---------------------------------------------------------------------------
def generator_forward(params, x, y, *, tm=256):
    B, C, H, W = x.shape
    N = B * H * W

    # NCHW -> (N, C) once per input, then zero-pad channels to the lane width.
    def to_flat(t):
        t2 = jnp.transpose(t, (0, 2, 3, 1)).reshape(N, C)
        return jnp.pad(t2, ((0, 0), (0, LANE - C)))

    x2d = to_flat(x)
    y2d = to_flat(y)

    # Row padding so any B*H*W works (no hard divisibility assert).
    n_tiles = pl.cdiv(N, tm)
    n_pad = n_tiles * tm
    if n_pad != N:
        x2d = jnp.pad(x2d, ((0, n_pad - N), (0, 0)))
        y2d = jnp.pad(y2d, ((0, n_pad - N), (0, 0)))

    wf, bf, wxy, bxy, wyx, byx, wr, br = _pack_params(params)

    w_spec = pl.BlockSpec((LANE, LANE), lambda i: (0, 0))
    b_spec = pl.BlockSpec((1, LANE), lambda i: (0, 0))
    in_spec = pl.BlockSpec((tm, LANE), lambda i: (i, 0))

    out = pl.pallas_call(
        _fused_generator_kernel,
        out_shape=jax.ShapeDtypeStruct((8, n_pad, LANE), jnp.float32),
        grid_spec=pltpu.PrefetchScalarGridSpec(
            num_scalar_prefetch=0,
            grid=(n_tiles,),
            in_specs=[
                in_spec, in_spec,          # x, y pixel tiles
                w_spec, b_spec,            # feature
                w_spec, b_spec,            # mapping_x_to_y
                w_spec, b_spec,            # mapping_y_to_x
                w_spec, b_spec,            # reconstruction
            ],
            out_specs=pl.BlockSpec((8, tm, LANE), lambda i: (0, i, 0)),
        ),
        compiler_params=pltpu.CompilerParams(
            dimension_semantics=("parallel",),
        ),
    )(x2d, y2d, wf, bf, wxy, bxy, wyx, byx, wr, br)

    # Unpack the lane-dense slab: (8, n_pad, 128) -> 8 x NCHW tensors.
    def to_nchw(slab):
        t = slab[:N, :C].reshape(B, H, W, C)
        return jnp.transpose(t, (0, 3, 1, 2))

    return tuple(to_nchw(out[k]) for k in range(8))


# ---------------------------------------------------------------------------
# Parameters (deterministic)
# ---------------------------------------------------------------------------
def make_params(C, F, key):
    ks = jax.random.split(key, 8)
    scale = 0.1
    return {
        "feat_w": scale * jax.random.normal(ks[0], (C, F), jnp.float32),
        "feat_b": scale * jax.random.normal(ks[1], (1, F), jnp.float32),
        "x2y_w": scale * jax.random.normal(ks[2], (F, F), jnp.float32),
        "x2y_b": scale * jax.random.normal(ks[3], (1, F), jnp.float32),
        "y2x_w": scale * jax.random.normal(ks[4], (F, F), jnp.float32),
        "y2x_b": scale * jax.random.normal(ks[5], (1, F), jnp.float32),
        "rec_w": scale * jax.random.normal(ks[6], (F, C), jnp.float32),
        "rec_b": scale * jax.random.normal(ks[7], (1, C), jnp.float32),
    }


# ---------------------------------------------------------------------------
# Pure-JAX reference (for a sanity tolerance check).
# ---------------------------------------------------------------------------
def _reference_forward(params, x, y):
    def conv1x1(t, w, b, relu=False):
        out = jnp.einsum("bchw,cf->bfhw", t, w) + b[0][None, :, None, None]
        return jnp.maximum(out, 0.0) if relu else out

    feature = lambda t: conv1x1(t, params["feat_w"], params["feat_b"], relu=True)
    map_x2y = lambda t: conv1x1(t, params["x2y_w"], params["x2y_b"])
    map_y2x = lambda t: conv1x1(t, params["y2x_w"], params["y2x_b"])
    recon = lambda t: conv1x1(t, params["rec_w"], params["rec_b"])

    fx, fy = feature(x), feature(y)
    mx2y, my2x = map_x2y(fx), map_y2x(fy)
    rx2y, ry2x = recon(mx2y), recon(my2x)
    ry2y, rx2x = recon(map_x2y(fy)), recon(map_y2x(fx))
    rx2y2x = recon(map_y2x(feature(rx2y)))
    ry2x2y = recon(map_x2y(feature(ry2x)))
    idy2y, idx2x = recon(fy), recon(fx)
    return (rx2y, ry2x, rx2x, ry2y, rx2y2x, ry2x2y, idx2x, idy2y)


if __name__ == "__main__":
    B, C, H, W = 2, 4, 16, 16
    F = 32

    key = jax.random.PRNGKey(0)
    kx, ky, kp = jax.random.split(key, 3)
    x = jax.random.normal(kx, (B, C, H, W), jnp.float32)
    y = jax.random.normal(ky, (B, C, H, W), jnp.float32)
    params = make_params(C, F, kp)

    outs = jax.jit(generator_forward)(params, x, y)
    outs = jax.block_until_ready(outs)

    # sanity: 8 outputs, NCHW shape, and close to the pure-JAX reference
    assert len(outs) == 8
    refs = _reference_forward(params, x, y)
    for o, r in zip(outs, refs):
        assert o.shape == (B, C, H, W), o.shape
        assert jnp.allclose(o, r, atol=2e-2, rtol=2e-2), float(jnp.max(jnp.abs(o - r)))

    print("KERNEL_OK")
</pallas_src>

<mosaic_0001>
module attributes {stable_mosaic.version = 11 : i64} {
  func.func @_fused_generator_kernel(%arg0: i32, %arg1: memref<256x128xf32, #tpu.memory_space<vmem>>, %arg2: memref<256x128xf32, #tpu.memory_space<vmem>>, %arg3: memref<128x128xf32, #tpu.memory_space<vmem>>, %arg4: memref<1x128xf32, #tpu.memory_space<vmem>>, %arg5: memref<128x128xf32, #tpu.memory_space<vmem>>, %arg6: memref<1x128xf32, #tpu.memory_space<vmem>>, %arg7: memref<128x128xf32, #tpu.memory_space<vmem>>, %arg8: memref<1x128xf32, #tpu.memory_space<vmem>>, %arg9: memref<128x128xf32, #tpu.memory_space<vmem>>, %arg10: memref<1x128xf32, #tpu.memory_space<vmem>>, %arg11: memref<8x256x128xf32, #tpu.memory_space<vmem>>) attributes {dimension_semantics = [#tpu.dimension_semantics<parallel>], iteration_bounds = array<i64: 2>, scalar_prefetch = 0 : i64, scratch_operands = 0 : i64, tpu.core_type = #tpu.core_type<tc>, window_params = [{transform_indices = @transform_0, window_bounds = array<i64: 256, 128>}, {transform_indices = @transform_1, window_bounds = array<i64: 256, 128>}, {pipeline_mode = #tpu.pipeline_mode<synchronous>, transform_indices = @transform_2, window_bounds = array<i64: 128, 128>}, {pipeline_mode = #tpu.pipeline_mode<synchronous>, transform_indices = @transform_3, window_bounds = array<i64: 1, 128>}, {pipeline_mode = #tpu.pipeline_mode<synchronous>, transform_indices = @transform_4, window_bounds = array<i64: 128, 128>}, {pipeline_mode = #tpu.pipeline_mode<synchronous>, transform_indices = @transform_5, window_bounds = array<i64: 1, 128>}, {pipeline_mode = #tpu.pipeline_mode<synchronous>, transform_indices = @transform_6, window_bounds = array<i64: 128, 128>}, {pipeline_mode = #tpu.pipeline_mode<synchronous>, transform_indices = @transform_7, window_bounds = array<i64: 1, 128>}, {pipeline_mode = #tpu.pipeline_mode<synchronous>, transform_indices = @transform_8, window_bounds = array<i64: 128, 128>}, {pipeline_mode = #tpu.pipeline_mode<synchronous>, transform_indices = @transform_9, window_bounds = array<i64: 1, 128>}, {transform_indices = @transform_10, window_bounds = array<i64: 8, 256, 128>}]} {
    %c0 = arith.constant 0 : index
    %c0_0 = arith.constant 0 : index
    %0 = vector.load %arg1[%c0, %c0_0] : memref<256x128xf32, #tpu.memory_space<vmem>>, vector<256x128xf32>
    %c0_1 = arith.constant 0 : index
    %c0_2 = arith.constant 0 : index
    %1 = vector.load %arg2[%c0_1, %c0_2] : memref<256x128xf32, #tpu.memory_space<vmem>>, vector<256x128xf32>
    %c0_3 = arith.constant 0 : index
    %c0_4 = arith.constant 0 : index
    %2 = vector.load %arg3[%c0_3, %c0_4] : memref<128x128xf32, #tpu.memory_space<vmem>>, vector<128x128xf32>
    %c0_5 = arith.constant 0 : index
    %c0_6 = arith.constant 0 : index
    %3 = vector.load %arg4[%c0_5, %c0_6] : memref<1x128xf32, #tpu.memory_space<vmem>>, vector<1x128xf32>
    %c0_7 = arith.constant 0 : index
    %c0_8 = arith.constant 0 : index
    %4 = vector.load %arg5[%c0_7, %c0_8] : memref<128x128xf32, #tpu.memory_space<vmem>>, vector<128x128xf32>
    %c0_9 = arith.constant 0 : index
    %c0_10 = arith.constant 0 : index
    %5 = vector.load %arg6[%c0_9, %c0_10] : memref<1x128xf32, #tpu.memory_space<vmem>>, vector<1x128xf32>
    %c0_11 = arith.constant 0 : index
    %c0_12 = arith.constant 0 : index
    %6 = vector.load %arg7[%c0_11, %c0_12] : memref<128x128xf32, #tpu.memory_space<vmem>>, vector<128x128xf32>
    %c0_13 = arith.constant 0 : index
    %c0_14 = arith.constant 0 : index
    %7 = vector.load %arg8[%c0_13, %c0_14] : memref<1x128xf32, #tpu.memory_space<vmem>>, vector<1x128xf32>
    %c0_15 = arith.constant 0 : index
    %c0_16 = arith.constant 0 : index
    %8 = vector.load %arg9[%c0_15, %c0_16] : memref<128x128xf32, #tpu.memory_space<vmem>>, vector<128x128xf32>
    %c0_17 = arith.constant 0 : index
    %c0_18 = arith.constant 0 : index
    %9 = vector.load %arg10[%c0_17, %c0_18] : memref<1x128xf32, #tpu.memory_space<vmem>>, vector<1x128xf32>
    %cst = arith.constant dense<0.000000e+00> : vector<256x128xf32>
    %10 = tpu.matmul %0, %2, %cst {dimension_numbers = #tpu.dot_dimension_numbers<[1], [0], [0], [1], [0, 0, 1, 1], [], []>} : vector<256x128xf32>, vector<128x128xf32>, vector<256x128xf32> -> vector<256x128xf32>
    %11 = vector.broadcast %3 : vector<1x128xf32> to vector<256x128xf32>
    %12 = arith.addf %10, %11 : vector<256x128xf32>
    %cst_19 = arith.constant 0.000000e+00 : f32
    %13 = vector.broadcast %cst_19 : f32 to vector<256x128xf32>
    %14 = arith.maximumf %12, %13 : vector<256x128xf32>
    %cst_20 = arith.constant dense<0.000000e+00> : vector<256x128xf32>
    %15 = tpu.matmul %1, %2, %cst_20 {dimension_numbers = #tpu.dot_dimension_numbers<[1], [0], [0], [1], [0, 0, 1, 1], [], []>} : vector<256x128xf32>, vector<128x128xf32>, vector<256x128xf32> -> vector<256x128xf32>
    %16 = vector.broadcast %3 : vector<1x128xf32> to vector<256x128xf32>
    %17 = arith.addf %15, %16 : vector<256x128xf32>
    %cst_21 = arith.constant 0.000000e+00 : f32
    %18 = vector.broadcast %cst_21 : f32 to vector<256x128xf32>
    %19 = arith.maximumf %17, %18 : vector<256x128xf32>
    %cst_22 = arith.constant dense<0.000000e+00> : vector<256x128xf32>
    %20 = tpu.matmul %14, %4, %cst_22 {dimension_numbers = #tpu.dot_dimension_numbers<[1], [0], [0], [1], [0, 0, 1, 1], [], []>} : vector<256x128xf32>, vector<128x128xf32>, vector<256x128xf32> -> vector<256x128xf32>
    %21 = vector.broadcast %5 : vector<1x128xf32> to vector<256x128xf32>
    %22 = arith.addf %20, %21 : vector<256x128xf32>
    %cst_23 = arith.constant dense<0.000000e+00> : vector<256x128xf32>
    %23 = tpu.matmul %19, %6, %cst_23 {dimension_numbers = #tpu.dot_dimension_numbers<[1], [0], [0], [1], [0, 0, 1, 1], [], []>} : vector<256x128xf32>, vector<128x128xf32>, vector<256x128xf32> -> vector<256x128xf32>
    %24 = vector.broadcast %7 : vector<1x128xf32> to vector<256x128xf32>
    %25 = arith.addf %23, %24 : vector<256x128xf32>
    %cst_24 = arith.constant dense<0.000000e+00> : vector<256x128xf32>
    %26 = tpu.matmul %19, %4, %cst_24 {dimension_numbers = #tpu.dot_dimension_numbers<[1], [0], [0], [1], [0, 0, 1, 1], [], []>} : vector<256x128xf32>, vector<128x128xf32>, vector<256x128xf32> -> vector<256x128xf32>
    %27 = vector.broadcast %5 : vector<1x128xf32> to vector<256x128xf32>
    %28 = arith.addf %26, %27 : vector<256x128xf32>
    %cst_25 = arith.constant dense<0.000000e+00> : vector<256x128xf32>
    %29 = tpu.matmul %14, %6, %cst_25 {dimension_numbers = #tpu.dot_dimension_numbers<[1], [0], [0], [1], [0, 0, 1, 1], [], []>} : vector<256x128xf32>, vector<128x128xf32>, vector<256x128xf32> -> vector<256x128xf32>
    %30 = vector.broadcast %7 : vector<1x128xf32> to vector<256x128xf32>
    %31 = arith.addf %29, %30 : vector<256x128xf32>
    %cst_26 = arith.constant dense<0.000000e+00> : vector<256x128xf32>
    %32 = tpu.matmul %22, %8, %cst_26 {dimension_numbers = #tpu.dot_dimension_numbers<[1], [0], [0], [1], [0, 0, 1, 1], [], []>} : vector<256x128xf32>, vector<128x128xf32>, vector<256x128xf32> -> vector<256x128xf32>
    %33 = vector.broadcast %9 : vector<1x128xf32> to vector<256x128xf32>
    %34 = arith.addf %32, %33 : vector<256x128xf32>
    %cst_27 = arith.constant dense<0.000000e+00> : vector<256x128xf32>
    %35 = tpu.matmul %25, %8, %cst_27 {dimension_numbers = #tpu.dot_dimension_numbers<[1], [0], [0], [1], [0, 0, 1, 1], [], []>} : vector<256x128xf32>, vector<128x128xf32>, vector<256x128xf32> -> vector<256x128xf32>
    %36 = vector.broadcast %9 : vector<1x128xf32> to vector<256x128xf32>
    %37 = arith.addf %35, %36 : vector<256x128xf32>
    %cst_28 = arith.constant dense<0.000000e+00> : vector<256x128xf32>
    %38 = tpu.matmul %34, %2, %cst_28 {dimension_numbers = #tpu.dot_dimension_numbers<[1], [0], [0], [1], [0, 0, 1, 1], [], []>} : vector<256x128xf32>, vector<128x128xf32>, vector<256x128xf32> -> vector<256x128xf32>
    %39 = vector.broadcast %3 : vector<1x128xf32> to vector<256x128xf32>
    %40 = arith.addf %38, %39 : vector<256x128xf32>
    %cst_29 = arith.constant 0.000000e+00 : f32
    %41 = vector.broadcast %cst_29 : f32 to vector<256x128xf32>
    %42 = arith.maximumf %40, %41 : vector<256x128xf32>
    %cst_30 = arith.constant dense<0.000000e+00> : vector<256x128xf32>
    %43 = tpu.matmul %37, %2, %cst_30 {dimension_numbers = #tpu.dot_dimension_numbers<[1], [0], [0], [1], [0, 0, 1, 1], [], []>} : vector<256x128xf32>, vector<128x128xf32>, vector<256x128xf32> -> vector<256x128xf32>
    %44 = vector.broadcast %3 : vector<1x128xf32> to vector<256x128xf32>
    %45 = arith.addf %43, %44 : vector<256x128xf32>
    %cst_31 = arith.constant 0.000000e+00 : f32
    %46 = vector.broadcast %cst_31 : f32 to vector<256x128xf32>
    %47 = arith.maximumf %45, %46 : vector<256x128xf32>
    %cst_32 = arith.constant dense<0.000000e+00> : vector<256x128xf32>
    %48 = tpu.matmul %42, %6, %cst_32 {dimension_numbers = #tpu.dot_dimension_numbers<[1], [0], [0], [1], [0, 0, 1, 1], [], []>} : vector<256x128xf32>, vector<128x128xf32>, vector<256x128xf32> -> vector<256x128xf32>
    %49 = vector.broadcast %7 : vector<1x128xf32> to vector<256x128xf32>
    %50 = arith.addf %48, %49 : vector<256x128xf32>
    %cst_33 = arith.constant dense<0.000000e+00> : vector<256x128xf32>
    %51 = tpu.matmul %47, %4, %cst_33 {dimension_numbers = #tpu.dot_dimension_numbers<[1], [0], [0], [1], [0, 0, 1, 1], [], []>} : vector<256x128xf32>, vector<128x128xf32>, vector<256x128xf32> -> vector<256x128xf32>
    %52 = vector.broadcast %5 : vector<1x128xf32> to vector<256x128xf32>
    %53 = arith.addf %51, %52 : vector<256x128xf32>
    %c0_34 = arith.constant 0 : index
    %c0_35 = arith.constant 0 : index
    %c0_36 = arith.constant 0 : index
    %54 = vector.load %arg11[%c0_34, %c0_35, %c0_36] : memref<8x256x128xf32, #tpu.memory_space<vmem>>, vector<1x256x128xf32>
    %55 = vector.shape_cast %54 : vector<1x256x128xf32> to vector<256x128xf32>
    %56 = vector.shape_cast %34 : vector<256x128xf32> to vector<1x256x128xf32>
    tpu.vector_store %arg11[%c0_34, %c0_35, %c0_36], %56 {strides = array<i32>} : memref<8x256x128xf32, #tpu.memory_space<vmem>>, vector<1x256x128xf32>,
    %c1 = arith.constant 1 : index
    %c0_37 = arith.constant 0 : index
    %c0_38 = arith.constant 0 : index
    %57 = vector.load %arg11[%c1, %c0_37, %c0_38] : memref<8x256x128xf32, #tpu.memory_space<vmem>>, vector<1x256x128xf32>
    %58 = vector.shape_cast %57 : vector<1x256x128xf32> to vector<256x128xf32>
    %59 = vector.shape_cast %37 : vector<256x128xf32> to vector<1x256x128xf32>
    tpu.vector_store %arg11[%c1, %c0_37, %c0_38], %59 {strides = array<i32>} : memref<8x256x128xf32, #tpu.memory_space<vmem>>, vector<1x256x128xf32>,
    %cst_39 = arith.constant dense<0.000000e+00> : vector<256x128xf32>
    %60 = tpu.matmul %31, %8, %cst_39 {dimension_numbers = #tpu.dot_dimension_numbers<[1], [0], [0], [1], [0, 0, 1, 1], [], []>} : vector<256x128xf32>, vector<128x128xf32>, vector<256x128xf32> -> vector<256x128xf32>
    %61 = vector.broadcast %9 : vector<1x128xf32> to vector<256x128xf32>
    %62 = arith.addf %60, %61 : vector<256x128xf32>
    %c2 = arith.constant 2 : index
    %c0_40 = arith.constant 0 : index
    %c0_41 = arith.constant 0 : index
    %63 = vector.load %arg11[%c2, %c0_40, %c0_41] : memref<8x256x128xf32, #tpu.memory_space<vmem>>, vector<1x256x128xf32>
    %64 = vector.shape_cast %63 : vector<1x256x128xf32> to vector<256x128xf32>
    %65 = vector.shape_cast %62 : vector<256x128xf32> to vector<1x256x128xf32>
    tpu.vector_store %arg11[%c2, %c0_40, %c0_41], %65 {strides = array<i32>} : memref<8x256x128xf32, #tpu.memory_space<vmem>>, vector<1x256x128xf32>,
    %cst_42 = arith.constant dense<0.000000e+00> : vector<256x128xf32>
    %66 = tpu.matmul %28, %8, %cst_42 {dimension_numbers = #tpu.dot_dimension_numbers<[1], [0], [0], [1], [0, 0, 1, 1], [], []>} : vector<256x128xf32>, vector<128x128xf32>, vector<256x128xf32> -> vector<256x128xf32>
    %67 = vector.broadcast %9 : vector<1x128xf32> to vector<256x128xf32>
    %68 = arith.addf %66, %67 : vector<256x128xf32>
    %c3 = arith.constant 3 : index
    %c0_43 = arith.constant 0 : index
    %c0_44 = arith.constant 0 : index
    %69 = vector.load %arg11[%c3, %c0_43, %c0_44] : memref<8x256x128xf32, #tpu.memory_space<vmem>>, vector<1x256x128xf32>
    %70 = vector.shape_cast %69 : vector<1x256x128xf32> to vector<256x128xf32>
    %71 = vector.shape_cast %68 : vector<256x128xf32> to vector<1x256x128xf32>
    tpu.vector_store %arg11[%c3, %c0_43, %c0_44], %71 {strides = array<i32>} : memref<8x256x128xf32, #tpu.memory_space<vmem>>, vector<1x256x128xf32>,
    %cst_45 = arith.constant dense<0.000000e+00> : vector<256x128xf32>
    %72 = tpu.matmul %50, %8, %cst_45 {dimension_numbers = #tpu.dot_dimension_numbers<[1], [0], [0], [1], [0, 0, 1, 1], [], []>} : vector<256x128xf32>, vector<128x128xf32>, vector<256x128xf32> -> vector<256x128xf32>
    %73 = vector.broadcast %9 : vector<1x128xf32> to vector<256x128xf32>
    %74 = arith.addf %72, %73 : vector<256x128xf32>
    %c4 = arith.constant 4 : index
    %c0_46 = arith.constant 0 : index
    %c0_47 = arith.constant 0 : index
    %75 = vector.load %arg11[%c4, %c0_46, %c0_47] : memref<8x256x128xf32, #tpu.memory_space<vmem>>, vector<1x256x128xf32>
    %76 = vector.shape_cast %75 : vector<1x256x128xf32> to vector<256x128xf32>
    %77 = vector.shape_cast %74 : vector<256x128xf32> to vector<1x256x128xf32>
    tpu.vector_store %arg11[%c4, %c0_46, %c0_47], %77 {strides = array<i32>} : memref<8x256x128xf32, #tpu.memory_space<vmem>>, vector<1x256x128xf32>,
    %cst_48 = arith.constant dense<0.000000e+00> : vector<256x128xf32>
    %78 = tpu.matmul %53, %8, %cst_48 {dimension_numbers = #tpu.dot_dimension_numbers<[1], [0], [0], [1], [0, 0, 1, 1], [], []>} : vector<256x128xf32>, vector<128x128xf32>, vector<256x128xf32> -> vector<256x128xf32>
    %79 = vector.broadcast %9 : vector<1x128xf32> to vector<256x128xf32>
    %80 = arith.addf %78, %79 : vector<256x128xf32>
    %c5 = arith.constant 5 : index
    %c0_49 = arith.constant 0 : index
    %c0_50 = arith.constant 0 : index
    %81 = vector.load %arg11[%c5, %c0_49, %c0_50] : memref<8x256x128xf32, #tpu.memory_space<vmem>>, vector<1x256x128xf32>
    %82 = vector.shape_cast %81 : vector<1x256x128xf32> to vector<256x128xf32>
    %83 = vector.shape_cast %80 : vector<256x128xf32> to vector<1x256x128xf32>
    tpu.vector_store %arg11[%c5, %c0_49, %c0_50], %83 {strides = array<i32>} : memref<8x256x128xf32, #tpu.memory_space<vmem>>, vector<1x256x128xf32>,
    %cst_51 = arith.constant dense<0.000000e+00> : vector<256x128xf32>
    %84 = tpu.matmul %14, %8, %cst_51 {dimension_numbers = #tpu.dot_dimension_numbers<[1], [0], [0], [1], [0, 0, 1, 1], [], []>} : vector<256x128xf32>, vector<128x128xf32>, vector<256x128xf32> -> vector<256x128xf32>
    %85 = vector.broadcast %9 : vector<1x128xf32> to vector<256x128xf32>
    %86 = arith.addf %84, %85 : vector<256x128xf32>
    %c6 = arith.constant 6 : index
    %c0_52 = arith.constant 0 : index
    %c0_53 = arith.constant 0 : index
    %87 = vector.load %arg11[%c6, %c0_52, %c0_53] : memref<8x256x128xf32, #tpu.memory_space<vmem>>, vector<1x256x128xf32>
    %88 = vector.shape_cast %87 : vector<1x256x128xf32> to vector<256x128xf32>
    %89 = vector.shape_cast %86 : vector<256x128xf32> to vector<1x256x128xf32>
    tpu.vector_store %arg11[%c6, %c0_52, %c0_53], %89 {strides = array<i32>} : memref<8x256x128xf32, #tpu.memory_space<vmem>>, vector<1x256x128xf32>,
    %cst_54 = arith.constant dense<0.000000e+00> : vector<256x128xf32>
    %90 = tpu.matmul %19, %8, %cst_54 {dimension_numbers = #tpu.dot_dimension_numbers<[1], [0], [0], [1], [0, 0, 1, 1], [], []>} : vector<256x128xf32>, vector<128x128xf32>, vector<256x128xf32> -> vector<256x128xf32>
    %91 = vector.broadcast %9 : vector<1x128xf32> to vector<256x128xf32>
    %92 = arith.addf %90, %91 : vector<256x128xf32>
    %c7 = arith.constant 7 : index
    %c0_55 = arith.constant 0 : index
    %c0_56 = arith.constant 0 : index
    %93 = vector.load %arg11[%c7, %c0_55, %c0_56] : memref<8x256x128xf32, #tpu.memory_space<vmem>>, vector<1x256x128xf32>
    %94 = vector.shape_cast %93 : vector<1x256x128xf32> to vector<256x128xf32>
    %95 = vector.shape_cast %92 : vector<256x128xf32> to vector<1x256x128xf32>
    tpu.vector_store %arg11[%c7, %c0_55, %c0_56], %95 {strides = array<i32>} : memref<8x256x128xf32, #tpu.memory_space<vmem>>, vector<1x256x128xf32>,
    return
  }
  func.func @transform_0(%arg0: i32) -> (i32, i32) {
    %c0_i32 = arith.constant 0 : i32
    %c0_i32_0 = arith.constant 0 : i32
    return %arg0, %c0_i32 : i32, i32
  }
  func.func @transform_1(%arg0: i32) -> (i32, i32) {
    %c0_i32 = arith.constant 0 : i32
    %c0_i32_0 = arith.constant 0 : i32
    return %arg0, %c0_i32 : i32, i32
  }
  func.func @transform_2(%arg0: i32) -> (i32, i32) {
    %c0_i32 = arith.constant 0 : i32
    %c0_i32_0 = arith.constant 0 : i32
    %c0_i32_1 = arith.constant 0 : i32
    return %c0_i32, %c0_i32_0 : i32, i32
  }
  func.func @transform_3(%arg0: i32) -> (i32, i32) {
    %c0_i32 = arith.constant 0 : i32
    %c0_i32_0 = arith.constant 0 : i32
    %c0_i32_1 = arith.constant 0 : i32
    return %c0_i32, %c0_i32_0 : i32, i32
  }
  func.func @transform_4(%arg0: i32) -> (i32, i32) {
    %c0_i32 = arith.constant 0 : i32
    %c0_i32_0 = arith.constant 0 : i32
    %c0_i32_1 = arith.constant 0 : i32
    return %c0_i32, %c0_i32_0 : i32, i32
  }
  func.func @transform_5(%arg0: i32) -> (i32, i32) {
    %c0_i32 = arith.constant 0 : i32
    %c0_i32_0 = arith.constant 0 : i32
    %c0_i32_1 = arith.constant 0 : i32
    return %c0_i32, %c0_i32_0 : i32, i32
  }
  func.func @transform_6(%arg0: i32) -> (i32, i32) {
    %c0_i32 = arith.constant 0 : i32
    %c0_i32_0 = arith.constant 0 : i32
    %c0_i32_1 = arith.constant 0 : i32
    return %c0_i32, %c0_i32_0 : i32, i32
  }
  func.func @transform_7(%arg0: i32) -> (i32, i32) {
    %c0_i32 = arith.constant 0 : i32
    %c0_i32_0 = arith.constant 0 : i32
    %c0_i32_1 = arith.constant 0 : i32
    return %c0_i32, %c0_i32_0 : i32, i32
  }
  func.func @transform_8(%arg0: i32) -> (i32, i32) {
    %c0_i32 = arith.constant 0 : i32
    %c0_i32_0 = arith.constant 0 : i32
    %c0_i32_1 = arith.constant 0 : i32
    return %c0_i32, %c0_i32_0 : i32, i32
  }
  func.func @transform_9(%arg0: i32) -> (i32, i32) {
    %c0_i32 = arith.constant 0 : i32
    %c0_i32_0 = arith.constant 0 : i32
    %c0_i32_1 = arith.constant 0 : i32
    return %c0_i32, %c0_i32_0 : i32, i32
  }
  func.func @transform_10(%arg0: i32) -> (i32, i32, i32) {
    %c0_i32 = arith.constant 0 : i32
    %c0_i32_0 = arith.constant 0 : i32
    %c0_i32_1 = arith.constant 0 : i32
    return %c0_i32, %arg0, %c0_i32_0 : i32, i32, i32
  }
}

</mosaic_0001>

<llo_original>
// kernel: generator_forward.1
$region0: #{generator_forward.1}
  #allocation0 [shape = 'u32[]', space=smem, size = 0x4, offset = 0x4, fixed_abs, tag = 'smem constant byte address 0x4 - core index']
  #allocation1 [shape = 'u32[144,128]{1,0:T(1,128)}', space=vmem, size = 0x12000, scoped, tag = 'internal scratch']
  %s0 = inlined_call_operand.vmem [shape: f32[512,128], index: 0, kind: input, shape index: {}]
  %s1 = inlined_call_operand.vmem [shape: f32[512,128], index: 1, kind: input, shape index: {}]
  %s2 = inlined_call_operand.vmem [shape: f32[128,128], index: 2, kind: input, shape index: {}]
  %s3 = inlined_call_operand.vmem [shape: f32[1,128], index: 3, kind: input, shape index: {}]
  %s4 = inlined_call_operand.vmem [shape: f32[128,128], index: 4, kind: input, shape index: {}]
  %s5 = inlined_call_operand.vmem [shape: f32[1,128], index: 5, kind: input, shape index: {}]
  %s6 = inlined_call_operand.vmem [shape: f32[128,128], index: 6, kind: input, shape index: {}]
  %s7 = inlined_call_operand.vmem [shape: f32[1,128], index: 7, kind: input, shape index: {}]
  %s8 = inlined_call_operand.vmem [shape: f32[128,128], index: 8, kind: input, shape index: {}]
  %s9 = inlined_call_operand.vmem [shape: f32[1,128], index: 9, kind: input, shape index: {}]
  %s10 = inlined_call_operand.vmem [shape: f32[8,512,128], index: 10, kind: output, shape index: {}]
  %s11 = sld [smem:[#allocation0]]
  $region107: #{generator_forward.1} parent=0
    _
  %s13 = ssub.s32 1, %s11
  %s14 = scalar_select 0, %s13, %s11
  $region1: #{generator_forward.1} parent=0
    #allocation2 [shape = 'u8[2097152]{0}', space=vmem, size = 0x200000, scoped, tag = 'output window, operand 0']
    loop: start=0, step=1, limit=4
    $region2: #{generator_forward.1} parent=1 // loop_pre_header
      _
    $region3: #{generator_forward.1} parent=1 // loop_header
      %s16 = sphi 0, %s20
      %p17 = scmp.ge.s32.totalorder %s16, 4
      %s26 = sphi 0, %s28
      %s29 = sphi 0, %s26
      %s30 = sphi 0, %s29
      %s46 = sphi 0, %s30
      %s52 = sphi 0, %s54
      %s55 = sphi 0, %s52
      %s56 = sphi 0, %s55
      %s72 = sphi 0, %s56
      %s76 = sphi 0, %s76
      %s78 = sphi 0, %s76
      %s79 = sphi 0, %s78
      %s93 = sphi 0, %s79
      %s97 = sphi 0, %s97
      %s99 = sphi 0, %s97
      %s100 = sphi 0, %s99
      %s114 = sphi 0, %s100
      %s118 = sphi 0, %s118
      %s120 = sphi 0, %s118
      %s121 = sphi 0, %s120
      %s135 = sphi 0, %s121
      %s139 = sphi 0, %s139
      %s141 = sphi 0, %s139
      %s142 = sphi 0, %s141
      %s156 = sphi 0, %s142
      %s160 = sphi 0, %s160
      %s162 = sphi 0, %s160
      %s163 = sphi 0, %s162
      %s177 = sphi 0, %s163
      %s181 = sphi 0, %s181
      %s183 = sphi 0, %s181
      %s184 = sphi 0, %s183
      %s198 = sphi 0, %s184
      %s202 = sphi 0, %s202
      %s204 = sphi 0, %s202
      %s205 = sphi 0, %s204
      %s219 = sphi 0, %s205
      %s223 = sphi 0, %s223
      %s225 = sphi 0, %s223
      %s226 = sphi 0, %s225
      %s240 = sphi 0, %s226
      %s246 = sphi 0, %s248
      %s249 = sphi 0, %s246
      %s250 = sphi 0, %s249
      %s266 = sphi 0, %s250
    $region4: #{generator_forward.1} parent=1 // loop_header_branch
      %19 = sbr.rel (%p17) target = $region8
    $region5: #{generator_forward.1} parent=1 // loop_body
      %s21 = ssub.s32 %s16, 1
      %s22 = ssub.s32 %s16, 2
      %s23 = sadd.s32 %s16, 1
      %s24 = ssub.s32 %s16, %s23
      %p25 = scmp.eq.s32.totalorder %s24, 0
      %s27 = sadd.s32 %s26, 1
      %s28 = scalar_select %p25, %s26, %s27
      %p31 = pneg %p25
      %p32 = scmp.eq.s32.totalorder %s16, 1
      %p33 = por %p31, %p32
      %p34 = scmp.ne.s32.totalorder %s26, %s29
      %p35 = scmp.eq.s32.totalorder %s16, 0
      %p36 = por %p34, %p35
      %p37 = scmp.ne.s32.totalorder %s26, %s29
      %p38 = scmp.eq.s32.totalorder %s21, 1
      %p39 = por %p37, %p38
      %p40 = scmp.ne.s32.totalorder %s29, %s30
      %p41 = scmp.eq.s32.totalorder %s21, 0
      %p42 = por %p40, %p41
      %p43 = scmp.ne.s32.totalorder %s29, %s30
      %p44 = scmp.eq.s32.totalorder %s22, 1
      %p45 = por %p43, %p44
      %p47 = scmp.ne.s32.totalorder %s30, %s46
      %p48 = scmp.eq.s32.totalorder %s22, 0
      %p49 = por %p47, %p48
      %s50 = ssub.s32 %s16, %s23
      %p51 = scmp.eq.s32.totalorder %s50, 0
      %s53 = sadd.s32 %s52, 1
      %s54 = scalar_select %p51, %s52, %s53
      %p57 = pneg %p51
      %p58 = scmp.eq.s32.totalorder %s16, 1
      %p59 = por %p57, %p58
      %p60 = scmp.ne.s32.totalorder %s52, %s55
      %p61 = scmp.eq.s32.totalorder %s16, 0
      %p62 = por %p60, %p61
      %p63 = scmp.ne.s32.totalorder %s52, %s55
      %p64 = scmp.eq.s32.totalorder %s21, 1
      %p65 = por %p63, %p64
      %p66 = scmp.ne.s32.totalorder %s55, %s56
      %p67 = scmp.eq.s32.totalorder %s21, 0
      %p68 = por %p66, %p67
      %p69 = scmp.ne.s32.totalorder %s55, %s56
      %p70 = scmp.eq.s32.totalorder %s22, 1
      %p71 = por %p69, %p70
      %p73 = scmp.ne.s32.totalorder %s56, %s72
      %p74 = scmp.eq.s32.totalorder %s22, 0
      %p75 = por %p73, %p74
      %s77 = sadd.s32 %s76, 1
      %p80 = scmp.eq.s32.totalorder %s16, 1
      %p81 = scmp.ne.s32.totalorder %s76, %s78
      %p82 = scmp.eq.s32.totalorder %s16, 0
      %p83 = por %p81, %p82
      %p84 = scmp.ne.s32.totalorder %s76, %s78
      %p85 = scmp.eq.s32.totalorder %s21, 1
      %p86 = por %p84, %p85
      %p87 = scmp.ne.s32.totalorder %s78, %s79
      %p88 = scmp.eq.s32.totalorder %s21, 0
      %p89 = por %p87, %p88
      %p90 = scmp.ne.s32.totalorder %s78, %s79
      %p91 = scmp.eq.s32.totalorder %s22, 1
      %p92 = por %p90, %p91
      %p94 = scmp.ne.s32.totalorder %s79, %s93
      %p95 = scmp.eq.s32.totalorder %s22, 0
      %p96 = por %p94, %p95
      %s98 = sadd.s32 %s97, 1
      %p101 = scmp.eq.s32.totalorder %s16, 1
      %p102 = scmp.ne.s32.totalorder %s97, %s99
      %p103 = scmp.eq.s32.totalorder %s16, 0
      %p104 = por %p102, %p103
      %p105 = scmp.ne.s32.totalorder %s97, %s99
      %p106 = scmp.eq.s32.totalorder %s21, 1
      %p107 = por %p105, %p106
      %p108 = scmp.ne.s32.totalorder %s99, %s100
      %p109 = scmp.eq.s32.totalorder %s21, 0
      %p110 = por %p108, %p109
      %p111 = scmp.ne.s32.totalorder %s99, %s100
      %p112 = scmp.eq.s32.totalorder %s22, 1
      %p113 = por %p111, %p112
      %p115 = scmp.ne.s32.totalorder %s100, %s114
      %p116 = scmp.eq.s32.totalorder %s22, 0
      %p117 = por %p115, %p116
      %s119 = sadd.s32 %s118, 1
      %p122 = scmp.eq.s32.totalorder %s16, 1
      %p123 = scmp.ne.s32.totalorder %s118, %s120
      %p124 = scmp.eq.s32.totalorder %s16, 0
      %p125 = por %p123, %p124
      %p126 = scmp.ne.s32.totalorder %s118, %s120
      %p127 = scmp.eq.s32.totalorder %s21, 1
      %p128 = por %p126, %p127
      %p129 = scmp.ne.s32.totalorder %s120, %s121
      %p130 = scmp.eq.s32.totalorder %s21, 0
      %p131 = por %p129, %p130
      %p132 = scmp.ne.s32.totalorder %s120, %s121
      %p133 = scmp.eq.s32.totalorder %s22, 1
      %p134 = por %p132, %p133
      %p136 = scmp.ne.s32.totalorder %s121, %s135
      %p137 = scmp.eq.s32.totalorder %s22, 0
      %p138 = por %p136, %p137
      %s140 = sadd.s32 %s139, 1
      %p143 = scmp.eq.s32.totalorder %s16, 1
      %p144 = scmp.ne.s32.totalorder %s139, %s141
      %p145 = scmp.eq.s32.totalorder %s16, 0
      %p146 = por %p144, %p145
      %p147 = scmp.ne.s32.totalorder %s139, %s141
      %p148 = scmp.eq.s32.totalorder %s21, 1
      %p149 = por %p147, %p148
      %p150 = scmp.ne.s32.totalorder %s141, %s142
      %p151 = scmp.eq.s32.totalorder %s21, 0
      %p152 = por %p150, %p151
      %p153 = scmp.ne.s32.totalorder %s141, %s142
      %p154 = scmp.eq.s32.totalorder %s22, 1
      %p155 = por %p153, %p154
      %p157 = scmp.ne.s32.totalorder %s142, %s156
      %p158 = scmp.eq.s32.totalorder %s22, 0
      %p159 = por %p157, %p158
      %s161 = sadd.s32 %s160, 1
      %p164 = scmp.eq.s32.totalorder %s16, 1
      %p165 = scmp.ne.s32.totalorder %s160, %s162
      %p166 = scmp.eq.s32.totalorder %s16, 0
      %p167 = por %p165, %p166
      %p168 = scmp.ne.s32.totalorder %s160, %s162
      %p169 = scmp.eq.s32.totalorder %s21, 1
      %p170 = por %p168, %p169
      %p171 = scmp.ne.s32.totalorder %s162, %s163
      %p172 = scmp.eq.s32.totalorder %s21, 0
      %p173 = por %p171, %p172
      %p174 = scmp.ne.s32.totalorder %s162, %s163
      %p175 = scmp.eq.s32.totalorder %s22, 1
      %p176 = por %p174, %p175
      %p178 = scmp.ne.s32.totalorder %s163, %s177
      %p179 = scmp.eq.s32.totalorder %s22, 0
      %p180 = por %p178, %p179
      %s182 = sadd.s32 %s181, 1
      %p185 = scmp.eq.s32.totalorder %s16, 1
      %p186 = scmp.ne.s32.totalorder %s181, %s183
      %p187 = scmp.eq.s32.totalorder %s16, 0
      %p188 = por %p186, %p187
      %p189 = scmp.ne.s32.totalorder %s181, %s183
      %p190 = scmp.eq.s32.totalorder %s21, 1
      %p191 = por %p189, %p190
      %p192 = scmp.ne.s32.totalorder %s183, %s184
      %p193 = scmp.eq.s32.totalorder %s21, 0
      %p194 = por %p192, %p193
      %p195 = scmp.ne.s32.totalorder %s183, %s184
      %p196 = scmp.eq.s32.totalorder %s22, 1
      %p197 = por %p195, %p196
      %p199 = scmp.ne.s32.totalorder %s184, %s198
      %p200 = scmp.eq.s32.totalorder %s22, 0
      %p201 = por %p199, %p200
      %s203 = sadd.s32 %s202, 1
      %p206 = scmp.eq.s32.totalorder %s16, 1
      %p207 = scmp.ne.s32.totalorder %s202, %s204
      %p208 = scmp.eq.s32.totalorder %s16, 0
      %p209 = por %p207, %p208
      %p210 = scmp.ne.s32.totalorder %s202, %s204
      %p211 = scmp.eq.s32.totalorder %s21, 1
      %p212 = por %p210, %p211
      %p213 = scmp.ne.s32.totalorder %s204, %s205
      %p214 = scmp.eq.s32.totalorder %s21, 0
      %p215 = por %p213, %p214
      %p216 = scmp.ne.s32.totalorder %s204, %s205
      %p217 = scmp.eq.s32.totalorder %s22, 1
      %p218 = por %p216, %p217
      %p220 = scmp.ne.s32.totalorder %s205, %s219
      %p221 = scmp.eq.s32.totalorder %s22, 0
      %p222 = por %p220, %p221
      %s224 = sadd.s32 %s223, 1
      %p227 = scmp.eq.s32.totalorder %s16, 1
      %p228 = scmp.ne.s32.totalorder %s223, %s225
      %p229 = scmp.eq.s32.totalorder %s16, 0
      %p230 = por %p228, %p229
      %p231 = scmp.ne.s32.totalorder %s223, %s225
      %p232 = scmp.eq.s32.totalorder %s21, 1
      %p233 = por %p231, %p232
      %p234 = scmp.ne.s32.totalorder %s225, %s226
      %p235 = scmp.eq.s32.totalorder %s21, 0
      %p236 = por %p234, %p235
      %p237 = scmp.ne.s32.totalorder %s225, %s226
      %p238 = scmp.eq.s32.totalorder %s22, 1
      %p239 = por %p237, %p238
      %p241 = scmp.ne.s32.totalorder %s226, %s240
      %p242 = scmp.eq.s32.totalorder %s22, 0
      %p243 = por %p241, %p242
      %s244 = ssub.s32 %s16, %s23
      %p245 = scmp.eq.s32.totalorder %s244, 0
      %s247 = sadd.s32 %s246, 1
      %s248 = scalar_select %p245, %s246, %s247
      %p251 = pneg %p245
      %p252 = scmp.eq.s32.totalorder %s16, 1
      %p253 = por %p251, %p252
      %p254 = scmp.ne.s32.totalorder %s246, %s249
      %p255 = scmp.eq.s32.totalorder %s16, 0
      %p256 = por %p254, %p255
      %p257 = scmp.ne.s32.totalorder %s246, %s249
      %p258 = scmp.eq.s32.totalorder %s21, 1
      %p259 = por %p257, %p258
      %p260 = scmp.ne.s32.totalorder %s249, %s250
      %p261 = scmp.eq.s32.totalorder %s21, 0
      %p262 = por %p260, %p261
      %p263 = scmp.ne.s32.totalorder %s249, %s250
      %p264 = scmp.eq.s32.totalorder %s22, 1
      %p265 = por %p263, %p264
      %p267 = scmp.ne.s32.totalorder %s250, %s266
      %p268 = scmp.eq.s32.totalorder %s22, 0
      %p269 = por %p267, %p268
      %p270 = scmp.le.s32.totalorder 1, %s16
      %p271 = scmp.lt.s32.totalorder %s16, 3
      %p272 = pnand %p270, %p271
      %p273 = pneg %p272
      // Predicated region
      $region9: #{generator_forward.1} parent=5 // pred_check
        _
      $region10: #{generator_forward.1} parent=5 // pred_check_branch
        %275 = sbr.rel (%p272) target = $region12
      $region11: #{generator_forward.1} parent=5 // pred_region
        %s276 = ssub.s32 %s16, 1
        // Predicated region
        $region13: #{generator_forward.1} parent=11 // pred_check
          %p277 = pneg %p89
        $region14: #{generator_forward.1} parent=11 // pred_check_branch
          %279 = sbr.rel (%p277) target = $region16
        $region15: #{generator_forward.1} parent=11 // pred_region
          _
        $region16: #{generator_forward.1} parent=11 // pred_fallthru
          _
        // Predicated region
        $region17: #{generator_forward.1} parent=11 // pred_check
          %p280 = pneg %p110
        $region18: #{generator_forward.1} parent=11 // pred_check_branch
          %282 = sbr.rel (%p280) target = $region20
        $region19: #{generator_forward.1} parent=11 // pred_region
          _
        $region20: #{generator_forward.1} parent=11 // pred_fallthru
          _
        // Predicated region
        $region21: #{generator_forward.1} parent=11 // pred_check
          %p283 = pneg %p131
        $region22: #{generator_forward.1} parent=11 // pred_check_branch
          %285 = sbr.rel (%p283) target = $region24
        $region23: #{generator_forward.1} parent=11 // pred_region
          _
        $region24: #{generator_forward.1} parent=11 // pred_fallthru
          _
        // Predicated region
        $region25: #{generator_forward.1} parent=11 // pred_check
          %p286 = pneg %p152
        $region26: #{generator_forward.1} parent=11 // pred_check_branch
          %288 = sbr.rel (%p286) target = $region28
        $region27: #{generator_forward.1} parent=11 // pred_region
          _
        $region28: #{generator_forward.1} parent=11 // pred_fallthru
          _
        // Predicated region
        $region29: #{generator_forward.1} parent=11 // pred_check
          %p289 = pneg %p173
        $region30: #{generator_forward.1} parent=11 // pred_check_branch
          %291 = sbr.rel (%p289) target = $region32
        $region31: #{generator_forward.1} parent=11 // pred_region
          _
        $region32: #{generator_forward.1} parent=11 // pred_fallthru
          _
        // Predicated region
        $region33: #{generator_forward.1} parent=11 // pred_check
          %p292 = pneg %p194
        $region34: #{generator_forward.1} parent=11 // pred_check_branch
          %294 = sbr.rel (%p292) target = $region36
        $region35: #{generator_forward.1} parent=11 // pred_region
          _
        $region36: #{generator_forward.1} parent=11 // pred_fallthru
          _
        // Predicated region
        $region37: #{generator_forward.1} parent=11 // pred_check
          %p295 = pneg %p215
        $region38: #{generator_forward.1} parent=11 // pred_check_branch
          %297 = sbr.rel (%p295) target = $region40
        $region39: #{generator_forward.1} parent=11 // pred_region
          _
        $region40: #{generator_forward.1} parent=11 // pred_fallthru
          _
        // Predicated region
        $region41: #{generator_forward.1} parent=11 // pred_check
          %p298 = pneg %p236
        $region42: #{generator_forward.1} parent=11 // pred_check_branch
          %300 = sbr.rel (%p298) target = $region44
        $region43: #{generator_forward.1} parent=11 // pred_region
          _
        $region44: #{generator_forward.1} parent=11 // pred_fallthru
          _
      $region12: #{generator_forward.1} parent=5 // pred_fallthru
        _
      %p301 = scmp.lt.s32.totalorder %s16, 2
      // Predicated region
      $region45: #{generator_forward.1} parent=5 // pred_check
        %p302 = pneg %p301
      $region46: #{generator_forward.1} parent=5 // pred_check_branch
        %304 = sbr.rel (%p302) target = $region48
      $region47: #{generator_forward.1} parent=5 // pred_region
        // Predicated region
        $region49: #{generator_forward.1} parent=47 // pred_check
          %p305 = pneg %p36
        $region50: #{generator_forward.1} parent=47 // pred_check_branch
          %307 = sbr.rel (%p305) target = $region52
        $region51: #{generator_forward.1} parent=47 // pred_region
          %s308 = smul.u32 32, %s16
          %p309 = scmp.lt.s32.totalorder %s308, 63
          %s310 = scalar_select %p309, %s308, 63
          %s311 = smul.addr %s310, 8
          %s312 = scalar_lea.vmem %s0, %s311
          %s313 = smul.u32 32, %s16
        $region52: #{generator_forward.1} parent=47 // pred_fallthru
          _
        // Predicated region
        $region53: #{generator_forward.1} parent=47 // pred_check
          %p314 = pneg %p62
        $region54: #{generator_forward.1} parent=47 // pred_check_branch
          %316 = sbr.rel (%p314) target = $region56
        $region55: #{generator_forward.1} parent=47 // pred_region
          %s317 = smul.u32 32, %s16
          %p318 = scmp.lt.s32.totalorder %s317, 63
          %s319 = scalar_select %p318, %s317, 63
          %s320 = smul.addr %s319, 8
          %s321 = scalar_lea.vmem %s1, %s320
          %s322 = smul.u32 32, %s16
        $region56: #{generator_forward.1} parent=47 // pred_fallthru
          _
      $region48: #{generator_forward.1} parent=5 // pred_fallthru
        _
      %p323 = scmp.le.s32.totalorder 1, %s16
      %p324 = scmp.lt.s32.totalorder %s16, 3
      %p325 = pnand %p323, %p324
      %p326 = pneg %p325
      // Predicated region
      $region57: #{generator_forward.1} parent=5 // pred_check
        _
      $region58: #{generator_forward.1} parent=5 // pred_check_branch
        %328 = sbr.rel (%p325) target = $region60
      $region59: #{generator_forward.1} parent=5 // pred_region
        %s329 = ssub.s32 %s16, 1
        %s330 = smul.u32 32, %s21
        %p331 = scmp.lt.s32.totalorder %s330, 63
        %s332 = scalar_select %p331, %s330, 63
        %s333 = smul.addr %s332, 8
        %s334 = scalar_lea.vmem %s0, %s333
        %p335 = pneg %p42
        %p336 = pneg %p39
        %s337 = smul.u32 32, %s21
        %p338 = scmp.lt.s32.totalorder %s337, 63
        %s339 = scalar_select %p338, %s337, 63
        %s340 = smul.addr %s339, 8
        %s341 = scalar_lea.vmem %s1, %s340
        %p342 = pneg %p68
        %p343 = pneg %p65
        %p344 = pneg %p89
        %p345 = pneg %p86
        %p346 = pneg %p110
        %p347 = pneg %p107
        %p348 = pneg %p131
        %p349 = pneg %p128
        %p350 = pneg %p152
        %p351 = pneg %p149
        %p352 = pneg %p173
        %p353 = pneg %p170
        %p354 = pneg %p194
        %p355 = pneg %p191
        %p356 = pneg %p215
        %p357 = pneg %p212
        %p358 = pneg %p236
        %p359 = pneg %p233
        %p360 = pneg %p262
        %p361 = pneg %p259
        %s362 = sand.u32 %s249, 1
        %s363 = sand.u32 %s249, 1
        %s364 = smul.addr %s363, 2048
        %s365 = scalar_lea.vmem [#allocation2], %s364
        %s366 = smul.u32 32, %s21
        %p367 = scmp.lt.s32.totalorder %s366, 63
        %s368 = scalar_select %p367, %s366, 63
        %s369 = smul.addr %s368, 8
        %s370 = scalar_lea.vmem %s0, %s369
        %s371 = smul.u32 32, %s21
        %s372 = smul.u32 32, %s21
        %p373 = scmp.lt.s32.totalorder %s372, 63
        %s374 = scalar_select %p373, %s372, 63
        %s375 = smul.addr %s374, 8
        %s376 = scalar_lea.vmem %s1, %s375
        %s377 = smul.u32 32, %s21
        %s378 = smul.u32 32, %s21
        %v379 = vld [vmem:[%s370] sm:$0xff]
        %v380 = vld [vmem:[%s370 + $0x8] sm:$0xff]
        %v381 = vld [vmem:[%s370 + $0x10] sm:$0xff]
        %v382 = vld [vmem:[%s370 + $0x18] sm:$0xff]
        %v383 = vld [vmem:[%s370 + $0x20] sm:$0xff]
        %v384 = vld [vmem:[%s370 + $0x28] sm:$0xff]
        %v385 = vld [vmem:[%s370 + $0x30] sm:$0xff]
        %v386 = vld [vmem:[%s370 + $0x38] sm:$0xff]
        %v387 = vld [vmem:[%s370 + $0x40] sm:$0xff]
        %v388 = vld [vmem:[%s370 + $0x48] sm:$0xff]
        %v389 = vld [vmem:[%s370 + $0x50] sm:$0xff]
        %v390 = vld [vmem:[%s370 + $0x58] sm:$0xff]
        %v391 = vld [vmem:[%s370 + $0x60] sm:$0xff]
        %v392 = vld [vmem:[%s370 + $0x68] sm:$0xff]
        %v393 = vld [vmem:[%s370 + $0x70] sm:$0xff]
        %v394 = vld [vmem:[%s370 + $0x78] sm:$0xff]
        %v395 = vld [vmem:[%s370 + $0x80] sm:$0xff]
        %v396 = vld [vmem:[%s370 + $0x88] sm:$0xff]
        %v397 = vld [vmem:[%s370 + $0x90] sm:$0xff]
        %v398 = vld [vmem:[%s370 + $0x98] sm:$0xff]
        %v399 = vld [vmem:[%s370 + $0xa0] sm:$0xff]
        %v400 = vld [vmem:[%s370 + $0xa8] sm:$0xff]
        %v401 = vld [vmem:[%s370 + $0xb0] sm:$0xff]
        %v402 = vld [vmem:[%s370 + $0xb8] sm:$0xff]
        %v403 = vld [vmem:[%s370 + $0xc0] sm:$0xff]
        %v404 = vld [vmem:[%s370 + $0xc8] sm:$0xff]
        %v405 = vld [vmem:[%s370 + $0xd0] sm:$0xff]
        %v406 = vld [vmem:[%s370 + $0xd8] sm:$0xff]
        %v407 = vld [vmem:[%s370 + $0xe0] sm:$0xff]
        %v408 = vld [vmem:[%s370 + $0xe8] sm:$0xff]
        %v409 = vld [vmem:[%s370 + $0xf0] sm:$0xff]
        %v410 = vld [vmem:[%s370 + $0xf8] sm:$0xff]
        %v411 = vld [vmem:[%s376] sm:$0xff]
        %v412 = vld [vmem:[%s376 + $0x8] sm:$0xff]
        %v413 = vld [vmem:[%s376 + $0x10] sm:$0xff]
        %v414 = vld [vmem:[%s376 + $0x18] sm:$0xff]
        %v415 = vld [vmem:[%s376 + $0x20] sm:$0xff]
        %v416 = vld [vmem:[%s376 + $0x28] sm:$0xff]
        %v417 = vld [vmem:[%s376 + $0x30] sm:$0xff]
        %v418 = vld [vmem:[%s376 + $0x38] sm:$0xff]
        %v419 = vld [vmem:[%s376 + $0x40] sm:$0xff]
        %v420 = vld [vmem:[%s376 + $0x48] sm:$0xff]
        %v421 = vld [vmem:[%s376 + $0x50] sm:$0xff]
        %v422 = vld [vmem:[%s376 + $0x58] sm:$0xff]
        %v423 = vld [vmem:[%s376 + $0x60] sm:$0xff]
        %v424 = vld [vmem:[%s376 + $0x68] sm:$0xff]
        %v425 = vld [vmem:[%s376 + $0x70] sm:$0xff]
        %v426 = vld [vmem:[%s376 + $0x78] sm:$0xff]
        %v427 = vld [vmem:[%s376 + $0x80] sm:$0xff]
        %v428 = vld [vmem:[%s376 + $0x88] sm:$0xff]
        %v429 = vld [vmem:[%s376 + $0x90] sm:$0xff]
        %v430 = vld [vmem:[%s376 + $0x98] sm:$0xff]
        %v431 = vld [vmem:[%s376 + $0xa0] sm:$0xff]
        %v432 = vld [vmem:[%s376 + $0xa8] sm:$0xff]
        %v433 = vld [vmem:[%s376 + $0xb0] sm:$0xff]
        %v434 = vld [vmem:[%s376 + $0xb8] sm:$0xff]
        %v435 = vld [vmem:[%s376 + $0xc0] sm:$0xff]
        %v436 = vld [vmem:[%s376 + $0xc8] sm:$0xff]
        %v437 = vld [vmem:[%s376 + $0xd0] sm:$0xff]
        %v438 = vld [vmem:[%s376 + $0xd8] sm:$0xff]
        %v439 = vld [vmem:[%s376 + $0xe0] sm:$0xff]
        %v440 = vld [vmem:[%s376 + $0xe8] sm:$0xff]
        %v441 = vld [vmem:[%s376 + $0xf0] sm:$0xff]
        %v442 = vld [vmem:[%s376 + $0xf8] sm:$0xff]
        %v443 = vld [vmem:[%s2] sm:$0xff]
        %v444 = vld [vmem:[%s2 + $0x8] sm:$0xff]
        %v445 = vld [vmem:[%s2 + $0x10] sm:$0xff]
        %v446 = vld [vmem:[%s2 + $0x18] sm:$0xff]
        %v447 = vld [vmem:[%s2 + $0x20] sm:$0xff]
        %v448 = vld [vmem:[%s2 + $0x28] sm:$0xff]
        %v449 = vld [vmem:[%s2 + $0x30] sm:$0xff]
        %v450 = vld [vmem:[%s2 + $0x38] sm:$0xff]
        %v451 = vld [vmem:[%s2 + $0x40] sm:$0xff]
        %v452 = vld [vmem:[%s2 + $0x48] sm:$0xff]
        %v453 = vld [vmem:[%s2 + $0x50] sm:$0xff]
        %v454 = vld [vmem:[%s2 + $0x58] sm:$0xff]
        %v455 = vld [vmem:[%s2 + $0x60] sm:$0xff]
        %v456 = vld [vmem:[%s2 + $0x68] sm:$0xff]
        %v457 = vld [vmem:[%s2 + $0x70] sm:$0xff]
        %v458 = vld [vmem:[%s2 + $0x78] sm:$0xff]
        %v459 = vld [vmem:[%s3] sm:$0x1]
        %v460 = vld [vmem:[%s4] sm:$0xff]
        %v461 = vld [vmem:[%s4 + $0x8] sm:$0xff]
        %v462 = vld [vmem:[%s4 + $0x10] sm:$0xff]
        %v463 = vld [vmem:[%s4 + $0x18] sm:$0xff]
        %v464 = vld [vmem:[%s4 + $0x20] sm:$0xff]
        %v465 = vld [vmem:[%s4 + $0x28] sm:$0xff]
        %v466 = vld [vmem:[%s4 + $0x30] sm:$0xff]
        %v467 = vld [vmem:[%s4 + $0x38] sm:$0xff]
        %v468 = vld [vmem:[%s4 + $0x40] sm:$0xff]
        %v469 = vld [vmem:[%s4 + $0x48] sm:$0xff]
        %v470 = vld [vmem:[%s4 + $0x50] sm:$0xff]
        %v471 = vld [vmem:[%s4 + $0x58] sm:$0xff]
        %v472 = vld [vmem:[%s4 + $0x60] sm:$0xff]
        %v473 = vld [vmem:[%s4 + $0x68] sm:$0xff]
        %v474 = vld [vmem:[%s4 + $0x70] sm:$0xff]
        %v475 = vld [vmem:[%s4 + $0x78] sm:$0xff]
        %v476 = vld [vmem:[%s5] sm:$0x1]
        %v477 = vld [vmem:[%s6] sm:$0xff]
        %v478 = vld [vmem:[%s6 + $0x8] sm:$0xff]
        %v479 = vld [vmem:[%s6 + $0x10] sm:$0xff]
        %v480 = vld [vmem:[%s6 + $0x18] sm:$0xff]
        %v481 = vld [vmem:[%s6 + $0x20] sm:$0xff]
        %v482 = vld [vmem:[%s6 + $0x28] sm:$0xff]
        %v483 = vld [vmem:[%s6 + $0x30] sm:$0xff]
        %v484 = vld [vmem:[%s6 + $0x38] sm:$0xff]
        %v485 = vld [vmem:[%s6 + $0x40] sm:$0xff]
        %v486 = vld [vmem:[%s6 + $0x48] sm:$0xff]
        %v487 = vld [vmem:[%s6 + $0x50] sm:$0xff]
        %v488 = vld [vmem:[%s6 + $0x58] sm:$0xff]
        %v489 = vld [vmem:[%s6 + $0x60] sm:$0xff]
        %v490 = vld [vmem:[%s6 + $0x68] sm:$0xff]
        %v491 = vld [vmem:[%s6 + $0x70] sm:$0xff]
        %v492 = vld [vmem:[%s6 + $0x78] sm:$0xff]
        %v493 = vld [vmem:[%s7] sm:$0x1]
        %v494 = vld [vmem:[%s8] sm:$0xff]
        %v495 = vld [vmem:[%s8 + $0x8] sm:$0xff]
        %v496 = vld [vmem:[%s8 + $0x10] sm:$0xff]
        %v497 = vld [vmem:[%s8 + $0x18] sm:$0xff]
        %v498 = vld [vmem:[%s8 + $0x20] sm:$0xff]
        %v499 = vld [vmem:[%s8 + $0x28] sm:$0xff]
        %v500 = vld [vmem:[%s8 + $0x30] sm:$0xff]
        %v501 = vld [vmem:[%s8 + $0x38] sm:$0xff]
        %v502 = vld [vmem:[%s8 + $0x40] sm:$0xff]
        %v503 = vld [vmem:[%s8 + $0x48] sm:$0xff]
        %v504 = vld [vmem:[%s8 + $0x50] sm:$0xff]
        %v505 = vld [vmem:[%s8 + $0x58] sm:$0xff]
        %v506 = vld [vmem:[%s8 + $0x60] sm:$0xff]
        %v507 = vld [vmem:[%s8 + $0x68] sm:$0xff]
        %v508 = vld [vmem:[%s8 + $0x70] sm:$0xff]
        %v509 = vld [vmem:[%s8 + $0x78] sm:$0xff]
        %v510 = vld [vmem:[%s9] sm:$0x1]
        %v512 = vlaneseq
        %v513 = vshrl.u32 %v512, 7
        %v514 = vsub.s32 0, %v513
        %v515 = vrot.slane %v459, %v514
        %517 = vmatprep.subr.mxu0 0.0
        %518 = vmatpush1.msra.mxu0 %v443
        %519 = vmatprep.subr.mxu0 0.0
        %520 = vmatpush1.msra.mxu0 %v444
        %521 = vmatprep.subr.mxu0 0.0
        %522 = vmatpush1.msra.mxu0 %v445
        %523 = vmatprep.subr.mxu0 0.0
        %524 = vmatpush1.msra.mxu0 %v446
        %525 = vmatprep.subr.mxu0 0.0
        %526 = vmatpush1.msra.mxu0 %v447
        %527 = vmatprep.subr.mxu0 0.0
        %528 = vmatpush1.msra.mxu0 %v448
        %529 = vmatprep.subr.mxu0 0.0
        %530 = vmatpush1.msra.mxu0 %v449
        %531 = vmatprep.subr.mxu0 0.0
        %532 = vmatpush1.msra.mxu0 %v450
        %533 = vmatprep.subr.mxu0 0.0
        %534 = vmatpush1.msra.mxu0 %v451
        %535 = vmatprep.subr.mxu0 0.0
        %536 = vmatpush1.msra.mxu0 %v452
        %537 = vmatprep.subr.mxu0 0.0
        %538 = vmatpush1.msra.mxu0 %v453
        %539 = vmatprep.subr.mxu0 0.0
        %540 = vmatpush1.msra.mxu0 %v454
        %541 = vmatprep.subr.mxu0 0.0
        %542 = vmatpush1.msra.mxu0 %v455
        %543 = vmatprep.subr.mxu0 0.0
        %544 = vmatpush1.msra.mxu0 %v456
        %545 = vmatprep.subr.mxu0 0.0
        %546 = vmatpush1.msra.mxu0 %v457
        %547 = vmatprep.subr.mxu0 0.0
        %548 = vmatpush1.msra.mxu0 %v458
        %549 = vmatprep.subr.mxu0 0.0
        %550 = vmatpush1.msra.mxu0 0.0
        %551 = vmatprep.subr.mxu0 0.0
        %552 = vmatpush1.msra.mxu0 0.0
        %553 = vmatprep.subr.mxu0 0.0
        %554 = vmatpush1.msra.mxu0 0.0
        %555 = vmatprep.subr.mxu0 0.0
        %556 = vmatpush1.msra.mxu0 0.0
        %557 = vmatprep.subr.mxu0 0.0
        %558 = vmatpush1.msra.mxu0 0.0
        %559 = vmatprep.subr.mxu0 0.0
        %560 = vmatpush1.msra.mxu0 0.0
        %561 = vmatprep.subr.mxu0 0.0
        %562 = vmatpush1.msra.mxu0 0.0
        %563 = vmatprep.subr.mxu0 0.0
        %564 = vmatpush1.msra.mxu0 0.0
        %565 = vmatprep.subr.mxu0 0.0
        %566 = vmatpush1.msra.mxu0 0.0
        %567 = vmatprep.subr.mxu0 0.0
        %568 = vmatpush1.msra.mxu0 0.0
        %569 = vmatprep.subr.mxu0 0.0
        %570 = vmatpush1.msra.mxu0 0.0
        %571 = vmatprep.subr.mxu0 0.0
        %572 = vmatpush1.msra.mxu0 0.0
        %573 = vmatprep.subr.mxu0 0.0
        %574 = vmatpush1.msra.mxu0 0.0
        %575 = vmatprep.subr.mxu0 0.0
        %576 = vmatpush1.msra.mxu0 0.0
        %577 = vmatprep.subr.mxu0 0.0
        %578 = vmatpush1.msra.mxu0 0.0
        %579 = vmatprep.subr.mxu0 0.0
        %580 = vmatpush1.msra.mxu0 0.0
        %581 = vmatprep.mubr.f32.mxu0 0.0
        %582 = vmatmul.mubr.f32.gmra.mrb[0].mxu0 %v379
        %v583 = vpop.f32.mrb[0].mxu0
        %v584 = vadd.f32 %v515, %v583
        %v585 = vpop.f32.mrb[0].mxu0
        %586 = vmatprep.mubr.f32.mxu0 0.0
        %587 = vmatmul.mubr.f32.gmra.mrb[0].mxu0 %v380
        %v588 = vpop.f32.mrb[0].mxu0
        %v589 = vadd.f32 %v515, %v588
        %v590 = vpop.f32.mrb[0].mxu0
        %591 = vmatprep.mubr.f32.mxu0 0.0
        %592 = vmatmul.mubr.f32.gmra.mrb[0].mxu0 %v381
        %v593 = vpop.f32.mrb[0].mxu0
        %v594 = vadd.f32 %v515, %v593
        %v595 = vpop.f32.mrb[0].mxu0
        %596 = vmatprep.mubr.f32.mxu0 0.0
        %597 = vmatmul.mubr.f32.gmra.mrb[0].mxu0 %v382
        %v598 = vpop.f32.mrb[0].mxu0
        %v599 = vadd.f32 %v515, %v598
        %v600 = vpop.f32.mrb[0].mxu0
        %601 = vmatprep.mubr.f32.mxu0 0.0
        %602 = vmatmul.mubr.f32.gmra.mrb[0].mxu0 %v383
        %v603 = vpop.f32.mrb[0].mxu0
        %v604 = vadd.f32 %v515, %v603
        %v605 = vpop.f32.mrb[0].mxu0
        %606 = vmatprep.mubr.f32.mxu0 0.0
        %607 = vmatmul.mubr.f32.gmra.mrb[0].mxu0 %v384
        %v608 = vpop.f32.mrb[0].mxu0
        %v609 = vadd.f32 %v515, %v608
        %v610 = vpop.f32.mrb[0].mxu0
        %611 = vmatprep.mubr.f32.mxu0 0.0
        %612 = vmatmul.mubr.f32.gmra.mrb[0].mxu0 %v385
        %v613 = vpop.f32.mrb[0].mxu0
        %v614 = vadd.f32 %v515, %v613
        %v615 = vpop.f32.mrb[0].mxu0
        %616 = vmatprep.mubr.f32.mxu0 0.0
        %617 = vmatmul.mubr.f32.gmra.mrb[0].mxu0 %v386
        %v618 = vpop.f32.mrb[0].mxu0
        %v619 = vadd.f32 %v515, %v618
        %v620 = vpop.f32.mrb[0].mxu0
        %621 = vmatprep.mubr.f32.mxu0 0.0
        %622 = vmatmul.mubr.f32.gmra.mrb[0].mxu0 %v387
        %v623 = vpop.f32.mrb[0].mxu0
        %v624 = vadd.f32 %v515, %v623
        %v625 = vpop.f32.mrb[0].mxu0
        %626 = vmatprep.mubr.f32.mxu0 0.0
        %627 = vmatmul.mubr.f32.gmra.mrb[0].mxu0 %v388
        %v628 = vpop.f32.mrb[0].mxu0
        %v629 = vadd.f32 %v515, %v628
        %v630 = vpop.f32.mrb[0].mxu0
        %631 = vmatprep.mubr.f32.mxu0 0.0
        %632 = vmatmul.mubr.f32.gmra.mrb[0].mxu0 %v389
        %v633 = vpop.f32.mrb[0].mxu0
        %v634 = vadd.f32 %v515, %v633
        %v635 = vpop.f32.mrb[0].mxu0
        %636 = vmatprep.mubr.f32.mxu0 0.0
        %637 = vmatmul.mubr.f32.gmra.mrb[0].mxu0 %v390
        %v638 = vpop.f32.mrb[0].mxu0
        %v639 = vadd.f32 %v515, %v638
        %v640 = vpop.f32.mrb[0].mxu0
        %641 = vmatprep.mubr.f32.mxu0 0.0
        %642 = vmatmul.mubr.f32.gmra.mrb[0].mxu0 %v391
        %v643 = vpop.f32.mrb[0].mxu0
        %v644 = vadd.f32 %v515, %v643
        %v645 = vpop.f32.mrb[0].mxu0
        %646 = vmatprep.mubr.f32.mxu0 0.0
        %647 = vmatmul.mubr.f32.gmra.mrb[0].mxu0 %v392
        %v648 = vpop.f32.mrb[0].mxu0
        %v649 = vadd.f32 %v515, %v648
        %v650 = vpop.f32.mrb[0].mxu0
        %651 = vmatprep.mubr.f32.mxu0 0.0
        %652 = vmatmul.mubr.f32.gmra.mrb[0].mxu0 %v393
        %v653 = vpop.f32.mrb[0].mxu0
        %v654 = vadd.f32 %v515, %v653
        %v655 = vpop.f32.mrb[0].mxu0
        %656 = vmatprep.mubr.f32.mxu0 0.0
        %657 = vmatmul.mubr.f32.gmra.mrb[0].mxu0 %v394
        %v658 = vpop.f32.mrb[0].mxu0
        %v659 = vadd.f32 %v515, %v658
        %v660 = vpop.f32.mrb[0].mxu0
        %661 = vmatprep.mubr.f32.mxu0 0.0
        %662 = vmatmul.mubr.f32.gmra.mrb[0].mxu0 %v395
        %v663 = vpop.f32.mrb[0].mxu0
        %v664 = vadd.f32 %v515, %v663
        %v665 = vpop.f32.mrb[0].mxu0
        %666 = vmatprep.mubr.f32.mxu0 0.0
        %667 = vmatmul.mubr.f32.gmra.mrb[0].mxu0 %v396
        %v668 = vpop.f32.mrb[0].mxu0
        %v669 = vadd.f32 %v515, %v668
        %v670 = vpop.f32.mrb[0].mxu0
        %671 = vmatprep.mubr.f32.mxu0 0.0
        %672 = vmatmul.mubr.f32.gmra.mrb[0].mxu0 %v397
        %v673 = vpop.f32.mrb[0].mxu0
        %v674 = vadd.f32 %v515, %v673
        %v675 = vpop.f32.mrb[0].mxu0
        %676 = vmatprep.mubr.f32.mxu0 0.0
        %677 = vmatmul.mubr.f32.gmra.mrb[0].mxu0 %v398
        %v678 = vpop.f32.mrb[0].mxu0
        %v679 = vadd.f32 %v515, %v678
        %v680 = vpop.f32.mrb[0].mxu0
        %681 = vmatprep.mubr.f32.mxu0 0.0
        %682 = vmatmul.mubr.f32.gmra.mrb[0].mxu0 %v399
        %v683 = vpop.f32.mrb[0].mxu0
        %v684 = vadd.f32 %v515, %v683
        %v685 = vpop.f32.mrb[0].mxu0
        %686 = vmatprep.mubr.f32.mxu0 0.0
        %687 = vmatmul.mubr.f32.gmra.mrb[0].mxu0 %v400
        %v688 = vpop.f32.mrb[0].mxu0
        %v689 = vadd.f32 %v515, %v688
        %v690 = vpop.f32.mrb[0].mxu0
        %691 = vmatprep.mubr.f32.mxu0 0.0
        %692 = vmatmul.mubr.f32.gmra.mrb[0].mxu0 %v401
        %v693 = vpop.f32.mrb[0].mxu0
        %v694 = vadd.f32 %v515, %v693
        %v695 = vpop.f32.mrb[0].mxu0
        %696 = vmatprep.mubr.f32.mxu0 0.0
        %697 = vmatmul.mubr.f32.gmra.mrb[0].mxu0 %v402
        %v698 = vpop.f32.mrb[0].mxu0
        %v699 = vadd.f32 %v515, %v698
        %v700 = vpop.f32.mrb[0].mxu0
        %701 = vmatprep.mubr.f32.mxu0 0.0
        %702 = vmatmul.mubr.f32.gmra.mrb[0].mxu0 %v403
        %v703 = vpop.f32.mrb[0].mxu0
        %v704 = vadd.f32 %v515, %v703
        %v705 = vpop.f32.mrb[0].mxu0
        %706 = vmatprep.mubr.f32.mxu0 0.0
        %707 = vmatmul.mubr.f32.gmra.mrb[0].mxu0 %v404
        %v708 = vpop.f32.mrb[0].mxu0
        %v709 = vadd.f32 %v515, %v708
        %v710 = vpop.f32.mrb[0].mxu0
        %711 = vmatprep.mubr.f32.mxu0 0.0
        %712 = vmatmul.mubr.f32.gmra.mrb[0].mxu0 %v405
        %v713 = vpop.f32.mrb[0].mxu0
        %v714 = vadd.f32 %v515, %v713
        %v715 = vpop.f32.mrb[0].mxu0
        %716 = vmatprep.mubr.f32.mxu0 0.0
        %717 = vmatmul.mubr.f32.gmra.mrb[0].mxu0 %v406
        %v718 = vpop.f32.mrb[0].mxu0
        %v719 = vadd.f32 %v515, %v718
        %v720 = vpop.f32.mrb[0].mxu0
        %721 = vmatprep.mubr.f32.mxu0 0.0
        %722 = vmatmul.mubr.f32.gmra.mrb[0].mxu0 %v407
        %v723 = vpop.f32.mrb[0].mxu0
        %v724 = vadd.f32 %v515, %v723
        %v725 = vpop.f32.mrb[0].mxu0
        %726 = vmatprep.mubr.f32.mxu0 0.0
        %727 = vmatmul.mubr.f32.gmra.mrb[0].mxu0 %v408
        %v728 = vpop.f32.mrb[0].mxu0
        %v729 = vadd.f32 %v515, %v728
        %v730 = vpop.f32.mrb[0].mxu0
        %731 = vmatprep.mubr.f32.mxu0 0.0
        %732 = vmatmul.mubr.f32.gmra.mrb[0].mxu0 %v409
        %v733 = vpop.f32.mrb[0].mxu0
        %v734 = vadd.f32 %v515, %v733
        %v735 = vpop.f32.mrb[0].mxu0
        %736 = vmatprep.mubr.f32.mxu0 0.0
        %737 = vmatmul.mubr.f32.gmra.mrb[0].mxu0 %v410
        %v738 = vpop.f32.mrb[0].mxu0
        %v739 = vadd.f32 %v515, %v738
        %v740 = vpop.f32.mrb[0].mxu0
        %741 = vdwg.mxu0
        %v742 = vmax.f32 %v584, 0.0
        %v743 = vmax.f32 %v589, 0.0
        %v744 = vmax.f32 %v594, 0.0
        %v745 = vmax.f32 %v599, 0.0
        %v746 = vmax.f32 %v604, 0.0
        %v747 = vmax.f32 %v609, 0.0
        %v748 = vmax.f32 %v614, 0.0
        %v749 = vmax.f32 %v619, 0.0
        %v750 = vmax.f32 %v624, 0.0
        %v751 = vmax.f32 %v629, 0.0
        %v752 = vmax.f32 %v634, 0.0
        %v753 = vmax.f32 %v639, 0.0
        %v754 = vmax.f32 %v644, 0.0
        %v755 = vmax.f32 %v649, 0.0
        %v756 = vmax.f32 %v654, 0.0
        %v757 = vmax.f32 %v659, 0.0
        %v758 = vmax.f32 %v664, 0.0
        %v759 = vmax.f32 %v669, 0.0
        %v760 = vmax.f32 %v674, 0.0
        %v761 = vmax.f32 %v679, 0.0
        %v762 = vmax.f32 %v684, 0.0
        %v763 = vmax.f32 %v689, 0.0
        %v764 = vmax.f32 %v694, 0.0
        %v765 = vmax.f32 %v699, 0.0
        %v766 = vmax.f32 %v704, 0.0
        %v767 = vmax.f32 %v709, 0.0
        %v768 = vmax.f32 %v714, 0.0
        %v769 = vmax.f32 %v719, 0.0
        %v770 = vmax.f32 %v724, 0.0
        %v771 = vmax.f32 %v729, 0.0
        %v772 = vmax.f32 %v734, 0.0
        %v773 = vmax.f32 %v739, 0.0
        %774 = vmatprep.subr.mxu0 0.0
        %775 = vmatpush1.msra.mxu0 %v443
        %776 = vmatprep.subr.mxu0 0.0
        %777 = vmatpush1.msra.mxu0 %v444
        %778 = vmatprep.subr.mxu0 0.0
        %779 = vmatpush1.msra.mxu0 %v445
        %780 = vmatprep.subr.mxu0 0.0
        %781 = vmatpush1.msra.mxu0 %v446
        %782 = vmatprep.subr.mxu0 0.0
        %783 = vmatpush1.msra.mxu0 %v447
        %784 = vmatprep.subr.mxu0 0.0
        %785 = vmatpush1.msra.mxu0 %v448
        %786 = vmatprep.subr.mxu0 0.0
        %787 = vmatpush1.msra.mxu0 %v449
        %788 = vmatprep.subr.mxu0 0.0
        %789 = vmatpush1.msra.mxu0 %v450
        %790 = vmatprep.subr.mxu0 0.0
        %791 = vmatpush1.msra.mxu0 %v451
        %792 = vmatprep.subr.mxu0 0.0
        %793 = vmatpush1.msra.mxu0 %v452
        %794 = vmatprep.subr.mxu0 0.0
        %795 = vmatpush1.msra.mxu0 %v453
        %796 = vmatprep.subr.mxu0 0.0
        %797 = vmatpush1.msra.mxu0 %v454
        %798 = vmatprep.subr.mxu0 0.0
        %799 = vmatpush1.msra.mxu0 %v455
        %800 = vmatprep.subr.mxu0 0.0
        %801 = vmatpush1.msra.mxu0 %v456
        %802 = vmatprep.subr.mxu0 0.0
        %803 = vmatpush1.msra.mxu0 %v457
        %804 = vmatprep.subr.mxu0 0.0
        %805 = vmatpush1.msra.mxu0 %v458
        %806 = vmatprep.subr.mxu0 0.0
        %807 = vmatpush1.msra.mxu0 0.0
        %808 = vmatprep.subr.mxu0 0.0
        %809 = vmatpush1.msra.mxu0 0.0
        %810 = vmatprep.subr.mxu0 0.0
        %811 = vmatpush1.msra.mxu0 0.0
        %812 = vmatprep.subr.mxu0 0.0
        %813 = vmatpush1.msra.mxu0 0.0
        %814 = vmatprep.subr.mxu0 0.0
        %815 = vmatpush1.msra.mxu0 0.0
        %816 = vmatprep.subr.mxu0 0.0
        %817 = vmatpush1.msra.mxu0 0.0
        %818 = vmatprep.subr.mxu0 0.0
        %819 = vmatpush1.msra.mxu0 0.0
        %820 = vmatprep.subr.mxu0 0.0
        %821 = vmatpush1.msra.mxu0 0.0
        %822 = vmatprep.subr.mxu0 0.0
        %823 = vmatpush1.msra.mxu0 0.0
        %824 = vmatprep.subr.mxu0 0.0
        %825 = vmatpush1.msra.mxu0 0.0
        %826 = vmatprep.subr.mxu0 0.0
        %827 = vmatpush1.msra.mxu0 0.0
        %828 = vmatprep.subr.mxu0 0.0
        %829 = vmatpush1.msra.mxu0 0.0
        %830 = vmatprep.subr.mxu0 0.0
        %831 = vmatpush1.msra.mxu0 0.0
        %832 = vmatprep.subr.mxu0 0.0
        %833 = vmatpush1.msra.mxu0 0.0
        %834 = vmatprep.subr.mxu0 0.0
        %835 = vmatpush1.msra.mxu0 0.0
        %836 = vmatprep.subr.mxu0 0.0
        %837 = vmatpush1.msra.mxu0 0.0
        %838 = vmatprep.mubr.f32.mxu0 0.0
        %839 = vmatmul.mubr.f32.gmra.mrb[0].mxu0 %v411
        %v840 = vpop.f32.mrb[0].mxu0
        %v841 = vadd.f32 %v515, %v840
        %v842 = vpop.f32.mrb[0].mxu0
        %843 = vmatprep.mubr.f32.mxu0 0.0
        %844 = vmatmul.mubr.f32.gmra.mrb[0].mxu0 %v412
        %v845 = vpop.f32.mrb[0].mxu0
        %v846 = vadd.f32 %v515, %v845
        %v847 = vpop.f32.mrb[0].mxu0
        %848 = vmatprep.mubr.f32.mxu0 0.0
        %849 = vmatmul.mubr.f32.gmra.mrb[0].mxu0 %v413
        %v850 = vpop.f32.mrb[0].mxu0
        %v851 = vadd.f32 %v515, %v850
        %v852 = vpop.f32.mrb[0].mxu0
        %853 = vmatprep.mubr.f32.mxu0 0.0
        %854 = vmatmul.mubr.f32.gmra.mrb[0].mxu0 %v414
        %v855 = vpop.f32.mrb[0].mxu0
        %v856 = vadd.f32 %v515, %v855
        %v857 = vpop.f32.mrb[0].mxu0
        %858 = vmatprep.mubr.f32.mxu0 0.0
        %859 = vmatmul.mubr.f32.gmra.mrb[0].mxu0 %v415
        %v860 = vpop.f32.mrb[0].mxu0
        %v861 = vadd.f32 %v515, %v860
        %v862 = vpop.f32.mrb[0].mxu0
        %863 = vmatprep.mubr.f32.mxu0 0.0
        %864 = vmatmul.mubr.f32.gmra.mrb[0].mxu0 %v416
        %v865 = vpop.f32.mrb[0].mxu0
        %v866 = vadd.f32 %v515, %v865
        %v867 = vpop.f32.mrb[0].mxu0
        %868 = vmatprep.mubr.f32.mxu0 0.0
        %869 = vmatmul.mubr.f32.gmra.mrb[0].mxu0 %v417
        %v870 = vpop.f32.mrb[0].mxu0
        %v871 = vadd.f32 %v515, %v870
        %v872 = vpop.f32.mrb[0].mxu0
        %873 = vmatprep.mubr.f32.mxu0 0.0
        %874 = vmatmul.mubr.f32.gmra.mrb[0].mxu0 %v418
        %v875 = vpop.f32.mrb[0].mxu0
        %v876 = vadd.f32 %v515, %v875
        %v877 = vpop.f32.mrb[0].mxu0
        %878 = vmatprep.mubr.f32.mxu0 0.0
        %879 = vmatmul.mubr.f32.gmra.mrb[0].mxu0 %v419
        %v880 = vpop.f32.mrb[0].mxu0
        %v881 = vadd.f32 %v515, %v880
        %v882 = vpop.f32.mrb[0].mxu0
        %883 = vmatprep.mubr.f32.mxu0 0.0
        %884 = vmatmul.mubr.f32.gmra.mrb[0].mxu0 %v420
        %v885 = vpop.f32.mrb[0].mxu0
        %v886 = vadd.f32 %v515, %v885
        %v887 = vpop.f32.mrb[0].mxu0
        %888 = vmatprep.mubr.f32.mxu0 0.0
        %889 = vmatmul.mubr.f32.gmra.mrb[0].mxu0 %v421
        %v890 = vpop.f32.mrb[0].mxu0
        %v891 = vadd.f32 %v515, %v890
        %v892 = vpop.f32.mrb[0].mxu0
        %893 = vmatprep.mubr.f32.mxu0 0.0
        %894 = vmatmul.mubr.f32.gmra.mrb[0].mxu0 %v422
        %v895 = vpop.f32.mrb[0].mxu0
        %v896 = vadd.f32 %v515, %v895
        %v897 = vpop.f32.mrb[0].mxu0
        %898 = vmatprep.mubr.f32.mxu0 0.0
        %899 = vmatmul.mubr.f32.gmra.mrb[0].mxu0 %v423
        %v900 = vpop.f32.mrb[0].mxu0
        %v901 = vadd.f32 %v515, %v900
        %v902 = vpop.f32.mrb[0].mxu0
        %903 = vmatprep.mubr.f32.mxu0 0.0
        %904 = vmatmul.mubr.f32.gmra.mrb[0].mxu0 %v424
        %v905 = vpop.f32.mrb[0].mxu0
        %v906 = vadd.f32 %v515, %v905
        %v907 = vpop.f32.mrb[0].mxu0
        %908 = vmatprep.mubr.f32.mxu0 0.0
        %909 = vmatmul.mubr.f32.gmra.mrb[0].mxu0 %v425
        %v910 = vpop.f32.mrb[0].mxu0
        %v911 = vadd.f32 %v515, %v910
        %v912 = vpop.f32.mrb[0].mxu0
        %913 = vmatprep.mubr.f32.mxu0 0.0
        %914 = vmatmul.mubr.f32.gmra.mrb[0].mxu0 %v426
        %v915 = vpop.f32.mrb[0].mxu0
        %v916 = vadd.f32 %v515, %v915
        %v917 = vpop.f32.mrb[0].mxu0
        %918 = vmatprep.mubr.f32.mxu0 0.0
        %919 = vmatmul.mubr.f32.gmra.mrb[0].mxu0 %v427
        %v920 = vpop.f32.mrb[0].mxu0
        %v921 = vadd.f32 %v515, %v920
        %v922 = vpop.f32.mrb[0].mxu0
        %923 = vmatprep.mubr.f32.mxu0 0.0
        %924 = vmatmul.mubr.f32.gmra.mrb[0].mxu0 %v428
        %v925 = vpop.f32.mrb[0].mxu0
        %v926 = vadd.f32 %v515, %v925
        %v927 = vpop.f32.mrb[0].mxu0
        %928 = vmatprep.mubr.f32.mxu0 0.0
        %929 = vmatmul.mubr.f32.gmra.mrb[0].mxu0 %v429
        %v930 = vpop.f32.mrb[0].mxu0
        %v931 = vadd.f32 %v515, %v930
        %v932 = vpop.f32.mrb[0].mxu0
        %933 = vmatprep.mubr.f32.mxu0 0.0
        %934 = vmatmul.mubr.f32.gmra.mrb[0].mxu0 %v430
        %v935 = vpop.f32.mrb[0].mxu0
        %v936 = vadd.f32 %v515, %v935
        %v937 = vpop.f32.mrb[0].mxu0
        %938 = vmatprep.mubr.f32.mxu0 0.0
        %939 = vmatmul.mubr.f32.gmra.mrb[0].mxu0 %v431
        %v940 = vpop.f32.mrb[0].mxu0
        %v941 = vadd.f32 %v515, %v940
        %v942 = vpop.f32.mrb[0].mxu0
        %943 = vmatprep.mubr.f32.mxu0 0.0
        %944 = vmatmul.mubr.f32.gmra.mrb[0].mxu0 %v432
        %v945 = vpop.f32.mrb[0].mxu0
        %v946 = vadd.f32 %v515, %v945
        %v947 = vpop.f32.mrb[0].mxu0
        %948 = vmatprep.mubr.f32.mxu0 0.0
        %949 = vmatmul.mubr.f32.gmra.mrb[0].mxu0 %v433
        %v950 = vpop.f32.mrb[0].mxu0
        %v951 = vadd.f32 %v515, %v950
        %v952 = vpop.f32.mrb[0].mxu0
        %953 = vmatprep.mubr.f32.mxu0 0.0
        %954 = vmatmul.mubr.f32.gmra.mrb[0].mxu0 %v434
        %v955 = vpop.f32.mrb[0].mxu0
        %v956 = vadd.f32 %v515, %v955
        %v957 = vpop.f32.mrb[0].mxu0
        %958 = vmatprep.mubr.f32.mxu0 0.0
        %959 = vmatmul.mubr.f32.gmra.mrb[0].mxu0 %v435
        %v960 = vpop.f32.mrb[0].mxu0
        %v961 = vadd.f32 %v515, %v960
        %v962 = vpop.f32.mrb[0].mxu0
        %963 = vmatprep.mubr.f32.mxu0 0.0
        %964 = vmatmul.mubr.f32.gmra.mrb[0].mxu0 %v436
        %v965 = vpop.f32.mrb[0].mxu0
        %v966 = vadd.f32 %v515, %v965
        %v967 = vpop.f32.mrb[0].mxu0
        %968 = vmatprep.mubr.f32.mxu0 0.0
        %969 = vmatmul.mubr.f32.gmra.mrb[0].mxu0 %v437
        %v970 = vpop.f32.mrb[0].mxu0
        %v971 = vadd.f32 %v515, %v970
        %v972 = vpop.f32.mrb[0].mxu0
        %973 = vmatprep.mubr.f32.mxu0 0.0
        %974 = vmatmul.mubr.f32.gmra.mrb[0].mxu0 %v438
        %v975 = vpop.f32.mrb[0].mxu0
        %v976 = vadd.f32 %v515, %v975
        %v977 = vpop.f32.mrb[0].mxu0
        %978 = vmatprep.mubr.f32.mxu0 0.0
        %979 = vmatmul.mubr.f32.gmra.mrb[0].mxu0 %v439
        %v980 = vpop.f32.mrb[0].mxu0
        %v981 = vadd.f32 %v515, %v980
        %v982 = vpop.f32.mrb[0].mxu0
        %983 = vmatprep.mubr.f32.mxu0 0.0
        %984 = vmatmul.mubr.f32.gmra.mrb[0].mxu0 %v440
        %v985 = vpop.f32.mrb[0].mxu0
        %v986 = vadd.f32 %v515, %v985
        %v987 = vpop.f32.mrb[0].mxu0
        %988 = vmatprep.mubr.f32.mxu0 0.0
        %989 = vmatmul.mubr.f32.gmra.mrb[0].mxu0 %v441
        %v990 = vpop.f32.mrb[0].mxu0
        %v991 = vadd.f32 %v515, %v990
        %v992 = vpop.f32.mrb[0].mxu0
        %993 = vmatprep.mubr.f32.mxu0 0.0
        %994 = vmatmul.mubr.f32.gmra.mrb[0].mxu0 %v442
        %v995 = vpop.f32.mrb[0].mxu0
        %v996 = vadd.f32 %v515, %v995
        %v997 = vpop.f32.mrb[0].mxu0
        %998 = vdwg.mxu0
        %v999 = vmax.f32 %v841, 0.0
        %v1000 = vmax.f32 %v846, 0.0
        %v1001 = vmax.f32 %v851, 0.0
        %v1002 = vmax.f32 %v856, 0.0
        %v1003 = vmax.f32 %v861, 0.0
        %v1004 = vmax.f32 %v866, 0.0
        %v1005 = vmax.f32 %v871, 0.0
        %v1006 = vmax.f32 %v876, 0.0
        %v1007 = vmax.f32 %v881, 0.0
        %v1008 = vmax.f32 %v886, 0.0
        %v1009 = vmax.f32 %v891, 0.0
        %v1010 = vmax.f32 %v896, 0.0
        %v1011 = vmax.f32 %v901, 0.0
        %v1012 = vmax.f32 %v906, 0.0
        %v1013 = vmax.f32 %v911, 0.0
        %v1014 = vmax.f32 %v916, 0.0
        %v1015 = vmax.f32 %v921, 0.0
        %v1016 = vmax.f32 %v926, 0.0
        %v1017 = vmax.f32 %v931, 0.0
        %v1018 = vmax.f32 %v936, 0.0
        %v1019 = vmax.f32 %v941, 0.0
        %v1020 = vmax.f32 %v946, 0.0
        %v1021 = vmax.f32 %v951, 0.0
        %v1022 = vmax.f32 %v956, 0.0
        %v1023 = vmax.f32 %v961, 0.0
        %v1024 = vmax.f32 %v966, 0.0
        %v1025 = vmax.f32 %v971, 0.0
        %v1026 = vmax.f32 %v976, 0.0
        %v1027 = vmax.f32 %v981, 0.0
        %v1028 = vmax.f32 %v986, 0.0
        %v1029 = vmax.f32 %v991, 0.0
        %v1030 = vmax.f32 %v996, 0.0
        %v1032 = vlaneseq
        %v1033 = vshrl.u32 %v1032, 7
        %v1034 = vsub.s32 0, %v1033
        %v1035 = vrot.slane %v476, %v1034
        %1037 = vmatprep.subr.mxu0 0.0
        %1038 = vmatpush1.msra.mxu0 %v460
        %1039 = vmatprep.subr.mxu0 0.0
        %1040 = vmatpush1.msra.mxu0 %v461
        %1041 = vmatprep.subr.mxu0 0.0
        %1042 = vmatpush1.msra.mxu0 %v462
        %1043 = vmatprep.subr.mxu0 0.0
        %1044 = vmatpush1.msra.mxu0 %v463
        %1045 = vmatprep.subr.mxu0 0.0
        %1046 = vmatpush1.msra.mxu0 %v464
        %1047 = vmatprep.subr.mxu0 0.0
        %1048 = vmatpush1.msra.mxu0 %v465
        %1049 = vmatprep.subr.mxu0 0.0
        %1050 = vmatpush1.msra.mxu0 %v466
        %1051 = vmatprep.subr.mxu0 0.0
        %1052 = vmatpush1.msra.mxu0 %v467
        %1053 = vmatprep.subr.mxu0 0.0
        %1054 = vmatpush1.msra.mxu0 %v468
        %1055 = vmatprep.subr.mxu0 0.0
        %1056 = vmatpush1.msra.mxu0 %v469
        %1057 = vmatprep.subr.mxu0 0.0
        %1058 = vmatpush1.msra.mxu0 %v470
        %1059 = vmatprep.subr.mxu0 0.0
        %1060 = vmatpush1.msra.mxu0 %v471
        %1061 = vmatprep.subr.mxu0 0.0
        %1062 = vmatpush1.msra.mxu0 %v472
        %1063 = vmatprep.subr.mxu0 0.0
        %1064 = vmatpush1.msra.mxu0 %v473
        %1065 = vmatprep.subr.mxu0 0.0
        %1066 = vmatpush1.msra.mxu0 %v474
        %1067 = vmatprep.subr.mxu0 0.0
        %1068 = vmatpush1.msra.mxu0 %v475
        %1069 = vmatprep.subr.mxu0 0.0
        %1070 = vmatpush1.msra.mxu0 0.0
        %1071 = vmatprep.subr.mxu0 0.0
        %1072 = vmatpush1.msra.mxu0 0.0
        %1073 = vmatprep.subr.mxu0 0.0
        %1074 = vmatpush1.msra.mxu0 0.0
        %1075 = vmatprep.subr.mxu0 0.0
        %1076 = vmatpush1.msra.mxu0 0.0
        %1077 = vmatprep.subr.mxu0 0.0
        %1078 = vmatpush1.msra.mxu0 0.0
        %1079 = vmatprep.subr.mxu0 0.0
        %1080 = vmatpush1.msra.mxu0 0.0
        %1081 = vmatprep.subr.mxu0 0.0
        %1082 = vmatpush1.msra.mxu0 0.0
        %1083 = vmatprep.subr.mxu0 0.0
        %1084 = vmatpush1.msra.mxu0 0.0
        %1085 = vmatprep.subr.mxu0 0.0
        %1086 = vmatpush1.msra.mxu0 0.0
        %1087 = vmatprep.subr.mxu0 0.0
        %1088 = vmatpush1.msra.mxu0 0.0
        %1089 = vmatprep.subr.mxu0 0.0
        %1090 = vmatpush1.msra.mxu0 0.0
        %1091 = vmatprep.subr.mxu0 0.0
        %1092 = vmatpush1.msra.mxu0 0.0
        %1093 = vmatprep.subr.mxu0 0.0
        %1094 = vmatpush1.msra.mxu0 0.0
        %1095 = vmatprep.subr.mxu0 0.0
        %1096 = vmatpush1.msra.mxu0 0.0
        %1097 = vmatprep.subr.mxu0 0.0
        %1098 = vmatpush1.msra.mxu0 0.0
        %1099 = vmatprep.subr.mxu0 0.0
        %1100 = vmatpush1.msra.mxu0 0.0
        %1101 = vmatprep.mubr.f32.mxu0 0.0
        %1102 = vmatmul.mubr.f32.gmra.mrb[0].mxu0 %v742
        %v1103 = vpop.f32.mrb[0].mxu0
        %v1104 = vadd.f32 %v1035, %v1103
        %v1105 = vpop.f32.mrb[0].mxu0
        %1106 = vmatprep.mubr.f32.mxu0 0.0
        %1107 = vmatmul.mubr.f32.gmra.mrb[0].mxu0 %v743
        %v1108 = vpop.f32.mrb[0].mxu0
        %v1109 = vadd.f32 %v1035, %v1108
        %v1110 = vpop.f32.mrb[0].mxu0
        %1111 = vmatprep.mubr.f32.mxu0 0.0
        %1112 = vmatmul.mubr.f32.gmra.mrb[0].mxu0 %v744
        %v1113 = vpop.f32.mrb[0].mxu0
        %v1114 = vadd.f32 %v1035, %v1113
        %v1115 = vpop.f32.mrb[0].mxu0
        %1116 = vmatprep.mubr.f32.mxu0 0.0
        %1117 = vmatmul.mubr.f32.gmra.mrb[0].mxu0 %v745
        %v1118 = vpop.f32.mrb[0].mxu0
        %v1119 = vadd.f32 %v1035, %v1118
        %v1120 = vpop.f32.mrb[0].mxu0
        %1121 = vmatprep.mubr.f32.mxu0 0.0
        %1122 = vmatmul.mubr.f32.gmra.mrb[0].mxu0 %v746
        %v1123 = vpop.f32.mrb[0].mxu0
        %v1124 = vadd.f32 %v1035, %v1123
        %v1125 = vpop.f32.mrb[0].mxu0
        %1126 = vmatprep.mubr.f32.mxu0 0.0
        %1127 = vmatmul.mubr.f32.gmra.mrb[0].mxu0 %v747
        %v1128 = vpop.f32.mrb[0].mxu0
        %v1129 = vadd.f32 %v1035, %v1128
        %v1130 = vpop.f32.mrb[0].mxu0
        %1131 = vmatprep.mubr.f32.mxu0 0.0
        %1132 = vmatmul.mubr.f32.gmra.mrb[0].mxu0 %v748
        %v1133 = vpop.f32.mrb[0].mxu0
        %v1134 = vadd.f32 %v1035, %v1133
        %v1135 = vpop.f32.mrb[0].mxu0
        %1136 = vmatprep.mubr.f32.mxu0 0.0
        %1137 = vmatmul.mubr.f32.gmra.mrb[0].mxu0 %v749
        %v1138 = vpop.f32.mrb[0].mxu0
        %v1139 = vadd.f32 %v1035, %v1138
        %v1140 = vpop.f32.mrb[0].mxu0
        %1141 = vmatprep.mubr.f32.mxu0 0.0
        %1142 = vmatmul.mubr.f32.gmra.mrb[0].mxu0 %v750
        %v1143 = vpop.f32.mrb[0].mxu0
        %v1144 = vadd.f32 %v1035, %v1143
        %v1145 = vpop.f32.mrb[0].mxu0
        %1146 = vmatprep.mubr.f32.mxu0 0.0
        %1147 = vmatmul.mubr.f32.gmra.mrb[0].mxu0 %v751
        %v1148 = vpop.f32.mrb[0].mxu0
        %v1149 = vadd.f32 %v1035, %v1148
        %v1150 = vpop.f32.mrb[0].mxu0
        %1151 = vmatprep.mubr.f32.mxu0 0.0
        %1152 = vmatmul.mubr.f32.gmra.mrb[0].mxu0 %v752
        %v1153 = vpop.f32.mrb[0].mxu0
        %v1154 = vadd.f32 %v1035, %v1153
        %v1155 = vpop.f32.mrb[0].mxu0
        %1156 = vmatprep.mubr.f32.mxu0 0.0
        %1157 = vmatmul.mubr.f32.gmra.mrb[0].mxu0 %v753
        %v1158 = vpop.f32.mrb[0].mxu0
        %v1159 = vadd.f32 %v1035, %v1158
        %v1160 = vpop.f32.mrb[0].mxu0
        %1161 = vmatprep.mubr.f32.mxu0 0.0
        %1162 = vmatmul.mubr.f32.gmra.mrb[0].mxu0 %v754
        %v1163 = vpop.f32.mrb[0].mxu0
        %v1164 = vadd.f32 %v1035, %v1163
        %v1165 = vpop.f32.mrb[0].mxu0
        %1166 = vmatprep.mubr.f32.mxu0 0.0
        %1167 = vmatmul.mubr.f32.gmra.mrb[0].mxu0 %v755
        %v1168 = vpop.f32.mrb[0].mxu0
        %v1169 = vadd.f32 %v1035, %v1168
        %v1170 = vpop.f32.mrb[0].mxu0
        %1171 = vmatprep.mubr.f32.mxu0 0.0
        %1172 = vmatmul.mubr.f32.gmra.mrb[0].mxu0 %v756
        %v1173 = vpop.f32.mrb[0].mxu0
        %v1174 = vadd.f32 %v1035, %v1173
        %v1175 = vpop.f32.mrb[0].mxu0
        %1176 = vmatprep.mubr.f32.mxu0 0.0
        %1177 = vmatmul.mubr.f32.gmra.mrb[0].mxu0 %v757
        %v1178 = vpop.f32.mrb[0].mxu0
        %v1179 = vadd.f32 %v1035, %v1178
        %v1180 = vpop.f32.mrb[0].mxu0
        %1181 = vmatprep.mubr.f32.mxu0 0.0
        %1182 = vmatmul.mubr.f32.gmra.mrb[0].mxu0 %v758
        %v1183 = vpop.f32.mrb[0].mxu0
        %v1184 = vadd.f32 %v1035, %v1183
        %v1185 = vpop.f32.mrb[0].mxu0
        %1186 = vmatprep.mubr.f32.mxu0 0.0
        %1187 = vmatmul.mubr.f32.gmra.mrb[0].mxu0 %v759
        %v1188 = vpop.f32.mrb[0].mxu0
        %v1189 = vadd.f32 %v1035, %v1188
        %v1190 = vpop.f32.mrb[0].mxu0
        %1191 = vmatprep.mubr.f32.mxu0 0.0
        %1192 = vmatmul.mubr.f32.gmra.mrb[0].mxu0 %v760
        %v1193 = vpop.f32.mrb[0].mxu0
        %v1194 = vadd.f32 %v1035, %v1193
        %v1195 = vpop.f32.mrb[0].mxu0
        %1196 = vmatprep.mubr.f32.mxu0 0.0
        %1197 = vmatmul.mubr.f32.gmra.mrb[0].mxu0 %v761
        %v1198 = vpop.f32.mrb[0].mxu0
        %v1199 = vadd.f32 %v1035, %v1198
        %v1200 = vpop.f32.mrb[0].mxu0
        %1201 = vmatprep.mubr.f32.mxu0 0.0
        %1202 = vmatmul.mubr.f32.gmra.mrb[0].mxu0 %v762
        %v1203 = vpop.f32.mrb[0].mxu0
        %v1204 = vadd.f32 %v1035, %v1203
        %v1205 = vpop.f32.mrb[0].mxu0
        %1206 = vmatprep.mubr.f32.mxu0 0.0
        %1207 = vmatmul.mubr.f32.gmra.mrb[0].mxu0 %v763
        %v1208 = vpop.f32.mrb[0].mxu0
        %v1209 = vadd.f32 %v1035, %v1208
        %v1210 = vpop.f32.mrb[0].mxu0
        %1211 = vmatprep.mubr.f32.mxu0 0.0
        %1212 = vmatmul.mubr.f32.gmra.mrb[0].mxu0 %v764
        %v1213 = vpop.f32.mrb[0].mxu0
        %v1214 = vadd.f32 %v1035, %v1213
        %v1215 = vpop.f32.mrb[0].mxu0
        %1216 = vmatprep.mubr.f32.mxu0 0.0
        %1217 = vmatmul.mubr.f32.gmra.mrb[0].mxu0 %v765
        %v1218 = vpop.f32.mrb[0].mxu0
        %v1219 = vadd.f32 %v1035, %v1218
        %v1220 = vpop.f32.mrb[0].mxu0
        %1221 = vmatprep.mubr.f32.mxu0 0.0
        %1222 = vmatmul.mubr.f32.gmra.mrb[0].mxu0 %v766
        %v1223 = vpop.f32.mrb[0].mxu0
        %v1224 = vadd.f32 %v1035, %v1223
        %v1225 = vpop.f32.mrb[0].mxu0
        %1226 = vmatprep.mubr.f32.mxu0 0.0
        %1227 = vmatmul.mubr.f32.gmra.mrb[0].mxu0 %v767
        %v1228 = vpop.f32.mrb[0].mxu0
        %v1229 = vadd.f32 %v1035, %v1228
        %v1230 = vpop.f32.mrb[0].mxu0
        %1231 = vmatprep.mubr.f32.mxu0 0.0
        %1232 = vmatmul.mubr.f32.gmra.mrb[0].mxu0 %v768
        %v1233 = vpop.f32.mrb[0].mxu0
        %v1234 = vadd.f32 %v1035, %v1233
        %v1235 = vpop.f32.mrb[0].mxu0
        %1236 = vmatprep.mubr.f32.mxu0 0.0
        %1237 = vmatmul.mubr.f32.gmra.mrb[0].mxu0 %v769
        %v1238 = vpop.f32.mrb[0].mxu0
        %v1239 = vadd.f32 %v1035, %v1238
        %v1240 = vpop.f32.mrb[0].mxu0
        %1241 = vmatprep.mubr.f32.mxu0 0.0
        %1242 = vmatmul.mubr.f32.gmra.mrb[0].mxu0 %v770
        %v1243 = vpop.f32.mrb[0].mxu0
        %v1244 = vadd.f32 %v1035, %v1243
        %v1245 = vpop.f32.mrb[0].mxu0
        %1246 = vmatprep.mubr.f32.mxu0 0.0
        %1247 = vmatmul.mubr.f32.gmra.mrb[0].mxu0 %v771
        %v1248 = vpop.f32.mrb[0].mxu0
        %v1249 = vadd.f32 %v1035, %v1248
        %v1250 = vpop.f32.mrb[0].mxu0
        %1251 = vmatprep.mubr.f32.mxu0 0.0
        %1252 = vmatmul.mubr.f32.gmra.mrb[0].mxu0 %v772
        %v1253 = vpop.f32.mrb[0].mxu0
        %v1254 = vadd.f32 %v1035, %v1253
        %v1255 = vpop.f32.mrb[0].mxu0
        %1256 = vmatprep.mubr.f32.mxu0 0.0
        %1257 = vmatmul.mubr.f32.gmra.mrb[0].mxu0 %v773
        %v1258 = vpop.f32.mrb[0].mxu0
        %v1259 = vadd.f32 %v1035, %v1258
        %v1260 = vpop.f32.mrb[0].mxu0
        %1261 = vdwg.mxu0
        %v1263 = vlaneseq
        %v1264 = vshrl.u32 %v1263, 7
        %v1265 = vsub.s32 0, %v1264
        %v1266 = vrot.slane %v493, %v1265
        %1268 = vmatprep.subr.mxu0 0.0
        %1269 = vmatpush1.msra.mxu0 %v477
        %1270 = vmatprep.subr.mxu0 0.0
        %1271 = vmatpush1.msra.mxu0 %v478
        %1272 = vmatprep.subr.mxu0 0.0
        %1273 = vmatpush1.msra.mxu0 %v479
        %1274 = vmatprep.subr.mxu0 0.0
        %1275 = vmatpush1.msra.mxu0 %v480
        %1276 = vmatprep.subr.mxu0 0.0
        %1277 = vmatpush1.msra.mxu0 %v481
        %1278 = vmatprep.subr.mxu0 0.0
        %1279 = vmatpush1.msra.mxu0 %v482
        %1280 = vmatprep.subr.mxu0 0.0
        %1281 = vmatpush1.msra.mxu0 %v483
        %1282 = vmatprep.subr.mxu0 0.0
        %1283 = vmatpush1.msra.mxu0 %v484
        %1284 = vmatprep.subr.mxu0 0.0
        %1285 = vmatpush1.msra.mxu0 %v485
        %1286 = vmatprep.subr.mxu0 0.0
        %1287 = vmatpush1.msra.mxu0 %v486
        %1288 = vmatprep.subr.mxu0 0.0
        %1289 = vmatpush1.msra.mxu0 %v487
        %1290 = vmatprep.subr.mxu0 0.0
        %1291 = vmatpush1.msra.mxu0 %v488
        %1292 = vmatprep.subr.mxu0 0.0
        %1293 = vmatpush1.msra.mxu0 %v489
        %1294 = vmatprep.subr.mxu0 0.0
        %1295 = vmatpush1.msra.mxu0 %v490
        %1296 = vmatprep.subr.mxu0 0.0
        %1297 = vmatpush1.msra.mxu0 %v491
        %1298 = vmatprep.subr.mxu0 0.0
        %1299 = vmatpush1.msra.mxu0 %v492
        %1300 = vmatprep.subr.mxu0 0.0
        %1301 = vmatpush1.msra.mxu0 0.0
        %1302 = vmatprep.subr.mxu0 0.0
        %1303 = vmatpush1.msra.mxu0 0.0
        %1304 = vmatprep.subr.mxu0 0.0
        %1305 = vmatpush1.msra.mxu0 0.0
        %1306 = vmatprep.subr.mxu0 0.0
        %1307 = vmatpush1.msra.mxu0 0.0
        %1308 = vmatprep.subr.mxu0 0.0
        %1309 = vmatpush1.msra.mxu0 0.0
        %1310 = vmatprep.subr.mxu0 0.0
        %1311 = vmatpush1.msra.mxu0 0.0
        %1312 = vmatprep.subr.mxu0 0.0
        %1313 = vmatpush1.msra.mxu0 0.0
        %1314 = vmatprep.subr.mxu0 0.0
        %1315 = vmatpush1.msra.mxu0 0.0
        %1316 = vmatprep.subr.mxu0 0.0
        %1317 = vmatpush1.msra.mxu0 0.0
        %1318 = vmatprep.subr.mxu0 0.0
        %1319 = vmatpush1.msra.mxu0 0.0
        %1320 = vmatprep.subr.mxu0 0.0
        %1321 = vmatpush1.msra.mxu0 0.0
        %1322 = vmatprep.subr.mxu0 0.0
        %1323 = vmatpush1.msra.mxu0 0.0
        %1324 = vmatprep.subr.mxu0 0.0
        %1325 = vmatpush1.msra.mxu0 0.0
        %1326 = vmatprep.subr.mxu0 0.0
        %1327 = vmatpush1.msra.mxu0 0.0
        %1328 = vmatprep.subr.mxu0 0.0
        %1329 = vmatpush1.msra.mxu0 0.0
        %1330 = vmatprep.subr.mxu0 0.0
        %1331 = vmatpush1.msra.mxu0 0.0
        %1332 = vmatprep.mubr.f32.mxu0 0.0
        %1333 = vmatmul.mubr.f32.gmra.mrb[0].mxu0 %v999
        %v1334 = vpop.f32.mrb[0].mxu0
        %v1335 = vadd.f32 %v1266, %v1334
        %v1336 = vpop.f32.mrb[0].mxu0
        %1337 = vmatprep.mubr.f32.mxu0 0.0
        %1338 = vmatmul.mubr.f32.gmra.mrb[0].mxu0 %v1000
        %v1339 = vpop.f32.mrb[0].mxu0
        %v1340 = vadd.f32 %v1266, %v1339
        %v1341 = vpop.f32.mrb[0].mxu0
        %1342 = vmatprep.mubr.f32.mxu0 0.0
        %1343 = vmatmul.mubr.f32.gmra.mrb[0].mxu0 %v1001
        %v1344 = vpop.f32.mrb[0].mxu0
        %v1345 = vadd.f32 %v1266, %v1344
        %v1346 = vpop.f32.mrb[0].mxu0
        %1347 = vmatprep.mubr.f32.mxu0 0.0
        %1348 = vmatmul.mubr.f32.gmra.mrb[0].mxu0 %v1002
        %v1349 = vpop.f32.mrb[0].mxu0
        %v1350 = vadd.f32 %v1266, %v1349
        %v1351 = vpop.f32.mrb[0].mxu0
        %1352 = vmatprep.mubr.f32.mxu0 0.0
        %1353 = vmatmul.mubr.f32.gmra.mrb[0].mxu0 %v1003
        %v1354 = vpop.f32.mrb[0].mxu0
        %v1355 = vadd.f32 %v1266, %v1354
        %v1356 = vpop.f32.mrb[0].mxu0
        %1357 = vmatprep.mubr.f32.mxu0 0.0
        %1358 = vmatmul.mubr.f32.gmra.mrb[0].mxu0 %v1004
        %v1359 = vpop.f32.mrb[0].mxu0
        %v1360 = vadd.f32 %v1266, %v1359
        %v1361 = vpop.f32.mrb[0].mxu0
        %1362 = vmatprep.mubr.f32.mxu0 0.0
        %1363 = vmatmul.mubr.f32.gmra.mrb[0].mxu0 %v1005
        %v1364 = vpop.f32.mrb[0].mxu0
        %v1365 = vadd.f32 %v1266, %v1364
        %v1366 = vpop.f32.mrb[0].mxu0
        %1367 = vmatprep.mubr.f32.mxu0 0.0
        %1368 = vmatmul.mubr.f32.gmra.mrb[0].mxu0 %v1006
        %v1369 = vpop.f32.mrb[0].mxu0
        %v1370 = vadd.f32 %v1266, %v1369
        %v1371 = vpop.f32.mrb[0].mxu0
        %1372 = vmatprep.mubr.f32.mxu0 0.0
        %1373 = vmatmul.mubr.f32.gmra.mrb[0].mxu0 %v1007
        %v1374 = vpop.f32.mrb[0].mxu0
        %v1375 = vadd.f32 %v1266, %v1374
        %v1376 = vpop.f32.mrb[0].mxu0
        %1377 = vmatprep.mubr.f32.mxu0 0.0
        %1378 = vmatmul.mubr.f32.gmra.mrb[0].mxu0 %v1008
        %v1379 = vpop.f32.mrb[0].mxu0
        %v1380 = vadd.f32 %v1266, %v1379
        %v1381 = vpop.f32.mrb[0].mxu0
        %1382 = vmatprep.mubr.f32.mxu0 0.0
        %1383 = vmatmul.mubr.f32.gmra.mrb[0].mxu0 %v1009
        %v1384 = vpop.f32.mrb[0].mxu0
        %v1385 = vadd.f32 %v1266, %v1384
        %v1386 = vpop.f32.mrb[0].mxu0
        %1387 = vmatprep.mubr.f32.mxu0 0.0
        %1388 = vmatmul.mubr.f32.gmra.mrb[0].mxu0 %v1010
        %v1389 = vpop.f32.mrb[0].mxu0
        %v1390 = vadd.f32 %v1266, %v1389
        %v1391 = vpop.f32.mrb[0].mxu0
        %1392 = vmatprep.mubr.f32.mxu0 0.0
        %1393 = vmatmul.mubr.f32.gmra.mrb[0].mxu0 %v1011
        %v1394 = vpop.f32.mrb[0].mxu0
        %v1395 = vadd.f32 %v1266, %v1394
        %v1396 = vpop.f32.mrb[0].mxu0
        %1397 = vmatprep.mubr.f32.mxu0 0.0
        %1398 = vmatmul.mubr.f32.gmra.mrb[0].mxu0 %v1012
        %v1399 = vpop.f32.mrb[0].mxu0
        %v1400 = vadd.f32 %v1266, %v1399
        %v1401 = vpop.f32.mrb[0].mxu0
        %1402 = vmatprep.mubr.f32.mxu0 0.0
        %1403 = vmatmul.mubr.f32.gmra.mrb[0].mxu0 %v1013
        %v1404 = vpop.f32.mrb[0].mxu0
        %v1405 = vadd.f32 %v1266, %v1404
        %v1406 = vpop.f32.mrb[0].mxu0
        %1407 = vmatprep.mubr.f32.mxu0 0.0
        %1408 = vmatmul.mubr.f32.gmra.mrb[0].mxu0 %v1014
        %v1409 = vpop.f32.mrb[0].mxu0
        %v1410 = vadd.f32 %v1266, %v1409
        %v1411 = vpop.f32.mrb[0].mxu0
        %1412 = vmatprep.mubr.f32.mxu0 0.0
        %1413 = vmatmul.mubr.f32.gmra.mrb[0].mxu0 %v1015
        %v1414 = vpop.f32.mrb[0].mxu0
        %v1415 = vadd.f32 %v1266, %v1414
        %v1416 = vpop.f32.mrb[0].mxu0
        %1417 = vmatprep.mubr.f32.mxu0 0.0
        %1418 = vmatmul.mubr.f32.gmra.mrb[0].mxu0 %v1016
        %v1419 = vpop.f32.mrb[0].mxu0
        %v1420 = vadd.f32 %v1266, %v1419
        %v1421 = vpop.f32.mrb[0].mxu0
        %1422 = vmatprep.mubr.f32.mxu0 0.0
        %1423 = vmatmul.mubr.f32.gmra.mrb[0].mxu0 %v1017
        %v1424 = vpop.f32.mrb[0].mxu0
        %v1425 = vadd.f32 %v1266, %v1424
        %v1426 = vpop.f32.mrb[0].mxu0
        %1427 = vmatprep.mubr.f32.mxu0 0.0
        %1428 = vmatmul.mubr.f32.gmra.mrb[0].mxu0 %v1018
        %v1429 = vpop.f32.mrb[0].mxu0
        %v1430 = vadd.f32 %v1266, %v1429
        %v1431 = vpop.f32.mrb[0].mxu0
        %1432 = vmatprep.mubr.f32.mxu0 0.0
        %1433 = vmatmul.mubr.f32.gmra.mrb[0].mxu0 %v1019
        %v1434 = vpop.f32.mrb[0].mxu0
        %v1435 = vadd.f32 %v1266, %v1434
        %v1436 = vpop.f32.mrb[0].mxu0
        %1437 = vmatprep.mubr.f32.mxu0 0.0
        %1438 = vmatmul.mubr.f32.gmra.mrb[0].mxu0 %v1020
        %v1439 = vpop.f32.mrb[0].mxu0
        %v1440 = vadd.f32 %v1266, %v1439
        %v1441 = vpop.f32.mrb[0].mxu0
        %1442 = vmatprep.mubr.f32.mxu0 0.0
        %1443 = vmatmul.mubr.f32.gmra.mrb[0].mxu0 %v1021
        %v1444 = vpop.f32.mrb[0].mxu0
        %v1445 = vadd.f32 %v1266, %v1444
        %v1446 = vpop.f32.mrb[0].mxu0
        %1447 = vmatprep.mubr.f32.mxu0 0.0
        %1448 = vmatmul.mubr.f32.gmra.mrb[0].mxu0 %v1022
        %v1449 = vpop.f32.mrb[0].mxu0
        %v1450 = vadd.f32 %v1266, %v1449
        %v1451 = vpop.f32.mrb[0].mxu0
        %1452 = vmatprep.mubr.f32.mxu0 0.0
        %1453 = vmatmul.mubr.f32.gmra.mrb[0].mxu0 %v1023
        %v1454 = vpop.f32.mrb[0].mxu0
        %v1455 = vadd.f32 %v1266, %v1454
        %v1456 = vpop.f32.mrb[0].mxu0
        %1457 = vmatprep.mubr.f32.mxu0 0.0
        %1458 = vmatmul.mubr.f32.gmra.mrb[0].mxu0 %v1024
        %v1459 = vpop.f32.mrb[0].mxu0
        %v1460 = vadd.f32 %v1266, %v1459
        %v1461 = vpop.f32.mrb[0].mxu0
        %1462 = vmatprep.mubr.f32.mxu0 0.0
        %1463 = vmatmul.mubr.f32.gmra.mrb[0].mxu0 %v1025
        %v1464 = vpop.f32.mrb[0].mxu0
        %v1465 = vadd.f32 %v1266, %v1464
        %v1466 = vpop.f32.mrb[0].mxu0
        %1467 = vmatprep.mubr.f32.mxu0 0.0
        %1468 = vmatmul.mubr.f32.gmra.mrb[0].mxu0 %v1026
        %v1469 = vpop.f32.mrb[0].mxu0
        %v1470 = vadd.f32 %v1266, %v1469
        %v1471 = vpop.f32.mrb[0].mxu0
        %1472 = vmatprep.mubr.f32.mxu0 0.0
        %1473 = vmatmul.mubr.f32.gmra.mrb[0].mxu0 %v1027
        %v1474 = vpop.f32.mrb[0].mxu0
        %v1475 = vadd.f32 %v1266, %v1474
        %v1476 = vpop.f32.mrb[0].mxu0
        %1477 = vmatprep.mubr.f32.mxu0 0.0
        %1478 = vmatmul.mubr.f32.gmra.mrb[0].mxu0 %v1028
        %v1479 = vpop.f32.mrb[0].mxu0
        %v1480 = vadd.f32 %v1266, %v1479
        %v1481 = vpop.f32.mrb[0].mxu0
        %1482 = vmatprep.mubr.f32.mxu0 0.0
        %1483 = vmatmul.mubr.f32.gmra.mrb[0].mxu0 %v1029
        %v1484 = vpop.f32.mrb[0].mxu0
        %v1485 = vadd.f32 %v1266, %v1484
        %v1486 = vpop.f32.mrb[0].mxu0
        %1487 = vmatprep.mubr.f32.mxu0 0.0
        %1488 = vmatmul.mubr.f32.gmra.mrb[0].mxu0 %v1030
        %v1489 = vpop.f32.mrb[0].mxu0
        %v1490 = vadd.f32 %v1266, %v1489
        %v1491 = vpop.f32.mrb[0].mxu0
        %1492 = vdwg.mxu0
        %1493 = vmatprep.subr.mxu0 0.0
        %1494 = vmatpush1.msra.mxu0 %v460
        %1495 = vmatprep.subr.mxu0 0.0
        %1496 = vmatpush1.msra.mxu0 %v461
        %1497 = vmatprep.subr.mxu0 0.0
        %1498 = vmatpush1.msra.mxu0 %v462
        %1499 = vmatprep.subr.mxu0 0.0
        %1500 = vmatpush1.msra.mxu0 %v463
        %1501 = vmatprep.subr.mxu0 0.0
        %1502 = vmatpush1.msra.mxu0 %v464
        %1503 = vmatprep.subr.mxu0 0.0
        %1504 = vmatpush1.msra.mxu0 %v465
        %1505 = vmatprep.subr.mxu0 0.0
        %1506 = vmatpush1.msra.mxu0 %v466
        %1507 = vmatprep.subr.mxu0 0.0
        %1508 = vmatpush1.msra.mxu0 %v467
        %1509 = vmatprep.subr.mxu0 0.0
        %1510 = vmatpush1.msra.mxu0 %v468
        %1511 = vmatprep.subr.mxu0 0.0
        %1512 = vmatpush1.msra.mxu0 %v469
        %1513 = vmatprep.subr.mxu0 0.0
        %1514 = vmatpush1.msra.mxu0 %v470
        %1515 = vmatprep.subr.mxu0 0.0
        %1516 = vmatpush1.msra.mxu0 %v471
        %1517 = vmatprep.subr.mxu0 0.0
        %1518 = vmatpush1.msra.mxu0 %v472
        %1519 = vmatprep.subr.mxu0 0.0
        %1520 = vmatpush1.msra.mxu0 %v473
        %1521 = vmatprep.subr.mxu0 0.0
        %1522 = vmatpush1.msra.mxu0 %v474
        %1523 = vmatprep.subr.mxu0 0.0
        %1524 = vmatpush1.msra.mxu0 %v475
        %1525 = vmatprep.subr.mxu0 0.0
        %1526 = vmatpush1.msra.mxu0 0.0
        %1527 = vmatprep.subr.mxu0 0.0
        %1528 = vmatpush1.msra.mxu0 0.0
        %1529 = vmatprep.subr.mxu0 0.0
        %1530 = vmatpush1.msra.mxu0 0.0
        %1531 = vmatprep.subr.mxu0 0.0
        %1532 = vmatpush1.msra.mxu0 0.0
        %1533 = vmatprep.subr.mxu0 0.0
        %1534 = vmatpush1.msra.mxu0 0.0
        %1535 = vmatprep.subr.mxu0 0.0
        %1536 = vmatpush1.msra.mxu0 0.0
        %1537 = vmatprep.subr.mxu0 0.0
        %1538 = vmatpush1.msra.mxu0 0.0
        %1539 = vmatprep.subr.mxu0 0.0
        %1540 = vmatpush1.msra.mxu0 0.0
        %1541 = vmatprep.subr.mxu0 0.0
        %1542 = vmatpush1.msra.mxu0 0.0
        %1543 = vmatprep.subr.mxu0 0.0
        %1544 = vmatpush1.msra.mxu0 0.0
        %1545 = vmatprep.subr.mxu0 0.0
        %1546 = vmatpush1.msra.mxu0 0.0
        %1547 = vmatprep.subr.mxu0 0.0
        %1548 = vmatpush1.msra.mxu0 0.0
        %1549 = vmatprep.subr.mxu0 0.0
        %1550 = vmatpush1.msra.mxu0 0.0
        %1551 = vmatprep.subr.mxu0 0.0
        %1552 = vmatpush1.msra.mxu0 0.0
        %1553 = vmatprep.subr.mxu0 0.0
        %1554 = vmatpush1.msra.mxu0 0.0
        %1555 = vmatprep.subr.mxu0 0.0
        %1556 = vmatpush1.msra.mxu0 0.0
        %1557 = vmatprep.mubr.f32.mxu0 0.0
        %1558 = vmatmul.mubr.f32.gmra.mrb[0].mxu0 %v999
        %v1559 = vpop.f32.mrb[0].mxu0
        %v1560 = vadd.f32 %v1035, %v1559
        %v1561 = vpop.f32.mrb[0].mxu0
        %1562 = vmatprep.mubr.f32.mxu0 0.0
        %1563 = vmatmul.mubr.f32.gmra.mrb[0].mxu0 %v1000
        %v1564 = vpop.f32.mrb[0].mxu0
        %v1565 = vadd.f32 %v1035, %v1564
        %v1566 = vpop.f32.mrb[0].mxu0
        %1567 = vmatprep.mubr.f32.mxu0 0.0
        %1568 = vmatmul.mubr.f32.gmra.mrb[0].mxu0 %v1001
        %v1569 = vpop.f32.mrb[0].mxu0
        %v1570 = vadd.f32 %v1035, %v1569
        %v1571 = vpop.f32.mrb[0].mxu0
        %1572 = vmatprep.mubr.f32.mxu0 0.0
        %1573 = vmatmul.mubr.f32.gmra.mrb[0].mxu0 %v1002
        %v1574 = vpop.f32.mrb[0].mxu0
        %v1575 = vadd.f32 %v1035, %v1574
        %v1576 = vpop.f32.mrb[0].mxu0
        %1577 = vmatprep.mubr.f32.mxu0 0.0
        %1578 = vmatmul.mubr.f32.gmra.mrb[0].mxu0 %v1003
        %v1579 = vpop.f32.mrb[0].mxu0
        %v1580 = vadd.f32 %v1035, %v1579
        %v1581 = vpop.f32.mrb[0].mxu0
        %1582 = vmatprep.mubr.f32.mxu0 0.0
        %1583 = vmatmul.mubr.f32.gmra.mrb[0].mxu0 %v1004
        %v1584 = vpop.f32.mrb[0].mxu0
        %v1585 = vadd.f32 %v1035, %v1584
        %v1586 = vpop.f32.mrb[0].mxu0
        %1587 = vmatprep.mubr.f32.mxu0 0.0
        %1588 = vmatmul.mubr.f32.gmra.mrb[0].mxu0 %v1005
        %v1589 = vpop.f32.mrb[0].mxu0
        %v1590 = vadd.f32 %v1035, %v1589
        %v1591 = vpop.f32.mrb[0].mxu0
        %1592 = vmatprep.mubr.f32.mxu0 0.0
        %1593 = vmatmul.mubr.f32.gmra.mrb[0].mxu0 %v1006
        %v1594 = vpop.f32.mrb[0].mxu0
        %v1595 = vadd.f32 %v1035, %v1594
        %v1596 = vpop.f32.mrb[0].mxu0
        %1597 = vmatprep.mubr.f32.mxu0 0.0
        %1598 = vmatmul.mubr.f32.gmra.mrb[0].mxu0 %v1007
        %v1599 = vpop.f32.mrb[0].mxu0
        %v1600 = vadd.f32 %v1035, %v1599
        %v1601 = vpop.f32.mrb[0].mxu0
        %1602 = vmatprep.mubr.f32.mxu0 0.0
        %1603 = vmatmul.mubr.f32.gmra.mrb[0].mxu0 %v1008
        %v1604 = vpop.f32.mrb[0].mxu0
        %v1605 = vadd.f32 %v1035, %v1604
        %v1606 = vpop.f32.mrb[0].mxu0
        %1607 = vmatprep.mubr.f32.mxu0 0.0
        %1608 = vmatmul.mubr.f32.gmra.mrb[0].mxu0 %v1009
        %v1609 = vpop.f32.mrb[0].mxu0
        %v1610 = vadd.f32 %v1035, %v1609
        %v1611 = vpop.f32.mrb[0].mxu0
        %1612 = vmatprep.mubr.f32.mxu0 0.0
        %1613 = vmatmul.mubr.f32.gmra.mrb[0].mxu0 %v1010
        %v1614 = vpop.f32.mrb[0].mxu0
        %v1615 = vadd.f32 %v1035, %v1614
        %v1616 = vpop.f32.mrb[0].mxu0
        %1617 = vmatprep.mubr.f32.mxu0 0.0
        %1618 = vmatmul.mubr.f32.gmra.mrb[0].mxu0 %v1011
        %v1619 = vpop.f32.mrb[0].mxu0
        %v1620 = vadd.f32 %v1035, %v1619
        %v1621 = vpop.f32.mrb[0].mxu0
        %1622 = vmatprep.mubr.f32.mxu0 0.0
        %1623 = vmatmul.mubr.f32.gmra.mrb[0].mxu0 %v1012
        %v1624 = vpop.f32.mrb[0].mxu0
        %v1625 = vadd.f32 %v1035, %v1624
        %v1626 = vpop.f32.mrb[0].mxu0
        %1627 = vmatprep.mubr.f32.mxu0 0.0
        %1628 = vmatmul.mubr.f32.gmra.mrb[0].mxu0 %v1013
        %v1629 = vpop.f32.mrb[0].mxu0
        %v1630 = vadd.f32 %v1035, %v1629
        %v1631 = vpop.f32.mrb[0].mxu0
        %1632 = vmatprep.mubr.f32.mxu0 0.0
        %1633 = vmatmul.mubr.f32.gmra.mrb[0].mxu0 %v1014
        %v1634 = vpop.f32.mrb[0].mxu0
        %v1635 = vadd.f32 %v1035, %v1634
        %v1636 = vpop.f32.mrb[0].mxu0
        %1637 = vmatprep.mubr.f32.mxu0 0.0
        %1638 = vmatmul.mubr.f32.gmra.mrb[0].mxu0 %v1015
        %v1639 = vpop.f32.mrb[0].mxu0
        %v1640 = vadd.f32 %v1035, %v1639
        %v1641 = vpop.f32.mrb[0].mxu0
        %1642 = vmatprep.mubr.f32.mxu0 0.0
        %1643 = vmatmul.mubr.f32.gmra.mrb[0].mxu0 %v1016
        %v1644 = vpop.f32.mrb[0].mxu0
        %v1645 = vadd.f32 %v1035, %v1644
        %v1646 = vpop.f32.mrb[0].mxu0
        %1647 = vmatprep.mubr.f32.mxu0 0.0
        %1648 = vmatmul.mubr.f32.gmra.mrb[0].mxu0 %v1017
        %v1649 = vpop.f32.mrb[0].mxu0
        %v1650 = vadd.f32 %v1035, %v1649
        %v1651 = vpop.f32.mrb[0].mxu0
        %1652 = vmatprep.mubr.f32.mxu0 0.0
        %1653 = vmatmul.mubr.f32.gmra.mrb[0].mxu0 %v1018
        %v1654 = vpop.f32.mrb[0].mxu0
        %v1655 = vadd.f32 %v1035, %v1654
        %v1656 = vpop.f32.mrb[0].mxu0
        %1657 = vmatprep.mubr.f32.mxu0 0.0
        %1658 = vmatmul.mubr.f32.gmra.mrb[0].mxu0 %v1019
        %v1659 = vpop.f32.mrb[0].mxu0
        %v1660 = vadd.f32 %v1035, %v1659
        %v1661 = vpop.f32.mrb[0].mxu0
        %1662 = vmatprep.mubr.f32.mxu0 0.0
        %1663 = vmatmul.mubr.f32.gmra.mrb[0].mxu0 %v1020
        %v1664 = vpop.f32.mrb[0].mxu0
        %v1665 = vadd.f32 %v1035, %v1664
        %v1666 = vpop.f32.mrb[0].mxu0
        %1667 = vmatprep.mubr.f32.mxu0 0.0
        %1668 = vmatmul.mubr.f32.gmra.mrb[0].mxu0 %v1021
        %v1669 = vpop.f32.mrb[0].mxu0
        %v1670 = vadd.f32 %v1035, %v1669
        %v1671 = vpop.f32.mrb[0].mxu0
        %1672 = vmatprep.mubr.f32.mxu0 0.0
        %1673 = vmatmul.mubr.f32.gmra.mrb[0].mxu0 %v1022
        %v1674 = vpop.f32.mrb[0].mxu0
        %v1675 = vadd.f32 %v1035, %v1674
        %v1676 = vpop.f32.mrb[0].mxu0
        %1677 = vmatprep.mubr.f32.mxu0 0.0
        %1678 = vmatmul.mubr.f32.gmra.mrb[0].mxu0 %v1023
        %v1679 = vpop.f32.mrb[0].mxu0
        %v1680 = vadd.f32 %v1035, %v1679
        %v1681 = vpop.f32.mrb[0].mxu0
        %1682 = vmatprep.mubr.f32.mxu0 0.0
        %1683 = vmatmul.mubr.f32.gmra.mrb[0].mxu0 %v1024
        %v1684 = vpop.f32.mrb[0].mxu0
        %v1685 = vadd.f32 %v1035, %v1684
        %v1686 = vpop.f32.mrb[0].mxu0
        %1687 = vmatprep.mubr.f32.mxu0 0.0
        %1688 = vmatmul.mubr.f32.gmra.mrb[0].mxu0 %v1025
        %v1689 = vpop.f32.mrb[0].mxu0
        %v1690 = vadd.f32 %v1035, %v1689
        %v1691 = vpop.f32.mrb[0].mxu0
        %1692 = vmatprep.mubr.f32.mxu0 0.0
        %1693 = vmatmul.mubr.f32.gmra.mrb[0].mxu0 %v1026
        %v1694 = vpop.f32.mrb[0].mxu0
        %v1695 = vadd.f32 %v1035, %v1694
        %v1696 = vpop.f32.mrb[0].mxu0
        %1697 = vmatprep.mubr.f32.mxu0 0.0
        %1698 = vmatmul.mubr.f32.gmra.mrb[0].mxu0 %v1027
        %v1699 = vpop.f32.mrb[0].mxu0
        %v1700 = vadd.f32 %v1035, %v1699
        %v1701 = vpop.f32.mrb[0].mxu0
        %1702 = vmatprep.mubr.f32.mxu0 0.0
        %1703 = vmatmul.mubr.f32.gmra.mrb[0].mxu0 %v1028
        %v1704 = vpop.f32.mrb[0].mxu0
        %v1705 = vadd.f32 %v1035, %v1704
        %v1706 = vpop.f32.mrb[0].mxu0
        %1707 = vmatprep.mubr.f32.mxu0 0.0
        %1708 = vmatmul.mubr.f32.gmra.mrb[0].mxu0 %v1029
        %v1709 = vpop.f32.mrb[0].mxu0
        %v1710 = vadd.f32 %v1035, %v1709
        %v1711 = vpop.f32.mrb[0].mxu0
        %1712 = vmatprep.mubr.f32.mxu0 0.0
        %1713 = vmatmul.mubr.f32.gmra.mrb[0].mxu0 %v1030
        %v1714 = vpop.f32.mrb[0].mxu0
        %v1715 = vadd.f32 %v1035, %v1714
        %v1716 = vpop.f32.mrb[0].mxu0
        %1717 = vdwg.mxu0
        %1718 = vmatprep.subr.mxu0 0.0
        %1719 = vmatpush1.msra.mxu0 %v477
        %1720 = vmatprep.subr.mxu0 0.0
        %1721 = vmatpush1.msra.mxu0 %v478
        %1722 = vmatprep.subr.mxu0 0.0
        %1723 = vmatpush1.msra.mxu0 %v479
        %1724 = vmatprep.subr.mxu0 0.0
        %1725 = vmatpush1.msra.mxu0 %v480
        %1726 = vmatprep.subr.mxu0 0.0
        %1727 = vmatpush1.msra.mxu0 %v481
        %1728 = vmatprep.subr.mxu0 0.0
        %1729 = vmatpush1.msra.mxu0 %v482
        %1730 = vmatprep.subr.mxu0 0.0
        %1731 = vmatpush1.msra.mxu0 %v483
        %1732 = vmatprep.subr.mxu0 0.0
        %1733 = vmatpush1.msra.mxu0 %v484
        %1734 = vmatprep.subr.mxu0 0.0
        %1735 = vmatpush1.msra.mxu0 %v485
        %1736 = vmatprep.subr.mxu0 0.0
        %1737 = vmatpush1.msra.mxu0 %v486
        %1738 = vmatprep.subr.mxu0 0.0
        %1739 = vmatpush1.msra.mxu0 %v487
        %1740 = vmatprep.subr.mxu0 0.0
        %1741 = vmatpush1.msra.mxu0 %v488
        %1742 = vmatprep.subr.mxu0 0.0
        %1743 = vmatpush1.msra.mxu0 %v489
        %1744 = vmatprep.subr.mxu0 0.0
        %1745 = vmatpush1.msra.mxu0 %v490
        %1746 = vmatprep.subr.mxu0 0.0
        %1747 = vmatpush1.msra.mxu0 %v491
        %1748 = vmatprep.subr.mxu0 0.0
        %1749 = vmatpush1.msra.mxu0 %v492
        %1750 = vmatprep.subr.mxu0 0.0
        %1751 = vmatpush1.msra.mxu0 0.0
        %1752 = vmatprep.subr.mxu0 0.0
        %1753 = vmatpush1.msra.mxu0 0.0
        %1754 = vmatprep.subr.mxu0 0.0
        %1755 = vmatpush1.msra.mxu0 0.0
        %1756 = vmatprep.subr.mxu0 0.0
        %1757 = vmatpush1.msra.mxu0 0.0
        %1758 = vmatprep.subr.mxu0 0.0
        %1759 = vmatpush1.msra.mxu0 0.0
        %1760 = vmatprep.subr.mxu0 0.0
        %1761 = vmatpush1.msra.mxu0 0.0
        %1762 = vmatprep.subr.mxu0 0.0
        %1763 = vmatpush1.msra.mxu0 0.0
        %1764 = vmatprep.subr.mxu0 0.0
        %1765 = vmatpush1.msra.mxu0 0.0
        %1766 = vmatprep.subr.mxu0 0.0
        %1767 = vmatpush1.msra.mxu0 0.0
        %1768 = vmatprep.subr.mxu0 0.0
        %1769 = vmatpush1.msra.mxu0 0.0
        %1770 = vmatprep.subr.mxu0 0.0
        %1771 = vmatpush1.msra.mxu0 0.0
        %1772 = vmatprep.subr.mxu0 0.0
        %1773 = vmatpush1.msra.mxu0 0.0
        %1774 = vmatprep.subr.mxu0 0.0
        %1775 = vmatpush1.msra.mxu0 0.0
        %1776 = vmatprep.subr.mxu0 0.0
        %1777 = vmatpush1.msra.mxu0 0.0
        %1778 = vmatprep.subr.mxu0 0.0
        %1779 = vmatpush1.msra.mxu0 0.0
        %1780 = vmatprep.subr.mxu0 0.0
        %1781 = vmatpush1.msra.mxu0 0.0
        %1782 = vmatprep.mubr.f32.mxu0 0.0
        %1783 = vmatmul.mubr.f32.gmra.mrb[0].mxu0 %v742
        %v1784 = vpop.f32.mrb[0].mxu0
        %v1785 = vadd.f32 %v1266, %v1784
        %v1786 = vpop.f32.mrb[0].mxu0
        %1787 = vmatprep.mubr.f32.mxu0 0.0
        %1788 = vmatmul.mubr.f32.gmra.mrb[0].mxu0 %v743
        %v1789 = vpop.f32.mrb[0].mxu0
        %v1790 = vadd.f32 %v1266, %v1789
        %v1791 = vpop.f32.mrb[0].mxu0
        %1792 = vmatprep.mubr.f32.mxu0 0.0
        %1793 = vmatmul.mubr.f32.gmra.mrb[0].mxu0 %v744
        %v1794 = vpop.f32.mrb[0].mxu0
        %v1795 = vadd.f32 %v1266, %v1794
        %v1796 = vpop.f32.mrb[0].mxu0
        %1797 = vmatprep.mubr.f32.mxu0 0.0
        %1798 = vmatmul.mubr.f32.gmra.mrb[0].mxu0 %v745
        %v1799 = vpop.f32.mrb[0].mxu0
        %v1800 = vadd.f32 %v1266, %v1799
        %v1801 = vpop.f32.mrb[0].mxu0
        %1802 = vmatprep.mubr.f32.mxu0 0.0
        %1803 = vmatmul.mubr.f32.gmra.mrb[0].mxu0 %v746
        %v1804 = vpop.f32.mrb[0].mxu0
        %v1805 = vadd.f32 %v1266, %v1804
        %v1806 = vpop.f32.mrb[0].mxu0
        %1807 = vmatprep.mubr.f32.mxu0 0.0
        %1808 = vmatmul.mubr.f32.gmra.mrb[0].mxu0 %v747
        %v1809 = vpop.f32.mrb[0].mxu0
        %v1810 = vadd.f32 %v1266, %v1809
        %v1811 = vpop.f32.mrb[0].mxu0
        %1812 = vmatprep.mubr.f32.mxu0 0.0
        %1813 = vmatmul.mubr.f32.gmra.mrb[0].mxu0 %v748
        %v1814 = vpop.f32.mrb[0].mxu0
        %v1815 = vadd.f32 %v1266, %v1814
        %v1816 = vpop.f32.mrb[0].mxu0
        %1817 = vmatprep.mubr.f32.mxu0 0.0
        %1818 = vmatmul.mubr.f32.gmra.mrb[0].mxu0 %v749
        %v1819 = vpop.f32.mrb[0].mxu0
        %v1820 = vadd.f32 %v1266, %v1819
        %v1821 = vpop.f32.mrb[0].mxu0
        %1822 = vmatprep.mubr.f32.mxu0 0.0
        %1823 = vmatmul.mubr.f32.gmra.mrb[0].mxu0 %v750
        %v1824 = vpop.f32.mrb[0].mxu0
        %v1825 = vadd.f32 %v1266, %v1824
        %v1826 = vpop.f32.mrb[0].mxu0
        %1827 = vmatprep.mubr.f32.mxu0 0.0
        %1828 = vmatmul.mubr.f32.gmra.mrb[0].mxu0 %v751
        %v1829 = vpop.f32.mrb[0].mxu0
        %v1830 = vadd.f32 %v1266, %v1829
        %v1831 = vpop.f32.mrb[0].mxu0
        %1832 = vmatprep.mubr.f32.mxu0 0.0
        %1833 = vmatmul.mubr.f32.gmra.mrb[0].mxu0 %v752
        %v1834 = vpop.f32.mrb[0].mxu0
        %v1835 = vadd.f32 %v1266, %v1834
        %v1836 = vpop.f32.mrb[0].mxu0
        %1837 = vmatprep.mubr.f32.mxu0 0.0
        %1838 = vmatmul.mubr.f32.gmra.mrb[0].mxu0 %v753
        %v1839 = vpop.f32.mrb[0].mxu0
        %v1840 = vadd.f32 %v1266, %v1839
        %v1841 = vpop.f32.mrb[0].mxu0
        %1842 = vmatprep.mubr.f32.mxu0 0.0
        %1843 = vmatmul.mubr.f32.gmra.mrb[0].mxu0 %v754
        %v1844 = vpop.f32.mrb[0].mxu0
        %v1845 = vadd.f32 %v1266, %v1844
        %v1846 = vpop.f32.mrb[0].mxu0
        %1847 = vmatprep.mubr.f32.mxu0 0.0
        %1848 = vmatmul.mubr.f32.gmra.mrb[0].mxu0 %v755
        %v1849 = vpop.f32.mrb[0].mxu0
        %v1850 = vadd.f32 %v1266, %v1849
        %v1851 = vpop.f32.mrb[0].mxu0
        %1852 = vmatprep.mubr.f32.mxu0 0.0
        %1853 = vmatmul.mubr.f32.gmra.mrb[0].mxu0 %v756
        %v1854 = vpop.f32.mrb[0].mxu0
        %v1855 = vadd.f32 %v1266, %v1854
        %v1856 = vpop.f32.mrb[0].mxu0
        %1857 = vmatprep.mubr.f32.mxu0 0.0
        %1858 = vmatmul.mubr.f32.gmra.mrb[0].mxu0 %v757
        %v1859 = vpop.f32.mrb[0].mxu0
        %v1860 = vadd.f32 %v1266, %v1859
        %v1861 = vpop.f32.mrb[0].mxu0
        %1862 = vmatprep.mubr.f32.mxu0 0.0
        %1863 = vmatmul.mubr.f32.gmra.mrb[0].mxu0 %v758
        %v1864 = vpop.f32.mrb[0].mxu0
        %v1865 = vadd.f32 %v1266, %v1864
        %v1866 = vpop.f32.mrb[0].mxu0
        %1867 = vmatprep.mubr.f32.mxu0 0.0
        %1868 = vmatmul.mubr.f32.gmra.mrb[0].mxu0 %v759
        %v1869 = vpop.f32.mrb[0].mxu0
        %v1870 = vadd.f32 %v1266, %v1869
        %v1871 = vpop.f32.mrb[0].mxu0
        %1872 = vmatprep.mubr.f32.mxu0 0.0
        %1873 = vmatmul.mubr.f32.gmra.mrb[0].mxu0 %v760
        %v1874 = vpop.f32.mrb[0].mxu0
        %v1875 = vadd.f32 %v1266, %v1874
        %v1876 = vpop.f32.mrb[0].mxu0
        %1877 = vmatprep.mubr.f32.mxu0 0.0
        %1878 = vmatmul.mubr.f32.gmra.mrb[0].mxu0 %v761
        %v1879 = vpop.f32.mrb[0].mxu0
        %v1880 = vadd.f32 %v1266, %v1879
        %v1881 = vpop.f32.mrb[0].mxu0
        %1882 = vmatprep.mubr.f32.mxu0 0.0
        %1883 = vmatmul.mubr.f32.gmra.mrb[0].mxu0 %v762
        %v1884 = vpop.f32.mrb[0].mxu0
        %v1885 = vadd.f32 %v1266, %v1884
        %v1886 = vpop.f32.mrb[0].mxu0
        %1887 = vmatprep.mubr.f32.mxu0 0.0
        %1888 = vmatmul.mubr.f32.gmra.mrb[0].mxu0 %v763
        %v1889 = vpop.f32.mrb[0].mxu0
        %v1890 = vadd.f32 %v1266, %v1889
        %v1891 = vpop.f32.mrb[0].mxu0
        %1892 = vmatprep.mubr.f32.mxu0 0.0
        %1893 = vmatmul.mubr.f32.gmra.mrb[0].mxu0 %v764
        %v1894 = vpop.f32.mrb[0].mxu0
        %v1895 = vadd.f32 %v1266, %v1894
        %v1896 = vpop.f32.mrb[0].mxu0
        %1897 = vmatprep.mubr.f32.mxu0 0.0
        %1898 = vmatmul.mubr.f32.gmra.mrb[0].mxu0 %v765
        %v1899 = vpop.f32.mrb[0].mxu0
        %v1900 = vadd.f32 %v1266, %v1899
        %v1901 = vpop.f32.mrb[0].mxu0
        %1902 = vmatprep.mubr.f32.mxu0 0.0
        %1903 = vmatmul.mubr.f32.gmra.mrb[0].mxu0 %v766
        %v1904 = vpop.f32.mrb[0].mxu0
        %v1905 = vadd.f32 %v1266, %v1904
        %v1906 = vpop.f32.mrb[0].mxu0
        %1907 = vmatprep.mubr.f32.mxu0 0.0
        %1908 = vmatmul.mubr.f32.gmra.mrb[0].mxu0 %v767
        %v1909 = vpop.f32.mrb[0].mxu0
        %v1910 = vadd.f32 %v1266, %v1909
        %v1911 = vpop.f32.mrb[0].mxu0
        %1912 = vmatprep.mubr.f32.mxu0 0.0
        %1913 = vmatmul.mubr.f32.gmra.mrb[0].mxu0 %v768
        %v1914 = vpop.f32.mrb[0].mxu0
        %v1915 = vadd.f32 %v1266, %v1914
        %v1916 = vpop.f32.mrb[0].mxu0
        %1917 = vmatprep.mubr.f32.mxu0 0.0
        %1918 = vmatmul.mubr.f32.gmra.mrb[0].mxu0 %v769
        %v1919 = vpop.f32.mrb[0].mxu0
        %v1920 = vadd.f32 %v1266, %v1919
        %v1921 = vpop.f32.mrb[0].mxu0
        %1922 = vmatprep.mubr.f32.mxu0 0.0
        %1923 = vmatmul.mubr.f32.gmra.mrb[0].mxu0 %v770
        %v1924 = vpop.f32.mrb[0].mxu0
        %v1925 = vadd.f32 %v1266, %v1924
        %v1926 = vpop.f32.mrb[0].mxu0
        %1927 = vmatprep.mubr.f32.mxu0 0.0
        %1928 = vmatmul.mubr.f32.gmra.mrb[0].mxu0 %v771
        %v1929 = vpop.f32.mrb[0].mxu0
        %v1930 = vadd.f32 %v1266, %v1929
        %v1931 = vpop.f32.mrb[0].mxu0
        %1932 = vmatprep.mubr.f32.mxu0 0.0
        %1933 = vmatmul.mubr.f32.gmra.mrb[0].mxu0 %v772
        %v1934 = vpop.f32.mrb[0].mxu0
        %v1935 = vadd.f32 %v1266, %v1934
        %v1936 = vpop.f32.mrb[0].mxu0
        %1937 = vmatprep.mubr.f32.mxu0 0.0
        %1938 = vmatmul.mubr.f32.gmra.mrb[0].mxu0 %v773
        %v1939 = vpop.f32.mrb[0].mxu0
        %v1940 = vadd.f32 %v1266, %v1939
        %v1941 = vpop.f32.mrb[0].mxu0
        %1942 = vdwg.mxu0
        %v1944 = vlaneseq
        %v1945 = vshrl.u32 %v1944, 7
        %v1946 = vsub.s32 0, %v1945
        %v1947 = vrot.slane %v510, %v1946
        %1949 = vmatprep.subr.mxu0 0.0
        %1950 = vmatpush1.msra.mxu0 %v494
        %1951 = vmatprep.subr.mxu0 0.0
        %1952 = vmatpush1.msra.mxu0 %v495
        %1953 = vmatprep.subr.mxu0 0.0
        %1954 = vmatpush1.msra.mxu0 %v496
        %1955 = vmatprep.subr.mxu0 0.0
        %1956 = vmatpush1.msra.mxu0 %v497
        %1957 = vmatprep.subr.mxu0 0.0
        %1958 = vmatpush1.msra.mxu0 %v498
        %1959 = vmatprep.subr.mxu0 0.0
        %1960 = vmatpush1.msra.mxu0 %v499
        %1961 = vmatprep.subr.mxu0 0.0
        %1962 = vmatpush1.msra.mxu0 %v500
        %1963 = vmatprep.subr.mxu0 0.0
        %1964 = vmatpush1.msra.mxu0 %v501
        %1965 = vmatprep.subr.mxu0 0.0
        %1966 = vmatpush1.msra.mxu0 %v502
        %1967 = vmatprep.subr.mxu0 0.0
        %1968 = vmatpush1.msra.mxu0 %v503
        %1969 = vmatprep.subr.mxu0 0.0
        %1970 = vmatpush1.msra.mxu0 %v504
        %1971 = vmatprep.subr.mxu0 0.0
        %1972 = vmatpush1.msra.mxu0 %v505
        %1973 = vmatprep.subr.mxu0 0.0
        %1974 = vmatpush1.msra.mxu0 %v506
        %1975 = vmatprep.subr.mxu0 0.0
        %1976 = vmatpush1.msra.mxu0 %v507
        %1977 = vmatprep.subr.mxu0 0.0
        %1978 = vmatpush1.msra.mxu0 %v508
        %1979 = vmatprep.subr.mxu0 0.0
        %1980 = vmatpush1.msra.mxu0 %v509
        %1981 = vmatprep.subr.mxu0 0.0
        %1982 = vmatpush1.msra.mxu0 0.0
        %1983 = vmatprep.subr.mxu0 0.0
        %1984 = vmatpush1.msra.mxu0 0.0
        %1985 = vmatprep.subr.mxu0 0.0
        %1986 = vmatpush1.msra.mxu0 0.0
        %1987 = vmatprep.subr.mxu0 0.0
        %1988 = vmatpush1.msra.mxu0 0.0
        %1989 = vmatprep.subr.mxu0 0.0
        %1990 = vmatpush1.msra.mxu0 0.0
        %1991 = vmatprep.subr.mxu0 0.0
        %1992 = vmatpush1.msra.mxu0 0.0
        %1993 = vmatprep.subr.mxu0 0.0
        %1994 = vmatpush1.msra.mxu0 0.0
        %1995 = vmatprep.subr.mxu0 0.0
        %1996 = vmatpush1.msra.mxu0 0.0
        %1997 = vmatprep.subr.mxu0 0.0
        %1998 = vmatpush1.msra.mxu0 0.0
        %1999 = vmatprep.subr.mxu0 0.0
        %2000 = vmatpush1.msra.mxu0 0.0
        %2001 = vmatprep.subr.mxu0 0.0
        %2002 = vmatpush1.msra.mxu0 0.0
        %2003 = vmatprep.subr.mxu0 0.0
        %2004 = vmatpush1.msra.mxu0 0.0
        %2005 = vmatprep.subr.mxu0 0.0
        %2006 = vmatpush1.msra.mxu0 0.0
        %2007 = vmatprep.subr.mxu0 0.0
        %2008 = vmatpush1.msra.mxu0 0.0
        %2009 = vmatprep.subr.mxu0 0.0
        %2010 = vmatpush1.msra.mxu0 0.0
        %2011 = vmatprep.subr.mxu0 0.0
        %2012 = vmatpush1.msra.mxu0 0.0
        %2013 = vmatprep.mubr.f32.mxu0 0.0
        %2014 = vmatmul.mubr.f32.gmra.mrb[0].mxu0 %v1104
        %v2015 = vpop.f32.mrb[0].mxu0
        %v2016 = vadd.f32 %v1947, %v2015
        %v2017 = vpop.f32.mrb[0].mxu0
        %2018 = vmatprep.mubr.f32.mxu0 0.0
        %2019 = vmatmul.mubr.f32.gmra.mrb[0].mxu0 %v1109
        %v2020 = vpop.f32.mrb[0].mxu0
        %v2021 = vadd.f32 %v1947, %v2020
        %v2022 = vpop.f32.mrb[0].mxu0
        %2023 = vmatprep.mubr.f32.mxu0 0.0
        %2024 = vmatmul.mubr.f32.gmra.mrb[0].mxu0 %v1114
        %v2025 = vpop.f32.mrb[0].mxu0
        %v2026 = vadd.f32 %v1947, %v2025
        %v2027 = vpop.f32.mrb[0].mxu0
        %2028 = vmatprep.mubr.f32.mxu0 0.0
        %2029 = vmatmul.mubr.f32.gmra.mrb[0].mxu0 %v1119
        %v2030 = vpop.f32.mrb[0].mxu0
        %v2031 = vadd.f32 %v1947, %v2030
        %v2032 = vpop.f32.mrb[0].mxu0
        %2033 = vmatprep.mubr.f32.mxu0 0.0
        %2034 = vmatmul.mubr.f32.gmra.mrb[0].mxu0 %v1124
        %v2035 = vpop.f32.mrb[0].mxu0
        %v2036 = vadd.f32 %v1947, %v2035
        %v2037 = vpop.f32.mrb[0].mxu0
        %2038 = vmatprep.mubr.f32.mxu0 0.0
        %2039 = vmatmul.mubr.f32.gmra.mrb[0].mxu0 %v1129
        %v2040 = vpop.f32.mrb[0].mxu0
        %v2041 = vadd.f32 %v1947, %v2040
        %v2042 = vpop.f32.mrb[0].mxu0
        %2043 = vmatprep.mubr.f32.mxu0 0.0
        %2044 = vmatmul.mubr.f32.gmra.mrb[0].mxu0 %v1134
        %v2045 = vpop.f32.mrb[0].mxu0
        %v2046 = vadd.f32 %v1947, %v2045
        %v2047 = vpop.f32.mrb[0].mxu0
        %2048 = vmatprep.mubr.f32.mxu0 0.0
        %2049 = vmatmul.mubr.f32.gmra.mrb[0].mxu0 %v1139
        %v2050 = vpop.f32.mrb[0].mxu0
        %v2051 = vadd.f32 %v1947, %v2050
        %v2052 = vpop.f32.mrb[0].mxu0
        %2053 = vmatprep.mubr.f32.mxu0 0.0
        %2054 = vmatmul.mubr.f32.gmra.mrb[0].mxu0 %v1144
        %v2055 = vpop.f32.mrb[0].mxu0
        %v2056 = vadd.f32 %v1947, %v2055
        %v2057 = vpop.f32.mrb[0].mxu0
        %2058 = vmatprep.mubr.f32.mxu0 0.0
        %2059 = vmatmul.mubr.f32.gmra.mrb[0].mxu0 %v1149
        %v2060 = vpop.f32.mrb[0].mxu0
        %v2061 = vadd.f32 %v1947, %v2060
        %v2062 = vpop.f32.mrb[0].mxu0
        %2063 = vmatprep.mubr.f32.mxu0 0.0
        %2064 = vmatmul.mubr.f32.gmra.mrb[0].mxu0 %v1154
        %v2065 = vpop.f32.mrb[0].mxu0
        %v2066 = vadd.f32 %v1947, %v2065
        %v2067 = vpop.f32.mrb[0].mxu0
        %2068 = vmatprep.mubr.f32.mxu0 0.0
        %2069 = vmatmul.mubr.f32.gmra.mrb[0].mxu0 %v1159
        %v2070 = vpop.f32.mrb[0].mxu0
        %v2071 = vadd.f32 %v1947, %v2070
        %v2072 = vpop.f32.mrb[0].mxu0
        %2073 = vmatprep.mubr.f32.mxu0 0.0
        %2074 = vmatmul.mubr.f32.gmra.mrb[0].mxu0 %v1164
        %v2075 = vpop.f32.mrb[0].mxu0
        %v2076 = vadd.f32 %v1947, %v2075
        %v2077 = vpop.f32.mrb[0].mxu0
        %2078 = vmatprep.mubr.f32.mxu0 0.0
        %2079 = vmatmul.mubr.f32.gmra.mrb[0].mxu0 %v1169
        %v2080 = vpop.f32.mrb[0].mxu0
        %v2081 = vadd.f32 %v1947, %v2080
        %v2082 = vpop.f32.mrb[0].mxu0
        %2083 = vmatprep.mubr.f32.mxu0 0.0
        %2084 = vmatmul.mubr.f32.gmra.mrb[0].mxu0 %v1174
        %v2085 = vpop.f32.mrb[0].mxu0
        %v2086 = vadd.f32 %v1947, %v2085
        %v2087 = vpop.f32.mrb[0].mxu0
        %2088 = vmatprep.mubr.f32.mxu0 0.0
        %2089 = vmatmul.mubr.f32.gmra.mrb[0].mxu0 %v1179
        %v2090 = vpop.f32.mrb[0].mxu0
        %v2091 = vadd.f32 %v1947, %v2090
        %v2092 = vpop.f32.mrb[0].mxu0
        %2093 = vmatprep.mubr.f32.mxu0 0.0
        %2094 = vmatmul.mubr.f32.gmra.mrb[0].mxu0 %v1184
        %v2095 = vpop.f32.mrb[0].mxu0
        %v2096 = vadd.f32 %v1947, %v2095
        %v2097 = vpop.f32.mrb[0].mxu0
        %2098 = vmatprep.mubr.f32.mxu0 0.0
        %2099 = vmatmul.mubr.f32.gmra.mrb[0].mxu0 %v1189
        %v2100 = vpop.f32.mrb[0].mxu0
        %v2101 = vadd.f32 %v1947, %v2100
        %v2102 = vpop.f32.mrb[0].mxu0
        %2103 = vmatprep.mubr.f32.mxu0 0.0
        %2104 = vmatmul.mubr.f32.gmra.mrb[0].mxu0 %v1194
        %v2105 = vpop.f32.mrb[0].mxu0
        %v2106 = vadd.f32 %v1947, %v2105
        %v2107 = vpop.f32.mrb[0].mxu0
        %2108 = vmatprep.mubr.f32.mxu0 0.0
        %2109 = vmatmul.mubr.f32.gmra.mrb[0].mxu0 %v1199
        %v2110 = vpop.f32.mrb[0].mxu0
        %v2111 = vadd.f32 %v1947, %v2110
        %v2112 = vpop.f32.mrb[0].mxu0
        %2113 = vmatprep.mubr.f32.mxu0 0.0
        %2114 = vmatmul.mubr.f32.gmra.mrb[0].mxu0 %v1204
        %v2115 = vpop.f32.mrb[0].mxu0
        %v2116 = vadd.f32 %v1947, %v2115
        %v2117 = vpop.f32.mrb[0].mxu0
        %2118 = vmatprep.mubr.f32.mxu0 0.0
        %2119 = vmatmul.mubr.f32.gmra.mrb[0].mxu0 %v1209
        %v2120 = vpop.f32.mrb[0].mxu0
        %v2121 = vadd.f32 %v1947, %v2120
        %v2122 = vpop.f32.mrb[0].mxu0
        %2123 = vmatprep.mubr.f32.mxu0 0.0
        %2124 = vmatmul.mubr.f32.gmra.mrb[0].mxu0 %v1214
        %v2125 = vpop.f32.mrb[0].mxu0
        %v2126 = vadd.f32 %v1947, %v2125
        %v2127 = vpop.f32.mrb[0].mxu0
        %2128 = vmatprep.mubr.f32.mxu0 0.0
        %2129 = vmatmul.mubr.f32.gmra.mrb[0].mxu0 %v1219
        %v2130 = vpop.f32.mrb[0].mxu0
        %v2131 = vadd.f32 %v1947, %v2130
        %v2132 = vpop.f32.mrb[0].mxu0
        %2133 = vmatprep.mubr.f32.mxu0 0.0
        %2134 = vmatmul.mubr.f32.gmra.mrb[0].mxu0 %v1224
        %v2135 = vpop.f32.mrb[0].mxu0
        %v2136 = vadd.f32 %v1947, %v2135
        %v2137 = vpop.f32.mrb[0].mxu0
        %2138 = vmatprep.mubr.f32.mxu0 0.0
        %2139 = vmatmul.mubr.f32.gmra.mrb[0].mxu0 %v1229
        %v2140 = vpop.f32.mrb[0].mxu0
        %v2141 = vadd.f32 %v1947, %v2140
        %v2142 = vpop.f32.mrb[0].mxu0
        %2143 = vmatprep.mubr.f32.mxu0 0.0
        %2144 = vmatmul.mubr.f32.gmra.mrb[0].mxu0 %v1234
        %v2145 = vpop.f32.mrb[0].mxu0
        %v2146 = vadd.f32 %v1947, %v2145
        %v2147 = vpop.f32.mrb[0].mxu0
        %2148 = vmatprep.mubr.f32.mxu0 0.0
        %2149 = vmatmul.mubr.f32.gmra.mrb[0].mxu0 %v1239
        %v2150 = vpop.f32.mrb[0].mxu0
        %v2151 = vadd.f32 %v1947, %v2150
        %v2152 = vpop.f32.mrb[0].mxu0
        %2153 = vmatprep.mubr.f32.mxu0 0.0
        %2154 = vmatmul.mubr.f32.gmra.mrb[0].mxu0 %v1244
        %v2155 = vpop.f32.mrb[0].mxu0
        %v2156 = vadd.f32 %v1947, %v2155
        %v2157 = vpop.f32.mrb[0].mxu0
        %2158 = vmatprep.mubr.f32.mxu0 0.0
        %2159 = vmatmul.mubr.f32.gmra.mrb[0].mxu0 %v1249
        %v2160 = vpop.f32.mrb[0].mxu0
        %v2161 = vadd.f32 %v1947, %v2160
        %v2162 = vpop.f32.mrb[0].mxu0
        %2163 = vmatprep.mubr.f32.mxu0 0.0
        %2164 = vmatmul.mubr.f32.gmra.mrb[0].mxu0 %v1254
        %v2165 = vpop.f32.mrb[0].mxu0
        %v2166 = vadd.f32 %v1947, %v2165
        %v2167 = vpop.f32.mrb[0].mxu0
        %2168 = vmatprep.mubr.f32.mxu0 0.0
        %2169 = vmatmul.mubr.f32.gmra.mrb[0].mxu0 %v1259
        %v2170 = vpop.f32.mrb[0].mxu0
        %v2171 = vadd.f32 %v1947, %v2170
        %v2172 = vpop.f32.mrb[0].mxu0
        %2173 = vdwg.mxu0
        %2174 = vmatprep.subr.mxu0 0.0
        %2175 = vmatpush1.msra.mxu0 %v494
        %2176 = vmatprep.subr.mxu0 0.0
        %2177 = vmatpush1.msra.mxu0 %v495
        %2178 = vmatprep.subr.mxu0 0.0
        %2179 = vmatpush1.msra.mxu0 %v496
        %2180 = vmatprep.subr.mxu0 0.0
        %2181 = vmatpush1.msra.mxu0 %v497
        %2182 = vmatprep.subr.mxu0 0.0
        %2183 = vmatpush1.msra.mxu0 %v498
        %2184 = vmatprep.subr.mxu0 0.0
        %2185 = vmatpush1.msra.mxu0 %v499
        %2186 = vmatprep.subr.mxu0 0.0
        %2187 = vmatpush1.msra.mxu0 %v500
        %2188 = vmatprep.subr.mxu0 0.0
        %2189 = vmatpush1.msra.mxu0 %v501
        %2190 = vmatprep.subr.mxu0 0.0
        %2191 = vmatpush1.msra.mxu0 %v502
        %2192 = vmatprep.subr.mxu0 0.0
        %2193 = vmatpush1.msra.mxu0 %v503
        %2194 = vmatprep.subr.mxu0 0.0
        %2195 = vmatpush1.msra.mxu0 %v504
        %2196 = vmatprep.subr.mxu0 0.0
        %2197 = vmatpush1.msra.mxu0 %v505
        %2198 = vmatprep.subr.mxu0 0.0
        %2199 = vmatpush1.msra.mxu0 %v506
        %2200 = vmatprep.subr.mxu0 0.0
        %2201 = vmatpush1.msra.mxu0 %v507
        %2202 = vmatprep.subr.mxu0 0.0
        %2203 = vmatpush1.msra.mxu0 %v508
        %2204 = vmatprep.subr.mxu0 0.0
        %2205 = vmatpush1.msra.mxu0 %v509
        %2206 = vmatprep.subr.mxu0 0.0
        %2207 = vmatpush1.msra.mxu0 0.0
        %2208 = vmatprep.subr.mxu0 0.0
        %2209 = vmatpush1.msra.mxu0 0.0
        %2210 = vmatprep.subr.mxu0 0.0
        %2211 = vmatpush1.msra.mxu0 0.0
        %2212 = vmatprep.subr.mxu0 0.0
        %2213 = vmatpush1.msra.mxu0 0.0
        %2214 = vmatprep.subr.mxu0 0.0
        %2215 = vmatpush1.msra.mxu0 0.0
        %2216 = vmatprep.subr.mxu0 0.0
        %2217 = vmatpush1.msra.mxu0 0.0
        %2218 = vmatprep.subr.mxu0 0.0
        %2219 = vmatpush1.msra.mxu0 0.0
        %2220 = vmatprep.subr.mxu0 0.0
        %2221 = vmatpush1.msra.mxu0 0.0
        %2222 = vmatprep.subr.mxu0 0.0
        %2223 = vmatpush1.msra.mxu0 0.0
        %2224 = vmatprep.subr.mxu0 0.0
        %2225 = vmatpush1.msra.mxu0 0.0
        %2226 = vmatprep.subr.mxu0 0.0
        %2227 = vmatpush1.msra.mxu0 0.0
        %2228 = vmatprep.subr.mxu0 0.0
        %2229 = vmatpush1.msra.mxu0 0.0
        %2230 = vmatprep.subr.mxu0 0.0
        %2231 = vmatpush1.msra.mxu0 0.0
        %2232 = vmatprep.subr.mxu0 0.0
        %2233 = vmatpush1.msra.mxu0 0.0
        %2234 = vmatprep.subr.mxu0 0.0
        %2235 = vmatpush1.msra.mxu0 0.0
        %2236 = vmatprep.subr.mxu0 0.0
        %2237 = vmatpush1.msra.mxu0 0.0
        %2238 = vmatprep.mubr.f32.mxu0 0.0
        %2239 = vmatmul.mubr.f32.gmra.mrb[0].mxu0 %v1335
        %v2240 = vpop.f32.mrb[0].mxu0
        %v2241 = vadd.f32 %v1947, %v2240
        %v2242 = vpop.f32.mrb[0].mxu0
        %2243 = vmatprep.mubr.f32.mxu0 0.0
        %2244 = vmatmul.mubr.f32.gmra.mrb[0].mxu0 %v1340
        %v2245 = vpop.f32.mrb[0].mxu0
        %v2246 = vadd.f32 %v1947, %v2245
        %v2247 = vpop.f32.mrb[0].mxu0
        %2248 = vmatprep.mubr.f32.mxu0 0.0
        %2249 = vmatmul.mubr.f32.gmra.mrb[0].mxu0 %v1345
        %v2250 = vpop.f32.mrb[0].mxu0
        %v2251 = vadd.f32 %v1947, %v2250
        %v2252 = vpop.f32.mrb[0].mxu0
        %2253 = vmatprep.mubr.f32.mxu0 0.0
        %2254 = vmatmul.mubr.f32.gmra.mrb[0].mxu0 %v1350
        %v2255 = vpop.f32.mrb[0].mxu0
        %v2256 = vadd.f32 %v1947, %v2255
        %v2257 = vpop.f32.mrb[0].mxu0
        %2258 = vmatprep.mubr.f32.mxu0 0.0
        %2259 = vmatmul.mubr.f32.gmra.mrb[0].mxu0 %v1355
        %v2260 = vpop.f32.mrb[0].mxu0
        %v2261 = vadd.f32 %v1947, %v2260
        %v2262 = vpop.f32.mrb[0].mxu0
        %2263 = vmatprep.mubr.f32.mxu0 0.0
        %2264 = vmatmul.mubr.f32.gmra.mrb[0].mxu0 %v1360
        %v2265 = vpop.f32.mrb[0].mxu0
        %v2266 = vadd.f32 %v1947, %v2265
        %v2267 = vpop.f32.mrb[0].mxu0
        %2268 = vmatprep.mubr.f32.mxu0 0.0
        %2269 = vmatmul.mubr.f32.gmra.mrb[0].mxu0 %v1365
        %v2270 = vpop.f32.mrb[0].mxu0
        %v2271 = vadd.f32 %v1947, %v2270
        %v2272 = vpop.f32.mrb[0].mxu0
        %2273 = vmatprep.mubr.f32.mxu0 0.0
        %2274 = vmatmul.mubr.f32.gmra.mrb[0].mxu0 %v1370
        %v2275 = vpop.f32.mrb[0].mxu0
        %v2276 = vadd.f32 %v1947, %v2275
        %v2277 = vpop.f32.mrb[0].mxu0
        %2278 = vmatprep.mubr.f32.mxu0 0.0
        %2279 = vmatmul.mubr.f32.gmra.mrb[0].mxu0 %v1375
        %v2280 = vpop.f32.mrb[0].mxu0
        %v2281 = vadd.f32 %v1947, %v2280
        %v2282 = vpop.f32.mrb[0].mxu0
        %2283 = vmatprep.mubr.f32.mxu0 0.0
        %2284 = vmatmul.mubr.f32.gmra.mrb[0].mxu0 %v1380
        %v2285 = vpop.f32.mrb[0].mxu0
        %v2286 = vadd.f32 %v1947, %v2285
        %v2287 = vpop.f32.mrb[0].mxu0
        %2288 = vmatprep.mubr.f32.mxu0 0.0
        %2289 = vmatmul.mubr.f32.gmra.mrb[0].mxu0 %v1385
        %v2290 = vpop.f32.mrb[0].mxu0
        %v2291 = vadd.f32 %v1947, %v2290
        %v2292 = vpop.f32.mrb[0].mxu0
        %2293 = vmatprep.mubr.f32.mxu0 0.0
        %2294 = vmatmul.mubr.f32.gmra.mrb[0].mxu0 %v1390
        %v2295 = vpop.f32.mrb[0].mxu0
        %v2296 = vadd.f32 %v1947, %v2295
        %v2297 = vpop.f32.mrb[0].mxu0
        %2298 = vmatprep.mubr.f32.mxu0 0.0
        %2299 = vmatmul.mubr.f32.gmra.mrb[0].mxu0 %v1395
        %v2300 = vpop.f32.mrb[0].mxu0
        %v2301 = vadd.f32 %v1947, %v2300
        %v2302 = vpop.f32.mrb[0].mxu0
        %2303 = vmatprep.mubr.f32.mxu0 0.0
        %2304 = vmatmul.mubr.f32.gmra.mrb[0].mxu0 %v1400
        %v2305 = vpop.f32.mrb[0].mxu0
        %v2306 = vadd.f32 %v1947, %v2305
        %v2307 = vpop.f32.mrb[0].mxu0
        %2308 = vmatprep.mubr.f32.mxu0 0.0
        %2309 = vmatmul.mubr.f32.gmra.mrb[0].mxu0 %v1405
        %v2310 = vpop.f32.mrb[0].mxu0
        %v2311 = vadd.f32 %v1947, %v2310
        %v2312 = vpop.f32.mrb[0].mxu0
        %2313 = vmatprep.mubr.f32.mxu0 0.0
        %2314 = vmatmul.mubr.f32.gmra.mrb[0].mxu0 %v1410
        %v2315 = vpop.f32.mrb[0].mxu0
        %v2316 = vadd.f32 %v1947, %v2315
        %v2317 = vpop.f32.mrb[0].mxu0
        %2318 = vmatprep.mubr.f32.mxu0 0.0
        %2319 = vmatmul.mubr.f32.gmra.mrb[0].mxu0 %v1415
        %v2320 = vpop.f32.mrb[0].mxu0
        %v2321 = vadd.f32 %v1947, %v2320
        %v2322 = vpop.f32.mrb[0].mxu0
        %2323 = vmatprep.mubr.f32.mxu0 0.0
        %2324 = vmatmul.mubr.f32.gmra.mrb[0].mxu0 %v1420
        %v2325 = vpop.f32.mrb[0].mxu0
        %v2326 = vadd.f32 %v1947, %v2325
        %v2327 = vpop.f32.mrb[0].mxu0
        %2328 = vmatprep.mubr.f32.mxu0 0.0
        %2329 = vmatmul.mubr.f32.gmra.mrb[0].mxu0 %v1425
        %v2330 = vpop.f32.mrb[0].mxu0
        %v2331 = vadd.f32 %v1947, %v2330
        %v2332 = vpop.f32.mrb[0].mxu0
        %2333 = vmatprep.mubr.f32.mxu0 0.0
        %2334 = vmatmul.mubr.f32.gmra.mrb[0].mxu0 %v1430
        %v2335 = vpop.f32.mrb[0].mxu0
        %v2336 = vadd.f32 %v1947, %v2335
        %v2337 = vpop.f32.mrb[0].mxu0
        %2338 = vmatprep.mubr.f32.mxu0 0.0
        %2339 = vmatmul.mubr.f32.gmra.mrb[0].mxu0 %v1435
        %v2340 = vpop.f32.mrb[0].mxu0
        %v2341 = vadd.f32 %v1947, %v2340
        %v2342 = vpop.f32.mrb[0].mxu0
        %2343 = vmatprep.mubr.f32.mxu0 0.0
        %2344 = vmatmul.mubr.f32.gmra.mrb[0].mxu0 %v1440
        %v2345 = vpop.f32.mrb[0].mxu0
        %v2346 = vadd.f32 %v1947, %v2345
        %v2347 = vpop.f32.mrb[0].mxu0
        %2348 = vmatprep.mubr.f32.mxu0 0.0
        %2349 = vmatmul.mubr.f32.gmra.mrb[0].mxu0 %v1445
        %v2350 = vpop.f32.mrb[0].mxu0
        %v2351 = vadd.f32 %v1947, %v2350
        %v2352 = vpop.f32.mrb[0].mxu0
        %2353 = vmatprep.mubr.f32.mxu0 0.0
        %2354 = vmatmul.mubr.f32.gmra.mrb[0].mxu0 %v1450
        %v2355 = vpop.f32.mrb[0].mxu0
        %v2356 = vadd.f32 %v1947, %v2355
        %v2357 = vpop.f32.mrb[0].mxu0
        %2358 = vmatprep.mubr.f32.mxu0 0.0
        %2359 = vmatmul.mubr.f32.gmra.mrb[0].mxu0 %v1455
        %v2360 = vpop.f32.mrb[0].mxu0
        %v2361 = vadd.f32 %v1947, %v2360
        %v2362 = vpop.f32.mrb[0].mxu0
        %2363 = vmatprep.mubr.f32.mxu0 0.0
        %2364 = vmatmul.mubr.f32.gmra.mrb[0].mxu0 %v1460
        %v2365 = vpop.f32.mrb[0].mxu0
        %v2366 = vadd.f32 %v1947, %v2365
        %v2367 = vpop.f32.mrb[0].mxu0
        %2368 = vmatprep.mubr.f32.mxu0 0.0
        %2369 = vmatmul.mubr.f32.gmra.mrb[0].mxu0 %v1465
        %v2370 = vpop.f32.mrb[0].mxu0
        %v2371 = vadd.f32 %v1947, %v2370
        %v2372 = vpop.f32.mrb[0].mxu0
        %2373 = vmatprep.mubr.f32.mxu0 0.0
        %2374 = vmatmul.mubr.f32.gmra.mrb[0].mxu0 %v1470
        %v2375 = vpop.f32.mrb[0].mxu0
        %v2376 = vadd.f32 %v1947, %v2375
        %v2377 = vpop.f32.mrb[0].mxu0
        %2378 = vmatprep.mubr.f32.mxu0 0.0
        %2379 = vmatmul.mubr.f32.gmra.mrb[0].mxu0 %v1475
        %v2380 = vpop.f32.mrb[0].mxu0
        %v2381 = vadd.f32 %v1947, %v2380
        %v2382 = vpop.f32.mrb[0].mxu0
        %2383 = vmatprep.mubr.f32.mxu0 0.0
        %2384 = vmatmul.mubr.f32.gmra.mrb[0].mxu0 %v1480
        %v2385 = vpop.f32.mrb[0].mxu0
        %v2386 = vadd.f32 %v1947, %v2385
        %v2387 = vpop.f32.mrb[0].mxu0
        %2388 = vmatprep.mubr.f32.mxu0 0.0
        %2389 = vmatmul.mubr.f32.gmra.mrb[0].mxu0 %v1485
        %v2390 = vpop.f32.mrb[0].mxu0
        %v2391 = vadd.f32 %v1947, %v2390
        %v2392 = vpop.f32.mrb[0].mxu0
        %2393 = vmatprep.mubr.f32.mxu0 0.0
        %2394 = vmatmul.mubr.f32.gmra.mrb[0].mxu0 %v1490
        %v2395 = vpop.f32.mrb[0].mxu0
        %v2396 = vadd.f32 %v1947, %v2395
        %v2397 = vpop.f32.mrb[0].mxu0
        %2398 = vdwg.mxu0
        %2399 = vmatprep.subr.mxu0 0.0
        %2400 = vmatpush1.msra.mxu0 %v443
        %2401 = vmatprep.subr.mxu0 0.0
        %2402 = vmatpush1.msra.mxu0 %v444
        %2403 = vmatprep.subr.mxu0 0.0
        %2404 = vmatpush1.msra.mxu0 %v445
        %2405 = vmatprep.subr.mxu0 0.0
        %2406 = vmatpush1.msra.mxu0 %v446
        %2407 = vmatprep.subr.mxu0 0.0
        %2408 = vmatpush1.msra.mxu0 %v447
        %2409 = vmatprep.subr.mxu0 0.0
        %2410 = vmatpush1.msra.mxu0 %v448
        %2411 = vmatprep.subr.mxu0 0.0
        %2412 = vmatpush1.msra.mxu0 %v449
        %2413 = vmatprep.subr.mxu0 0.0
        %2414 = vmatpush1.msra.mxu0 %v450
        %2415 = vmatprep.subr.mxu0 0.0
        %2416 = vmatpush1.msra.mxu0 %v451
        %2417 = vmatprep.subr.mxu0 0.0
        %2418 = vmatpush1.msra.mxu0 %v452
        %2419 = vmatprep.subr.mxu0 0.0
        %2420 = vmatpush1.msra.mxu0 %v453
        %2421 = vmatprep.subr.mxu0 0.0
        %2422 = vmatpush1.msra.mxu0 %v454
        %2423 = vmatprep.subr.mxu0 0.0
        %2424 = vmatpush1.msra.mxu0 %v455
        %2425 = vmatprep.subr.mxu0 0.0
        %2426 = vmatpush1.msra.mxu0 %v456
        %2427 = vmatprep.subr.mxu0 0.0
        %2428 = vmatpush1.msra.mxu0 %v457
        %2429 = vmatprep.subr.mxu0 0.0
        %2430 = vmatpush1.msra.mxu0 %v458
        %2431 = vmatprep.subr.mxu0 0.0
        %2432 = vmatpush1.msra.mxu0 0.0
        %2433 = vmatprep.subr.mxu0 0.0
        %2434 = vmatpush1.msra.mxu0 0.0
        %2435 = vmatprep.subr.mxu0 0.0
        %2436 = vmatpush1.msra.mxu0 0.0
        %2437 = vmatprep.subr.mxu0 0.0
        %2438 = vmatpush1.msra.mxu0 0.0
        %2439 = vmatprep.subr.mxu0 0.0
        %2440 = vmatpush1.msra.mxu0 0.0
        %2441 = vmatprep.subr.mxu0 0.0
        %2442 = vmatpush1.msra.mxu0 0.0
        %2443 = vmatprep.subr.mxu0 0.0
        %2444 = vmatpush1.msra.mxu0 0.0
        %2445 = vmatprep.subr.mxu0 0.0
        %2446 = vmatpush1.msra.mxu0 0.0
        %2447 = vmatprep.subr.mxu0 0.0
        %2448 = vmatpush1.msra.mxu0 0.0
        %2449 = vmatprep.subr.mxu0 0.0
        %2450 = vmatpush1.msra.mxu0 0.0
        %2451 = vmatprep.subr.mxu0 0.0
        %2452 = vmatpush1.msra.mxu0 0.0
        %2453 = vmatprep.subr.mxu0 0.0
        %2454 = vmatpush1.msra.mxu0 0.0
        %2455 = vmatprep.subr.mxu0 0.0
        %2456 = vmatpush1.msra.mxu0 0.0
        %2457 = vmatprep.subr.mxu0 0.0
        %2458 = vmatpush1.msra.mxu0 0.0
        %2459 = vmatprep.subr.mxu0 0.0
        %2460 = vmatpush1.msra.mxu0 0.0
        %2461 = vmatprep.subr.mxu0 0.0
        %2462 = vmatpush1.msra.mxu0 0.0
        %2463 = vmatprep.mubr.f32.mxu0 0.0
        %2464 = vmatmul.mubr.f32.gmra.mrb[0].mxu0 %v2016
        %v2465 = vpop.f32.mrb[0].mxu0
        %v2466 = vadd.f32 %v515, %v2465
        %v2467 = vpop.f32.mrb[0].mxu0
        %2468 = vmatprep.mubr.f32.mxu0 0.0
        %2469 = vmatmul.mubr.f32.gmra.mrb[0].mxu0 %v2021
        %v2470 = vpop.f32.mrb[0].mxu0
        %v2471 = vadd.f32 %v515, %v2470
        %v2472 = vpop.f32.mrb[0].mxu0
        %2473 = vmatprep.mubr.f32.mxu0 0.0
        %2474 = vmatmul.mubr.f32.gmra.mrb[0].mxu0 %v2026
        %v2475 = vpop.f32.mrb[0].mxu0
        %v2476 = vadd.f32 %v515, %v2475
        %v2477 = vpop.f32.mrb[0].mxu0
        %2478 = vmatprep.mubr.f32.mxu0 0.0
        %2479 = vmatmul.mubr.f32.gmra.mrb[0].mxu0 %v2031
        %v2480 = vpop.f32.mrb[0].mxu0
        %v2481 = vadd.f32 %v515, %v2480
        %v2482 = vpop.f32.mrb[0].mxu0
        %2483 = vmatprep.mubr.f32.mxu0 0.0
        %2484 = vmatmul.mubr.f32.gmra.mrb[0].mxu0 %v2036
        %v2485 = vpop.f32.mrb[0].mxu0
        %v2486 = vadd.f32 %v515, %v2485
        %v2487 = vpop.f32.mrb[0].mxu0
        %2488 = vmatprep.mubr.f32.mxu0 0.0
        %2489 = vmatmul.mubr.f32.gmra.mrb[0].mxu0 %v2041
        %v2490 = vpop.f32.mrb[0].mxu0
        %v2491 = vadd.f32 %v515, %v2490
        %v2492 = vpop.f32.mrb[0].mxu0
        %2493 = vmatprep.mubr.f32.mxu0 0.0
        %2494 = vmatmul.mubr.f32.gmra.mrb[0].mxu0 %v2046
        %v2495 = vpop.f32.mrb[0].mxu0
        %v2496 = vadd.f32 %v515, %v2495
        %v2497 = vpop.f32.mrb[0].mxu0
        %2498 = vmatprep.mubr.f32.mxu0 0.0
        %2499 = vmatmul.mubr.f32.gmra.mrb[0].mxu0 %v2051
        %v2500 = vpop.f32.mrb[0].mxu0
        %v2501 = vadd.f32 %v515, %v2500
        %v2502 = vpop.f32.mrb[0].mxu0
        %2503 = vmatprep.mubr.f32.mxu0 0.0
        %2504 = vmatmul.mubr.f32.gmra.mrb[0].mxu0 %v2056
        %v2505 = vpop.f32.mrb[0].mxu0
        %v2506 = vadd.f32 %v515, %v2505
        %v2507 = vpop.f32.mrb[0].mxu0
        %2508 = vmatprep.mubr.f32.mxu0 0.0
        %2509 = vmatmul.mubr.f32.gmra.mrb[0].mxu0 %v2061
        %v2510 = vpop.f32.mrb[0].mxu0
        %v2511 = vadd.f32 %v515, %v2510
        %v2512 = vpop.f32.mrb[0].mxu0
        %2513 = vmatprep.mubr.f32.mxu0 0.0
        %2514 = vmatmul.mubr.f32.gmra.mrb[0].mxu0 %v2066
        %v2515 = vpop.f32.mrb[0].mxu0
        %v2516 = vadd.f32 %v515, %v2515
        %v2517 = vpop.f32.mrb[0].mxu0
        %2518 = vmatprep.mubr.f32.mxu0 0.0
        %2519 = vmatmul.mubr.f32.gmra.mrb[0].mxu0 %v2071
        %v2520 = vpop.f32.mrb[0].mxu0
        %v2521 = vadd.f32 %v515, %v2520
        %v2522 = vpop.f32.mrb[0].mxu0
        %2523 = vmatprep.mubr.f32.mxu0 0.0
        %2524 = vmatmul.mubr.f32.gmra.mrb[0].mxu0 %v2076
        %v2525 = vpop.f32.mrb[0].mxu0
        %v2526 = vadd.f32 %v515, %v2525
        %v2527 = vpop.f32.mrb[0].mxu0
        %2528 = vmatprep.mubr.f32.mxu0 0.0
        %2529 = vmatmul.mubr.f32.gmra.mrb[0].mxu0 %v2081
        %v2530 = vpop.f32.mrb[0].mxu0
        %v2531 = vadd.f32 %v515, %v2530
        %v2532 = vpop.f32.mrb[0].mxu0
        %2533 = vmatprep.mubr.f32.mxu0 0.0
        %2534 = vmatmul.mubr.f32.gmra.mrb[0].mxu0 %v2086
        %v2535 = vpop.f32.mrb[0].mxu0
        %v2536 = vadd.f32 %v515, %v2535
        %v2537 = vpop.f32.mrb[0].mxu0
        %2538 = vmatprep.mubr.f32.mxu0 0.0
        %2539 = vmatmul.mubr.f32.gmra.mrb[0].mxu0 %v2091
        %v2540 = vpop.f32.mrb[0].mxu0
        %v2541 = vadd.f32 %v515, %v2540
        %v2542 = vpop.f32.mrb[0].mxu0
        %2543 = vmatprep.mubr.f32.mxu0 0.0
        %2544 = vmatmul.mubr.f32.gmra.mrb[0].mxu0 %v2096
        %v2545 = vpop.f32.mrb[0].mxu0
        %v2546 = vadd.f32 %v515, %v2545
        %v2547 = vpop.f32.mrb[0].mxu0
        %2548 = vmatprep.mubr.f32.mxu0 0.0
        %2549 = vmatmul.mubr.f32.gmra.mrb[0].mxu0 %v2101
        %v2550 = vpop.f32.mrb[0].mxu0
        %v2551 = vadd.f32 %v515, %v2550
        %v2552 = vpop.f32.mrb[0].mxu0
        %2553 = vmatprep.mubr.f32.mxu0 0.0
        %2554 = vmatmul.mubr.f32.gmra.mrb[0].mxu0 %v2106
        %v2555 = vpop.f32.mrb[0].mxu0
        %v2556 = vadd.f32 %v515, %v2555
        %v2557 = vpop.f32.mrb[0].mxu0
        %2558 = vmatprep.mubr.f32.mxu0 0.0
        %2559 = vmatmul.mubr.f32.gmra.mrb[0].mxu0 %v2111
        %v2560 = vpop.f32.mrb[0].mxu0
        %v2561 = vadd.f32 %v515, %v2560
        %v2562 = vpop.f32.mrb[0].mxu0
        %2563 = vmatprep.mubr.f32.mxu0 0.0
        %2564 = vmatmul.mubr.f32.gmra.mrb[0].mxu0 %v2116
        %v2565 = vpop.f32.mrb[0].mxu0
        %v2566 = vadd.f32 %v515, %v2565
        %v2567 = vpop.f32.mrb[0].mxu0
        %2568 = vmatprep.mubr.f32.mxu0 0.0
        %2569 = vmatmul.mubr.f32.gmra.mrb[0].mxu0 %v2121
        %v2570 = vpop.f32.mrb[0].mxu0
        %v2571 = vadd.f32 %v515, %v2570
        %v2572 = vpop.f32.mrb[0].mxu0
        %2573 = vmatprep.mubr.f32.mxu0 0.0
        %2574 = vmatmul.mubr.f32.gmra.mrb[0].mxu0 %v2126
        %v2575 = vpop.f32.mrb[0].mxu0
        %v2576 = vadd.f32 %v515, %v2575
        %v2577 = vpop.f32.mrb[0].mxu0
        %2578 = vmatprep.mubr.f32.mxu0 0.0
        %2579 = vmatmul.mubr.f32.gmra.mrb[0].mxu0 %v2131
        %v2580 = vpop.f32.mrb[0].mxu0
        %v2581 = vadd.f32 %v515, %v2580
        %v2582 = vpop.f32.mrb[0].mxu0
        %2583 = vmatprep.mubr.f32.mxu0 0.0
        %2584 = vmatmul.mubr.f32.gmra.mrb[0].mxu0 %v2136
        %v2585 = vpop.f32.mrb[0].mxu0
        %v2586 = vadd.f32 %v515, %v2585
        %v2587 = vpop.f32.mrb[0].mxu0
        %2588 = vmatprep.mubr.f32.mxu0 0.0
        %2589 = vmatmul.mubr.f32.gmra.mrb[0].mxu0 %v2141
        %v2590 = vpop.f32.mrb[0].mxu0
        %v2591 = vadd.f32 %v515, %v2590
        %v2592 = vpop.f32.mrb[0].mxu0
        %2593 = vmatprep.mubr.f32.mxu0 0.0
        %2594 = vmatmul.mubr.f32.gmra.mrb[0].mxu0 %v2146
        %v2595 = vpop.f32.mrb[0].mxu0
        %v2596 = vadd.f32 %v515, %v2595
        %v2597 = vpop.f32.mrb[0].mxu0
        %2598 = vmatprep.mubr.f32.mxu0 0.0
        %2599 = vmatmul.mubr.f32.gmra.mrb[0].mxu0 %v2151
        %v2600 = vpop.f32.mrb[0].mxu0
        %v2601 = vadd.f32 %v515, %v2600
        %v2602 = vpop.f32.mrb[0].mxu0
        %2603 = vmatprep.mubr.f32.mxu0 0.0
        %2604 = vmatmul.mubr.f32.gmra.mrb[0].mxu0 %v2156
        %v2605 = vpop.f32.mrb[0].mxu0
        %v2606 = vadd.f32 %v515, %v2605
        %v2607 = vpop.f32.mrb[0].mxu0
        %2608 = vmatprep.mubr.f32.mxu0 0.0
        %2609 = vmatmul.mubr.f32.gmra.mrb[0].mxu0 %v2161
        %v2610 = vpop.f32.mrb[0].mxu0
        %v2611 = vadd.f32 %v515, %v2610
        %v2612 = vpop.f32.mrb[0].mxu0
        %2613 = vmatprep.mubr.f32.mxu0 0.0
        %2614 = vmatmul.mubr.f32.gmra.mrb[0].mxu0 %v2166
        %v2615 = vpop.f32.mrb[0].mxu0
        %v2616 = vadd.f32 %v515, %v2615
        %v2617 = vpop.f32.mrb[0].mxu0
        %2618 = vmatprep.mubr.f32.mxu0 0.0
        %2619 = vmatmul.mubr.f32.gmra.mrb[0].mxu0 %v2171
        %v2620 = vpop.f32.mrb[0].mxu0
        %v2621 = vadd.f32 %v515, %v2620
        %v2622 = vpop.f32.mrb[0].mxu0
        %2623 = vdwg.mxu0
        %v2624 = vmax.f32 %v2466, 0.0
        %v2625 = vmax.f32 %v2471, 0.0
        %v2626 = vmax.f32 %v2476, 0.0
        %v2627 = vmax.f32 %v2481, 0.0
        %v2628 = vmax.f32 %v2486, 0.0
        %v2629 = vmax.f32 %v2491, 0.0
        %v2630 = vmax.f32 %v2496, 0.0
        %v2631 = vmax.f32 %v2501, 0.0
        %v2632 = vmax.f32 %v2506, 0.0
        %v2633 = vmax.f32 %v2511, 0.0
        %v2634 = vmax.f32 %v2516, 0.0
        %v2635 = vmax.f32 %v2521, 0.0
        %v2636 = vmax.f32 %v2526, 0.0
        %v2637 = vmax.f32 %v2531, 0.0
        %v2638 = vmax.f32 %v2536, 0.0
        %v2639 = vmax.f32 %v2541, 0.0
        %v2640 = vmax.f32 %v2546, 0.0
        %v2641 = vmax.f32 %v2551, 0.0
        %v2642 = vmax.f32 %v2556, 0.0
        %v2643 = vmax.f32 %v2561, 0.0
        %v2644 = vmax.f32 %v2566, 0.0
        %v2645 = vmax.f32 %v2571, 0.0
        %v2646 = vmax.f32 %v2576, 0.0
        %v2647 = vmax.f32 %v2581, 0.0
        %v2648 = vmax.f32 %v2586, 0.0
        %v2649 = vmax.f32 %v2591, 0.0
        %v2650 = vmax.f32 %v2596, 0.0
        %v2651 = vmax.f32 %v2601, 0.0
        %v2652 = vmax.f32 %v2606, 0.0
        %v2653 = vmax.f32 %v2611, 0.0
        %v2654 = vmax.f32 %v2616, 0.0
        %v2655 = vmax.f32 %v2621, 0.0
        %2656 = vmatprep.subr.mxu0 0.0
        %2657 = vmatpush1.msra.mxu0 %v443
        %2658 = vmatprep.subr.mxu0 0.0
        %2659 = vmatpush1.msra.mxu0 %v444
        %2660 = vmatprep.subr.mxu0 0.0
        %2661 = vmatpush1.msra.mxu0 %v445
        %2662 = vmatprep.subr.mxu0 0.0
        %2663 = vmatpush1.msra.mxu0 %v446
        %2664 = vmatprep.subr.mxu0 0.0
        %2665 = vmatpush1.msra.mxu0 %v447
        %2666 = vmatprep.subr.mxu0 0.0
        %2667 = vmatpush1.msra.mxu0 %v448
        %2668 = vmatprep.subr.mxu0 0.0
        %2669 = vmatpush1.msra.mxu0 %v449
        %2670 = vmatprep.subr.mxu0 0.0
        %2671 = vmatpush1.msra.mxu0 %v450
        %2672 = vmatprep.subr.mxu0 0.0
        %2673 = vmatpush1.msra.mxu0 %v451
        %2674 = vmatprep.subr.mxu0 0.0
        %2675 = vmatpush1.msra.mxu0 %v452
        %2676 = vmatprep.subr.mxu0 0.0
        %2677 = vmatpush1.msra.mxu0 %v453
        %2678 = vmatprep.subr.mxu0 0.0
        %2679 = vmatpush1.msra.mxu0 %v454
        %2680 = vmatprep.subr.mxu0 0.0
        %2681 = vmatpush1.msra.mxu0 %v455
        %2682 = vmatprep.subr.mxu0 0.0
        %2683 = vmatpush1.msra.mxu0 %v456
        %2684 = vmatprep.subr.mxu0 0.0
        %2685 = vmatpush1.msra.mxu0 %v457
        %2686 = vmatprep.subr.mxu0 0.0
        %2687 = vmatpush1.msra.mxu0 %v458
        %2688 = vmatprep.subr.mxu0 0.0
        %2689 = vmatpush1.msra.mxu0 0.0
        %2690 = vmatprep.subr.mxu0 0.0
        %2691 = vmatpush1.msra.mxu0 0.0
        %2692 = vmatprep.subr.mxu0 0.0
        %2693 = vmatpush1.msra.mxu0 0.0
        %2694 = vmatprep.subr.mxu0 0.0
        %2695 = vmatpush1.msra.mxu0 0.0
        %2696 = vmatprep.subr.mxu0 0.0
        %2697 = vmatpush1.msra.mxu0 0.0
        %2698 = vmatprep.subr.mxu0 0.0
        %2699 = vmatpush1.msra.mxu0 0.0
        %2700 = vmatprep.subr.mxu0 0.0
        %2701 = vmatpush1.msra.mxu0 0.0
        %2702 = vmatprep.subr.mxu0 0.0
        %2703 = vmatpush1.msra.mxu0 0.0
        %2704 = vmatprep.subr.mxu0 0.0
        %2705 = vmatpush1.msra.mxu0 0.0
        %2706 = vmatprep.subr.mxu0 0.0
        %2707 = vmatpush1.msra.mxu0 0.0
        %2708 = vmatprep.subr.mxu0 0.0
        %2709 = vmatpush1.msra.mxu0 0.0
        %2710 = vmatprep.subr.mxu0 0.0
        %2711 = vmatpush1.msra.mxu0 0.0
        %2712 = vmatprep.subr.mxu0 0.0
        %2713 = vmatpush1.msra.mxu0 0.0
        %2714 = vmatprep.subr.mxu0 0.0
        %2715 = vmatpush1.msra.mxu0 0.0
        %2716 = vmatprep.subr.mxu0 0.0
        %2717 = vmatpush1.msra.mxu0 0.0
        %2718 = vmatprep.subr.mxu0 0.0
        %2719 = vmatpush1.msra.mxu0 0.0
        %2720 = vmatprep.mubr.f32.mxu0 0.0
        %2721 = vmatmul.mubr.f32.gmra.mrb[0].mxu0 %v2241
        %v2722 = vpop.f32.mrb[0].mxu0
        %v2723 = vadd.f32 %v515, %v2722
        %v2724 = vpop.f32.mrb[0].mxu0
        %2725 = vmatprep.mubr.f32.mxu0 0.0
        %2726 = vmatmul.mubr.f32.gmra.mrb[0].mxu0 %v2246
        %v2727 = vpop.f32.mrb[0].mxu0
        %v2728 = vadd.f32 %v515, %v2727
        %v2729 = vpop.f32.mrb[0].mxu0
        %2730 = vmatprep.mubr.f32.mxu0 0.0
        %2731 = vmatmul.mubr.f32.gmra.mrb[0].mxu0 %v2251
        %v2732 = vpop.f32.mrb[0].mxu0
        %v2733 = vadd.f32 %v515, %v2732
        %v2734 = vpop.f32.mrb[0].mxu0
        %2735 = vmatprep.mubr.f32.mxu0 0.0
        %2736 = vmatmul.mubr.f32.gmra.mrb[0].mxu0 %v2256
        %v2737 = vpop.f32.mrb[0].mxu0
        %v2738 = vadd.f32 %v515, %v2737
        %v2739 = vpop.f32.mrb[0].mxu0
        %2740 = vmatprep.mubr.f32.mxu0 0.0
        %2741 = vmatmul.mubr.f32.gmra.mrb[0].mxu0 %v2261
        %v2742 = vpop.f32.mrb[0].mxu0
        %v2743 = vadd.f32 %v515, %v2742
        %v2744 = vpop.f32.mrb[0].mxu0
        %2745 = vmatprep.mubr.f32.mxu0 0.0
        %2746 = vmatmul.mubr.f32.gmra.mrb[0].mxu0 %v2266
        %v2747 = vpop.f32.mrb[0].mxu0
        %v2748 = vadd.f32 %v515, %v2747
        %v2749 = vpop.f32.mrb[0].mxu0
        %2750 = vmatprep.mubr.f32.mxu0 0.0
        %2751 = vmatmul.mubr.f32.gmra.mrb[0].mxu0 %v2271
        %v2752 = vpop.f32.mrb[0].mxu0
        %v2753 = vadd.f32 %v515, %v2752
        %v2754 = vpop.f32.mrb[0].mxu0
        %2755 = vmatprep.mubr.f32.mxu0 0.0
        %2756 = vmatmul.mubr.f32.gmra.mrb[0].mxu0 %v2276
        %v2757 = vpop.f32.mrb[0].mxu0
        %v2758 = vadd.f32 %v515, %v2757
        %v2759 = vpop.f32.mrb[0].mxu0
        %2760 = vmatprep.mubr.f32.mxu0 0.0
        %2761 = vmatmul.mubr.f32.gmra.mrb[0].mxu0 %v2281
        %v2762 = vpop.f32.mrb[0].mxu0
        %v2763 = vadd.f32 %v515, %v2762
        %v2764 = vpop.f32.mrb[0].mxu0
        %2765 = vmatprep.mubr.f32.mxu0 0.0
        %2766 = vmatmul.mubr.f32.gmra.mrb[0].mxu0 %v2286
        %v2767 = vpop.f32.mrb[0].mxu0
        %v2768 = vadd.f32 %v515, %v2767
        %v2769 = vpop.f32.mrb[0].mxu0
        %2770 = vmatprep.mubr.f32.mxu0 0.0
        %2771 = vmatmul.mubr.f32.gmra.mrb[0].mxu0 %v2291
        %v2772 = vpop.f32.mrb[0].mxu0
        %v2773 = vadd.f32 %v515, %v2772
        %v2774 = vpop.f32.mrb[0].mxu0
        %2775 = vmatprep.mubr.f32.mxu0 0.0
        %2776 = vmatmul.mubr.f32.gmra.mrb[0].mxu0 %v2296
        %v2777 = vpop.f32.mrb[0].mxu0
        %v2778 = vadd.f32 %v515, %v2777
        %v2779 = vpop.f32.mrb[0].mxu0
        %2780 = vmatprep.mubr.f32.mxu0 0.0
        %2781 = vmatmul.mubr.f32.gmra.mrb[0].mxu0 %v2301
        %v2782 = vpop.f32.mrb[0].mxu0
        %v2783 = vadd.f32 %v515, %v2782
        %v2784 = vpop.f32.mrb[0].mxu0
        %2785 = vmatprep.mubr.f32.mxu0 0.0
        %2786 = vmatmul.mubr.f32.gmra.mrb[0].mxu0 %v2306
        %v2787 = vpop.f32.mrb[0].mxu0
        %v2788 = vadd.f32 %v515, %v2787
        %v2789 = vpop.f32.mrb[0].mxu0
        %2790 = vmatprep.mubr.f32.mxu0 0.0
        %2791 = vmatmul.mubr.f32.gmra.mrb[0].mxu0 %v2311
        %v2792 = vpop.f32.mrb[0].mxu0
        %v2793 = vadd.f32 %v515, %v2792
        %v2794 = vpop.f32.mrb[0].mxu0
        %2795 = vmatprep.mubr.f32.mxu0 0.0
        %2796 = vmatmul.mubr.f32.gmra.mrb[0].mxu0 %v2316
        %v2797 = vpop.f32.mrb[0].mxu0
        %v2798 = vadd.f32 %v515, %v2797
        %v2799 = vpop.f32.mrb[0].mxu0
        %2800 = vmatprep.mubr.f32.mxu0 0.0
        %2801 = vmatmul.mubr.f32.gmra.mrb[0].mxu0 %v2321
        %v2802 = vpop.f32.mrb[0].mxu0
        %v2803 = vadd.f32 %v515, %v2802
        %v2804 = vpop.f32.mrb[0].mxu0
        %2805 = vmatprep.mubr.f32.mxu0 0.0
        %2806 = vmatmul.mubr.f32.gmra.mrb[0].mxu0 %v2326
        %v2807 = vpop.f32.mrb[0].mxu0
        %v2808 = vadd.f32 %v515, %v2807
        %v2809 = vpop.f32.mrb[0].mxu0
        %2810 = vmatprep.mubr.f32.mxu0 0.0
        %2811 = vmatmul.mubr.f32.gmra.mrb[0].mxu0 %v2331
        %v2812 = vpop.f32.mrb[0].mxu0
        %v2813 = vadd.f32 %v515, %v2812
        %v2814 = vpop.f32.mrb[0].mxu0
        %2815 = vmatprep.mubr.f32.mxu0 0.0
        %2816 = vmatmul.mubr.f32.gmra.mrb[0].mxu0 %v2336
        %v2817 = vpop.f32.mrb[0].mxu0
        %v2818 = vadd.f32 %v515, %v2817
        %v2819 = vpop.f32.mrb[0].mxu0
        %2820 = vmatprep.mubr.f32.mxu0 0.0
        %2821 = vmatmul.mubr.f32.gmra.mrb[0].mxu0 %v2341
        %v2822 = vpop.f32.mrb[0].mxu0
        %v2823 = vadd.f32 %v515, %v2822
        %v2824 = vpop.f32.mrb[0].mxu0
        %2825 = vmatprep.mubr.f32.mxu0 0.0
        %2826 = vmatmul.mubr.f32.gmra.mrb[0].mxu0 %v2346
        %v2827 = vpop.f32.mrb[0].mxu0
        %v2828 = vadd.f32 %v515, %v2827
        %v2829 = vpop.f32.mrb[0].mxu0
        %2830 = vmatprep.mubr.f32.mxu0 0.0
        %2831 = vmatmul.mubr.f32.gmra.mrb[0].mxu0 %v2351
        %v2832 = vpop.f32.mrb[0].mxu0
        %v2833 = vadd.f32 %v515, %v2832
        %v2834 = vpop.f32.mrb[0].mxu0
        %2835 = vmatprep.mubr.f32.mxu0 0.0
        %2836 = vmatmul.mubr.f32.gmra.mrb[0].mxu0 %v2356
        %v2837 = vpop.f32.mrb[0].mxu0
        %v2838 = vadd.f32 %v515, %v2837
        %v2839 = vpop.f32.mrb[0].mxu0
        %2840 = vmatprep.mubr.f32.mxu0 0.0
        %2841 = vmatmul.mubr.f32.gmra.mrb[0].mxu0 %v2361
        %v2842 = vpop.f32.mrb[0].mxu0
        %v2843 = vadd.f32 %v515, %v2842
        %v2844 = vpop.f32.mrb[0].mxu0
        %2845 = vmatprep.mubr.f32.mxu0 0.0
        %2846 = vmatmul.mubr.f32.gmra.mrb[0].mxu0 %v2366
        %v2847 = vpop.f32.mrb[0].mxu0
        %v2848 = vadd.f32 %v515, %v2847
        %v2849 = vpop.f32.mrb[0].mxu0
        %2850 = vmatprep.mubr.f32.mxu0 0.0
        %2851 = vmatmul.mubr.f32.gmra.mrb[0].mxu0 %v2371
        %v2852 = vpop.f32.mrb[0].mxu0
        %v2853 = vadd.f32 %v515, %v2852
        %v2854 = vpop.f32.mrb[0].mxu0
        %2855 = vmatprep.mubr.f32.mxu0 0.0
        %2856 = vmatmul.mubr.f32.gmra.mrb[0].mxu0 %v2376
        %v2857 = vpop.f32.mrb[0].mxu0
        %v2858 = vadd.f32 %v515, %v2857
        %v2859 = vpop.f32.mrb[0].mxu0
        %2860 = vmatprep.mubr.f32.mxu0 0.0
        %2861 = vmatmul.mubr.f32.gmra.mrb[0].mxu0 %v2381
        %v2862 = vpop.f32.mrb[0].mxu0
        %v2863 = vadd.f32 %v515, %v2862
        %v2864 = vpop.f32.mrb[0].mxu0
        %2865 = vmatprep.mubr.f32.mxu0 0.0
        %2866 = vmatmul.mubr.f32.gmra.mrb[0].mxu0 %v2386
        %v2867 = vpop.f32.mrb[0].mxu0
        %v2868 = vadd.f32 %v515, %v2867
        %v2869 = vpop.f32.mrb[0].mxu0
        %2870 = vmatprep.mubr.f32.mxu0 0.0
        %2871 = vmatmul.mubr.f32.gmra.mrb[0].mxu0 %v2391
        %v2872 = vpop.f32.mrb[0].mxu0
        %v2873 = vadd.f32 %v515, %v2872
        %v2874 = vpop.f32.mrb[0].mxu0
        %2875 = vmatprep.mubr.f32.mxu0 0.0
        %2876 = vmatmul.mubr.f32.gmra.mrb[0].mxu0 %v2396
        %v2877 = vpop.f32.mrb[0].mxu0
        %v2878 = vadd.f32 %v515, %v2877
        %v2879 = vpop.f32.mrb[0].mxu0
        %2880 = vdwg.mxu0
        %v2881 = vmax.f32 %v2723, 0.0
        %v2882 = vmax.f32 %v2728, 0.0
        %v2883 = vmax.f32 %v2733, 0.0
        %v2884 = vmax.f32 %v2738, 0.0
        %v2885 = vmax.f32 %v2743, 0.0
        %v2886 = vmax.f32 %v2748, 0.0
        %v2887 = vmax.f32 %v2753, 0.0
        %v2888 = vmax.f32 %v2758, 0.0
        %v2889 = vmax.f32 %v2763, 0.0
        %v2890 = vmax.f32 %v2768, 0.0
        %v2891 = vmax.f32 %v2773, 0.0
        %v2892 = vmax.f32 %v2778, 0.0
        %v2893 = vmax.f32 %v2783, 0.0
        %v2894 = vmax.f32 %v2788, 0.0
        %v2895 = vmax.f32 %v2793, 0.0
        %v2896 = vmax.f32 %v2798, 0.0
        %v2897 = vmax.f32 %v2803, 0.0
        %v2898 = vmax.f32 %v2808, 0.0
        %v2899 = vmax.f32 %v2813, 0.0
        %v2900 = vmax.f32 %v2818, 0.0
        %v2901 = vmax.f32 %v2823, 0.0
        %v2902 = vmax.f32 %v2828, 0.0
        %v2903 = vmax.f32 %v2833, 0.0
        %v2904 = vmax.f32 %v2838, 0.0
        %v2905 = vmax.f32 %v2843, 0.0
        %v2906 = vmax.f32 %v2848, 0.0
        %v2907 = vmax.f32 %v2853, 0.0
        %v2908 = vmax.f32 %v2858, 0.0
        %v2909 = vmax.f32 %v2863, 0.0
        %v2910 = vmax.f32 %v2868, 0.0
        %v2911 = vmax.f32 %v2873, 0.0
        %v2912 = vmax.f32 %v2878, 0.0
        %2913 = vmatprep.subr.mxu0 0.0
        %2914 = vmatpush1.msra.mxu0 %v477
        %2915 = vmatprep.subr.mxu0 0.0
        %2916 = vmatpush1.msra.mxu0 %v478
        %2917 = vmatprep.subr.mxu0 0.0
        %2918 = vmatpush1.msra.mxu0 %v479
        %2919 = vmatprep.subr.mxu0 0.0
        %2920 = vmatpush1.msra.mxu0 %v480
        %2921 = vmatprep.subr.mxu0 0.0
        %2922 = vmatpush1.msra.mxu0 %v481
        %2923 = vmatprep.subr.mxu0 0.0
        %2924 = vmatpush1.msra.mxu0 %v482
        %2925 = vmatprep.subr.mxu0 0.0
        %2926 = vmatpush1.msra.mxu0 %v483
        %2927 = vmatprep.subr.mxu0 0.0
        %2928 = vmatpush1.msra.mxu0 %v484
        %2929 = vmatprep.subr.mxu0 0.0
        %2930 = vmatpush1.msra.mxu0 %v485
        %2931 = vmatprep.subr.mxu0 0.0
        %2932 = vmatpush1.msra.mxu0 %v486
        %2933 = vmatprep.subr.mxu0 0.0
        %2934 = vmatpush1.msra.mxu0 %v487
        %2935 = vmatprep.subr.mxu0 0.0
        %2936 = vmatpush1.msra.mxu0 %v488
        %2937 = vmatprep.subr.mxu0 0.0
        %2938 = vmatpush1.msra.mxu0 %v489
        %2939 = vmatprep.subr.mxu0 0.0
        %2940 = vmatpush1.msra.mxu0 %v490
        %2941 = vmatprep.subr.mxu0 0.0
        %2942 = vmatpush1.msra.mxu0 %v491
        %2943 = vmatprep.subr.mxu0 0.0
        %2944 = vmatpush1.msra.mxu0 %v492
        %2945 = vmatprep.subr.mxu0 0.0
        %2946 = vmatpush1.msra.mxu0 0.0
        %2947 = vmatprep.subr.mxu0 0.0
        %2948 = vmatpush1.msra.mxu0 0.0
        %2949 = vmatprep.subr.mxu0 0.0
        %2950 = vmatpush1.msra.mxu0 0.0
        %2951 = vmatprep.subr.mxu0 0.0
        %2952 = vmatpush1.msra.mxu0 0.0
        %2953 = vmatprep.subr.mxu0 0.0
        %2954 = vmatpush1.msra.mxu0 0.0
        %2955 = vmatprep.subr.mxu0 0.0
        %2956 = vmatpush1.msra.mxu0 0.0
        %2957 = vmatprep.subr.mxu0 0.0
        %2958 = vmatpush1.msra.mxu0 0.0
        %2959 = vmatprep.subr.mxu0 0.0
        %2960 = vmatpush1.msra.mxu0 0.0
        %2961 = vmatprep.subr.mxu0 0.0
        %2962 = vmatpush1.msra.mxu0 0.0
        %2963 = vmatprep.subr.mxu0 0.0
        %2964 = vmatpush1.msra.mxu0 0.0
        %2965 = vmatprep.subr.mxu0 0.0
        %2966 = vmatpush1.msra.mxu0 0.0
        %2967 = vmatprep.subr.mxu0 0.0
        %2968 = vmatpush1.msra.mxu0 0.0
        %2969 = vmatprep.subr.mxu0 0.0
        %2970 = vmatpush1.msra.mxu0 0.0
        %2971 = vmatprep.subr.mxu0 0.0
        %2972 = vmatpush1.msra.mxu0 0.0
        %2973 = vmatprep.subr.mxu0 0.0
        %2974 = vmatpush1.msra.mxu0 0.0
        %2975 = vmatprep.subr.mxu0 0.0
        %2976 = vmatpush1.msra.mxu0 0.0
        %2977 = vmatprep.mubr.f32.mxu0 0.0
        %2978 = vmatmul.mubr.f32.gmra.mrb[0].mxu0 %v2624
        %v2979 = vpop.f32.mrb[0].mxu0
        %v2980 = vadd.f32 %v1266, %v2979
        %v2981 = vpop.f32.mrb[0].mxu0
        %2982 = vmatprep.mubr.f32.mxu0 0.0
        %2983 = vmatmul.mubr.f32.gmra.mrb[0].mxu0 %v2625
        %v2984 = vpop.f32.mrb[0].mxu0
        %v2985 = vadd.f32 %v1266, %v2984
        %v2986 = vpop.f32.mrb[0].mxu0
        %2987 = vmatprep.mubr.f32.mxu0 0.0
        %2988 = vmatmul.mubr.f32.gmra.mrb[0].mxu0 %v2626
        %v2989 = vpop.f32.mrb[0].mxu0
        %v2990 = vadd.f32 %v1266, %v2989
        %v2991 = vpop.f32.mrb[0].mxu0
        %2992 = vmatprep.mubr.f32.mxu0 0.0
        %2993 = vmatmul.mubr.f32.gmra.mrb[0].mxu0 %v2627
        %v2994 = vpop.f32.mrb[0].mxu0
        %v2995 = vadd.f32 %v1266, %v2994
        %v2996 = vpop.f32.mrb[0].mxu0
        %2997 = vmatprep.mubr.f32.mxu0 0.0
        %2998 = vmatmul.mubr.f32.gmra.mrb[0].mxu0 %v2628
        %v2999 = vpop.f32.mrb[0].mxu0
        %v3000 = vadd.f32 %v1266, %v2999
        %v3001 = vpop.f32.mrb[0].mxu0
        %3002 = vmatprep.mubr.f32.mxu0 0.0
        %3003 = vmatmul.mubr.f32.gmra.mrb[0].mxu0 %v2629
        %v3004 = vpop.f32.mrb[0].mxu0
        %v3005 = vadd.f32 %v1266, %v3004
        %v3006 = vpop.f32.mrb[0].mxu0
        %3007 = vmatprep.mubr.f32.mxu0 0.0
        %3008 = vmatmul.mubr.f32.gmra.mrb[0].mxu0 %v2630
        %v3009 = vpop.f32.mrb[0].mxu0
        %v3010 = vadd.f32 %v1266, %v3009
        %v3011 = vpop.f32.mrb[0].mxu0
        %3012 = vmatprep.mubr.f32.mxu0 0.0
        %3013 = vmatmul.mubr.f32.gmra.mrb[0].mxu0 %v2631
        %v3014 = vpop.f32.mrb[0].mxu0
        %v3015 = vadd.f32 %v1266, %v3014
        %v3016 = vpop.f32.mrb[0].mxu0
        %3017 = vmatprep.mubr.f32.mxu0 0.0
        %3018 = vmatmul.mubr.f32.gmra.mrb[0].mxu0 %v2632
        %v3019 = vpop.f32.mrb[0].mxu0
        %v3020 = vadd.f32 %v1266, %v3019
        %v3021 = vpop.f32.mrb[0].mxu0
        %3022 = vmatprep.mubr.f32.mxu0 0.0
        %3023 = vmatmul.mubr.f32.gmra.mrb[0].mxu0 %v2633
        %v3024 = vpop.f32.mrb[0].mxu0
        %v3025 = vadd.f32 %v1266, %v3024
        %v3026 = vpop.f32.mrb[0].mxu0
        %3027 = vmatprep.mubr.f32.mxu0 0.0
        %3028 = vmatmul.mubr.f32.gmra.mrb[0].mxu0 %v2634
        %v3029 = vpop.f32.mrb[0].mxu0
        %v3030 = vadd.f32 %v1266, %v3029
        %v3031 = vpop.f32.mrb[0].mxu0
        %3032 = vmatprep.mubr.f32.mxu0 0.0
        %3033 = vmatmul.mubr.f32.gmra.mrb[0].mxu0 %v2635
        %v3034 = vpop.f32.mrb[0].mxu0
        %v3035 = vadd.f32 %v1266, %v3034
        %v3036 = vpop.f32.mrb[0].mxu0
        %3037 = vmatprep.mubr.f32.mxu0 0.0
        %3038 = vmatmul.mubr.f32.gmra.mrb[0].mxu0 %v2636
        %v3039 = vpop.f32.mrb[0].mxu0
        %v3040 = vadd.f32 %v1266, %v3039
        %v3041 = vpop.f32.mrb[0].mxu0
        %3042 = vmatprep.mubr.f32.mxu0 0.0
        %3043 = vmatmul.mubr.f32.gmra.mrb[0].mxu0 %v2637
        %v3044 = vpop.f32.mrb[0].mxu0
        %v3045 = vadd.f32 %v1266, %v3044
        %v3046 = vpop.f32.mrb[0].mxu0
        %3047 = vmatprep.mubr.f32.mxu0 0.0
        %3048 = vmatmul.mubr.f32.gmra.mrb[0].mxu0 %v2638
        %v3049 = vpop.f32.mrb[0].mxu0
        %v3050 = vadd.f32 %v1266, %v3049
        %v3051 = vpop.f32.mrb[0].mxu0
        %3052 = vmatprep.mubr.f32.mxu0 0.0
        %3053 = vmatmul.mubr.f32.gmra.mrb[0].mxu0 %v2639
        %v3054 = vpop.f32.mrb[0].mxu0
        %v3055 = vadd.f32 %v1266, %v3054
        %v3056 = vpop.f32.mrb[0].mxu0
        %3057 = vmatprep.mubr.f32.mxu0 0.0
        %3058 = vmatmul.mubr.f32.gmra.mrb[0].mxu0 %v2640
        %v3059 = vpop.f32.mrb[0].mxu0
        %v3060 = vadd.f32 %v1266, %v3059
        %v3061 = vpop.f32.mrb[0].mxu0
        %3062 = vmatprep.mubr.f32.mxu0 0.0
        %3063 = vmatmul.mubr.f32.gmra.mrb[0].mxu0 %v2641
        %v3064 = vpop.f32.mrb[0].mxu0
        %v3065 = vadd.f32 %v1266, %v3064
        %v3066 = vpop.f32.mrb[0].mxu0
        %3067 = vmatprep.mubr.f32.mxu0 0.0
        %3068 = vmatmul.mubr.f32.gmra.mrb[0].mxu0 %v2642
        %v3069 = vpop.f32.mrb[0].mxu0
        %v3070 = vadd.f32 %v1266, %v3069
        %v3071 = vpop.f32.mrb[0].mxu0
        %3072 = vmatprep.mubr.f32.mxu0 0.0
        %3073 = vmatmul.mubr.f32.gmra.mrb[0].mxu0 %v2643
        %v3074 = vpop.f32.mrb[0].mxu0
        %v3075 = vadd.f32 %v1266, %v3074
        %v3076 = vpop.f32.mrb[0].mxu0
        %3077 = vmatprep.mubr.f32.mxu0 0.0
        %3078 = vmatmul.mubr.f32.gmra.mrb[0].mxu0 %v2644
        %v3079 = vpop.f32.mrb[0].mxu0
        %v3080 = vadd.f32 %v1266, %v3079
        %v3081 = vpop.f32.mrb[0].mxu0
        %3082 = vmatprep.mubr.f32.mxu0 0.0
        %3083 = vmatmul.mubr.f32.gmra.mrb[0].mxu0 %v2645
        %v3084 = vpop.f32.mrb[0].mxu0
        %v3085 = vadd.f32 %v1266, %v3084
        %v3086 = vpop.f32.mrb[0].mxu0
        %3087 = vmatprep.mubr.f32.mxu0 0.0
        %3088 = vmatmul.mubr.f32.gmra.mrb[0].mxu0 %v2646
        %v3089 = vpop.f32.mrb[0].mxu0
        %v3090 = vadd.f32 %v1266, %v3089
        %v3091 = vpop.f32.mrb[0].mxu0
        %3092 = vmatprep.mubr.f32.mxu0 0.0
        %3093 = vmatmul.mubr.f32.gmra.mrb[0].mxu0 %v2647
        %v3094 = vpop.f32.mrb[0].mxu0
        %v3095 = vadd.f32 %v1266, %v3094
        %v3096 = vpop.f32.mrb[0].mxu0
        %3097 = vmatprep.mubr.f32.mxu0 0.0
        %3098 = vmatmul.mubr.f32.gmra.mrb[0].mxu0 %v2648
        %v3099 = vpop.f32.mrb[0].mxu0
        %v3100 = vadd.f32 %v1266, %v3099
        %v3101 = vpop.f32.mrb[0].mxu0
        %3102 = vmatprep.mubr.f32.mxu0 0.0
        %3103 = vmatmul.mubr.f32.gmra.mrb[0].mxu0 %v2649
        %v3104 = vpop.f32.mrb[0].mxu0
        %v3105 = vadd.f32 %v1266, %v3104
        %v3106 = vpop.f32.mrb[0].mxu0
        %3107 = vmatprep.mubr.f32.mxu0 0.0
        %3108 = vmatmul.mubr.f32.gmra.mrb[0].mxu0 %v2650
        %v3109 = vpop.f32.mrb[0].mxu0
        %v3110 = vadd.f32 %v1266, %v3109
        %v3111 = vpop.f32.mrb[0].mxu0
        %3112 = vmatprep.mubr.f32.mxu0 0.0
        %3113 = vmatmul.mubr.f32.gmra.mrb[0].mxu0 %v2651
        %v3114 = vpop.f32.mrb[0].mxu0
        %v3115 = vadd.f32 %v1266, %v3114
        %v3116 = vpop.f32.mrb[0].mxu0
        %3117 = vmatprep.mubr.f32.mxu0 0.0
        %3118 = vmatmul.mubr.f32.gmra.mrb[0].mxu0 %v2652
        %v3119 = vpop.f32.mrb[0].mxu0
        %v3120 = vadd.f32 %v1266, %v3119
        %v3121 = vpop.f32.mrb[0].mxu0
        %3122 = vmatprep.mubr.f32.mxu0 0.0
        %3123 = vmatmul.mubr.f32.gmra.mrb[0].mxu0 %v2653
        %v3124 = vpop.f32.mrb[0].mxu0
        %v3125 = vadd.f32 %v1266, %v3124
        %v3126 = vpop.f32.mrb[0].mxu0
        %3127 = vmatprep.mubr.f32.mxu0 0.0
        %3128 = vmatmul.mubr.f32.gmra.mrb[0].mxu0 %v2654
        %v3129 = vpop.f32.mrb[0].mxu0
        %v3130 = vadd.f32 %v1266, %v3129
        %v3131 = vpop.f32.mrb[0].mxu0
        %3132 = vmatprep.mubr.f32.mxu0 0.0
        %3133 = vmatmul.mubr.f32.gmra.mrb[0].mxu0 %v2655
        %v3134 = vpop.f32.mrb[0].mxu0
        %v3135 = vadd.f32 %v1266, %v3134
        %v3136 = vpop.f32.mrb[0].mxu0
        %3137 = vdwg.mxu0
        %3138 = vmatprep.subr.mxu0 0.0
        %3139 = vmatpush1.msra.mxu0 %v460
        %3140 = vmatprep.subr.mxu0 0.0
        %3141 = vmatpush1.msra.mxu0 %v461
        %3142 = vmatprep.subr.mxu0 0.0
        %3143 = vmatpush1.msra.mxu0 %v462
        %3144 = vmatprep.subr.mxu0 0.0
        %3145 = vmatpush1.msra.mxu0 %v463
        %3146 = vmatprep.subr.mxu0 0.0
        %3147 = vmatpush1.msra.mxu0 %v464
        %3148 = vmatprep.subr.mxu0 0.0
        %3149 = vmatpush1.msra.mxu0 %v465
        %3150 = vmatprep.subr.mxu0 0.0
        %3151 = vmatpush1.msra.mxu0 %v466
        %3152 = vmatprep.subr.mxu0 0.0
        %3153 = vmatpush1.msra.mxu0 %v467
        %3154 = vmatprep.subr.mxu0 0.0
        %3155 = vmatpush1.msra.mxu0 %v468
        %3156 = vmatprep.subr.mxu0 0.0
        %3157 = vmatpush1.msra.mxu0 %v469
        %3158 = vmatprep.subr.mxu0 0.0
        %3159 = vmatpush1.msra.mxu0 %v470
        %3160 = vmatprep.subr.mxu0 0.0
        %3161 = vmatpush1.msra.mxu0 %v471
        %3162 = vmatprep.subr.mxu0 0.0
        %3163 = vmatpush1.msra.mxu0 %v472
        %3164 = vmatprep.subr.mxu0 0.0
        %3165 = vmatpush1.msra.mxu0 %v473
        %3166 = vmatprep.subr.mxu0 0.0
        %3167 = vmatpush1.msra.mxu0 %v474
        %3168 = vmatprep.subr.mxu0 0.0
        %3169 = vmatpush1.msra.mxu0 %v475
        %3170 = vmatprep.subr.mxu0 0.0
        %3171 = vmatpush1.msra.mxu0 0.0
        %3172 = vmatprep.subr.mxu0 0.0
        %3173 = vmatpush1.msra.mxu0 0.0
        %3174 = vmatprep.subr.mxu0 0.0
        %3175 = vmatpush1.msra.mxu0 0.0
        %3176 = vmatprep.subr.mxu0 0.0
        %3177 = vmatpush1.msra.mxu0 0.0
        %3178 = vmatprep.subr.mxu0 0.0
        %3179 = vmatpush1.msra.mxu0 0.0
        %3180 = vmatprep.subr.mxu0 0.0
        %3181 = vmatpush1.msra.mxu0 0.0
        %3182 = vmatprep.subr.mxu0 0.0
        %3183 = vmatpush1.msra.mxu0 0.0
        %3184 = vmatprep.subr.mxu0 0.0
        %3185 = vmatpush1.msra.mxu0 0.0
        %3186 = vmatprep.subr.mxu0 0.0
        %3187 = vmatpush1.msra.mxu0 0.0
        %3188 = vmatprep.subr.mxu0 0.0
        %3189 = vmatpush1.msra.mxu0 0.0
        %3190 = vmatprep.subr.mxu0 0.0
        %3191 = vmatpush1.msra.mxu0 0.0
        %3192 = vmatprep.subr.mxu0 0.0
        %3193 = vmatpush1.msra.mxu0 0.0
        %3194 = vmatprep.subr.mxu0 0.0
        %3195 = vmatpush1.msra.mxu0 0.0
        %3196 = vmatprep.subr.mxu0 0.0
        %3197 = vmatpush1.msra.mxu0 0.0
        %3198 = vmatprep.subr.mxu0 0.0
        %3199 = vmatpush1.msra.mxu0 0.0
        %3200 = vmatprep.subr.mxu0 0.0
        %3201 = vmatpush1.msra.mxu0 0.0
        %3202 = vmatprep.mubr.f32.mxu0 0.0
        %3203 = vmatmul.mubr.f32.gmra.mrb[0].mxu0 %v2881
        %v3204 = vpop.f32.mrb[0].mxu0
        %v3205 = vadd.f32 %v1035, %v3204
        %v3206 = vpop.f32.mrb[0].mxu0
        %3207 = vmatprep.mubr.f32.mxu0 0.0
        %3208 = vmatmul.mubr.f32.gmra.mrb[0].mxu0 %v2882
        %v3209 = vpop.f32.mrb[0].mxu0
        %v3210 = vadd.f32 %v1035, %v3209
        %v3211 = vpop.f32.mrb[0].mxu0
        %3212 = vmatprep.mubr.f32.mxu0 0.0
        %3213 = vmatmul.mubr.f32.gmra.mrb[0].mxu0 %v2883
        %v3214 = vpop.f32.mrb[0].mxu0
        %v3215 = vadd.f32 %v1035, %v3214
        %v3216 = vpop.f32.mrb[0].mxu0
        %3217 = vmatprep.mubr.f32.mxu0 0.0
        %3218 = vmatmul.mubr.f32.gmra.mrb[0].mxu0 %v2884
        %v3219 = vpop.f32.mrb[0].mxu0
        %v3220 = vadd.f32 %v1035, %v3219
        %v3221 = vpop.f32.mrb[0].mxu0
        %3222 = vmatprep.mubr.f32.mxu0 0.0
        %3223 = vmatmul.mubr.f32.gmra.mrb[0].mxu0 %v2885
        %v3224 = vpop.f32.mrb[0].mxu0
        %v3225 = vadd.f32 %v1035, %v3224
        %v3226 = vpop.f32.mrb[0].mxu0
        %3227 = vmatprep.mubr.f32.mxu0 0.0
        %3228 = vmatmul.mubr.f32.gmra.mrb[0].mxu0 %v2886
        %v3229 = vpop.f32.mrb[0].mxu0
        %v3230 = vadd.f32 %v1035, %v3229
        %v3231 = vpop.f32.mrb[0].mxu0
        %3232 = vmatprep.mubr.f32.mxu0 0.0
        %3233 = vmatmul.mubr.f32.gmra.mrb[0].mxu0 %v2887
        %v3234 = vpop.f32.mrb[0].mxu0
        %v3235 = vadd.f32 %v1035, %v3234
        %v3236 = vpop.f32.mrb[0].mxu0
        %3237 = vmatprep.mubr.f32.mxu0 0.0
        %3238 = vmatmul.mubr.f32.gmra.mrb[0].mxu0 %v2888
        %v3239 = vpop.f32.mrb[0].mxu0
        %v3240 = vadd.f32 %v1035, %v3239
        %v3241 = vpop.f32.mrb[0].mxu0
        %3242 = vmatprep.mubr.f32.mxu0 0.0
        %3243 = vmatmul.mubr.f32.gmra.mrb[0].mxu0 %v2889
        %v3244 = vpop.f32.mrb[0].mxu0
        %v3245 = vadd.f32 %v1035, %v3244
        %v3246 = vpop.f32.mrb[0].mxu0
        %3247 = vmatprep.mubr.f32.mxu0 0.0
        %3248 = vmatmul.mubr.f32.gmra.mrb[0].mxu0 %v2890
        %v3249 = vpop.f32.mrb[0].mxu0
        %v3250 = vadd.f32 %v1035, %v3249
        %v3251 = vpop.f32.mrb[0].mxu0
        %3252 = vmatprep.mubr.f32.mxu0 0.0
        %3253 = vmatmul.mubr.f32.gmra.mrb[0].mxu0 %v2891
        %v3254 = vpop.f32.mrb[0].mxu0
        %v3255 = vadd.f32 %v1035, %v3254
        %v3256 = vpop.f32.mrb[0].mxu0
        %3257 = vmatprep.mubr.f32.mxu0 0.0
        %3258 = vmatmul.mubr.f32.gmra.mrb[0].mxu0 %v2892
        %v3259 = vpop.f32.mrb[0].mxu0
        %v3260 = vadd.f32 %v1035, %v3259
        %v3261 = vpop.f32.mrb[0].mxu0
        %3262 = vmatprep.mubr.f32.mxu0 0.0
        %3263 = vmatmul.mubr.f32.gmra.mrb[0].mxu0 %v2893
        %v3264 = vpop.f32.mrb[0].mxu0
        %v3265 = vadd.f32 %v1035, %v3264
        %v3266 = vpop.f32.mrb[0].mxu0
        %3267 = vmatprep.mubr.f32.mxu0 0.0
        %3268 = vmatmul.mubr.f32.gmra.mrb[0].mxu0 %v2894
        %v3269 = vpop.f32.mrb[0].mxu0
        %v3270 = vadd.f32 %v1035, %v3269
        %v3271 = vpop.f32.mrb[0].mxu0
        %3272 = vmatprep.mubr.f32.mxu0 0.0
        %3273 = vmatmul.mubr.f32.gmra.mrb[0].mxu0 %v2895
        %v3274 = vpop.f32.mrb[0].mxu0
        %v3275 = vadd.f32 %v1035, %v3274
        %v3276 = vpop.f32.mrb[0].mxu0
        %3277 = vmatprep.mubr.f32.mxu0 0.0
        %3278 = vmatmul.mubr.f32.gmra.mrb[0].mxu0 %v2896
        %v3279 = vpop.f32.mrb[0].mxu0
        %v3280 = vadd.f32 %v1035, %v3279
        %v3281 = vpop.f32.mrb[0].mxu0
        %3282 = vmatprep.mubr.f32.mxu0 0.0
        %3283 = vmatmul.mubr.f32.gmra.mrb[0].mxu0 %v2897
        %v3284 = vpop.f32.mrb[0].mxu0
        %v3285 = vadd.f32 %v1035, %v3284
        %v3286 = vpop.f32.mrb[0].mxu0
        %3287 = vmatprep.mubr.f32.mxu0 0.0
        %3288 = vmatmul.mubr.f32.gmra.mrb[0].mxu0 %v2898
        %v3289 = vpop.f32.mrb[0].mxu0
        %v3290 = vadd.f32 %v1035, %v3289
        %v3291 = vpop.f32.mrb[0].mxu0
        %3292 = vmatprep.mubr.f32.mxu0 0.0
        %3293 = vmatmul.mubr.f32.gmra.mrb[0].mxu0 %v2899
        %v3294 = vpop.f32.mrb[0].mxu0
        %v3295 = vadd.f32 %v1035, %v3294
        %v3296 = vpop.f32.mrb[0].mxu0
        %3297 = vmatprep.mubr.f32.mxu0 0.0
        %3298 = vmatmul.mubr.f32.gmra.mrb[0].mxu0 %v2900
        %v3299 = vpop.f32.mrb[0].mxu0
        %v3300 = vadd.f32 %v1035, %v3299
        %v3301 = vpop.f32.mrb[0].mxu0
        %3302 = vmatprep.mubr.f32.mxu0 0.0
        %3303 = vmatmul.mubr.f32.gmra.mrb[0].mxu0 %v2901
        %v3304 = vpop.f32.mrb[0].mxu0
        %v3305 = vadd.f32 %v1035, %v3304
        %v3306 = vpop.f32.mrb[0].mxu0
        %3307 = vmatprep.mubr.f32.mxu0 0.0
        %3308 = vmatmul.mubr.f32.gmra.mrb[0].mxu0 %v2902
        %v3309 = vpop.f32.mrb[0].mxu0
        %v3310 = vadd.f32 %v1035, %v3309
        %v3311 = vpop.f32.mrb[0].mxu0
        %3312 = vmatprep.mubr.f32.mxu0 0.0
        %3313 = vmatmul.mubr.f32.gmra.mrb[0].mxu0 %v2903
        %v3314 = vpop.f32.mrb[0].mxu0
        %v3315 = vadd.f32 %v1035, %v3314
        %v3316 = vpop.f32.mrb[0].mxu0
        %3317 = vmatprep.mubr.f32.mxu0 0.0
        %3318 = vmatmul.mubr.f32.gmra.mrb[0].mxu0 %v2904
        %v3319 = vpop.f32.mrb[0].mxu0
        %v3320 = vadd.f32 %v1035, %v3319
        %v3321 = vpop.f32.mrb[0].mxu0
        %3322 = vmatprep.mubr.f32.mxu0 0.0
        %3323 = vmatmul.mubr.f32.gmra.mrb[0].mxu0 %v2905
        %v3324 = vpop.f32.mrb[0].mxu0
        %v3325 = vadd.f32 %v1035, %v3324
        %v3326 = vpop.f32.mrb[0].mxu0
        %3327 = vmatprep.mubr.f32.mxu0 0.0
        %3328 = vmatmul.mubr.f32.gmra.mrb[0].mxu0 %v2906
        %v3329 = vpop.f32.mrb[0].mxu0
        %v3330 = vadd.f32 %v1035, %v3329
        %v3331 = vpop.f32.mrb[0].mxu0
        %3332 = vmatprep.mubr.f32.mxu0 0.0
        %3333 = vmatmul.mubr.f32.gmra.mrb[0].mxu0 %v2907
        %v3334 = vpop.f32.mrb[0].mxu0
        %v3335 = vadd.f32 %v1035, %v3334
        %v3336 = vpop.f32.mrb[0].mxu0
        %3337 = vmatprep.mubr.f32.mxu0 0.0
        %3338 = vmatmul.mubr.f32.gmra.mrb[0].mxu0 %v2908
        %v3339 = vpop.f32.mrb[0].mxu0
        %v3340 = vadd.f32 %v1035, %v3339
        %v3341 = vpop.f32.mrb[0].mxu0
        %3342 = vmatprep.mubr.f32.mxu0 0.0
        %3343 = vmatmul.mubr.f32.gmra.mrb[0].mxu0 %v2909
        %v3344 = vpop.f32.mrb[0].mxu0
        %v3345 = vadd.f32 %v1035, %v3344
        %v3346 = vpop.f32.mrb[0].mxu0
        %3347 = vmatprep.mubr.f32.mxu0 0.0
        %3348 = vmatmul.mubr.f32.gmra.mrb[0].mxu0 %v2910
        %v3349 = vpop.f32.mrb[0].mxu0
        %v3350 = vadd.f32 %v1035, %v3349
        %v3351 = vpop.f32.mrb[0].mxu0
        %3352 = vmatprep.mubr.f32.mxu0 0.0
        %3353 = vmatmul.mubr.f32.gmra.mrb[0].mxu0 %v2911
        %v3354 = vpop.f32.mrb[0].mxu0
        %v3355 = vadd.f32 %v1035, %v3354
        %v3356 = vpop.f32.mrb[0].mxu0
        %3357 = vmatprep.mubr.f32.mxu0 0.0
        %3358 = vmatmul.mubr.f32.gmra.mrb[0].mxu0 %v2912
        %v3359 = vpop.f32.mrb[0].mxu0
        %v3360 = vadd.f32 %v1035, %v3359
        %v3361 = vpop.f32.mrb[0].mxu0
        %3362 = vdwg.mxu0
        %3363 = vst [vmem:[%s365] sm:$0xff] %v2016
        %3364 = vst [vmem:[%s365 + $0x8] sm:$0xff] %v2021
        %3365 = vst [vmem:[%s365 + $0x10] sm:$0xff] %v2026
        %3366 = vst [vmem:[%s365 + $0x18] sm:$0xff] %v2031
        %3367 = vst [vmem:[%s365 + $0x20] sm:$0xff] %v2036
        %3368 = vst [vmem:[%s365 + $0x28] sm:$0xff] %v2041
        %3369 = vst [vmem:[%s365 + $0x30] sm:$0xff] %v2046
        %3370 = vst [vmem:[%s365 + $0x38] sm:$0xff] %v2051
        %3371 = vst [vmem:[%s365 + $0x40] sm:$0xff] %v2056
        %3372 = vst [vmem:[%s365 + $0x48] sm:$0xff] %v2061
        %3373 = vst [vmem:[%s365 + $0x50] sm:$0xff] %v2066
        %3374 = vst [vmem:[%s365 + $0x58] sm:$0xff] %v2071
        %3375 = vst [vmem:[%s365 + $0x60] sm:$0xff] %v2076
        %3376 = vst [vmem:[%s365 + $0x68] sm:$0xff] %v2081
        %3377 = vst [vmem:[%s365 + $0x70] sm:$0xff] %v2086
        %3378 = vst [vmem:[%s365 + $0x78] sm:$0xff] %v2091
        %3379 = vst [vmem:[%s365 + $0x80] sm:$0xff] %v2096
        %3380 = vst [vmem:[%s365 + $0x88] sm:$0xff] %v2101
        %3381 = vst [vmem:[%s365 + $0x90] sm:$0xff] %v2106
        %3382 = vst [vmem:[%s365 + $0x98] sm:$0xff] %v2111
        %3383 = vst [vmem:[%s365 + $0xa0] sm:$0xff] %v2116
        %3384 = vst [vmem:[%s365 + $0xa8] sm:$0xff] %v2121
        %3385 = vst [vmem:[%s365 + $0xb0] sm:$0xff] %v2126
        %3386 = vst [vmem:[%s365 + $0xb8] sm:$0xff] %v2131
        %3387 = vst [vmem:[%s365 + $0xc0] sm:$0xff] %v2136
        %3388 = vst [vmem:[%s365 + $0xc8] sm:$0xff] %v2141
        %3389 = vst [vmem:[%s365 + $0xd0] sm:$0xff] %v2146
        %3390 = vst [vmem:[%s365 + $0xd8] sm:$0xff] %v2151
        %3391 = vst [vmem:[%s365 + $0xe0] sm:$0xff] %v2156
        %3392 = vst [vmem:[%s365 + $0xe8] sm:$0xff] %v2161
        %3393 = vst [vmem:[%s365 + $0xf0] sm:$0xff] %v2166
        %3394 = vst [vmem:[%s365 + $0xf8] sm:$0xff] %v2171
        %s3395 = scalar_lea.vmem %s365, 256 [#allocation2]
        %3396 = vst [vmem:[%s3395] sm:$0xff] %v2241
        %3397 = vst [vmem:[%s3395 + $0x8] sm:$0xff] %v2246
        %3398 = vst [vmem:[%s3395 + $0x10] sm:$0xff] %v2251
        %3399 = vst [vmem:[%s3395 + $0x18] sm:$0xff] %v2256
        %3400 = vst [vmem:[%s3395 + $0x20] sm:$0xff] %v2261
        %3401 = vst [vmem:[%s3395 + $0x28] sm:$0xff] %v2266
        %3402 = vst [vmem:[%s3395 + $0x30] sm:$0xff] %v2271
        %3403 = vst [vmem:[%s3395 + $0x38] sm:$0xff] %v2276
        %3404 = vst [vmem:[%s3395 + $0x40] sm:$0xff] %v2281
        %3405 = vst [vmem:[%s3395 + $0x48] sm:$0xff] %v2286
        %3406 = vst [vmem:[%s3395 + $0x50] sm:$0xff] %v2291
        %3407 = vst [vmem:[%s3395 + $0x58] sm:$0xff] %v2296
        %3408 = vst [vmem:[%s3395 + $0x60] sm:$0xff] %v2301
        %3409 = vst [vmem:[%s3395 + $0x68] sm:$0xff] %v2306
        %3410 = vst [vmem:[%s3395 + $0x70] sm:$0xff] %v2311
        %3411 = vst [vmem:[%s3395 + $0x78] sm:$0xff] %v2316
        %3412 = vst [vmem:[%s3395 + $0x80] sm:$0xff] %v2321
        %3413 = vst [vmem:[%s3395 + $0x88] sm:$0xff] %v2326
        %3414 = vst [vmem:[%s3395 + $0x90] sm:$0xff] %v2331
        %3415 = vst [vmem:[%s3395 + $0x98] sm:$0xff] %v2336
        %3416 = vst [vmem:[%s3395 + $0xa0] sm:$0xff] %v2341
        %3417 = vst [vmem:[%s3395 + $0xa8] sm:$0xff] %v2346
        %3418 = vst [vmem:[%s3395 + $0xb0] sm:$0xff] %v2351
        %3419 = vst [vmem:[%s3395 + $0xb8] sm:$0xff] %v2356
        %3420 = vst [vmem:[%s3395 + $0xc0] sm:$0xff] %v2361
        %3421 = vst [vmem:[%s3395 + $0xc8] sm:$0xff] %v2366
        %3422 = vst [vmem:[%s3395 + $0xd0] sm:$0xff] %v2371
        %3423 = vst [vmem:[%s3395 + $0xd8] sm:$0xff] %v2376
        %3424 = vst [vmem:[%s3395 + $0xe0] sm:$0xff] %v2381
        %3425 = vst [vmem:[%s3395 + $0xe8] sm:$0xff] %v2386
        %3426 = vst [vmem:[%s3395 + $0xf0] sm:$0xff] %v2391
        %3427 = vst [vmem:[%s3395 + $0xf8] sm:$0xff] %v2396
        %3428 = vmatprep.subr.mxu0 0.0
        %3429 = vmatpush1.msra.mxu0 %v494
        %3430 = vmatprep.subr.mxu0 0.0
        %3431 = vmatpush1.msra.mxu0 %v495
        %3432 = vmatprep.subr.mxu0 0.0
        %3433 = vmatpush1.msra.mxu0 %v496
        %3434 = vmatprep.subr.mxu0 0.0
        %3435 = vmatpush1.msra.mxu0 %v497
        %3436 = vmatprep.subr.mxu0 0.0
        %3437 = vmatpush1.msra.mxu0 %v498
        %3438 = vmatprep.subr.mxu0 0.0
        %3439 = vmatpush1.msra.mxu0 %v499
        %3440 = vmatprep.subr.mxu0 0.0
        %3441 = vmatpush1.msra.mxu0 %v500
        %3442 = vmatprep.subr.mxu0 0.0
        %3443 = vmatpush1.msra.mxu0 %v501
        %3444 = vmatprep.subr.mxu0 0.0
        %3445 = vmatpush1.msra.mxu0 %v502
        %3446 = vmatprep.subr.mxu0 0.0
        %3447 = vmatpush1.msra.mxu0 %v503
        %3448 = vmatprep.subr.mxu0 0.0
        %3449 = vmatpush1.msra.mxu0 %v504
        %3450 = vmatprep.subr.mxu0 0.0
        %3451 = vmatpush1.msra.mxu0 %v505
        %3452 = vmatprep.subr.mxu0 0.0
        %3453 = vmatpush1.msra.mxu0 %v506
        %3454 = vmatprep.subr.mxu0 0.0
        %3455 = vmatpush1.msra.mxu0 %v507
        %3456 = vmatprep.subr.mxu0 0.0
        %3457 = vmatpush1.msra.mxu0 %v508
        %3458 = vmatprep.subr.mxu0 0.0
        %3459 = vmatpush1.msra.mxu0 %v509
        %3460 = vmatprep.subr.mxu0 0.0
        %3461 = vmatpush1.msra.mxu0 0.0
        %3462 = vmatprep.subr.mxu0 0.0
        %3463 = vmatpush1.msra.mxu0 0.0
        %3464 = vmatprep.subr.mxu0 0.0
        %3465 = vmatpush1.msra.mxu0 0.0
        %3466 = vmatprep.subr.mxu0 0.0
        %3467 = vmatpush1.msra.mxu0 0.0
        %3468 = vmatprep.subr.mxu0 0.0
        %3469 = vmatpush1.msra.mxu0 0.0
        %3470 = vmatprep.subr.mxu0 0.0
        %3471 = vmatpush1.msra.mxu0 0.0
        %3472 = vmatprep.subr.mxu0 0.0
        %3473 = vmatpush1.msra.mxu0 0.0
        %3474 = vmatprep.subr.mxu0 0.0
        %3475 = vmatpush1.msra.mxu0 0.0
        %3476 = vmatprep.subr.mxu0 0.0
        %3477 = vmatpush1.msra.mxu0 0.0
        %3478 = vmatprep.subr.mxu0 0.0
        %3479 = vmatpush1.msra.mxu0 0.0
        %3480 = vmatprep.subr.mxu0 0.0
        %3481 = vmatpush1.msra.mxu0 0.0
        %3482 = vmatprep.subr.mxu0 0.0
        %3483 = vmatpush1.msra.mxu0 0.0
        %3484 = vmatprep.subr.mxu0 0.0
        %3485 = vmatpush1.msra.mxu0 0.0
        %3486 = vmatprep.subr.mxu0 0.0
        %3487 = vmatpush1.msra.mxu0 0.0
        %3488 = vmatprep.subr.mxu0 0.0
        %3489 = vmatpush1.msra.mxu0 0.0
        %3490 = vmatprep.subr.mxu0 0.0
        %3491 = vmatpush1.msra.mxu0 0.0
        %3492 = vmatprep.mubr.f32.mxu0 0.0
        %3493 = vmatmul.mubr.f32.gmra.mrb[0].mxu0 %v1785
        %v3494 = vpop.f32.mrb[0].mxu0
        %v3495 = vadd.f32 %v1947, %v3494
        %v3496 = vpop.f32.mrb[0].mxu0
        %3497 = vmatprep.mubr.f32.mxu0 0.0
        %3498 = vmatmul.mubr.f32.gmra.mrb[0].mxu0 %v1790
        %v3499 = vpop.f32.mrb[0].mxu0
        %v3500 = vadd.f32 %v1947, %v3499
        %v3501 = vpop.f32.mrb[0].mxu0
        %3502 = vmatprep.mubr.f32.mxu0 0.0
        %3503 = vmatmul.mubr.f32.gmra.mrb[0].mxu0 %v1795
        %v3504 = vpop.f32.mrb[0].mxu0
        %v3505 = vadd.f32 %v1947, %v3504
        %v3506 = vpop.f32.mrb[0].mxu0
        %3507 = vmatprep.mubr.f32.mxu0 0.0
        %3508 = vmatmul.mubr.f32.gmra.mrb[0].mxu0 %v1800
        %v3509 = vpop.f32.mrb[0].mxu0
        %v3510 = vadd.f32 %v1947, %v3509
        %v3511 = vpop.f32.mrb[0].mxu0
        %3512 = vmatprep.mubr.f32.mxu0 0.0
        %3513 = vmatmul.mubr.f32.gmra.mrb[0].mxu0 %v1805
        %v3514 = vpop.f32.mrb[0].mxu0
        %v3515 = vadd.f32 %v1947, %v3514
        %v3516 = vpop.f32.mrb[0].mxu0
        %3517 = vmatprep.mubr.f32.mxu0 0.0
        %3518 = vmatmul.mubr.f32.gmra.mrb[0].mxu0 %v1810
        %v3519 = vpop.f32.mrb[0].mxu0
        %v3520 = vadd.f32 %v1947, %v3519
        %v3521 = vpop.f32.mrb[0].mxu0
        %3522 = vmatprep.mubr.f32.mxu0 0.0
        %3523 = vmatmul.mubr.f32.gmra.mrb[0].mxu0 %v1815
        %v3524 = vpop.f32.mrb[0].mxu0
        %v3525 = vadd.f32 %v1947, %v3524
        %v3526 = vpop.f32.mrb[0].mxu0
        %3527 = vmatprep.mubr.f32.mxu0 0.0
        %3528 = vmatmul.mubr.f32.gmra.mrb[0].mxu0 %v1820
        %v3529 = vpop.f32.mrb[0].mxu0
        %v3530 = vadd.f32 %v1947, %v3529
        %v3531 = vpop.f32.mrb[0].mxu0
        %3532 = vmatprep.mubr.f32.mxu0 0.0
        %3533 = vmatmul.mubr.f32.gmra.mrb[0].mxu0 %v1825
        %v3534 = vpop.f32.mrb[0].mxu0
        %v3535 = vadd.f32 %v1947, %v3534
        %v3536 = vpop.f32.mrb[0].mxu0
        %3537 = vmatprep.mubr.f32.mxu0 0.0
        %3538 = vmatmul.mubr.f32.gmra.mrb[0].mxu0 %v1830
        %v3539 = vpop.f32.mrb[0].mxu0
        %v3540 = vadd.f32 %v1947, %v3539
        %v3541 = vpop.f32.mrb[0].mxu0
        %3542 = vmatprep.mubr.f32.mxu0 0.0
        %3543 = vmatmul.mubr.f32.gmra.mrb[0].mxu0 %v1835
        %v3544 = vpop.f32.mrb[0].mxu0
        %v3545 = vadd.f32 %v1947, %v3544
        %v3546 = vpop.f32.mrb[0].mxu0
        %3547 = vmatprep.mubr.f32.mxu0 0.0
        %3548 = vmatmul.mubr.f32.gmra.mrb[0].mxu0 %v1840
        %v3549 = vpop.f32.mrb[0].mxu0
        %v3550 = vadd.f32 %v1947, %v3549
        %v3551 = vpop.f32.mrb[0].mxu0
        %3552 = vmatprep.mubr.f32.mxu0 0.0
        %3553 = vmatmul.mubr.f32.gmra.mrb[0].mxu0 %v1845
        %v3554 = vpop.f32.mrb[0].mxu0
        %v3555 = vadd.f32 %v1947, %v3554
        %v3556 = vpop.f32.mrb[0].mxu0
        %3557 = vmatprep.mubr.f32.mxu0 0.0
        %3558 = vmatmul.mubr.f32.gmra.mrb[0].mxu0 %v1850
        %v3559 = vpop.f32.mrb[0].mxu0
        %v3560 = vadd.f32 %v1947, %v3559
        %v3561 = vpop.f32.mrb[0].mxu0
        %3562 = vmatprep.mubr.f32.mxu0 0.0
        %3563 = vmatmul.mubr.f32.gmra.mrb[0].mxu0 %v1855
        %v3564 = vpop.f32.mrb[0].mxu0
        %v3565 = vadd.f32 %v1947, %v3564
        %v3566 = vpop.f32.mrb[0].mxu0
        %3567 = vmatprep.mubr.f32.mxu0 0.0
        %3568 = vmatmul.mubr.f32.gmra.mrb[0].mxu0 %v1860
        %v3569 = vpop.f32.mrb[0].mxu0
        %v3570 = vadd.f32 %v1947, %v3569
        %v3571 = vpop.f32.mrb[0].mxu0
        %3572 = vmatprep.mubr.f32.mxu0 0.0
        %3573 = vmatmul.mubr.f32.gmra.mrb[0].mxu0 %v1865
        %v3574 = vpop.f32.mrb[0].mxu0
        %v3575 = vadd.f32 %v1947, %v3574
        %v3576 = vpop.f32.mrb[0].mxu0
        %3577 = vmatprep.mubr.f32.mxu0 0.0
        %3578 = vmatmul.mubr.f32.gmra.mrb[0].mxu0 %v1870
        %v3579 = vpop.f32.mrb[0].mxu0
        %v3580 = vadd.f32 %v1947, %v3579
        %v3581 = vpop.f32.mrb[0].mxu0
        %3582 = vmatprep.mubr.f32.mxu0 0.0
        %3583 = vmatmul.mubr.f32.gmra.mrb[0].mxu0 %v1875
        %v3584 = vpop.f32.mrb[0].mxu0
        %v3585 = vadd.f32 %v1947, %v3584
        %v3586 = vpop.f32.mrb[0].mxu0
        %3587 = vmatprep.mubr.f32.mxu0 0.0
        %3588 = vmatmul.mubr.f32.gmra.mrb[0].mxu0 %v1880
        %v3589 = vpop.f32.mrb[0].mxu0
        %v3590 = vadd.f32 %v1947, %v3589
        %v3591 = vpop.f32.mrb[0].mxu0
        %3592 = vmatprep.mubr.f32.mxu0 0.0
        %3593 = vmatmul.mubr.f32.gmra.mrb[0].mxu0 %v1885
        %v3594 = vpop.f32.mrb[0].mxu0
        %v3595 = vadd.f32 %v1947, %v3594
        %v3596 = vpop.f32.mrb[0].mxu0
        %3597 = vmatprep.mubr.f32.mxu0 0.0
        %3598 = vmatmul.mubr.f32.gmra.mrb[0].mxu0 %v1890
        %v3599 = vpop.f32.mrb[0].mxu0
        %v3600 = vadd.f32 %v1947, %v3599
        %v3601 = vpop.f32.mrb[0].mxu0
        %3602 = vmatprep.mubr.f32.mxu0 0.0
        %3603 = vmatmul.mubr.f32.gmra.mrb[0].mxu0 %v1895
        %v3604 = vpop.f32.mrb[0].mxu0
        %v3605 = vadd.f32 %v1947, %v3604
        %v3606 = vpop.f32.mrb[0].mxu0
        %3607 = vmatprep.mubr.f32.mxu0 0.0
        %3608 = vmatmul.mubr.f32.gmra.mrb[0].mxu0 %v1900
        %v3609 = vpop.f32.mrb[0].mxu0
        %v3610 = vadd.f32 %v1947, %v3609
        %v3611 = vpop.f32.mrb[0].mxu0
        %3612 = vmatprep.mubr.f32.mxu0 0.0
        %3613 = vmatmul.mubr.f32.gmra.mrb[0].mxu0 %v1905
        %v3614 = vpop.f32.mrb[0].mxu0
        %v3615 = vadd.f32 %v1947, %v3614
        %v3616 = vpop.f32.mrb[0].mxu0
        %3617 = vmatprep.mubr.f32.mxu0 0.0
        %3618 = vmatmul.mubr.f32.gmra.mrb[0].mxu0 %v1910
        %v3619 = vpop.f32.mrb[0].mxu0
        %v3620 = vadd.f32 %v1947, %v3619
        %v3621 = vpop.f32.mrb[0].mxu0
        %3622 = vmatprep.mubr.f32.mxu0 0.0
        %3623 = vmatmul.mubr.f32.gmra.mrb[0].mxu0 %v1915
        %v3624 = vpop.f32.mrb[0].mxu0
        %v3625 = vadd.f32 %v1947, %v3624
        %v3626 = vpop.f32.mrb[0].mxu0
        %3627 = vmatprep.mubr.f32.mxu0 0.0
        %3628 = vmatmul.mubr.f32.gmra.mrb[0].mxu0 %v1920
        %v3629 = vpop.f32.mrb[0].mxu0
        %v3630 = vadd.f32 %v1947, %v3629
        %v3631 = vpop.f32.mrb[0].mxu0
        %3632 = vmatprep.mubr.f32.mxu0 0.0
        %3633 = vmatmul.mubr.f32.gmra.mrb[0].mxu0 %v1925
        %v3634 = vpop.f32.mrb[0].mxu0
        %v3635 = vadd.f32 %v1947, %v3634
        %v3636 = vpop.f32.mrb[0].mxu0
        %3637 = vmatprep.mubr.f32.mxu0 0.0
        %3638 = vmatmul.mubr.f32.gmra.mrb[0].mxu0 %v1930
        %v3639 = vpop.f32.mrb[0].mxu0
        %v3640 = vadd.f32 %v1947, %v3639
        %v3641 = vpop.f32.mrb[0].mxu0
        %3642 = vmatprep.mubr.f32.mxu0 0.0
        %3643 = vmatmul.mubr.f32.gmra.mrb[0].mxu0 %v1935
        %v3644 = vpop.f32.mrb[0].mxu0
        %v3645 = vadd.f32 %v1947, %v3644
        %v3646 = vpop.f32.mrb[0].mxu0
        %3647 = vmatprep.mubr.f32.mxu0 0.0
        %3648 = vmatmul.mubr.f32.gmra.mrb[0].mxu0 %v1940
        %v3649 = vpop.f32.mrb[0].mxu0
        %v3650 = vadd.f32 %v1947, %v3649
        %v3651 = vpop.f32.mrb[0].mxu0
        %3652 = vdwg.mxu0
        %s3653 = scalar_lea.vmem %s365, 512 [#allocation2]
        %3654 = vst [vmem:[%s3653] sm:$0xff] %v3495
        %3655 = vst [vmem:[%s3653 + $0x8] sm:$0xff] %v3500
        %3656 = vst [vmem:[%s3653 + $0x10] sm:$0xff] %v3505
        %3657 = vst [vmem:[%s3653 + $0x18] sm:$0xff] %v3510
        %3658 = vst [vmem:[%s3653 + $0x20] sm:$0xff] %v3515
        %3659 = vst [vmem:[%s3653 + $0x28] sm:$0xff] %v3520
        %3660 = vst [vmem:[%s3653 + $0x30] sm:$0xff] %v3525
        %3661 = vst [vmem:[%s3653 + $0x38] sm:$0xff] %v3530
        %3662 = vst [vmem:[%s3653 + $0x40] sm:$0xff] %v3535
        %3663 = vst [vmem:[%s3653 + $0x48] sm:$0xff] %v3540
        %3664 = vst [vmem:[%s3653 + $0x50] sm:$0xff] %v3545
        %3665 = vst [vmem:[%s3653 + $0x58] sm:$0xff] %v3550
        %3666 = vst [vmem:[%s3653 + $0x60] sm:$0xff] %v3555
        %3667 = vst [vmem:[%s3653 + $0x68] sm:$0xff] %v3560
        %3668 = vst [vmem:[%s3653 + $0x70] sm:$0xff] %v3565
        %3669 = vst [vmem:[%s3653 + $0x78] sm:$0xff] %v3570
        %3670 = vst [vmem:[%s3653 + $0x80] sm:$0xff] %v3575
        %3671 = vst [vmem:[%s3653 + $0x88] sm:$0xff] %v3580
        %3672 = vst [vmem:[%s3653 + $0x90] sm:$0xff] %v3585
        %3673 = vst [vmem:[%s3653 + $0x98] sm:$0xff] %v3590
        %3674 = vst [vmem:[%s3653 + $0xa0] sm:$0xff] %v3595
        %3675 = vst [vmem:[%s3653 + $0xa8] sm:$0xff] %v3600
        %3676 = vst [vmem:[%s3653 + $0xb0] sm:$0xff] %v3605
        %3677 = vst [vmem:[%s3653 + $0xb8] sm:$0xff] %v3610
        %3678 = vst [vmem:[%s3653 + $0xc0] sm:$0xff] %v3615
        %3679 = vst [vmem:[%s3653 + $0xc8] sm:$0xff] %v3620
        %3680 = vst [vmem:[%s3653 + $0xd0] sm:$0xff] %v3625
        %3681 = vst [vmem:[%s3653 + $0xd8] sm:$0xff] %v3630
        %3682 = vst [vmem:[%s3653 + $0xe0] sm:$0xff] %v3635
        %3683 = vst [vmem:[%s3653 + $0xe8] sm:$0xff] %v3640
        %3684 = vst [vmem:[%s3653 + $0xf0] sm:$0xff] %v3645
        %3685 = vst [vmem:[%s3653 + $0xf8] sm:$0xff] %v3650
        %3686 = vmatprep.subr.mxu0 0.0
        %3687 = vmatpush1.msra.mxu0 %v494
        %3688 = vmatprep.subr.mxu0 0.0
        %3689 = vmatpush1.msra.mxu0 %v495
        %3690 = vmatprep.subr.mxu0 0.0
        %3691 = vmatpush1.msra.mxu0 %v496
        %3692 = vmatprep.subr.mxu0 0.0
        %3693 = vmatpush1.msra.mxu0 %v497
        %3694 = vmatprep.subr.mxu0 0.0
        %3695 = vmatpush1.msra.mxu0 %v498
        %3696 = vmatprep.subr.mxu0 0.0
        %3697 = vmatpush1.msra.mxu0 %v499
        %3698 = vmatprep.subr.mxu0 0.0
        %3699 = vmatpush1.msra.mxu0 %v500
        %3700 = vmatprep.subr.mxu0 0.0
        %3701 = vmatpush1.msra.mxu0 %v501
        %3702 = vmatprep.subr.mxu0 0.0
        %3703 = vmatpush1.msra.mxu0 %v502
        %3704 = vmatprep.subr.mxu0 0.0
        %3705 = vmatpush1.msra.mxu0 %v503
        %3706 = vmatprep.subr.mxu0 0.0
        %3707 = vmatpush1.msra.mxu0 %v504
        %3708 = vmatprep.subr.mxu0 0.0
        %3709 = vmatpush1.msra.mxu0 %v505
        %3710 = vmatprep.subr.mxu0 0.0
        %3711 = vmatpush1.msra.mxu0 %v506
        %3712 = vmatprep.subr.mxu0 0.0
        %3713 = vmatpush1.msra.mxu0 %v507
        %3714 = vmatprep.subr.mxu0 0.0
        %3715 = vmatpush1.msra.mxu0 %v508
        %3716 = vmatprep.subr.mxu0 0.0
        %3717 = vmatpush1.msra.mxu0 %v509
        %3718 = vmatprep.subr.mxu0 0.0
        %3719 = vmatpush1.msra.mxu0 0.0
        %3720 = vmatprep.subr.mxu0 0.0
        %3721 = vmatpush1.msra.mxu0 0.0
        %3722 = vmatprep.subr.mxu0 0.0
        %3723 = vmatpush1.msra.mxu0 0.0
        %3724 = vmatprep.subr.mxu0 0.0
        %3725 = vmatpush1.msra.mxu0 0.0
        %3726 = vmatprep.subr.mxu0 0.0
        %3727 = vmatpush1.msra.mxu0 0.0
        %3728 = vmatprep.subr.mxu0 0.0
        %3729 = vmatpush1.msra.mxu0 0.0
        %3730 = vmatprep.subr.mxu0 0.0
        %3731 = vmatpush1.msra.mxu0 0.0
        %3732 = vmatprep.subr.mxu0 0.0
        %3733 = vmatpush1.msra.mxu0 0.0
        %3734 = vmatprep.subr.mxu0 0.0
        %3735 = vmatpush1.msra.mxu0 0.0
        %3736 = vmatprep.subr.mxu0 0.0
        %3737 = vmatpush1.msra.mxu0 0.0
        %3738 = vmatprep.subr.mxu0 0.0
        %3739 = vmatpush1.msra.mxu0 0.0
        %3740 = vmatprep.subr.mxu0 0.0
        %3741 = vmatpush1.msra.mxu0 0.0
        %3742 = vmatprep.subr.mxu0 0.0
        %3743 = vmatpush1.msra.mxu0 0.0
        %3744 = vmatprep.subr.mxu0 0.0
        %3745 = vmatpush1.msra.mxu0 0.0
        %3746 = vmatprep.subr.mxu0 0.0
        %3747 = vmatpush1.msra.mxu0 0.0
        %3748 = vmatprep.subr.mxu0 0.0
        %3749 = vmatpush1.msra.mxu0 0.0
        %3750 = vmatprep.mubr.f32.mxu0 0.0
        %3751 = vmatmul.mubr.f32.gmra.mrb[0].mxu0 %v1560
        %v3752 = vpop.f32.mrb[0].mxu0
        %v3753 = vadd.f32 %v1947, %v3752
        %v3754 = vpop.f32.mrb[0].mxu0
        %3755 = vmatprep.mubr.f32.mxu0 0.0
        %3756 = vmatmul.mubr.f32.gmra.mrb[0].mxu0 %v1565
        %v3757 = vpop.f32.mrb[0].mxu0
        %v3758 = vadd.f32 %v1947, %v3757
        %v3759 = vpop.f32.mrb[0].mxu0
        %3760 = vmatprep.mubr.f32.mxu0 0.0
        %3761 = vmatmul.mubr.f32.gmra.mrb[0].mxu0 %v1570
        %v3762 = vpop.f32.mrb[0].mxu0
        %v3763 = vadd.f32 %v1947, %v3762
        %v3764 = vpop.f32.mrb[0].mxu0
        %3765 = vmatprep.mubr.f32.mxu0 0.0
        %3766 = vmatmul.mubr.f32.gmra.mrb[0].mxu0 %v1575
        %v3767 = vpop.f32.mrb[0].mxu0
        %v3768 = vadd.f32 %v1947, %v3767
        %v3769 = vpop.f32.mrb[0].mxu0
        %3770 = vmatprep.mubr.f32.mxu0 0.0
        %3771 = vmatmul.mubr.f32.gmra.mrb[0].mxu0 %v1580
        %v3772 = vpop.f32.mrb[0].mxu0
        %v3773 = vadd.f32 %v1947, %v3772
        %v3774 = vpop.f32.mrb[0].mxu0
        %3775 = vmatprep.mubr.f32.mxu0 0.0
        %3776 = vmatmul.mubr.f32.gmra.mrb[0].mxu0 %v1585
        %v3777 = vpop.f32.mrb[0].mxu0
        %v3778 = vadd.f32 %v1947, %v3777
        %v3779 = vpop.f32.mrb[0].mxu0
        %3780 = vmatprep.mubr.f32.mxu0 0.0
        %3781 = vmatmul.mubr.f32.gmra.mrb[0].mxu0 %v1590
        %v3782 = vpop.f32.mrb[0].mxu0
        %v3783 = vadd.f32 %v1947, %v3782
        %v3784 = vpop.f32.mrb[0].mxu0
        %3785 = vmatprep.mubr.f32.mxu0 0.0
        %3786 = vmatmul.mubr.f32.gmra.mrb[0].mxu0 %v1595
        %v3787 = vpop.f32.mrb[0].mxu0
        %v3788 = vadd.f32 %v1947, %v3787
        %v3789 = vpop.f32.mrb[0].mxu0
        %3790 = vmatprep.mubr.f32.mxu0 0.0
        %3791 = vmatmul.mubr.f32.gmra.mrb[0].mxu0 %v1600
        %v3792 = vpop.f32.mrb[0].mxu0
        %v3793 = vadd.f32 %v1947, %v3792
        %v3794 = vpop.f32.mrb[0].mxu0
        %3795 = vmatprep.mubr.f32.mxu0 0.0
        %3796 = vmatmul.mubr.f32.gmra.mrb[0].mxu0 %v1605
        %v3797 = vpop.f32.mrb[0].mxu0
        %v3798 = vadd.f32 %v1947, %v3797
        %v3799 = vpop.f32.mrb[0].mxu0
        %3800 = vmatprep.mubr.f32.mxu0 0.0
        %3801 = vmatmul.mubr.f32.gmra.mrb[0].mxu0 %v1610
        %v3802 = vpop.f32.mrb[0].mxu0
        %v3803 = vadd.f32 %v1947, %v3802
        %v3804 = vpop.f32.mrb[0].mxu0
        %3805 = vmatprep.mubr.f32.mxu0 0.0
        %3806 = vmatmul.mubr.f32.gmra.mrb[0].mxu0 %v1615
        %v3807 = vpop.f32.mrb[0].mxu0
        %v3808 = vadd.f32 %v1947, %v3807
        %v3809 = vpop.f32.mrb[0].mxu0
        %3810 = vmatprep.mubr.f32.mxu0 0.0
        %3811 = vmatmul.mubr.f32.gmra.mrb[0].mxu0 %v1620
        %v3812 = vpop.f32.mrb[0].mxu0
        %v3813 = vadd.f32 %v1947, %v3812
        %v3814 = vpop.f32.mrb[0].mxu0
        %3815 = vmatprep.mubr.f32.mxu0 0.0
        %3816 = vmatmul.mubr.f32.gmra.mrb[0].mxu0 %v1625
        %v3817 = vpop.f32.mrb[0].mxu0
        %v3818 = vadd.f32 %v1947, %v3817
        %v3819 = vpop.f32.mrb[0].mxu0
        %3820 = vmatprep.mubr.f32.mxu0 0.0
        %3821 = vmatmul.mubr.f32.gmra.mrb[0].mxu0 %v1630
        %v3822 = vpop.f32.mrb[0].mxu0
        %v3823 = vadd.f32 %v1947, %v3822
        %v3824 = vpop.f32.mrb[0].mxu0
        %3825 = vmatprep.mubr.f32.mxu0 0.0
        %3826 = vmatmul.mubr.f32.gmra.mrb[0].mxu0 %v1635
        %v3827 = vpop.f32.mrb[0].mxu0
        %v3828 = vadd.f32 %v1947, %v3827
        %v3829 = vpop.f32.mrb[0].mxu0
        %3830 = vmatprep.mubr.f32.mxu0 0.0
        %3831 = vmatmul.mubr.f32.gmra.mrb[0].mxu0 %v1640
        %v3832 = vpop.f32.mrb[0].mxu0
        %v3833 = vadd.f32 %v1947, %v3832
        %v3834 = vpop.f32.mrb[0].mxu0
        %3835 = vmatprep.mubr.f32.mxu0 0.0
        %3836 = vmatmul.mubr.f32.gmra.mrb[0].mxu0 %v1645
        %v3837 = vpop.f32.mrb[0].mxu0
        %v3838 = vadd.f32 %v1947, %v3837
        %v3839 = vpop.f32.mrb[0].mxu0
        %3840 = vmatprep.mubr.f32.mxu0 0.0
        %3841 = vmatmul.mubr.f32.gmra.mrb[0].mxu0 %v1650
        %v3842 = vpop.f32.mrb[0].mxu0
        %v3843 = vadd.f32 %v1947, %v3842
        %v3844 = vpop.f32.mrb[0].mxu0
        %3845 = vmatprep.mubr.f32.mxu0 0.0
        %3846 = vmatmul.mubr.f32.gmra.mrb[0].mxu0 %v1655
        %v3847 = vpop.f32.mrb[0].mxu0
        %v3848 = vadd.f32 %v1947, %v3847
        %v3849 = vpop.f32.mrb[0].mxu0
        %3850 = vmatprep.mubr.f32.mxu0 0.0
        %3851 = vmatmul.mubr.f32.gmra.mrb[0].mxu0 %v1660
        %v3852 = vpop.f32.mrb[0].mxu0
        %v3853 = vadd.f32 %v1947, %v3852
        %v3854 = vpop.f32.mrb[0].mxu0
        %3855 = vmatprep.mubr.f32.mxu0 0.0
        %3856 = vmatmul.mubr.f32.gmra.mrb[0].mxu0 %v1665
        %v3857 = vpop.f32.mrb[0].mxu0
        %v3858 = vadd.f32 %v1947, %v3857
        %v3859 = vpop.f32.mrb[0].mxu0
        %3860 = vmatprep.mubr.f32.mxu0 0.0
        %3861 = vmatmul.mubr.f32.gmra.mrb[0].mxu0 %v1670
        %v3862 = vpop.f32.mrb[0].mxu0
        %v3863 = vadd.f32 %v1947, %v3862
        %v3864 = vpop.f32.mrb[0].mxu0
        %3865 = vmatprep.mubr.f32.mxu0 0.0
        %3866 = vmatmul.mubr.f32.gmra.mrb[0].mxu0 %v1675
        %v3867 = vpop.f32.mrb[0].mxu0
        %v3868 = vadd.f32 %v1947, %v3867
        %v3869 = vpop.f32.mrb[0].mxu0
        %3870 = vmatprep.mubr.f32.mxu0 0.0
        %3871 = vmatmul.mubr.f32.gmra.mrb[0].mxu0 %v1680
        %v3872 = vpop.f32.mrb[0].mxu0
        %v3873 = vadd.f32 %v1947, %v3872
        %v3874 = vpop.f32.mrb[0].mxu0
        %3875 = vmatprep.mubr.f32.mxu0 0.0
        %3876 = vmatmul.mubr.f32.gmra.mrb[0].mxu0 %v1685
        %v3877 = vpop.f32.mrb[0].mxu0
        %v3878 = vadd.f32 %v1947, %v3877
        %v3879 = vpop.f32.mrb[0].mxu0
        %3880 = vmatprep.mubr.f32.mxu0 0.0
        %3881 = vmatmul.mubr.f32.gmra.mrb[0].mxu0 %v1690
        %v3882 = vpop.f32.mrb[0].mxu0
        %v3883 = vadd.f32 %v1947, %v3882
        %v3884 = vpop.f32.mrb[0].mxu0
        %3885 = vmatprep.mubr.f32.mxu0 0.0
        %3886 = vmatmul.mubr.f32.gmra.mrb[0].mxu0 %v1695
        %v3887 = vpop.f32.mrb[0].mxu0
        %v3888 = vadd.f32 %v1947, %v3887
        %v3889 = vpop.f32.mrb[0].mxu0
        %3890 = vmatprep.mubr.f32.mxu0 0.0
        %3891 = vmatmul.mubr.f32.gmra.mrb[0].mxu0 %v1700
        %v3892 = vpop.f32.mrb[0].mxu0
        %v3893 = vadd.f32 %v1947, %v3892
        %v3894 = vpop.f32.mrb[0].mxu0
        %3895 = vmatprep.mubr.f32.mxu0 0.0
        %3896 = vmatmul.mubr.f32.gmra.mrb[0].mxu0 %v1705
        %v3897 = vpop.f32.mrb[0].mxu0
        %v3898 = vadd.f32 %v1947, %v3897
        %v3899 = vpop.f32.mrb[0].mxu0
        %3900 = vmatprep.mubr.f32.mxu0 0.0
        %3901 = vmatmul.mubr.f32.gmra.mrb[0].mxu0 %v1710
        %v3902 = vpop.f32.mrb[0].mxu0
        %v3903 = vadd.f32 %v1947, %v3902
        %v3904 = vpop.f32.mrb[0].mxu0
        %3905 = vmatprep.mubr.f32.mxu0 0.0
        %3906 = vmatmul.mubr.f32.gmra.mrb[0].mxu0 %v1715
        %v3907 = vpop.f32.mrb[0].mxu0
        %v3908 = vadd.f32 %v1947, %v3907
        %v3909 = vpop.f32.mrb[0].mxu0
        %3910 = vdwg.mxu0
        %s3911 = scalar_lea.vmem %s365, 768 [#allocation2]
        %3912 = vst [vmem:[%s3911] sm:$0xff] %v3753
        %3913 = vst [vmem:[%s3911 + $0x8] sm:$0xff] %v3758
        %3914 = vst [vmem:[%s3911 + $0x10] sm:$0xff] %v3763
        %3915 = vst [vmem:[%s3911 + $0x18] sm:$0xff] %v3768
        %3916 = vst [vmem:[%s3911 + $0x20] sm:$0xff] %v3773
        %3917 = vst [vmem:[%s3911 + $0x28] sm:$0xff] %v3778
        %3918 = vst [vmem:[%s3911 + $0x30] sm:$0xff] %v3783
        %3919 = vst [vmem:[%s3911 + $0x38] sm:$0xff] %v3788
        %3920 = vst [vmem:[%s3911 + $0x40] sm:$0xff] %v3793
        %3921 = vst [vmem:[%s3911 + $0x48] sm:$0xff] %v3798
        %3922 = vst [vmem:[%s3911 + $0x50] sm:$0xff] %v3803
        %3923 = vst [vmem:[%s3911 + $0x58] sm:$0xff] %v3808
        %3924 = vst [vmem:[%s3911 + $0x60] sm:$0xff] %v3813
        %3925 = vst [vmem:[%s3911 + $0x68] sm:$0xff] %v3818
        %3926 = vst [vmem:[%s3911 + $0x70] sm:$0xff] %v3823
        %3927 = vst [vmem:[%s3911 + $0x78] sm:$0xff] %v3828
        %3928 = vst [vmem:[%s3911 + $0x80] sm:$0xff] %v3833
        %3929 = vst [vmem:[%s3911 + $0x88] sm:$0xff] %v3838
        %3930 = vst [vmem:[%s3911 + $0x90] sm:$0xff] %v3843
        %3931 = vst [vmem:[%s3911 + $0x98] sm:$0xff] %v3848
        %3932 = vst [vmem:[%s3911 + $0xa0] sm:$0xff] %v3853
        %3933 = vst [vmem:[%s3911 + $0xa8] sm:$0xff] %v3858
        %3934 = vst [vmem:[%s3911 + $0xb0] sm:$0xff] %v3863
        %3935 = vst [vmem:[%s3911 + $0xb8] sm:$0xff] %v3868
        %3936 = vst [vmem:[%s3911 + $0xc0] sm:$0xff] %v3873
        %3937 = vst [vmem:[%s3911 + $0xc8] sm:$0xff] %v3878
        %3938 = vst [vmem:[%s3911 + $0xd0] sm:$0xff] %v3883
        %3939 = vst [vmem:[%s3911 + $0xd8] sm:$0xff] %v3888
        %3940 = vst [vmem:[%s3911 + $0xe0] sm:$0xff] %v3893
        %3941 = vst [vmem:[%s3911 + $0xe8] sm:$0xff] %v3898
        %3942 = vst [vmem:[%s3911 + $0xf0] sm:$0xff] %v3903
        %3943 = vst [vmem:[%s3911 + $0xf8] sm:$0xff] %v3908
        %3944 = vmatprep.subr.mxu0 0.0
        %3945 = vmatpush1.msra.mxu0 %v494
        %3946 = vmatprep.subr.mxu0 0.0
        %3947 = vmatpush1.msra.mxu0 %v495
        %3948 = vmatprep.subr.mxu0 0.0
        %3949 = vmatpush1.msra.mxu0 %v496
        %3950 = vmatprep.subr.mxu0 0.0
        %3951 = vmatpush1.msra.mxu0 %v497
        %3952 = vmatprep.subr.mxu0 0.0
        %3953 = vmatpush1.msra.mxu0 %v498
        %3954 = vmatprep.subr.mxu0 0.0
        %3955 = vmatpush1.msra.mxu0 %v499
        %3956 = vmatprep.subr.mxu0 0.0
        %3957 = vmatpush1.msra.mxu0 %v500
        %3958 = vmatprep.subr.mxu0 0.0
        %3959 = vmatpush1.msra.mxu0 %v501
        %3960 = vmatprep.subr.mxu0 0.0
        %3961 = vmatpush1.msra.mxu0 %v502
        %3962 = vmatprep.subr.mxu0 0.0
        %3963 = vmatpush1.msra.mxu0 %v503
        %3964 = vmatprep.subr.mxu0 0.0
        %3965 = vmatpush1.msra.mxu0 %v504
        %3966 = vmatprep.subr.mxu0 0.0
        %3967 = vmatpush1.msra.mxu0 %v505
        %3968 = vmatprep.subr.mxu0 0.0
        %3969 = vmatpush1.msra.mxu0 %v506
        %3970 = vmatprep.subr.mxu0 0.0
        %3971 = vmatpush1.msra.mxu0 %v507
        %3972 = vmatprep.subr.mxu0 0.0
        %3973 = vmatpush1.msra.mxu0 %v508
        %3974 = vmatprep.subr.mxu0 0.0
        %3975 = vmatpush1.msra.mxu0 %v509
        %3976 = vmatprep.subr.mxu0 0.0
        %3977 = vmatpush1.msra.mxu0 0.0
        %3978 = vmatprep.subr.mxu0 0.0
        %3979 = vmatpush1.msra.mxu0 0.0
        %3980 = vmatprep.subr.mxu0 0.0
        %3981 = vmatpush1.msra.mxu0 0.0
        %3982 = vmatprep.subr.mxu0 0.0
        %3983 = vmatpush1.msra.mxu0 0.0
        %3984 = vmatprep.subr.mxu0 0.0
        %3985 = vmatpush1.msra.mxu0 0.0
        %3986 = vmatprep.subr.mxu0 0.0
        %3987 = vmatpush1.msra.mxu0 0.0
        %3988 = vmatprep.subr.mxu0 0.0
        %3989 = vmatpush1.msra.mxu0 0.0
        %3990 = vmatprep.subr.mxu0 0.0
        %3991 = vmatpush1.msra.mxu0 0.0
        %3992 = vmatprep.subr.mxu0 0.0
        %3993 = vmatpush1.msra.mxu0 0.0
        %3994 = vmatprep.subr.mxu0 0.0
        %3995 = vmatpush1.msra.mxu0 0.0
        %3996 = vmatprep.subr.mxu0 0.0
        %3997 = vmatpush1.msra.mxu0 0.0
        %3998 = vmatprep.subr.mxu0 0.0
        %3999 = vmatpush1.msra.mxu0 0.0
        %4000 = vmatprep.subr.mxu0 0.0
        %4001 = vmatpush1.msra.mxu0 0.0
        %4002 = vmatprep.subr.mxu0 0.0
        %4003 = vmatpush1.msra.mxu0 0.0
        %4004 = vmatprep.subr.mxu0 0.0
        %4005 = vmatpush1.msra.mxu0 0.0
        %4006 = vmatprep.subr.mxu0 0.0
        %4007 = vmatpush1.msra.mxu0 0.0
        %4008 = vmatprep.mubr.f32.mxu0 0.0
        %4009 = vmatmul.mubr.f32.gmra.mrb[0].mxu0 %v2980
        %v4010 = vpop.f32.mrb[0].mxu0
        %v4011 = vadd.f32 %v1947, %v4010
        %v4012 = vpop.f32.mrb[0].mxu0
        %4013 = vmatprep.mubr.f32.mxu0 0.0
        %4014 = vmatmul.mubr.f32.gmra.mrb[0].mxu0 %v2985
        %v4015 = vpop.f32.mrb[0].mxu0
        %v4016 = vadd.f32 %v1947, %v4015
        %v4017 = vpop.f32.mrb[0].mxu0
        %4018 = vmatprep.mubr.f32.mxu0 0.0
        %4019 = vmatmul.mubr.f32.gmra.mrb[0].mxu0 %v2990
        %v4020 = vpop.f32.mrb[0].mxu0
        %v4021 = vadd.f32 %v1947, %v4020
        %v4022 = vpop.f32.mrb[0].mxu0
        %4023 = vmatprep.mubr.f32.mxu0 0.0
        %4024 = vmatmul.mubr.f32.gmra.mrb[0].mxu0 %v2995
        %v4025 = vpop.f32.mrb[0].mxu0
        %v4026 = vadd.f32 %v1947, %v4025
        %v4027 = vpop.f32.mrb[0].mxu0
        %4028 = vmatprep.mubr.f32.mxu0 0.0
        %4029 = vmatmul.mubr.f32.gmra.mrb[0].mxu0 %v3000
        %v4030 = vpop.f32.mrb[0].mxu0
        %v4031 = vadd.f32 %v1947, %v4030
        %v4032 = vpop.f32.mrb[0].mxu0
        %4033 = vmatprep.mubr.f32.mxu0 0.0
        %4034 = vmatmul.mubr.f32.gmra.mrb[0].mxu0 %v3005
        %v4035 = vpop.f32.mrb[0].mxu0
        %v4036 = vadd.f32 %v1947, %v4035
        %v4037 = vpop.f32.mrb[0].mxu0
        %4038 = vmatprep.mubr.f32.mxu0 0.0
        %4039 = vmatmul.mubr.f32.gmra.mrb[0].mxu0 %v3010
        %v4040 = vpop.f32.mrb[0].mxu0
        %v4041 = vadd.f32 %v1947, %v4040
        %v4042 = vpop.f32.mrb[0].mxu0
        %4043 = vmatprep.mubr.f32.mxu0 0.0
        %4044 = vmatmul.mubr.f32.gmra.mrb[0].mxu0 %v3015
        %v4045 = vpop.f32.mrb[0].mxu0
        %v4046 = vadd.f32 %v1947, %v4045
        %v4047 = vpop.f32.mrb[0].mxu0
        %4048 = vmatprep.mubr.f32.mxu0 0.0
        %4049 = vmatmul.mubr.f32.gmra.mrb[0].mxu0 %v3020
        %v4050 = vpop.f32.mrb[0].mxu0
        %v4051 = vadd.f32 %v1947, %v4050
        %v4052 = vpop.f32.mrb[0].mxu0
        %4053 = vmatprep.mubr.f32.mxu0 0.0
        %4054 = vmatmul.mubr.f32.gmra.mrb[0].mxu0 %v3025
        %v4055 = vpop.f32.mrb[0].mxu0
        %v4056 = vadd.f32 %v1947, %v4055
        %v4057 = vpop.f32.mrb[0].mxu0
        %4058 = vmatprep.mubr.f32.mxu0 0.0
        %4059 = vmatmul.mubr.f32.gmra.mrb[0].mxu0 %v3030
        %v4060 = vpop.f32.mrb[0].mxu0
        %v4061 = vadd.f32 %v1947, %v4060
        %v4062 = vpop.f32.mrb[0].mxu0
        %4063 = vmatprep.mubr.f32.mxu0 0.0
        %4064 = vmatmul.mubr.f32.gmra.mrb[0].mxu0 %v3035
        %v4065 = vpop.f32.mrb[0].mxu0
        %v4066 = vadd.f32 %v1947, %v4065
        %v4067 = vpop.f32.mrb[0].mxu0
        %4068 = vmatprep.mubr.f32.mxu0 0.0
        %4069 = vmatmul.mubr.f32.gmra.mrb[0].mxu0 %v3040
        %v4070 = vpop.f32.mrb[0].mxu0
        %v4071 = vadd.f32 %v1947, %v4070
        %v4072 = vpop.f32.mrb[0].mxu0
        %4073 = vmatprep.mubr.f32.mxu0 0.0
        %4074 = vmatmul.mubr.f32.gmra.mrb[0].mxu0 %v3045
        %v4075 = vpop.f32.mrb[0].mxu0
        %v4076 = vadd.f32 %v1947, %v4075
        %v4077 = vpop.f32.mrb[0].mxu0
        %4078 = vmatprep.mubr.f32.mxu0 0.0
        %4079 = vmatmul.mubr.f32.gmra.mrb[0].mxu0 %v3050
        %v4080 = vpop.f32.mrb[0].mxu0
        %v4081 = vadd.f32 %v1947, %v4080
        %v4082 = vpop.f32.mrb[0].mxu0
        %4083 = vmatprep.mubr.f32.mxu0 0.0
        %4084 = vmatmul.mubr.f32.gmra.mrb[0].mxu0 %v3055
        %v4085 = vpop.f32.mrb[0].mxu0
        %v4086 = vadd.f32 %v1947, %v4085
        %v4087 = vpop.f32.mrb[0].mxu0
        %4088 = vmatprep.mubr.f32.mxu0 0.0
        %4089 = vmatmul.mubr.f32.gmra.mrb[0].mxu0 %v3060
        %v4090 = vpop.f32.mrb[0].mxu0
        %v4091 = vadd.f32 %v1947, %v4090
        %v4092 = vpop.f32.mrb[0].mxu0
        %4093 = vmatprep.mubr.f32.mxu0 0.0
        %4094 = vmatmul.mubr.f32.gmra.mrb[0].mxu0 %v3065
        %v4095 = vpop.f32.mrb[0].mxu0
        %v4096 = vadd.f32 %v1947, %v4095
        %v4097 = vpop.f32.mrb[0].mxu0
        %4098 = vmatprep.mubr.f32.mxu0 0.0
        %4099 = vmatmul.mubr.f32.gmra.mrb[0].mxu0 %v3070
        %v4100 = vpop.f32.mrb[0].mxu0
        %v4101 = vadd.f32 %v1947, %v4100
        %v4102 = vpop.f32.mrb[0].mxu0
        %4103 = vmatprep.mubr.f32.mxu0 0.0
        %4104 = vmatmul.mubr.f32.gmra.mrb[0].mxu0 %v3075
        %v4105 = vpop.f32.mrb[0].mxu0
        %v4106 = vadd.f32 %v1947, %v4105
        %v4107 = vpop.f32.mrb[0].mxu0
        %4108 = vmatprep.mubr.f32.mxu0 0.0
        %4109 = vmatmul.mubr.f32.gmra.mrb[0].mxu0 %v3080
        %v4110 = vpop.f32.mrb[0].mxu0
        %v4111 = vadd.f32 %v1947, %v4110
        %v4112 = vpop.f32.mrb[0].mxu0
        %4113 = vmatprep.mubr.f32.mxu0 0.0
        %4114 = vmatmul.mubr.f32.gmra.mrb[0].mxu0 %v3085
        %v4115 = vpop.f32.mrb[0].mxu0
        %v4116 = vadd.f32 %v1947, %v4115
        %v4117 = vpop.f32.mrb[0].mxu0
        %4118 = vmatprep.mubr.f32.mxu0 0.0
        %4119 = vmatmul.mubr.f32.gmra.mrb[0].mxu0 %v3090
        %v4120 = vpop.f32.mrb[0].mxu0
        %v4121 = vadd.f32 %v1947, %v4120
        %v4122 = vpop.f32.mrb[0].mxu0
        %4123 = vmatprep.mubr.f32.mxu0 0.0
        %4124 = vmatmul.mubr.f32.gmra.mrb[0].mxu0 %v3095
        %v4125 = vpop.f32.mrb[0].mxu0
        %v4126 = vadd.f32 %v1947, %v4125
        %v4127 = vpop.f32.mrb[0].mxu0
        %4128 = vmatprep.mubr.f32.mxu0 0.0
        %4129 = vmatmul.mubr.f32.gmra.mrb[0].mxu0 %v3100
        %v4130 = vpop.f32.mrb[0].mxu0
        %v4131 = vadd.f32 %v1947, %v4130
        %v4132 = vpop.f32.mrb[0].mxu0
        %4133 = vmatprep.mubr.f32.mxu0 0.0
        %4134 = vmatmul.mubr.f32.gmra.mrb[0].mxu0 %v3105
        %v4135 = vpop.f32.mrb[0].mxu0
        %v4136 = vadd.f32 %v1947, %v4135
        %v4137 = vpop.f32.mrb[0].mxu0
        %4138 = vmatprep.mubr.f32.mxu0 0.0
        %4139 = vmatmul.mubr.f32.gmra.mrb[0].mxu0 %v3110
        %v4140 = vpop.f32.mrb[0].mxu0
        %v4141 = vadd.f32 %v1947, %v4140
        %v4142 = vpop.f32.mrb[0].mxu0
        %4143 = vmatprep.mubr.f32.mxu0 0.0
        %4144 = vmatmul.mubr.f32.gmra.mrb[0].mxu0 %v3115
        %v4145 = vpop.f32.mrb[0].mxu0
        %v4146 = vadd.f32 %v1947, %v4145
        %v4147 = vpop.f32.mrb[0].mxu0
        %4148 = vmatprep.mubr.f32.mxu0 0.0
        %4149 = vmatmul.mubr.f32.gmra.mrb[0].mxu0 %v3120
        %v4150 = vpop.f32.mrb[0].mxu0
        %v4151 = vadd.f32 %v1947, %v4150
        %v4152 = vpop.f32.mrb[0].mxu0
        %4153 = vmatprep.mubr.f32.mxu0 0.0
        %4154 = vmatmul.mubr.f32.gmra.mrb[0].mxu0 %v3125
        %v4155 = vpop.f32.mrb[0].mxu0
        %v4156 = vadd.f32 %v1947, %v4155
        %v4157 = vpop.f32.mrb[0].mxu0
        %4158 = vmatprep.mubr.f32.mxu0 0.0
        %4159 = vmatmul.mubr.f32.gmra.mrb[0].mxu0 %v3130
        %v4160 = vpop.f32.mrb[0].mxu0
        %v4161 = vadd.f32 %v1947, %v4160
        %v4162 = vpop.f32.mrb[0].mxu0
        %4163 = vmatprep.mubr.f32.mxu0 0.0
        %4164 = vmatmul.mubr.f32.gmra.mrb[0].mxu0 %v3135
        %v4165 = vpop.f32.mrb[0].mxu0
        %v4166 = vadd.f32 %v1947, %v4165
        %v4167 = vpop.f32.mrb[0].mxu0
        %4168 = vdwg.mxu0
        %s4169 = scalar_lea.vmem %s365, 1024 [#allocation2]
        %4170 = vst [vmem:[%s4169] sm:$0xff] %v4011
        %4171 = vst [vmem:[%s4169 + $0x8] sm:$0xff] %v4016
        %4172 = vst [vmem:[%s4169 + $0x10] sm:$0xff] %v4021
        %4173 = vst [vmem:[%s4169 + $0x18] sm:$0xff] %v4026
        %4174 = vst [vmem:[%s4169 + $0x20] sm:$0xff] %v4031
        %4175 = vst [vmem:[%s4169 + $0x28] sm:$0xff] %v4036
        %4176 = vst [vmem:[%s4169 + $0x30] sm:$0xff] %v4041
        %4177 = vst [vmem:[%s4169 + $0x38] sm:$0xff] %v4046
        %4178 = vst [vmem:[%s4169 + $0x40] sm:$0xff] %v4051
        %4179 = vst [vmem:[%s4169 + $0x48] sm:$0xff] %v4056
        %4180 = vst [vmem:[%s4169 + $0x50] sm:$0xff] %v4061
        %4181 = vst [vmem:[%s4169 + $0x58] sm:$0xff] %v4066
        %4182 = vst [vmem:[%s4169 + $0x60] sm:$0xff] %v4071
        %4183 = vst [vmem:[%s4169 + $0x68] sm:$0xff] %v4076
        %4184 = vst [vmem:[%s4169 + $0x70] sm:$0xff] %v4081
        %4185 = vst [vmem:[%s4169 + $0x78] sm:$0xff] %v4086
        %4186 = vst [vmem:[%s4169 + $0x80] sm:$0xff] %v4091
        %4187 = vst [vmem:[%s4169 + $0x88] sm:$0xff] %v4096
        %4188 = vst [vmem:[%s4169 + $0x90] sm:$0xff] %v4101
        %4189 = vst [vmem:[%s4169 + $0x98] sm:$0xff] %v4106
        %4190 = vst [vmem:[%s4169 + $0xa0] sm:$0xff] %v4111
        %4191 = vst [vmem:[%s4169 + $0xa8] sm:$0xff] %v4116
        %4192 = vst [vmem:[%s4169 + $0xb0] sm:$0xff] %v4121
        %4193 = vst [vmem:[%s4169 + $0xb8] sm:$0xff] %v4126
        %4194 = vst [vmem:[%s4169 + $0xc0] sm:$0xff] %v4131
        %4195 = vst [vmem:[%s4169 + $0xc8] sm:$0xff] %v4136
        %4196 = vst [vmem:[%s4169 + $0xd0] sm:$0xff] %v4141
        %4197 = vst [vmem:[%s4169 + $0xd8] sm:$0xff] %v4146
        %4198 = vst [vmem:[%s4169 + $0xe0] sm:$0xff] %v4151
        %4199 = vst [vmem:[%s4169 + $0xe8] sm:$0xff] %v4156
        %4200 = vst [vmem:[%s4169 + $0xf0] sm:$0xff] %v4161
        %4201 = vst [vmem:[%s4169 + $0xf8] sm:$0xff] %v4166
        %4202 = vmatprep.subr.mxu0 0.0
        %4203 = vmatpush1.msra.mxu0 %v494
        %4204 = vmatprep.subr.mxu0 0.0
        %4205 = vmatpush1.msra.mxu0 %v495
        %4206 = vmatprep.subr.mxu0 0.0
        %4207 = vmatpush1.msra.mxu0 %v496
        %4208 = vmatprep.subr.mxu0 0.0
        %4209 = vmatpush1.msra.mxu0 %v497
        %4210 = vmatprep.subr.mxu0 0.0
        %4211 = vmatpush1.msra.mxu0 %v498
        %4212 = vmatprep.subr.mxu0 0.0
        %4213 = vmatpush1.msra.mxu0 %v499
        %4214 = vmatprep.subr.mxu0 0.0
        %4215 = vmatpush1.msra.mxu0 %v500
        %4216 = vmatprep.subr.mxu0 0.0
        %4217 = vmatpush1.msra.mxu0 %v501
        %4218 = vmatprep.subr.mxu0 0.0
        %4219 = vmatpush1.msra.mxu0 %v502
        %4220 = vmatprep.subr.mxu0 0.0
        %4221 = vmatpush1.msra.mxu0 %v503
        %4222 = vmatprep.subr.mxu0 0.0
        %4223 = vmatpush1.msra.mxu0 %v504
        %4224 = vmatprep.subr.mxu0 0.0
        %4225 = vmatpush1.msra.mxu0 %v505
        %4226 = vmatprep.subr.mxu0 0.0
        %4227 = vmatpush1.msra.mxu0 %v506
        %4228 = vmatprep.subr.mxu0 0.0
        %4229 = vmatpush1.msra.mxu0 %v507
        %4230 = vmatprep.subr.mxu0 0.0
        %4231 = vmatpush1.msra.mxu0 %v508
        %4232 = vmatprep.subr.mxu0 0.0
        %4233 = vmatpush1.msra.mxu0 %v509
        %4234 = vmatprep.subr.mxu0 0.0
        %4235 = vmatpush1.msra.mxu0 0.0
        %4236 = vmatprep.subr.mxu0 0.0
        %4237 = vmatpush1.msra.mxu0 0.0
        %4238 = vmatprep.subr.mxu0 0.0
        %4239 = vmatpush1.msra.mxu0 0.0
        %4240 = vmatprep.subr.mxu0 0.0
        %4241 = vmatpush1.msra.mxu0 0.0
        %4242 = vmatprep.subr.mxu0 0.0
        %4243 = vmatpush1.msra.mxu0 0.0
        %4244 = vmatprep.subr.mxu0 0.0
        %4245 = vmatpush1.msra.mxu0 0.0
        %4246 = vmatprep.subr.mxu0 0.0
        %4247 = vmatpush1.msra.mxu0 0.0
        %4248 = vmatprep.subr.mxu0 0.0
        %4249 = vmatpush1.msra.mxu0 0.0
        %4250 = vmatprep.subr.mxu0 0.0
        %4251 = vmatpush1.msra.mxu0 0.0
        %4252 = vmatprep.subr.mxu0 0.0
        %4253 = vmatpush1.msra.mxu0 0.0
        %4254 = vmatprep.subr.mxu0 0.0
        %4255 = vmatpush1.msra.mxu0 0.0
        %4256 = vmatprep.subr.mxu0 0.0
        %4257 = vmatpush1.msra.mxu0 0.0
        %4258 = vmatprep.subr.mxu0 0.0
        %4259 = vmatpush1.msra.mxu0 0.0
        %4260 = vmatprep.subr.mxu0 0.0
        %4261 = vmatpush1.msra.mxu0 0.0
        %4262 = vmatprep.subr.mxu0 0.0
        %4263 = vmatpush1.msra.mxu0 0.0
        %4264 = vmatprep.subr.mxu0 0.0
        %4265 = vmatpush1.msra.mxu0 0.0
        %4266 = vmatprep.mubr.f32.mxu0 0.0
        %4267 = vmatmul.mubr.f32.gmra.mrb[0].mxu0 %v3205
        %v4268 = vpop.f32.mrb[0].mxu0
        %v4269 = vadd.f32 %v1947, %v4268
        %v4270 = vpop.f32.mrb[0].mxu0
        %4271 = vmatprep.mubr.f32.mxu0 0.0
        %4272 = vmatmul.mubr.f32.gmra.mrb[0].mxu0 %v3210
        %v4273 = vpop.f32.mrb[0].mxu0
        %v4274 = vadd.f32 %v1947, %v4273
        %v4275 = vpop.f32.mrb[0].mxu0
        %4276 = vmatprep.mubr.f32.mxu0 0.0
        %4277 = vmatmul.mubr.f32.gmra.mrb[0].mxu0 %v3215
        %v4278 = vpop.f32.mrb[0].mxu0
        %v4279 = vadd.f32 %v1947, %v4278
        %v4280 = vpop.f32.mrb[0].mxu0
        %4281 = vmatprep.mubr.f32.mxu0 0.0
        %4282 = vmatmul.mubr.f32.gmra.mrb[0].mxu0 %v3220
        %v4283 = vpop.f32.mrb[0].mxu0
        %v4284 = vadd.f32 %v1947, %v4283
        %v4285 = vpop.f32.mrb[0].mxu0
        %4286 = vmatprep.mubr.f32.mxu0 0.0
        %4287 = vmatmul.mubr.f32.gmra.mrb[0].mxu0 %v3225
        %v4288 = vpop.f32.mrb[0].mxu0
        %v4289 = vadd.f32 %v1947, %v4288
        %v4290 = vpop.f32.mrb[0].mxu0
        %4291 = vmatprep.mubr.f32.mxu0 0.0
        %4292 = vmatmul.mubr.f32.gmra.mrb[0].mxu0 %v3230
        %v4293 = vpop.f32.mrb[0].mxu0
        %v4294 = vadd.f32 %v1947, %v4293
        %v4295 = vpop.f32.mrb[0].mxu0
        %4296 = vmatprep.mubr.f32.mxu0 0.0
        %4297 = vmatmul.mubr.f32.gmra.mrb[0].mxu0 %v3235
        %v4298 = vpop.f32.mrb[0].mxu0
        %v4299 = vadd.f32 %v1947, %v4298
        %v4300 = vpop.f32.mrb[0].mxu0
        %4301 = vmatprep.mubr.f32.mxu0 0.0
        %4302 = vmatmul.mubr.f32.gmra.mrb[0].mxu0 %v3240
        %v4303 = vpop.f32.mrb[0].mxu0
        %v4304 = vadd.f32 %v1947, %v4303
        %v4305 = vpop.f32.mrb[0].mxu0
        %4306 = vmatprep.mubr.f32.mxu0 0.0
        %4307 = vmatmul.mubr.f32.gmra.mrb[0].mxu0 %v3245
        %v4308 = vpop.f32.mrb[0].mxu0
        %v4309 = vadd.f32 %v1947, %v4308
        %v4310 = vpop.f32.mrb[0].mxu0
        %4311 = vmatprep.mubr.f32.mxu0 0.0
        %4312 = vmatmul.mubr.f32.gmra.mrb[0].mxu0 %v3250
        %v4313 = vpop.f32.mrb[0].mxu0
        %v4314 = vadd.f32 %v1947, %v4313
        %v4315 = vpop.f32.mrb[0].mxu0
        %4316 = vmatprep.mubr.f32.mxu0 0.0
        %4317 = vmatmul.mubr.f32.gmra.mrb[0].mxu0 %v3255
        %v4318 = vpop.f32.mrb[0].mxu0
        %v4319 = vadd.f32 %v1947, %v4318
        %v4320 = vpop.f32.mrb[0].mxu0
        %4321 = vmatprep.mubr.f32.mxu0 0.0
        %4322 = vmatmul.mubr.f32.gmra.mrb[0].mxu0 %v3260
        %v4323 = vpop.f32.mrb[0].mxu0
        %v4324 = vadd.f32 %v1947, %v4323
        %v4325 = vpop.f32.mrb[0].mxu0
        %4326 = vmatprep.mubr.f32.mxu0 0.0
        %4327 = vmatmul.mubr.f32.gmra.mrb[0].mxu0 %v3265
        %v4328 = vpop.f32.mrb[0].mxu0
        %v4329 = vadd.f32 %v1947, %v4328
        %v4330 = vpop.f32.mrb[0].mxu0
        %4331 = vmatprep.mubr.f32.mxu0 0.0
        %4332 = vmatmul.mubr.f32.gmra.mrb[0].mxu0 %v3270
        %v4333 = vpop.f32.mrb[0].mxu0
        %v4334 = vadd.f32 %v1947, %v4333
        %v4335 = vpop.f32.mrb[0].mxu0
        %4336 = vmatprep.mubr.f32.mxu0 0.0
        %4337 = vmatmul.mubr.f32.gmra.mrb[0].mxu0 %v3275
        %v4338 = vpop.f32.mrb[0].mxu0
        %v4339 = vadd.f32 %v1947, %v4338
        %v4340 = vpop.f32.mrb[0].mxu0
        %4341 = vmatprep.mubr.f32.mxu0 0.0
        %4342 = vmatmul.mubr.f32.gmra.mrb[0].mxu0 %v3280
        %v4343 = vpop.f32.mrb[0].mxu0
        %v4344 = vadd.f32 %v1947, %v4343
        %v4345 = vpop.f32.mrb[0].mxu0
        %4346 = vmatprep.mubr.f32.mxu0 0.0
        %4347 = vmatmul.mubr.f32.gmra.mrb[0].mxu0 %v3285
        %v4348 = vpop.f32.mrb[0].mxu0
        %v4349 = vadd.f32 %v1947, %v4348
        %v4350 = vpop.f32.mrb[0].mxu0
        %4351 = vmatprep.mubr.f32.mxu0 0.0
        %4352 = vmatmul.mubr.f32.gmra.mrb[0].mxu0 %v3290
        %v4353 = vpop.f32.mrb[0].mxu0
        %v4354 = vadd.f32 %v1947, %v4353
        %v4355 = vpop.f32.mrb[0].mxu0
        %4356 = vmatprep.mubr.f32.mxu0 0.0
        %4357 = vmatmul.mubr.f32.gmra.mrb[0].mxu0 %v3295
        %v4358 = vpop.f32.mrb[0].mxu0
        %v4359 = vadd.f32 %v1947, %v4358
        %v4360 = vpop.f32.mrb[0].mxu0
        %4361 = vmatprep.mubr.f32.mxu0 0.0
        %4362 = vmatmul.mubr.f32.gmra.mrb[0].mxu0 %v3300
        %v4363 = vpop.f32.mrb[0].mxu0
        %v4364 = vadd.f32 %v1947, %v4363
        %v4365 = vpop.f32.mrb[0].mxu0
        %4366 = vmatprep.mubr.f32.mxu0 0.0
        %4367 = vmatmul.mubr.f32.gmra.mrb[0].mxu0 %v3305
        %v4368 = vpop.f32.mrb[0].mxu0
        %v4369 = vadd.f32 %v1947, %v4368
        %v4370 = vpop.f32.mrb[0].mxu0
        %4371 = vmatprep.mubr.f32.mxu0 0.0
        %4372 = vmatmul.mubr.f32.gmra.mrb[0].mxu0 %v3310
        %v4373 = vpop.f32.mrb[0].mxu0
        %v4374 = vadd.f32 %v1947, %v4373
        %v4375 = vpop.f32.mrb[0].mxu0
        %4376 = vmatprep.mubr.f32.mxu0 0.0
        %4377 = vmatmul.mubr.f32.gmra.mrb[0].mxu0 %v3315
        %v4378 = vpop.f32.mrb[0].mxu0
        %v4379 = vadd.f32 %v1947, %v4378
        %v4380 = vpop.f32.mrb[0].mxu0
        %4381 = vmatprep.mubr.f32.mxu0 0.0
        %4382 = vmatmul.mubr.f32.gmra.mrb[0].mxu0 %v3320
        %v4383 = vpop.f32.mrb[0].mxu0
        %v4384 = vadd.f32 %v1947, %v4383
        %v4385 = vpop.f32.mrb[0].mxu0
        %4386 = vmatprep.mubr.f32.mxu0 0.0
        %4387 = vmatmul.mubr.f32.gmra.mrb[0].mxu0 %v3325
        %v4388 = vpop.f32.mrb[0].mxu0
        %v4389 = vadd.f32 %v1947, %v4388
        %v4390 = vpop.f32.mrb[0].mxu0
        %4391 = vmatprep.mubr.f32.mxu0 0.0
        %4392 = vmatmul.mubr.f32.gmra.mrb[0].mxu0 %v3330
        %v4393 = vpop.f32.mrb[0].mxu0
        %v4394 = vadd.f32 %v1947, %v4393
        %v4395 = vpop.f32.mrb[0].mxu0
        %4396 = vmatprep.mubr.f32.mxu0 0.0
        %4397 = vmatmul.mubr.f32.gmra.mrb[0].mxu0 %v3335
        %v4398 = vpop.f32.mrb[0].mxu0
        %v4399 = vadd.f32 %v1947, %v4398
        %v4400 = vpop.f32.mrb[0].mxu0
        %4401 = vmatprep.mubr.f32.mxu0 0.0
        %4402 = vmatmul.mubr.f32.gmra.mrb[0].mxu0 %v3340
        %v4403 = vpop.f32.mrb[0].mxu0
        %v4404 = vadd.f32 %v1947, %v4403
        %v4405 = vpop.f32.mrb[0].mxu0
        %4406 = vmatprep.mubr.f32.mxu0 0.0
        %4407 = vmatmul.mubr.f32.gmra.mrb[0].mxu0 %v3345
        %v4408 = vpop.f32.mrb[0].mxu0
        %v4409 = vadd.f32 %v1947, %v4408
        %v4410 = vpop.f32.mrb[0].mxu0
        %4411 = vmatprep.mubr.f32.mxu0 0.0
        %4412 = vmatmul.mubr.f32.gmra.mrb[0].mxu0 %v3350
        %v4413 = vpop.f32.mrb[0].mxu0
        %v4414 = vadd.f32 %v1947, %v4413
        %v4415 = vpop.f32.mrb[0].mxu0
        %4416 = vmatprep.mubr.f32.mxu0 0.0
        %4417 = vmatmul.mubr.f32.gmra.mrb[0].mxu0 %v3355
        %v4418 = vpop.f32.mrb[0].mxu0
        %v4419 = vadd.f32 %v1947, %v4418
        %v4420 = vpop.f32.mrb[0].mxu0
        %4421 = vmatprep.mubr.f32.mxu0 0.0
        %4422 = vmatmul.mubr.f32.gmra.mrb[0].mxu0 %v3360
        %v4423 = vpop.f32.mrb[0].mxu0
        %v4424 = vadd.f32 %v1947, %v4423
        %v4425 = vpop.f32.mrb[0].mxu0
        %4426 = vdwg.mxu0
        %s4427 = scalar_lea.vmem %s365, 1280 [#allocation2]
        %4428 = vst [vmem:[%s4427] sm:$0xff] %v4269
        %4429 = vst [vmem:[%s4427 + $0x8] sm:$0xff] %v4274
        %4430 = vst [vmem:[%s4427 + $0x10] sm:$0xff] %v4279
        %4431 = vst [vmem:[%s4427 + $0x18] sm:$0xff] %v4284
        %4432 = vst [vmem:[%s4427 + $0x20] sm:$0xff] %v4289
        %4433 = vst [vmem:[%s4427 + $0x28] sm:$0xff] %v4294
        %4434 = vst [vmem:[%s4427 + $0x30] sm:$0xff] %v4299
        %4435 = vst [vmem:[%s4427 + $0x38] sm:$0xff] %v4304
        %4436 = vst [vmem:[%s4427 + $0x40] sm:$0xff] %v4309
        %4437 = vst [vmem:[%s4427 + $0x48] sm:$0xff] %v4314
        %4438 = vst [vmem:[%s4427 + $0x50] sm:$0xff] %v4319
        %4439 = vst [vmem:[%s4427 + $0x58] sm:$0xff] %v4324
        %4440 = vst [vmem:[%s4427 + $0x60] sm:$0xff] %v4329
        %4441 = vst [vmem:[%s4427 + $0x68] sm:$0xff] %v4334
        %4442 = vst [vmem:[%s4427 + $0x70] sm:$0xff] %v4339
        %4443 = vst [vmem:[%s4427 + $0x78] sm:$0xff] %v4344
        %4444 = vst [vmem:[%s4427 + $0x80] sm:$0xff] %v4349
        %4445 = vst [vmem:[%s4427 + $0x88] sm:$0xff] %v4354
        %4446 = vst [vmem:[%s4427 + $0x90] sm:$0xff] %v4359
        %4447 = vst [vmem:[%s4427 + $0x98] sm:$0xff] %v4364
        %4448 = vst [vmem:[%s4427 + $0xa0] sm:$0xff] %v4369
        %4449 = vst [vmem:[%s4427 + $0xa8] sm:$0xff] %v4374
        %4450 = vst [vmem:[%s4427 + $0xb0] sm:$0xff] %v4379
        %4451 = vst [vmem:[%s4427 + $0xb8] sm:$0xff] %v4384
        %4452 = vst [vmem:[%s4427 + $0xc0] sm:$0xff] %v4389
        %4453 = vst [vmem:[%s4427 + $0xc8] sm:$0xff] %v4394
        %4454 = vst [vmem:[%s4427 + $0xd0] sm:$0xff] %v4399
        %4455 = vst [vmem:[%s4427 + $0xd8] sm:$0xff] %v4404
        %4456 = vst [vmem:[%s4427 + $0xe0] sm:$0xff] %v4409
        %4457 = vst [vmem:[%s4427 + $0xe8] sm:$0xff] %v4414
        %4458 = vst [vmem:[%s4427 + $0xf0] sm:$0xff] %v4419
        %4459 = vst [vmem:[%s4427 + $0xf8] sm:$0xff] %v4424
        %4460 = vmatprep.subr.mxu0 0.0
        %4461 = vmatpush1.msra.mxu0 %v494
        %4462 = vmatprep.subr.mxu0 0.0
        %4463 = vmatpush1.msra.mxu0 %v495
        %4464 = vmatprep.subr.mxu0 0.0
        %4465 = vmatpush1.msra.mxu0 %v496
        %4466 = vmatprep.subr.mxu0 0.0
        %4467 = vmatpush1.msra.mxu0 %v497
        %4468 = vmatprep.subr.mxu0 0.0
        %4469 = vmatpush1.msra.mxu0 %v498
        %4470 = vmatprep.subr.mxu0 0.0
        %4471 = vmatpush1.msra.mxu0 %v499
        %4472 = vmatprep.subr.mxu0 0.0
        %4473 = vmatpush1.msra.mxu0 %v500
        %4474 = vmatprep.subr.mxu0 0.0
        %4475 = vmatpush1.msra.mxu0 %v501
        %4476 = vmatprep.subr.mxu0 0.0
        %4477 = vmatpush1.msra.mxu0 %v502
        %4478 = vmatprep.subr.mxu0 0.0
        %4479 = vmatpush1.msra.mxu0 %v503
        %4480 = vmatprep.subr.mxu0 0.0
        %4481 = vmatpush1.msra.mxu0 %v504
        %4482 = vmatprep.subr.mxu0 0.0
        %4483 = vmatpush1.msra.mxu0 %v505
        %4484 = vmatprep.subr.mxu0 0.0
        %4485 = vmatpush1.msra.mxu0 %v506
        %4486 = vmatprep.subr.mxu0 0.0
        %4487 = vmatpush1.msra.mxu0 %v507
        %4488 = vmatprep.subr.mxu0 0.0
        %4489 = vmatpush1.msra.mxu0 %v508
        %4490 = vmatprep.subr.mxu0 0.0
        %4491 = vmatpush1.msra.mxu0 %v509
        %4492 = vmatprep.subr.mxu0 0.0
        %4493 = vmatpush1.msra.mxu0 0.0
        %4494 = vmatprep.subr.mxu0 0.0
        %4495 = vmatpush1.msra.mxu0 0.0
        %4496 = vmatprep.subr.mxu0 0.0
        %4497 = vmatpush1.msra.mxu0 0.0
        %4498 = vmatprep.subr.mxu0 0.0
        %4499 = vmatpush1.msra.mxu0 0.0
        %4500 = vmatprep.subr.mxu0 0.0
        %4501 = vmatpush1.msra.mxu0 0.0
        %4502 = vmatprep.subr.mxu0 0.0
        %4503 = vmatpush1.msra.mxu0 0.0
        %4504 = vmatprep.subr.mxu0 0.0
        %4505 = vmatpush1.msra.mxu0 0.0
        %4506 = vmatprep.subr.mxu0 0.0
        %4507 = vmatpush1.msra.mxu0 0.0
        %4508 = vmatprep.subr.mxu0 0.0
        %4509 = vmatpush1.msra.mxu0 0.0
        %4510 = vmatprep.subr.mxu0 0.0
        %4511 = vmatpush1.msra.mxu0 0.0
        %4512 = vmatprep.subr.mxu0 0.0
        %4513 = vmatpush1.msra.mxu0 0.0
        %4514 = vmatprep.subr.mxu0 0.0
        %4515 = vmatpush1.msra.mxu0 0.0
        %4516 = vmatprep.subr.mxu0 0.0
        %4517 = vmatpush1.msra.mxu0 0.0
        %4518 = vmatprep.subr.mxu0 0.0
        %4519 = vmatpush1.msra.mxu0 0.0
        %4520 = vmatprep.subr.mxu0 0.0
        %4521 = vmatpush1.msra.mxu0 0.0
        %4522 = vmatprep.subr.mxu0 0.0
        %4523 = vmatpush1.msra.mxu0 0.0
        %4524 = vmatprep.mubr.f32.mxu0 0.0
        %4525 = vmatmul.mubr.f32.gmra.mrb[0].mxu0 %v742
        %v4526 = vpop.f32.mrb[0].mxu0
        %v4527 = vadd.f32 %v1947, %v4526
        %v4528 = vpop.f32.mrb[0].mxu0
        %4529 = vmatprep.mubr.f32.mxu0 0.0
        %4530 = vmatmul.mubr.f32.gmra.mrb[0].mxu0 %v743
        %v4531 = vpop.f32.mrb[0].mxu0
        %v4532 = vadd.f32 %v1947, %v4531
        %v4533 = vpop.f32.mrb[0].mxu0
        %4534 = vmatprep.mubr.f32.mxu0 0.0
        %4535 = vmatmul.mubr.f32.gmra.mrb[0].mxu0 %v744
        %v4536 = vpop.f32.mrb[0].mxu0
        %v4537 = vadd.f32 %v1947, %v4536
        %v4538 = vpop.f32.mrb[0].mxu0
        %4539 = vmatprep.mubr.f32.mxu0 0.0
        %4540 = vmatmul.mubr.f32.gmra.mrb[0].mxu0 %v745
        %v4541 = vpop.f32.mrb[0].mxu0
        %v4542 = vadd.f32 %v1947, %v4541
        %v4543 = vpop.f32.mrb[0].mxu0
        %4544 = vmatprep.mubr.f32.mxu0 0.0
        %4545 = vmatmul.mubr.f32.gmra.mrb[0].mxu0 %v746
        %v4546 = vpop.f32.mrb[0].mxu0
        %v4547 = vadd.f32 %v1947, %v4546
        %v4548 = vpop.f32.mrb[0].mxu0
        %4549 = vmatprep.mubr.f32.mxu0 0.0
        %4550 = vmatmul.mubr.f32.gmra.mrb[0].mxu0 %v747
        %v4551 = vpop.f32.mrb[0].mxu0
        %v4552 = vadd.f32 %v1947, %v4551
        %v4553 = vpop.f32.mrb[0].mxu0
        %4554 = vmatprep.mubr.f32.mxu0 0.0
        %4555 = vmatmul.mubr.f32.gmra.mrb[0].mxu0 %v748
        %v4556 = vpop.f32.mrb[0].mxu0
        %v4557 = vadd.f32 %v1947, %v4556
        %v4558 = vpop.f32.mrb[0].mxu0
        %4559 = vmatprep.mubr.f32.mxu0 0.0
        %4560 = vmatmul.mubr.f32.gmra.mrb[0].mxu0 %v749
        %v4561 = vpop.f32.mrb[0].mxu0
        %v4562 = vadd.f32 %v1947, %v4561
        %v4563 = vpop.f32.mrb[0].mxu0
        %4564 = vmatprep.mubr.f32.mxu0 0.0
        %4565 = vmatmul.mubr.f32.gmra.mrb[0].mxu0 %v750
        %v4566 = vpop.f32.mrb[0].mxu0
        %v4567 = vadd.f32 %v1947, %v4566
        %v4568 = vpop.f32.mrb[0].mxu0
        %4569 = vmatprep.mubr.f32.mxu0 0.0
        %4570 = vmatmul.mubr.f32.gmra.mrb[0].mxu0 %v751
        %v4571 = vpop.f32.mrb[0].mxu0
        %v4572 = vadd.f32 %v1947, %v4571
        %v4573 = vpop.f32.mrb[0].mxu0
        %4574 = vmatprep.mubr.f32.mxu0 0.0
        %4575 = vmatmul.mubr.f32.gmra.mrb[0].mxu0 %v752
        %v4576 = vpop.f32.mrb[0].mxu0
        %v4577 = vadd.f32 %v1947, %v4576
        %v4578 = vpop.f32.mrb[0].mxu0
        %4579 = vmatprep.mubr.f32.mxu0 0.0
        %4580 = vmatmul.mubr.f32.gmra.mrb[0].mxu0 %v753
        %v4581 = vpop.f32.mrb[0].mxu0
        %v4582 = vadd.f32 %v1947, %v4581
        %v4583 = vpop.f32.mrb[0].mxu0
        %4584 = vmatprep.mubr.f32.mxu0 0.0
        %4585 = vmatmul.mubr.f32.gmra.mrb[0].mxu0 %v754
        %v4586 = vpop.f32.mrb[0].mxu0
        %v4587 = vadd.f32 %v1947, %v4586
        %v4588 = vpop.f32.mrb[0].mxu0
        %4589 = vmatprep.mubr.f32.mxu0 0.0
        %4590 = vmatmul.mubr.f32.gmra.mrb[0].mxu0 %v755
        %v4591 = vpop.f32.mrb[0].mxu0
        %v4592 = vadd.f32 %v1947, %v4591
        %v4593 = vpop.f32.mrb[0].mxu0
        %4594 = vmatprep.mubr.f32.mxu0 0.0
        %4595 = vmatmul.mubr.f32.gmra.mrb[0].mxu0 %v756
        %v4596 = vpop.f32.mrb[0].mxu0
        %v4597 = vadd.f32 %v1947, %v4596
        %v4598 = vpop.f32.mrb[0].mxu0
        %4599 = vmatprep.mubr.f32.mxu0 0.0
        %4600 = vmatmul.mubr.f32.gmra.mrb[0].mxu0 %v757
        %v4601 = vpop.f32.mrb[0].mxu0
        %v4602 = vadd.f32 %v1947, %v4601
        %v4603 = vpop.f32.mrb[0].mxu0
        %4604 = vmatprep.mubr.f32.mxu0 0.0
        %4605 = vmatmul.mubr.f32.gmra.mrb[0].mxu0 %v758
        %v4606 = vpop.f32.mrb[0].mxu0
        %v4607 = vadd.f32 %v1947, %v4606
        %v4608 = vpop.f32.mrb[0].mxu0
        %4609 = vmatprep.mubr.f32.mxu0 0.0
        %4610 = vmatmul.mubr.f32.gmra.mrb[0].mxu0 %v759
        %v4611 = vpop.f32.mrb[0].mxu0
        %v4612 = vadd.f32 %v1947, %v4611
        %v4613 = vpop.f32.mrb[0].mxu0
        %4614 = vmatprep.mubr.f32.mxu0 0.0
        %4615 = vmatmul.mubr.f32.gmra.mrb[0].mxu0 %v760
        %v4616 = vpop.f32.mrb[0].mxu0
        %v4617 = vadd.f32 %v1947, %v4616
        %v4618 = vpop.f32.mrb[0].mxu0
        %4619 = vmatprep.mubr.f32.mxu0 0.0
        %4620 = vmatmul.mubr.f32.gmra.mrb[0].mxu0 %v761
        %v4621 = vpop.f32.mrb[0].mxu0
        %v4622 = vadd.f32 %v1947, %v4621
        %v4623 = vpop.f32.mrb[0].mxu0
        %4624 = vmatprep.mubr.f32.mxu0 0.0
        %4625 = vmatmul.mubr.f32.gmra.mrb[0].mxu0 %v762
        %v4626 = vpop.f32.mrb[0].mxu0
        %v4627 = vadd.f32 %v1947, %v4626
        %v4628 = vpop.f32.mrb[0].mxu0
        %4629 = vmatprep.mubr.f32.mxu0 0.0
        %4630 = vmatmul.mubr.f32.gmra.mrb[0].mxu0 %v763
        %v4631 = vpop.f32.mrb[0].mxu0
        %v4632 = vadd.f32 %v1947, %v4631
        %v4633 = vpop.f32.mrb[0].mxu0
        %4634 = vmatprep.mubr.f32.mxu0 0.0
        %4635 = vmatmul.mubr.f32.gmra.mrb[0].mxu0 %v764
        %v4636 = vpop.f32.mrb[0].mxu0
        %v4637 = vadd.f32 %v1947, %v4636
        %v4638 = vpop.f32.mrb[0].mxu0
        %4639 = vmatprep.mubr.f32.mxu0 0.0
        %4640 = vmatmul.mubr.f32.gmra.mrb[0].mxu0 %v765
        %v4641 = vpop.f32.mrb[0].mxu0
        %v4642 = vadd.f32 %v1947, %v4641
        %v4643 = vpop.f32.mrb[0].mxu0
        %4644 = vmatprep.mubr.f32.mxu0 0.0
        %4645 = vmatmul.mubr.f32.gmra.mrb[0].mxu0 %v766
        %v4646 = vpop.f32.mrb[0].mxu0
        %v4647 = vadd.f32 %v1947, %v4646
        %v4648 = vpop.f32.mrb[0].mxu0
        %4649 = vmatprep.mubr.f32.mxu0 0.0
        %4650 = vmatmul.mubr.f32.gmra.mrb[0].mxu0 %v767
        %v4651 = vpop.f32.mrb[0].mxu0
        %v4652 = vadd.f32 %v1947, %v4651
        %v4653 = vpop.f32.mrb[0].mxu0
        %4654 = vmatprep.mubr.f32.mxu0 0.0
        %4655 = vmatmul.mubr.f32.gmra.mrb[0].mxu0 %v768
        %v4656 = vpop.f32.mrb[0].mxu0
        %v4657 = vadd.f32 %v1947, %v4656
        %v4658 = vpop.f32.mrb[0].mxu0
        %4659 = vmatprep.mubr.f32.mxu0 0.0
        %4660 = vmatmul.mubr.f32.gmra.mrb[0].mxu0 %v769
        %v4661 = vpop.f32.mrb[0].mxu0
        %v4662 = vadd.f32 %v1947, %v4661
        %v4663 = vpop.f32.mrb[0].mxu0
        %4664 = vmatprep.mubr.f32.mxu0 0.0
        %4665 = vmatmul.mubr.f32.gmra.mrb[0].mxu0 %v770
        %v4666 = vpop.f32.mrb[0].mxu0
        %v4667 = vadd.f32 %v1947, %v4666
        %v4668 = vpop.f32.mrb[0].mxu0
        %4669 = vmatprep.mubr.f32.mxu0 0.0
        %4670 = vmatmul.mubr.f32.gmra.mrb[0].mxu0 %v771
        %v4671 = vpop.f32.mrb[0].mxu0
        %v4672 = vadd.f32 %v1947, %v4671
        %v4673 = vpop.f32.mrb[0].mxu0
        %4674 = vmatprep.mubr.f32.mxu0 0.0
        %4675 = vmatmul.mubr.f32.gmra.mrb[0].mxu0 %v772
        %v4676 = vpop.f32.mrb[0].mxu0
        %v4677 = vadd.f32 %v1947, %v4676
        %v4678 = vpop.f32.mrb[0].mxu0
        %4679 = vmatprep.mubr.f32.mxu0 0.0
        %4680 = vmatmul.mubr.f32.gmra.mrb[0].mxu0 %v773
        %v4681 = vpop.f32.mrb[0].mxu0
        %v4682 = vadd.f32 %v1947, %v4681
        %v4683 = vpop.f32.mrb[0].mxu0
        %4684 = vdwg.mxu0
        %s4685 = scalar_lea.vmem %s365, 1536 [#allocation2]
        %4686 = vst [vmem:[%s4685] sm:$0xff] %v4527
        %4687 = vst [vmem:[%s4685 + $0x8] sm:$0xff] %v4532
        %4688 = vst [vmem:[%s4685 + $0x10] sm:$0xff] %v4537
        %4689 = vst [vmem:[%s4685 + $0x18] sm:$0xff] %v4542
        %4690 = vst [vmem:[%s4685 + $0x20] sm:$0xff] %v4547
        %4691 = vst [vmem:[%s4685 + $0x28] sm:$0xff] %v4552
        %4692 = vst [vmem:[%s4685 + $0x30] sm:$0xff] %v4557
        %4693 = vst [vmem:[%s4685 + $0x38] sm:$0xff] %v4562
        %4694 = vst [vmem:[%s4685 + $0x40] sm:$0xff] %v4567
        %4695 = vst [vmem:[%s4685 + $0x48] sm:$0xff] %v4572
        %4696 = vst [vmem:[%s4685 + $0x50] sm:$0xff] %v4577
        %4697 = vst [vmem:[%s4685 + $0x58] sm:$0xff] %v4582
        %4698 = vst [vmem:[%s4685 + $0x60] sm:$0xff] %v4587
        %4699 = vst [vmem:[%s4685 + $0x68] sm:$0xff] %v4592
        %4700 = vst [vmem:[%s4685 + $0x70] sm:$0xff] %v4597
        %4701 = vst [vmem:[%s4685 + $0x78] sm:$0xff] %v4602
        %4702 = vst [vmem:[%s4685 + $0x80] sm:$0xff] %v4607
        %4703 = vst [vmem:[%s4685 + $0x88] sm:$0xff] %v4612
        %4704 = vst [vmem:[%s4685 + $0x90] sm:$0xff] %v4617
        %4705 = vst [vmem:[%s4685 + $0x98] sm:$0xff] %v4622
        %4706 = vst [vmem:[%s4685 + $0xa0] sm:$0xff] %v4627
        %4707 = vst [vmem:[%s4685 + $0xa8] sm:$0xff] %v4632
        %4708 = vst [vmem:[%s4685 + $0xb0] sm:$0xff] %v4637
        %4709 = vst [vmem:[%s4685 + $0xb8] sm:$0xff] %v4642
        %4710 = vst [vmem:[%s4685 + $0xc0] sm:$0xff] %v4647
        %4711 = vst [vmem:[%s4685 + $0xc8] sm:$0xff] %v4652
        %4712 = vst [vmem:[%s4685 + $0xd0] sm:$0xff] %v4657
        %4713 = vst [vmem:[%s4685 + $0xd8] sm:$0xff] %v4662
        %4714 = vst [vmem:[%s4685 + $0xe0] sm:$0xff] %v4667
        %4715 = vst [vmem:[%s4685 + $0xe8] sm:$0xff] %v4672
        %4716 = vst [vmem:[%s4685 + $0xf0] sm:$0xff] %v4677
        %4717 = vst [vmem:[%s4685 + $0xf8] sm:$0xff] %v4682
        %4718 = vmatprep.subr.mxu0 0.0
        %4719 = vmatpush1.msra.mxu0 %v494
        %4720 = vmatprep.subr.mxu0 0.0
        %4721 = vmatpush1.msra.mxu0 %v495
        %4722 = vmatprep.subr.mxu0 0.0
        %4723 = vmatpush1.msra.mxu0 %v496
        %4724 = vmatprep.subr.mxu0 0.0
        %4725 = vmatpush1.msra.mxu0 %v497
        %4726 = vmatprep.subr.mxu0 0.0
        %4727 = vmatpush1.msra.mxu0 %v498
        %4728 = vmatprep.subr.mxu0 0.0
        %4729 = vmatpush1.msra.mxu0 %v499
        %4730 = vmatprep.subr.mxu0 0.0
        %4731 = vmatpush1.msra.mxu0 %v500
        %4732 = vmatprep.subr.mxu0 0.0
        %4733 = vmatpush1.msra.mxu0 %v501
        %4734 = vmatprep.subr.mxu0 0.0
        %4735 = vmatpush1.msra.mxu0 %v502
        %4736 = vmatprep.subr.mxu0 0.0
        %4737 = vmatpush1.msra.mxu0 %v503
        %4738 = vmatprep.subr.mxu0 0.0
        %4739 = vmatpush1.msra.mxu0 %v504
        %4740 = vmatprep.subr.mxu0 0.0
        %4741 = vmatpush1.msra.mxu0 %v505
        %4742 = vmatprep.subr.mxu0 0.0
        %4743 = vmatpush1.msra.mxu0 %v506
        %4744 = vmatprep.subr.mxu0 0.0
        %4745 = vmatpush1.msra.mxu0 %v507
        %4746 = vmatprep.subr.mxu0 0.0
        %4747 = vmatpush1.msra.mxu0 %v508
        %4748 = vmatprep.subr.mxu0 0.0
        %4749 = vmatpush1.msra.mxu0 %v509
        %4750 = vmatprep.subr.mxu0 0.0
        %4751 = vmatpush1.msra.mxu0 0.0
        %4752 = vmatprep.subr.mxu0 0.0
        %4753 = vmatpush1.msra.mxu0 0.0
        %4754 = vmatprep.subr.mxu0 0.0
        %4755 = vmatpush1.msra.mxu0 0.0
        %4756 = vmatprep.subr.mxu0 0.0
        %4757 = vmatpush1.msra.mxu0 0.0
        %4758 = vmatprep.subr.mxu0 0.0
        %4759 = vmatpush1.msra.mxu0 0.0
        %4760 = vmatprep.subr.mxu0 0.0
        %4761 = vmatpush1.msra.mxu0 0.0
        %4762 = vmatprep.subr.mxu0 0.0
        %4763 = vmatpush1.msra.mxu0 0.0
        %4764 = vmatprep.subr.mxu0 0.0
        %4765 = vmatpush1.msra.mxu0 0.0
        %4766 = vmatprep.subr.mxu0 0.0
        %4767 = vmatpush1.msra.mxu0 0.0
        %4768 = vmatprep.subr.mxu0 0.0
        %4769 = vmatpush1.msra.mxu0 0.0
        %4770 = vmatprep.subr.mxu0 0.0
        %4771 = vmatpush1.msra.mxu0 0.0
        %4772 = vmatprep.subr.mxu0 0.0
        %4773 = vmatpush1.msra.mxu0 0.0
        %4774 = vmatprep.subr.mxu0 0.0
        %4775 = vmatpush1.msra.mxu0 0.0
        %4776 = vmatprep.subr.mxu0 0.0
        %4777 = vmatpush1.msra.mxu0 0.0
        %4778 = vmatprep.subr.mxu0 0.0
        %4779 = vmatpush1.msra.mxu0 0.0
        %4780 = vmatprep.subr.mxu0 0.0
        %4781 = vmatpush1.msra.mxu0 0.0
        %4782 = vmatprep.mubr.f32.mxu0 0.0
        %4783 = vmatmul.mubr.f32.gmra.mrb[0].mxu0 %v999
        %v4784 = vpop.f32.mrb[0].mxu0
        %v4785 = vadd.f32 %v1947, %v4784
        %v4786 = vpop.f32.mrb[0].mxu0
        %4787 = vmatprep.mubr.f32.mxu0 0.0
        %4788 = vmatmul.mubr.f32.gmra.mrb[0].mxu0 %v1000
        %v4789 = vpop.f32.mrb[0].mxu0
        %v4790 = vadd.f32 %v1947, %v4789
        %v4791 = vpop.f32.mrb[0].mxu0
        %4792 = vmatprep.mubr.f32.mxu0 0.0
        %4793 = vmatmul.mubr.f32.gmra.mrb[0].mxu0 %v1001
        %v4794 = vpop.f32.mrb[0].mxu0
        %v4795 = vadd.f32 %v1947, %v4794
        %v4796 = vpop.f32.mrb[0].mxu0
        %4797 = vmatprep.mubr.f32.mxu0 0.0
        %4798 = vmatmul.mubr.f32.gmra.mrb[0].mxu0 %v1002
        %v4799 = vpop.f32.mrb[0].mxu0
        %v4800 = vadd.f32 %v1947, %v4799
        %v4801 = vpop.f32.mrb[0].mxu0
        %4802 = vmatprep.mubr.f32.mxu0 0.0
        %4803 = vmatmul.mubr.f32.gmra.mrb[0].mxu0 %v1003
        %v4804 = vpop.f32.mrb[0].mxu0
        %v4805 = vadd.f32 %v1947, %v4804
        %v4806 = vpop.f32.mrb[0].mxu0
        %4807 = vmatprep.mubr.f32.mxu0 0.0
        %4808 = vmatmul.mubr.f32.gmra.mrb[0].mxu0 %v1004
        %v4809 = vpop.f32.mrb[0].mxu0
        %v4810 = vadd.f32 %v1947, %v4809
        %v4811 = vpop.f32.mrb[0].mxu0
        %4812 = vmatprep.mubr.f32.mxu0 0.0
        %4813 = vmatmul.mubr.f32.gmra.mrb[0].mxu0 %v1005
        %v4814 = vpop.f32.mrb[0].mxu0
        %v4815 = vadd.f32 %v1947, %v4814
        %v4816 = vpop.f32.mrb[0].mxu0
        %4817 = vmatprep.mubr.f32.mxu0 0.0
        %4818 = vmatmul.mubr.f32.gmra.mrb[0].mxu0 %v1006
        %v4819 = vpop.f32.mrb[0].mxu0
        %v4820 = vadd.f32 %v1947, %v4819
        %v4821 = vpop.f32.mrb[0].mxu0
        %4822 = vmatprep.mubr.f32.mxu0 0.0
        %4823 = vmatmul.mubr.f32.gmra.mrb[0].mxu0 %v1007
        %v4824 = vpop.f32.mrb[0].mxu0
        %v4825 = vadd.f32 %v1947, %v4824
        %v4826 = vpop.f32.mrb[0].mxu0
        %4827 = vmatprep.mubr.f32.mxu0 0.0
        %4828 = vmatmul.mubr.f32.gmra.mrb[0].mxu0 %v1008
        %v4829 = vpop.f32.mrb[0].mxu0
        %v4830 = vadd.f32 %v1947, %v4829
        %v4831 = vpop.f32.mrb[0].mxu0
        %4832 = vmatprep.mubr.f32.mxu0 0.0
        %4833 = vmatmul.mubr.f32.gmra.mrb[0].mxu0 %v1009
        %v4834 = vpop.f32.mrb[0].mxu0
        %v4835 = vadd.f32 %v1947, %v4834
        %v4836 = vpop.f32.mrb[0].mxu0
        %4837 = vmatprep.mubr.f32.mxu0 0.0
        %4838 = vmatmul.mubr.f32.gmra.mrb[0].mxu0 %v1010
        %v4839 = vpop.f32.mrb[0].mxu0
        %v4840 = vadd.f32 %v1947, %v4839
        %v4841 = vpop.f32.mrb[0].mxu0
        %4842 = vmatprep.mubr.f32.mxu0 0.0
        %4843 = vmatmul.mubr.f32.gmra.mrb[0].mxu0 %v1011
        %v4844 = vpop.f32.mrb[0].mxu0
        %v4845 = vadd.f32 %v1947, %v4844
        %v4846 = vpop.f32.mrb[0].mxu0
        %4847 = vmatprep.mubr.f32.mxu0 0.0
        %4848 = vmatmul.mubr.f32.gmra.mrb[0].mxu0 %v1012
        %v4849 = vpop.f32.mrb[0].mxu0
        %v4850 = vadd.f32 %v1947, %v4849
        %v4851 = vpop.f32.mrb[0].mxu0
        %4852 = vmatprep.mubr.f32.mxu0 0.0
        %4853 = vmatmul.mubr.f32.gmra.mrb[0].mxu0 %v1013
        %v4854 = vpop.f32.mrb[0].mxu0
        %v4855 = vadd.f32 %v1947, %v4854
        %v4856 = vpop.f32.mrb[0].mxu0
        %4857 = vmatprep.mubr.f32.mxu0 0.0
        %4858 = vmatmul.mubr.f32.gmra.mrb[0].mxu0 %v1014
        %v4859 = vpop.f32.mrb[0].mxu0
        %v4860 = vadd.f32 %v1947, %v4859
        %v4861 = vpop.f32.mrb[0].mxu0
        %4862 = vmatprep.mubr.f32.mxu0 0.0
        %4863 = vmatmul.mubr.f32.gmra.mrb[0].mxu0 %v1015
        %v4864 = vpop.f32.mrb[0].mxu0
        %v4865 = vadd.f32 %v1947, %v4864
        %v4866 = vpop.f32.mrb[0].mxu0
        %4867 = vmatprep.mubr.f32.mxu0 0.0
        %4868 = vmatmul.mubr.f32.gmra.mrb[0].mxu0 %v1016
        %v4869 = vpop.f32.mrb[0].mxu0
        %v4870 = vadd.f32 %v1947, %v4869
        %v4871 = vpop.f32.mrb[0].mxu0
        %4872 = vmatprep.mubr.f32.mxu0 0.0
        %4873 = vmatmul.mubr.f32.gmra.mrb[0].mxu0 %v1017
        %v4874 = vpop.f32.mrb[0].mxu0
        %v4875 = vadd.f32 %v1947, %v4874
        %v4876 = vpop.f32.mrb[0].mxu0
        %4877 = vmatprep.mubr.f32.mxu0 0.0
        %4878 = vmatmul.mubr.f32.gmra.mrb[0].mxu0 %v1018
        %v4879 = vpop.f32.mrb[0].mxu0
        %v4880 = vadd.f32 %v1947, %v4879
        %v4881 = vpop.f32.mrb[0].mxu0
        %4882 = vmatprep.mubr.f32.mxu0 0.0
        %4883 = vmatmul.mubr.f32.gmra.mrb[0].mxu0 %v1019
        %v4884 = vpop.f32.mrb[0].mxu0
        %v4885 = vadd.f32 %v1947, %v4884
        %v4886 = vpop.f32.mrb[0].mxu0
        %4887 = vmatprep.mubr.f32.mxu0 0.0
        %4888 = vmatmul.mubr.f32.gmra.mrb[0].mxu0 %v1020
        %v4889 = vpop.f32.mrb[0].mxu0
        %v4890 = vadd.f32 %v1947, %v4889
        %v4891 = vpop.f32.mrb[0].mxu0
        %4892 = vmatprep.mubr.f32.mxu0 0.0
        %4893 = vmatmul.mubr.f32.gmra.mrb[0].mxu0 %v1021
        %v4894 = vpop.f32.mrb[0].mxu0
        %v4895 = vadd.f32 %v1947, %v4894
        %v4896 = vpop.f32.mrb[0].mxu0
        %4897 = vmatprep.mubr.f32.mxu0 0.0
        %4898 = vmatmul.mubr.f32.gmra.mrb[0].mxu0 %v1022
        %v4899 = vpop.f32.mrb[0].mxu0
        %v4900 = vadd.f32 %v1947, %v4899
        %v4901 = vpop.f32.mrb[0].mxu0
        %4902 = vmatprep.mubr.f32.mxu0 0.0
        %4903 = vmatmul.mubr.f32.gmra.mrb[0].mxu0 %v1023
        %v4904 = vpop.f32.mrb[0].mxu0
        %v4905 = vadd.f32 %v1947, %v4904
        %v4906 = vpop.f32.mrb[0].mxu0
        %4907 = vmatprep.mubr.f32.mxu0 0.0
        %4908 = vmatmul.mubr.f32.gmra.mrb[0].mxu0 %v1024
        %v4909 = vpop.f32.mrb[0].mxu0
        %v4910 = vadd.f32 %v1947, %v4909
        %v4911 = vpop.f32.mrb[0].mxu0
        %4912 = vmatprep.mubr.f32.mxu0 0.0
        %4913 = vmatmul.mubr.f32.gmra.mrb[0].mxu0 %v1025
        %v4914 = vpop.f32.mrb[0].mxu0
        %v4915 = vadd.f32 %v1947, %v4914
        %v4916 = vpop.f32.mrb[0].mxu0
        %4917 = vmatprep.mubr.f32.mxu0 0.0
        %4918 = vmatmul.mubr.f32.gmra.mrb[0].mxu0 %v1026
        %v4919 = vpop.f32.mrb[0].mxu0
        %v4920 = vadd.f32 %v1947, %v4919
        %v4921 = vpop.f32.mrb[0].mxu0
        %4922 = vmatprep.mubr.f32.mxu0 0.0
        %4923 = vmatmul.mubr.f32.gmra.mrb[0].mxu0 %v1027
        %v4924 = vpop.f32.mrb[0].mxu0
        %v4925 = vadd.f32 %v1947, %v4924
        %v4926 = vpop.f32.mrb[0].mxu0
        %4927 = vmatprep.mubr.f32.mxu0 0.0
        %4928 = vmatmul.mubr.f32.gmra.mrb[0].mxu0 %v1028
        %v4929 = vpop.f32.mrb[0].mxu0
        %v4930 = vadd.f32 %v1947, %v4929
        %v4931 = vpop.f32.mrb[0].mxu0
        %4932 = vmatprep.mubr.f32.mxu0 0.0
        %4933 = vmatmul.mubr.f32.gmra.mrb[0].mxu0 %v1029
        %v4934 = vpop.f32.mrb[0].mxu0
        %v4935 = vadd.f32 %v1947, %v4934
        %v4936 = vpop.f32.mrb[0].mxu0
        %4937 = vmatprep.mubr.f32.mxu0 0.0
        %4938 = vmatmul.mubr.f32.gmra.mrb[0].mxu0 %v1030
        %v4939 = vpop.f32.mrb[0].mxu0
        %v4940 = vadd.f32 %v1947, %v4939
        %v4941 = vpop.f32.mrb[0].mxu0
        %4942 = vdwg.mxu0
        %s4943 = scalar_lea.vmem %s365, 1792 [#allocation2]
        %4944 = vst [vmem:[%s4943] sm:$0xff] %v4785
        %4945 = vst [vmem:[%s4943 + $0x8] sm:$0xff] %v4790
        %4946 = vst [vmem:[%s4943 + $0x10] sm:$0xff] %v4795
        %4947 = vst [vmem:[%s4943 + $0x18] sm:$0xff] %v4800
        %4948 = vst [vmem:[%s4943 + $0x20] sm:$0xff] %v4805
        %4949 = vst [vmem:[%s4943 + $0x28] sm:$0xff] %v4810
        %4950 = vst [vmem:[%s4943 + $0x30] sm:$0xff] %v4815
        %4951 = vst [vmem:[%s4943 + $0x38] sm:$0xff] %v4820
        %4952 = vst [vmem:[%s4943 + $0x40] sm:$0xff] %v4825
        %4953 = vst [vmem:[%s4943 + $0x48] sm:$0xff] %v4830
        %4954 = vst [vmem:[%s4943 + $0x50] sm:$0xff] %v4835
        %4955 = vst [vmem:[%s4943 + $0x58] sm:$0xff] %v4840
        %4956 = vst [vmem:[%s4943 + $0x60] sm:$0xff] %v4845
        %4957 = vst [vmem:[%s4943 + $0x68] sm:$0xff] %v4850
        %4958 = vst [vmem:[%s4943 + $0x70] sm:$0xff] %v4855
        %4959 = vst [vmem:[%s4943 + $0x78] sm:$0xff] %v4860
        %4960 = vst [vmem:[%s4943 + $0x80] sm:$0xff] %v4865
        %4961 = vst [vmem:[%s4943 + $0x88] sm:$0xff] %v4870
        %4962 = vst [vmem:[%s4943 + $0x90] sm:$0xff] %v4875
        %4963 = vst [vmem:[%s4943 + $0x98] sm:$0xff] %v4880
        %4964 = vst [vmem:[%s4943 + $0xa0] sm:$0xff] %v4885
        %4965 = vst [vmem:[%s4943 + $0xa8] sm:$0xff] %v4890
        %4966 = vst [vmem:[%s4943 + $0xb0] sm:$0xff] %v4895
        %4967 = vst [vmem:[%s4943 + $0xb8] sm:$0xff] %v4900
        %4968 = vst [vmem:[%s4943 + $0xc0] sm:$0xff] %v4905
        %4969 = vst [vmem:[%s4943 + $0xc8] sm:$0xff] %v4910
        %4970 = vst [vmem:[%s4943 + $0xd0] sm:$0xff] %v4915
        %4971 = vst [vmem:[%s4943 + $0xd8] sm:$0xff] %v4920
        %4972 = vst [vmem:[%s4943 + $0xe0] sm:$0xff] %v4925
        %4973 = vst [vmem:[%s4943 + $0xe8] sm:$0xff] %v4930
        %4974 = vst [vmem:[%s4943 + $0xf0] sm:$0xff] %v4935
        %4975 = vst [vmem:[%s4943 + $0xf8] sm:$0xff] %v4940
        %s4976 = sand.u32 %s249, 1
        %s4977 = sand.u32 %s249, 1
        %s4978 = smul.addr %s4977, 2048
        %s4979 = scalar_lea.vmem [#allocation2], %s4978
        // Predicated region
        $region61: #{generator_forward.1} parent=59 // pred_check
          %p4980 = pneg %p259
        $region62: #{generator_forward.1} parent=59 // pred_check_branch
          %4982 = sbr.rel (%p4980) target = $region64
        $region63: #{generator_forward.1} parent=59 // pred_region
          %s4983 = smul.u32 32, %s21
          %s4984 = smul.addr %s4983, 8
          %s4985 = scalar_lea.vmem %s10, %s4984
          // Predicated region
          $region65: #{generator_forward.1} parent=63 // pred_check
            _
          $region66: #{generator_forward.1} parent=63 // pred_check_branch
            %4987 = sbr.rel (0) target = $region68
          $region67: #{generator_forward.1} parent=63 // pred_region
            // Predicated region
            $region69: #{generator_forward.1} parent=67 // pred_check
              _
            $region70: #{generator_forward.1} parent=67 // pred_check_branch
              %4989 = sbr.rel (0) target = $region72
            $region71: #{generator_forward.1} parent=67 // pred_region
              // Predicated region
              $region84: #{generator_forward.1} parent=71 // pred_check
                _
              $region85: #{generator_forward.1} parent=71 // pred_check_branch
                %5514 = sbr.rel (0) target = $region87
              $region86: #{generator_forward.1} parent=71 // pred_region
                loop: start=0, step=1, limit=1
                $region88: #{generator_forward.1} parent=86 // loop_pre_header
                  _
                $region89: #{generator_forward.1} parent=86 // loop_header
                  %s5516 = sphi 0, %s5520
                  %p5517 = scmp.ge.s32.totalorder %s5516, 1
                  %s5521 = sphi %s4979, %s4979
                  %s5522 = sphi %s4985, %s4985
                $region90: #{generator_forward.1} parent=86 // loop_header_branch
                  %5519 = sbr.rel (%p5517) target = $region94
                $region91: #{generator_forward.1} parent=86 // loop_body
                  %v5523 = vld [vmem:[%s5521] sm:$0xff]
                  %5524 = vst [vmem:[%s5522] sm:$0xff] %v5523
                  %v5525 = vld [vmem:[%s5521 + $0x8] sm:$0xff]
                  %5526 = vst [vmem:[%s5522 + $0x8] sm:$0xff] %v5525
                  %v5527 = vld [vmem:[%s5521 + $0x10] sm:$0xff]
                  %5528 = vst [vmem:[%s5522 + $0x10] sm:$0xff] %v5527
                  %v5529 = vld [vmem:[%s5521 + $0x18] sm:$0xff]
                  %5530 = vst [vmem:[%s5522 + $0x18] sm:$0xff] %v5529
                  %v5531 = vld [vmem:[%s5521 + $0x20] sm:$0xff]
                  %5532 = vst [vmem:[%s5522 + $0x20] sm:$0xff] %v5531
                  %v5533 = vld [vmem:[%s5521 + $0x28] sm:$0xff]
                  %5534 = vst [vmem:[%s5522 + $0x28] sm:$0xff] %v5533
                  %v5535 = vld [vmem:[%s5521 + $0x30] sm:$0xff]
                  %5536 = vst [vmem:[%s5522 + $0x30] sm:$0xff] %v5535
                  %v5537 = vld [vmem:[%s5521 + $0x38] sm:$0xff]
                  %5538 = vst [vmem:[%s5522 + $0x38] sm:$0xff] %v5537
                  %v5539 = vld [vmem:[%s5521 + $0x40] sm:$0xff]
                  %5540 = vst [vmem:[%s5522 + $0x40] sm:$0xff] %v5539
                  %v5541 = vld [vmem:[%s5521 + $0x48] sm:$0xff]
                  %5542 = vst [vmem:[%s5522 + $0x48] sm:$0xff] %v5541
                  %v5543 = vld [vmem:[%s5521 + $0x50] sm:$0xff]
                  %5544 = vst [vmem:[%s5522 + $0x50] sm:$0xff] %v5543
                  %v5545 = vld [vmem:[%s5521 + $0x58] sm:$0xff]
                  %5546 = vst [vmem:[%s5522 + $0x58] sm:$0xff] %v5545
                  %v5547 = vld [vmem:[%s5521 + $0x60] sm:$0xff]
                  %5548 = vst [vmem:[%s5522 + $0x60] sm:$0xff] %v5547
                  %v5549 = vld [vmem:[%s5521 + $0x68] sm:$0xff]
                  %5550 = vst [vmem:[%s5522 + $0x68] sm:$0xff] %v5549
                  %v5551 = vld [vmem:[%s5521 + $0x70] sm:$0xff]
                  %5552 = vst [vmem:[%s5522 + $0x70] sm:$0xff] %v5551
                  %v5553 = vld [vmem:[%s5521 + $0x78] sm:$0xff]
                  %5554 = vst [vmem:[%s5522 + $0x78] sm:$0xff] %v5553
                  %v5555 = vld [vmem:[%s5521 + $0x80] sm:$0xff]
                  %5556 = vst [vmem:[%s5522 + $0x80] sm:$0xff] %v5555
                  %v5557 = vld [vmem:[%s5521 + $0x88] sm:$0xff]
                  %5558 = vst [vmem:[%s5522 + $0x88] sm:$0xff] %v5557
                  %v5559 = vld [vmem:[%s5521 + $0x90] sm:$0xff]
                  %5560 = vst [vmem:[%s5522 + $0x90] sm:$0xff] %v5559
                  %v5561 = vld [vmem:[%s5521 + $0x98] sm:$0xff]
                  %5562 = vst [vmem:[%s5522 + $0x98] sm:$0xff] %v5561
                  %v5563 = vld [vmem:[%s5521 + $0xa0] sm:$0xff]
                  %5564 = vst [vmem:[%s5522 + $0xa0] sm:$0xff] %v5563
                  %v5565 = vld [vmem:[%s5521 + $0xa8] sm:$0xff]
                  %5566 = vst [vmem:[%s5522 + $0xa8] sm:$0xff] %v5565
                  %v5567 = vld [vmem:[%s5521 + $0xb0] sm:$0xff]
                  %5568 = vst [vmem:[%s5522 + $0xb0] sm:$0xff] %v5567
                  %v5569 = vld [vmem:[%s5521 + $0xb8] sm:$0xff]
                  %5570 = vst [vmem:[%s5522 + $0xb8] sm:$0xff] %v5569
                  %v5571 = vld [vmem:[%s5521 + $0xc0] sm:$0xff]
                  %5572 = vst [vmem:[%s5522 + $0xc0] sm:$0xff] %v5571
                  %v5573 = vld [vmem:[%s5521 + $0xc8] sm:$0xff]
                  %5574 = vst [vmem:[%s5522 + $0xc8] sm:$0xff] %v5573
                  %v5575 = vld [vmem:[%s5521 + $0xd0] sm:$0xff]
                  %5576 = vst [vmem:[%s5522 + $0xd0] sm:$0xff] %v5575
                  %v5577 = vld [vmem:[%s5521 + $0xd8] sm:$0xff]
                  %5578 = vst [vmem:[%s5522 + $0xd8] sm:$0xff] %v5577
                  %v5579 = vld [vmem:[%s5521 + $0xe0] sm:$0xff]
                  %5580 = vst [vmem:[%s5522 + $0xe0] sm:$0xff] %v5579
                  %v5581 = vld [vmem:[%s5521 + $0xe8] sm:$0xff]
                  %5582 = vst [vmem:[%s5522 + $0xe8] sm:$0xff] %v5581
                  %v5583 = vld [vmem:[%s5521 + $0xf0] sm:$0xff]
                  %5584 = vst [vmem:[%s5522 + $0xf0] sm:$0xff] %v5583
                  %v5585 = vld [vmem:[%s5521 + $0xf8] sm:$0xff]
                  %5586 = vst [vmem:[%s5522 + $0xf8] sm:$0xff] %v5585
                  %v5587 = vld [vmem:[%s5521 + $0x100] sm:$0xff]
                  %5588 = vst [vmem:[%s5522 + $0x200] sm:$0xff] %v5587
                  %v5589 = vld [vmem:[%s5521 + $0x108] sm:$0xff]
                  %5590 = vst [vmem:[%s5522 + $0x208] sm:$0xff] %v5589
                  %v5591 = vld [vmem:[%s5521 + $0x110] sm:$0xff]
                  %5592 = vst [vmem:[%s5522 + $0x210] sm:$0xff] %v5591
                  %v5593 = vld [vmem:[%s5521 + $0x118] sm:$0xff]
                  %5594 = vst [vmem:[%s5522 + $0x218] sm:$0xff] %v5593
                  %v5595 = vld [vmem:[%s5521 + $0x120] sm:$0xff]
                  %5596 = vst [vmem:[%s5522 + $0x220] sm:$0xff] %v5595
                  %v5597 = vld [vmem:[%s5521 + $0x128] sm:$0xff]
                  %5598 = vst [vmem:[%s5522 + $0x228] sm:$0xff] %v5597
                  %v5599 = vld [vmem:[%s5521 + $0x130] sm:$0xff]
                  %5600 = vst [vmem:[%s5522 + $0x230] sm:$0xff] %v5599
                  %v5601 = vld [vmem:[%s5521 + $0x138] sm:$0xff]
                  %5602 = vst [vmem:[%s5522 + $0x238] sm:$0xff] %v5601
                  %v5603 = vld [vmem:[%s5521 + $0x140] sm:$0xff]
                  %5604 = vst [vmem:[%s5522 + $0x240] sm:$0xff] %v5603
                  %v5605 = vld [vmem:[%s5521 + $0x148] sm:$0xff]
                  %5606 = vst [vmem:[%s5522 + $0x248] sm:$0xff] %v5605
                  %v5607 = vld [vmem:[%s5521 + $0x150] sm:$0xff]
                  %5608 = vst [vmem:[%s5522 + $0x250] sm:$0xff] %v5607
                  %v5609 = vld [vmem:[%s5521 + $0x158] sm:$0xff]
                  %5610 = vst [vmem:[%s5522 + $0x258] sm:$0xff] %v5609
                  %v5611 = vld [vmem:[%s5521 + $0x160] sm:$0xff]
                  %5612 = vst [vmem:[%s5522 + $0x260] sm:$0xff] %v5611
                  %v5613 = vld [vmem:[%s5521 + $0x168] sm:$0xff]
                  %5614 = vst [vmem:[%s5522 + $0x268] sm:$0xff] %v5613
                  %v5615 = vld [vmem:[%s5521 + $0x170] sm:$0xff]
                  %5616 = vst [vmem:[%s5522 + $0x270] sm:$0xff] %v5615
                  %v5617 = vld [vmem:[%s5521 + $0x178] sm:$0xff]
                  %5618 = vst [vmem:[%s5522 + $0x278] sm:$0xff] %v5617
                  %v5619 = vld [vmem:[%s5521 + $0x180] sm:$0xff]
                  %5620 = vst [vmem:[%s5522 + $0x280] sm:$0xff] %v5619
                  %v5621 = vld [vmem:[%s5521 + $0x188] sm:$0xff]
                  %5622 = vst [vmem:[%s5522 + $0x288] sm:$0xff] %v5621
                  %v5623 = vld [vmem:[%s5521 + $0x190] sm:$0xff]
                  %5624 = vst [vmem:[%s5522 + $0x290] sm:$0xff] %v5623
                  %v5625 = vld [vmem:[%s5521 + $0x198] sm:$0xff]
                  %5626 = vst [vmem:[%s5522 + $0x298] sm:$0xff] %v5625
                  %v5627 = vld [vmem:[%s5521 + $0x1a0] sm:$0xff]
                  %5628 = vst [vmem:[%s5522 + $0x2a0] sm:$0xff] %v5627
                  %v5629 = vld [vmem:[%s5521 + $0x1a8] sm:$0xff]
                  %5630 = vst [vmem:[%s5522 + $0x2a8] sm:$0xff] %v5629
                  %v5631 = vld [vmem:[%s5521 + $0x1b0] sm:$0xff]
                  %5632 = vst [vmem:[%s5522 + $0x2b0] sm:$0xff] %v5631
                  %v5633 = vld [vmem:[%s5521 + $0x1b8] sm:$0xff]
                  %5634 = vst [vmem:[%s5522 + $0x2b8] sm:$0xff] %v5633
                  %v5635 = vld [vmem:[%s5521 + $0x1c0] sm:$0xff]
                  %5636 = vst [vmem:[%s5522 + $0x2c0] sm:$0xff] %v5635
                  %v5637 = vld [vmem:[%s5521 + $0x1c8] sm:$0xff]
                  %5638 = vst [vmem:[%s5522 + $0x2c8] sm:$0xff] %v5637
                  %v5639 = vld [vmem:[%s5521 + $0x1d0] sm:$0xff]
                  %5640 = vst [vmem:[%s5522 + $0x2d0] sm:$0xff] %v5639
                  %v5641 = vld [vmem:[%s5521 + $0x1d8] sm:$0xff]
                  %5642 = vst [vmem:[%s5522 + $0x2d8] sm:$0xff] %v5641
                  %v5643 = vld [vmem:[%s5521 + $0x1e0] sm:$0xff]
                  %5644 = vst [vmem:[%s5522 + $0x2e0] sm:$0xff] %v5643
                  %v5645 = vld [vmem:[%s5521 + $0x1e8] sm:$0xff]
                  %5646 = vst [vmem:[%s5522 + $0x2e8] sm:$0xff] %v5645
                  %v5647 = vld [vmem:[%s5521 + $0x1f0] sm:$0xff]
                  %5648 = vst [vmem:[%s5522 + $0x2f0] sm:$0xff] %v5647
                  %v5649 = vld [vmem:[%s5521 + $0x1f8] sm:$0xff]
                  %5650 = vst [vmem:[%s5522 + $0x2f8] sm:$0xff] %v5649
                  %v5651 = vld [vmem:[%s5521 + $0x200] sm:$0xff]
                  %5652 = vst [vmem:[%s5522 + $0x400] sm:$0xff] %v5651
                  %v5653 = vld [vmem:[%s5521 + $0x208] sm:$0xff]
                  %5654 = vst [vmem:[%s5522 + $0x408] sm:$0xff] %v5653
                  %v5655 = vld [vmem:[%s5521 + $0x210] sm:$0xff]
                  %5656 = vst [vmem:[%s5522 + $0x410] sm:$0xff] %v5655
                  %v5657 = vld [vmem:[%s5521 + $0x218] sm:$0xff]
                  %5658 = vst [vmem:[%s5522 + $0x418] sm:$0xff] %v5657
                  %v5659 = vld [vmem:[%s5521 + $0x220] sm:$0xff]
                  %5660 = vst [vmem:[%s5522 + $0x420] sm:$0xff] %v5659
                  %v5661 = vld [vmem:[%s5521 + $0x228] sm:$0xff]
                  %5662 = vst [vmem:[%s5522 + $0x428] sm:$0xff] %v5661
                  %v5663 = vld [vmem:[%s5521 + $0x230] sm:$0xff]
                  %5664 = vst [vmem:[%s5522 + $0x430] sm:$0xff] %v5663
                  %v5665 = vld [vmem:[%s5521 + $0x238] sm:$0xff]
                  %5666 = vst [vmem:[%s5522 + $0x438] sm:$0xff] %v5665
                  %v5667 = vld [vmem:[%s5521 + $0x240] sm:$0xff]
                  %5668 = vst [vmem:[%s5522 + $0x440] sm:$0xff] %v5667
                  %v5669 = vld [vmem:[%s5521 + $0x248] sm:$0xff]
                  %5670 = vst [vmem:[%s5522 + $0x448] sm:$0xff] %v5669
                  %v5671 = vld [vmem:[%s5521 + $0x250] sm:$0xff]
                  %5672 = vst [vmem:[%s5522 + $0x450] sm:$0xff] %v5671
                  %v5673 = vld [vmem:[%s5521 + $0x258] sm:$0xff]
                  %5674 = vst [vmem:[%s5522 + $0x458] sm:$0xff] %v5673
                  %v5675 = vld [vmem:[%s5521 + $0x260] sm:$0xff]
                  %5676 = vst [vmem:[%s5522 + $0x460] sm:$0xff] %v5675
                  %v5677 = vld [vmem:[%s5521 + $0x268] sm:$0xff]
                  %5678 = vst [vmem:[%s5522 + $0x468] sm:$0xff] %v5677
                  %v5679 = vld [vmem:[%s5521 + $0x270] sm:$0xff]
                  %5680 = vst [vmem:[%s5522 + $0x470] sm:$0xff] %v5679
                  %v5681 = vld [vmem:[%s5521 + $0x278] sm:$0xff]
                  %5682 = vst [vmem:[%s5522 + $0x478] sm:$0xff] %v5681
                  %v5683 = vld [vmem:[%s5521 + $0x280] sm:$0xff]
                  %5684 = vst [vmem:[%s5522 + $0x480] sm:$0xff] %v5683
                  %v5685 = vld [vmem:[%s5521 + $0x288] sm:$0xff]
                  %5686 = vst [vmem:[%s5522 + $0x488] sm:$0xff] %v5685
                  %v5687 = vld [vmem:[%s5521 + $0x290] sm:$0xff]
                  %5688 = vst [vmem:[%s5522 + $0x490] sm:$0xff] %v5687
                  %v5689 = vld [vmem:[%s5521 + $0x298] sm:$0xff]
                  %5690 = vst [vmem:[%s5522 + $0x498] sm:$0xff] %v5689
                  %v5691 = vld [vmem:[%s5521 + $0x2a0] sm:$0xff]
                  %5692 = vst [vmem:[%s5522 + $0x4a0] sm:$0xff] %v5691
                  %v5693 = vld [vmem:[%s5521 + $0x2a8] sm:$0xff]
                  %5694 = vst [vmem:[%s5522 + $0x4a8] sm:$0xff] %v5693
                  %v5695 = vld [vmem:[%s5521 + $0x2b0] sm:$0xff]
                  %5696 = vst [vmem:[%s5522 + $0x4b0] sm:$0xff] %v5695
                  %v5697 = vld [vmem:[%s5521 + $0x2b8] sm:$0xff]
                  %5698 = vst [vmem:[%s5522 + $0x4b8] sm:$0xff] %v5697
                  %v5699 = vld [vmem:[%s5521 + $0x2c0] sm:$0xff]
                  %5700 = vst [vmem:[%s5522 + $0x4c0] sm:$0xff] %v5699
                  %v5701 = vld [vmem:[%s5521 + $0x2c8] sm:$0xff]
                  %5702 = vst [vmem:[%s5522 + $0x4c8] sm:$0xff] %v5701
                  %v5703 = vld [vmem:[%s5521 + $0x2d0] sm:$0xff]
                  %5704 = vst [vmem:[%s5522 + $0x4d0] sm:$0xff] %v5703
                  %v5705 = vld [vmem:[%s5521 + $0x2d8] sm:$0xff]
                  %5706 = vst [vmem:[%s5522 + $0x4d8] sm:$0xff] %v5705
                  %v5707 = vld [vmem:[%s5521 + $0x2e0] sm:$0xff]
                  %5708 = vst [vmem:[%s5522 + $0x4e0] sm:$0xff] %v5707
                  %v5709 = vld [vmem:[%s5521 + $0x2e8] sm:$0xff]
                  %5710 = vst [vmem:[%s5522 + $0x4e8] sm:$0xff] %v5709
                  %v5711 = vld [vmem:[%s5521 + $0x2f0] sm:$0xff]
                  %5712 = vst [vmem:[%s5522 + $0x4f0] sm:$0xff] %v5711
                  %v5713 = vld [vmem:[%s5521 + $0x2f8] sm:$0xff]
                  %5714 = vst [vmem:[%s5522 + $0x4f8] sm:$0xff] %v5713
                  %v5715 = vld [vmem:[%s5521 + $0x300] sm:$0xff]
                  %5716 = vst [vmem:[%s5522 + $0x600] sm:$0xff] %v5715
                  %v5717 = vld [vmem:[%s5521 + $0x308] sm:$0xff]
                  %5718 = vst [vmem:[%s5522 + $0x608] sm:$0xff] %v5717
                  %v5719 = vld [vmem:[%s5521 + $0x310] sm:$0xff]
                  %5720 = vst [vmem:[%s5522 + $0x610] sm:$0xff] %v5719
                  %v5721 = vld [vmem:[%s5521 + $0x318] sm:$0xff]
                  %5722 = vst [vmem:[%s5522 + $0x618] sm:$0xff] %v5721
                  %v5723 = vld [vmem:[%s5521 + $0x320] sm:$0xff]
                  %5724 = vst [vmem:[%s5522 + $0x620] sm:$0xff] %v5723
                  %v5725 = vld [vmem:[%s5521 + $0x328] sm:$0xff]
                  %5726 = vst [vmem:[%s5522 + $0x628] sm:$0xff] %v5725
                  %v5727 = vld [vmem:[%s5521 + $0x330] sm:$0xff]
                  %5728 = vst [vmem:[%s5522 + $0x630] sm:$0xff] %v5727
                  %v5729 = vld [vmem:[%s5521 + $0x338] sm:$0xff]
                  %5730 = vst [vmem:[%s5522 + $0x638] sm:$0xff] %v5729
                  %v5731 = vld [vmem:[%s5521 + $0x340] sm:$0xff]
                  %5732 = vst [vmem:[%s5522 + $0x640] sm:$0xff] %v5731
                  %v5733 = vld [vmem:[%s5521 + $0x348] sm:$0xff]
                  %5734 = vst [vmem:[%s5522 + $0x648] sm:$0xff] %v5733
                  %v5735 = vld [vmem:[%s5521 + $0x350] sm:$0xff]
                  %5736 = vst [vmem:[%s5522 + $0x650] sm:$0xff] %v5735
                  %v5737 = vld [vmem:[%s5521 + $0x358] sm:$0xff]
                  %5738 = vst [vmem:[%s5522 + $0x658] sm:$0xff] %v5737
                  %v5739 = vld [vmem:[%s5521 + $0x360] sm:$0xff]
                  %5740 = vst [vmem:[%s5522 + $0x660] sm:$0xff] %v5739
                  %v5741 = vld [vmem:[%s5521 + $0x368] sm:$0xff]
                  %5742 = vst [vmem:[%s5522 + $0x668] sm:$0xff] %v5741
                  %v5743 = vld [vmem:[%s5521 + $0x370] sm:$0xff]
                  %5744 = vst [vmem:[%s5522 + $0x670] sm:$0xff] %v5743
                  %v5745 = vld [vmem:[%s5521 + $0x378] sm:$0xff]
                  %5746 = vst [vmem:[%s5522 + $0x678] sm:$0xff] %v5745
                  %v5747 = vld [vmem:[%s5521 + $0x380] sm:$0xff]
                  %5748 = vst [vmem:[%s5522 + $0x680] sm:$0xff] %v5747
                  %v5749 = vld [vmem:[%s5521 + $0x388] sm:$0xff]
                  %5750 = vst [vmem:[%s5522 + $0x688] sm:$0xff] %v5749
                  %v5751 = vld [vmem:[%s5521 + $0x390] sm:$0xff]
                  %5752 = vst [vmem:[%s5522 + $0x690] sm:$0xff] %v5751
                  %v5753 = vld [vmem:[%s5521 + $0x398] sm:$0xff]
                  %5754 = vst [vmem:[%s5522 + $0x698] sm:$0xff] %v5753
                  %v5755 = vld [vmem:[%s5521 + $0x3a0] sm:$0xff]
                  %5756 = vst [vmem:[%s5522 + $0x6a0] sm:$0xff] %v5755
                  %v5757 = vld [vmem:[%s5521 + $0x3a8] sm:$0xff]
                  %5758 = vst [vmem:[%s5522 + $0x6a8] sm:$0xff] %v5757
                  %v5759 = vld [vmem:[%s5521 + $0x3b0] sm:$0xff]
                  %5760 = vst [vmem:[%s5522 + $0x6b0] sm:$0xff] %v5759
                  %v5761 = vld [vmem:[%s5521 + $0x3b8] sm:$0xff]
                  %5762 = vst [vmem:[%s5522 + $0x6b8] sm:$0xff] %v5761
                  %v5763 = vld [vmem:[%s5521 + $0x3c0] sm:$0xff]
                  %5764 = vst [vmem:[%s5522 + $0x6c0] sm:$0xff] %v5763
                  %v5765 = vld [vmem:[%s5521 + $0x3c8] sm:$0xff]
                  %5766 = vst [vmem:[%s5522 + $0x6c8] sm:$0xff] %v5765
                  %v5767 = vld [vmem:[%s5521 + $0x3d0] sm:$0xff]
                  %5768 = vst [vmem:[%s5522 + $0x6d0] sm:$0xff] %v5767
                  %v5769 = vld [vmem:[%s5521 + $0x3d8] sm:$0xff]
                  %5770 = vst [vmem:[%s5522 + $0x6d8] sm:$0xff] %v5769
                  %v5771 = vld [vmem:[%s5521 + $0x3e0] sm:$0xff]
                  %5772 = vst [vmem:[%s5522 + $0x6e0] sm:$0xff] %v5771
                  %v5773 = vld [vmem:[%s5521 + $0x3e8] sm:$0xff]
                  %5774 = vst [vmem:[%s5522 + $0x6e8] sm:$0xff] %v5773
                  %v5775 = vld [vmem:[%s5521 + $0x3f0] sm:$0xff]
                  %5776 = vst [vmem:[%s5522 + $0x6f0] sm:$0xff] %v5775
                  %v5777 = vld [vmem:[%s5521 + $0x3f8] sm:$0xff]
                  %5778 = vst [vmem:[%s5522 + $0x6f8] sm:$0xff] %v5777
                  %v5779 = vld [vmem:[%s5521 + $0x400] sm:$0xff]
                  %5780 = vst [vmem:[%s5522 + $0x800] sm:$0xff] %v5779
                  %v5781 = vld [vmem:[%s5521 + $0x408] sm:$0xff]
                  %5782 = vst [vmem:[%s5522 + $0x808] sm:$0xff] %v5781
                  %v5783 = vld [vmem:[%s5521 + $0x410] sm:$0xff]
                  %5784 = vst [vmem:[%s5522 + $0x810] sm:$0xff] %v5783
                  %v5785 = vld [vmem:[%s5521 + $0x418] sm:$0xff]
                  %5786 = vst [vmem:[%s5522 + $0x818] sm:$0xff] %v5785
                  %v5787 = vld [vmem:[%s5521 + $0x420] sm:$0xff]
                  %5788 = vst [vmem:[%s5522 + $0x820] sm:$0xff] %v5787
                  %v5789 = vld [vmem:[%s5521 + $0x428] sm:$0xff]
                  %5790 = vst [vmem:[%s5522 + $0x828] sm:$0xff] %v5789
                  %v5791 = vld [vmem:[%s5521 + $0x430] sm:$0xff]
                  %5792 = vst [vmem:[%s5522 + $0x830] sm:$0xff] %v5791
                  %v5793 = vld [vmem:[%s5521 + $0x438] sm:$0xff]
                  %5794 = vst [vmem:[%s5522 + $0x838] sm:$0xff] %v5793
                  %v5795 = vld [vmem:[%s5521 + $0x440] sm:$0xff]
                  %5796 = vst [vmem:[%s5522 + $0x840] sm:$0xff] %v5795
                  %v5797 = vld [vmem:[%s5521 + $0x448] sm:$0xff]
                  %5798 = vst [vmem:[%s5522 + $0x848] sm:$0xff] %v5797
                  %v5799 = vld [vmem:[%s5521 + $0x450] sm:$0xff]
                  %5800 = vst [vmem:[%s5522 + $0x850] sm:$0xff] %v5799
                  %v5801 = vld [vmem:[%s5521 + $0x458] sm:$0xff]
                  %5802 = vst [vmem:[%s5522 + $0x858] sm:$0xff] %v5801
                  %v5803 = vld [vmem:[%s5521 + $0x460] sm:$0xff]
                  %5804 = vst [vmem:[%s5522 + $0x860] sm:$0xff] %v5803
                  %v5805 = vld [vmem:[%s5521 + $0x468] sm:$0xff]
                  %5806 = vst [vmem:[%s5522 + $0x868] sm:$0xff] %v5805
                  %v5807 = vld [vmem:[%s5521 + $0x470] sm:$0xff]
                  %5808 = vst [vmem:[%s5522 + $0x870] sm:$0xff] %v5807
                  %v5809 = vld [vmem:[%s5521 + $0x478] sm:$0xff]
                  %5810 = vst [vmem:[%s5522 + $0x878] sm:$0xff] %v5809
                  %v5811 = vld [vmem:[%s5521 + $0x480] sm:$0xff]
                  %5812 = vst [vmem:[%s5522 + $0x880] sm:$0xff] %v5811
                  %v5813 = vld [vmem:[%s5521 + $0x488] sm:$0xff]
                  %5814 = vst [vmem:[%s5522 + $0x888] sm:$0xff] %v5813
                  %v5815 = vld [vmem:[%s5521 + $0x490] sm:$0xff]
                  %5816 = vst [vmem:[%s5522 + $0x890] sm:$0xff] %v5815
                  %v5817 = vld [vmem:[%s5521 + $0x498] sm:$0xff]
                  %5818 = vst [vmem:[%s5522 + $0x898] sm:$0xff] %v5817
                  %v5819 = vld [vmem:[%s5521 + $0x4a0] sm:$0xff]
                  %5820 = vst [vmem:[%s5522 + $0x8a0] sm:$0xff] %v5819
                  %v5821 = vld [vmem:[%s5521 + $0x4a8] sm:$0xff]
                  %5822 = vst [vmem:[%s5522 + $0x8a8] sm:$0xff] %v5821
                  %v5823 = vld [vmem:[%s5521 + $0x4b0] sm:$0xff]
                  %5824 = vst [vmem:[%s5522 + $0x8b0] sm:$0xff] %v5823
                  %v5825 = vld [vmem:[%s5521 + $0x4b8] sm:$0xff]
                  %5826 = vst [vmem:[%s5522 + $0x8b8] sm:$0xff] %v5825
                  %v5827 = vld [vmem:[%s5521 + $0x4c0] sm:$0xff]
                  %5828 = vst [vmem:[%s5522 + $0x8c0] sm:$0xff] %v5827
                  %v5829 = vld [vmem:[%s5521 + $0x4c8] sm:$0xff]
                  %5830 = vst [vmem:[%s5522 + $0x8c8] sm:$0xff] %v5829
                  %v5831 = vld [vmem:[%s5521 + $0x4d0] sm:$0xff]
                  %5832 = vst [vmem:[%s5522 + $0x8d0] sm:$0xff] %v5831
                  %v5833 = vld [vmem:[%s5521 + $0x4d8] sm:$0xff]
                  %5834 = vst [vmem:[%s5522 + $0x8d8] sm:$0xff] %v5833
                  %v5835 = vld [vmem:[%s5521 + $0x4e0] sm:$0xff]
                  %5836 = vst [vmem:[%s5522 + $0x8e0] sm:$0xff] %v5835
                  %v5837 = vld [vmem:[%s5521 + $0x4e8] sm:$0xff]
                  %5838 = vst [vmem:[%s5522 + $0x8e8] sm:$0xff] %v5837
                  %v5839 = vld [vmem:[%s5521 + $0x4f0] sm:$0xff]
                  %5840 = vst [vmem:[%s5522 + $0x8f0] sm:$0xff] %v5839
                  %v5841 = vld [vmem:[%s5521 + $0x4f8] sm:$0xff]
                  %5842 = vst [vmem:[%s5522 + $0x8f8] sm:$0xff] %v5841
                  %v5843 = vld [vmem:[%s5521 + $0x500] sm:$0xff]
                  %5844 = vst [vmem:[%s5522 + $0xa00] sm:$0xff] %v5843
                  %v5845 = vld [vmem:[%s5521 + $0x508] sm:$0xff]
                  %5846 = vst [vmem:[%s5522 + $0xa08] sm:$0xff] %v5845
                  %v5847 = vld [vmem:[%s5521 + $0x510] sm:$0xff]
                  %5848 = vst [vmem:[%s5522 + $0xa10] sm:$0xff] %v5847
                  %v5849 = vld [vmem:[%s5521 + $0x518] sm:$0xff]
                  %5850 = vst [vmem:[%s5522 + $0xa18] sm:$0xff] %v5849
                  %v5851 = vld [vmem:[%s5521 + $0x520] sm:$0xff]
                  %5852 = vst [vmem:[%s5522 + $0xa20] sm:$0xff] %v5851
                  %v5853 = vld [vmem:[%s5521 + $0x528] sm:$0xff]
                  %5854 = vst [vmem:[%s5522 + $0xa28] sm:$0xff] %v5853
                  %v5855 = vld [vmem:[%s5521 + $0x530] sm:$0xff]
                  %5856 = vst [vmem:[%s5522 + $0xa30] sm:$0xff] %v5855
                  %v5857 = vld [vmem:[%s5521 + $0x538] sm:$0xff]
                  %5858 = vst [vmem:[%s5522 + $0xa38] sm:$0xff] %v5857
                  %v5859 = vld [vmem:[%s5521 + $0x540] sm:$0xff]
                  %5860 = vst [vmem:[%s5522 + $0xa40] sm:$0xff] %v5859
                  %v5861 = vld [vmem:[%s5521 + $0x548] sm:$0xff]
                  %5862 = vst [vmem:[%s5522 + $0xa48] sm:$0xff] %v5861
                  %v5863 = vld [vmem:[%s5521 + $0x550] sm:$0xff]
                  %5864 = vst [vmem:[%s5522 + $0xa50] sm:$0xff] %v5863
                  %v5865 = vld [vmem:[%s5521 + $0x558] sm:$0xff]
                  %5866 = vst [vmem:[%s5522 + $0xa58] sm:$0xff] %v5865
                  %v5867 = vld [vmem:[%s5521 + $0x560] sm:$0xff]
                  %5868 = vst [vmem:[%s5522 + $0xa60] sm:$0xff] %v5867
                  %v5869 = vld [vmem:[%s5521 + $0x568] sm:$0xff]
                  %5870 = vst [vmem:[%s5522 + $0xa68] sm:$0xff] %v5869
                  %v5871 = vld [vmem:[%s5521 + $0x570] sm:$0xff]
                  %5872 = vst [vmem:[%s5522 + $0xa70] sm:$0xff] %v5871
                  %v5873 = vld [vmem:[%s5521 + $0x578] sm:$0xff]
                  %5874 = vst [vmem:[%s5522 + $0xa78] sm:$0xff] %v5873
                  %v5875 = vld [vmem:[%s5521 + $0x580] sm:$0xff]
                  %5876 = vst [vmem:[%s5522 + $0xa80] sm:$0xff] %v5875
                  %v5877 = vld [vmem:[%s5521 + $0x588] sm:$0xff]
                  %5878 = vst [vmem:[%s5522 + $0xa88] sm:$0xff] %v5877
                  %v5879 = vld [vmem:[%s5521 + $0x590] sm:$0xff]
                  %5880 = vst [vmem:[%s5522 + $0xa90] sm:$0xff] %v5879
                  %v5881 = vld [vmem:[%s5521 + $0x598] sm:$0xff]
                  %5882 = vst [vmem:[%s5522 + $0xa98] sm:$0xff] %v5881
                  %v5883 = vld [vmem:[%s5521 + $0x5a0] sm:$0xff]
                  %5884 = vst [vmem:[%s5522 + $0xaa0] sm:$0xff] %v5883
                  %v5885 = vld [vmem:[%s5521 + $0x5a8] sm:$0xff]
                  %5886 = vst [vmem:[%s5522 + $0xaa8] sm:$0xff] %v5885
                  %v5887 = vld [vmem:[%s5521 + $0x5b0] sm:$0xff]
                  %5888 = vst [vmem:[%s5522 + $0xab0] sm:$0xff] %v5887
                  %v5889 = vld [vmem:[%s5521 + $0x5b8] sm:$0xff]
                  %5890 = vst [vmem:[%s5522 + $0xab8] sm:$0xff] %v5889
                  %v5891 = vld [vmem:[%s5521 + $0x5c0] sm:$0xff]
                  %5892 = vst [vmem:[%s5522 + $0xac0] sm:$0xff] %v5891
                  %v5893 = vld [vmem:[%s5521 + $0x5c8] sm:$0xff]
                  %5894 = vst [vmem:[%s5522 + $0xac8] sm:$0xff] %v5893
                  %v5895 = vld [vmem:[%s5521 + $0x5d0] sm:$0xff]
                  %5896 = vst [vmem:[%s5522 + $0xad0] sm:$0xff] %v5895
                  %v5897 = vld [vmem:[%s5521 + $0x5d8] sm:$0xff]
                  %5898 = vst [vmem:[%s5522 + $0xad8] sm:$0xff] %v5897
                  %v5899 = vld [vmem:[%s5521 + $0x5e0] sm:$0xff]
                  %5900 = vst [vmem:[%s5522 + $0xae0] sm:$0xff] %v5899
                  %v5901 = vld [vmem:[%s5521 + $0x5e8] sm:$0xff]
                  %5902 = vst [vmem:[%s5522 + $0xae8] sm:$0xff] %v5901
                  %v5903 = vld [vmem:[%s5521 + $0x5f0] sm:$0xff]
                  %5904 = vst [vmem:[%s5522 + $0xaf0] sm:$0xff] %v5903
                  %v5905 = vld [vmem:[%s5521 + $0x5f8] sm:$0xff]
                  %5906 = vst [vmem:[%s5522 + $0xaf8] sm:$0xff] %v5905
                  %v5907 = vld [vmem:[%s5521 + $0x600] sm:$0xff]
                  %5908 = vst [vmem:[%s5522 + $0xc00] sm:$0xff] %v5907
                  %v5909 = vld [vmem:[%s5521 + $0x608] sm:$0xff]
                  %5910 = vst [vmem:[%s5522 + $0xc08] sm:$0xff] %v5909
                  %v5911 = vld [vmem:[%s5521 + $0x610] sm:$0xff]
                  %5912 = vst [vmem:[%s5522 + $0xc10] sm:$0xff] %v5911
                  %v5913 = vld [vmem:[%s5521 + $0x618] sm:$0xff]
                  %5914 = vst [vmem:[%s5522 + $0xc18] sm:$0xff] %v5913
                  %v5915 = vld [vmem:[%s5521 + $0x620] sm:$0xff]
                  %5916 = vst [vmem:[%s5522 + $0xc20] sm:$0xff] %v5915
                  %v5917 = vld [vmem:[%s5521 + $0x628] sm:$0xff]
                  %5918 = vst [vmem:[%s5522 + $0xc28] sm:$0xff] %v5917
                  %v5919 = vld [vmem:[%s5521 + $0x630] sm:$0xff]
                  %5920 = vst [vmem:[%s5522 + $0xc30] sm:$0xff] %v5919
                  %v5921 = vld [vmem:[%s5521 + $0x638] sm:$0xff]
                  %5922 = vst [vmem:[%s5522 + $0xc38] sm:$0xff] %v5921
                  %v5923 = vld [vmem:[%s5521 + $0x640] sm:$0xff]
                  %5924 = vst [vmem:[%s5522 + $0xc40] sm:$0xff] %v5923
                  %v5925 = vld [vmem:[%s5521 + $0x648] sm:$0xff]
                  %5926 = vst [vmem:[%s5522 + $0xc48] sm:$0xff] %v5925
                  %v5927 = vld [vmem:[%s5521 + $0x650] sm:$0xff]
                  %5928 = vst [vmem:[%s5522 + $0xc50] sm:$0xff] %v5927
                  %v5929 = vld [vmem:[%s5521 + $0x658] sm:$0xff]
                  %5930 = vst [vmem:[%s5522 + $0xc58] sm:$0xff] %v5929
                  %v5931 = vld [vmem:[%s5521 + $0x660] sm:$0xff]
                  %5932 = vst [vmem:[%s5522 + $0xc60] sm:$0xff] %v5931
                  %v5933 = vld [vmem:[%s5521 + $0x668] sm:$0xff]
                  %5934 = vst [vmem:[%s5522 + $0xc68] sm:$0xff] %v5933
                  %v5935 = vld [vmem:[%s5521 + $0x670] sm:$0xff]
                  %5936 = vst [vmem:[%s5522 + $0xc70] sm:$0xff] %v5935
                  %v5937 = vld [vmem:[%s5521 + $0x678] sm:$0xff]
                  %5938 = vst [vmem:[%s5522 + $0xc78] sm:$0xff] %v5937
                  %v5939 = vld [vmem:[%s5521 + $0x680] sm:$0xff]
                  %5940 = vst [vmem:[%s5522 + $0xc80] sm:$0xff] %v5939
                  %v5941 = vld [vmem:[%s5521 + $0x688] sm:$0xff]
                  %5942 = vst [vmem:[%s5522 + $0xc88] sm:$0xff] %v5941
                  %v5943 = vld [vmem:[%s5521 + $0x690] sm:$0xff]
                  %5944 = vst [vmem:[%s5522 + $0xc90] sm:$0xff] %v5943
                  %v5945 = vld [vmem:[%s5521 + $0x698] sm:$0xff]
                  %5946 = vst [vmem:[%s5522 + $0xc98] sm:$0xff] %v5945
                  %v5947 = vld [vmem:[%s5521 + $0x6a0] sm:$0xff]
                  %5948 = vst [vmem:[%s5522 + $0xca0] sm:$0xff] %v5947
                  %v5949 = vld [vmem:[%s5521 + $0x6a8] sm:$0xff]
                  %5950 = vst [vmem:[%s5522 + $0xca8] sm:$0xff] %v5949
                  %v5951 = vld [vmem:[%s5521 + $0x6b0] sm:$0xff]
                  %5952 = vst [vmem:[%s5522 + $0xcb0] sm:$0xff] %v5951
                  %v5953 = vld [vmem:[%s5521 + $0x6b8] sm:$0xff]
                  %5954 = vst [vmem:[%s5522 + $0xcb8] sm:$0xff] %v5953
                  %v5955 = vld [vmem:[%s5521 + $0x6c0] sm:$0xff]
                  %5956 = vst [vmem:[%s5522 + $0xcc0] sm:$0xff] %v5955
                  %v5957 = vld [vmem:[%s5521 + $0x6c8] sm:$0xff]
                  %5958 = vst [vmem:[%s5522 + $0xcc8] sm:$0xff] %v5957
                  %v5959 = vld [vmem:[%s5521 + $0x6d0] sm:$0xff]
                  %5960 = vst [vmem:[%s5522 + $0xcd0] sm:$0xff] %v5959
                  %v5961 = vld [vmem:[%s5521 + $0x6d8] sm:$0xff]
                  %5962 = vst [vmem:[%s5522 + $0xcd8] sm:$0xff] %v5961
                  %v5963 = vld [vmem:[%s5521 + $0x6e0] sm:$0xff]
                  %5964 = vst [vmem:[%s5522 + $0xce0] sm:$0xff] %v5963
                  %v5965 = vld [vmem:[%s5521 + $0x6e8] sm:$0xff]
                  %5966 = vst [vmem:[%s5522 + $0xce8] sm:$0xff] %v5965
                  %v5967 = vld [vmem:[%s5521 + $0x6f0] sm:$0xff]
                  %5968 = vst [vmem:[%s5522 + $0xcf0] sm:$0xff] %v5967
                  %v5969 = vld [vmem:[%s5521 + $0x6f8] sm:$0xff]
                  %5970 = vst [vmem:[%s5522 + $0xcf8] sm:$0xff] %v5969
                  %v5971 = vld [vmem:[%s5521 + $0x700] sm:$0xff]
                  %5972 = vst [vmem:[%s5522 + $0xe00] sm:$0xff] %v5971
                  %v5973 = vld [vmem:[%s5521 + $0x708] sm:$0xff]
                  %5974 = vst [vmem:[%s5522 + $0xe08] sm:$0xff] %v5973
                  %v5975 = vld [vmem:[%s5521 + $0x710] sm:$0xff]
                  %5976 = vst [vmem:[%s5522 + $0xe10] sm:$0xff] %v5975
                  %v5977 = vld [vmem:[%s5521 + $0x718] sm:$0xff]
                  %5978 = vst [vmem:[%s5522 + $0xe18] sm:$0xff] %v5977
                  %v5979 = vld [vmem:[%s5521 + $0x720] sm:$0xff]
                  %5980 = vst [vmem:[%s5522 + $0xe20] sm:$0xff] %v5979
                  %v5981 = vld [vmem:[%s5521 + $0x728] sm:$0xff]
                  %5982 = vst [vmem:[%s5522 + $0xe28] sm:$0xff] %v5981
                  %v5983 = vld [vmem:[%s5521 + $0x730] sm:$0xff]
                  %5984 = vst [vmem:[%s5522 + $0xe30] sm:$0xff] %v5983
                  %v5985 = vld [vmem:[%s5521 + $0x738] sm:$0xff]
                  %5986 = vst [vmem:[%s5522 + $0xe38] sm:$0xff] %v5985
                  %v5987 = vld [vmem:[%s5521 + $0x740] sm:$0xff]
                  %5988 = vst [vmem:[%s5522 + $0xe40] sm:$0xff] %v5987
                  %v5989 = vld [vmem:[%s5521 + $0x748] sm:$0xff]
                  %5990 = vst [vmem:[%s5522 + $0xe48] sm:$0xff] %v5989
                  %v5991 = vld [vmem:[%s5521 + $0x750] sm:$0xff]
                  %5992 = vst [vmem:[%s5522 + $0xe50] sm:$0xff] %v5991
                  %v5993 = vld [vmem:[%s5521 + $0x758] sm:$0xff]
                  %5994 = vst [vmem:[%s5522 + $0xe58] sm:$0xff] %v5993
                  %v5995 = vld [vmem:[%s5521 + $0x760] sm:$0xff]
                  %5996 = vst [vmem:[%s5522 + $0xe60] sm:$0xff] %v5995
                  %v5997 = vld [vmem:[%s5521 + $0x768] sm:$0xff]
                  %5998 = vst [vmem:[%s5522 + $0xe68] sm:$0xff] %v5997
                  %v5999 = vld [vmem:[%s5521 + $0x770] sm:$0xff]
                  %6000 = vst [vmem:[%s5522 + $0xe70] sm:$0xff] %v5999
                  %v6001 = vld [vmem:[%s5521 + $0x778] sm:$0xff]
                  %6002 = vst [vmem:[%s5522 + $0xe78] sm:$0xff] %v6001
                  %v6003 = vld [vmem:[%s5521 + $0x780] sm:$0xff]
                  %6004 = vst [vmem:[%s5522 + $0xe80] sm:$0xff] %v6003
                  %v6005 = vld [vmem:[%s5521 + $0x788] sm:$0xff]
                  %6006 = vst [vmem:[%s5522 + $0xe88] sm:$0xff] %v6005
                  %v6007 = vld [vmem:[%s5521 + $0x790] sm:$0xff]
                  %6008 = vst [vmem:[%s5522 + $0xe90] sm:$0xff] %v6007
                  %v6009 = vld [vmem:[%s5521 + $0x798] sm:$0xff]
                  %6010 = vst [vmem:[%s5522 + $0xe98] sm:$0xff] %v6009
                  %v6011 = vld [vmem:[%s5521 + $0x7a0] sm:$0xff]
                  %6012 = vst [vmem:[%s5522 + $0xea0] sm:$0xff] %v6011
                  %v6013 = vld [vmem:[%s5521 + $0x7a8] sm:$0xff]
                  %6014 = vst [vmem:[%s5522 + $0xea8] sm:$0xff] %v6013
                  %v6015 = vld [vmem:[%s5521 + $0x7b0] sm:$0xff]
                  %6016 = vst [vmem:[%s5522 + $0xeb0] sm:$0xff] %v6015
                  %v6017 = vld [vmem:[%s5521 + $0x7b8] sm:$0xff]
                  %6018 = vst [vmem:[%s5522 + $0xeb8] sm:$0xff] %v6017
                  %v6019 = vld [vmem:[%s5521 + $0x7c0] sm:$0xff]
                  %6020 = vst [vmem:[%s5522 + $0xec0] sm:$0xff] %v6019
                  %v6021 = vld [vmem:[%s5521 + $0x7c8] sm:$0xff]
                  %6022 = vst [vmem:[%s5522 + $0xec8] sm:$0xff] %v6021
                  %v6023 = vld [vmem:[%s5521 + $0x7d0] sm:$0xff]
                  %6024 = vst [vmem:[%s5522 + $0xed0] sm:$0xff] %v6023
                  %v6025 = vld [vmem:[%s5521 + $0x7d8] sm:$0xff]
                  %6026 = vst [vmem:[%s5522 + $0xed8] sm:$0xff] %v6025
                  %v6027 = vld [vmem:[%s5521 + $0x7e0] sm:$0xff]
                  %6028 = vst [vmem:[%s5522 + $0xee0] sm:$0xff] %v6027
                  %v6029 = vld [vmem:[%s5521 + $0x7e8] sm:$0xff]
                  %6030 = vst [vmem:[%s5522 + $0xee8] sm:$0xff] %v6029
                  %v6031 = vld [vmem:[%s5521 + $0x7f0] sm:$0xff]
                  %6032 = vst [vmem:[%s5522 + $0xef0] sm:$0xff] %v6031
                  %v6033 = vld [vmem:[%s5521 + $0x7f8] sm:$0xff]
                  %6034 = vst [vmem:[%s5522 + $0xef8] sm:$0xff] %v6033
                $region92: #{generator_forward.1} parent=86 // loop_footer
                  %s5520 = sadd.s32 1, %s5516
                $region93: #{generator_forward.1} parent=86 // loop_footer_branch
                  %5515 = sbr.rel target = $region89
                $region94: #{generator_forward.1} parent=86 // loop_exit
                  _
              $region87: #{generator_forward.1} parent=71 // pred_fallthru
                _
              // Predicated region
              $region95: #{generator_forward.1} parent=71 // pred_check
                _
              $region96: #{generator_forward.1} parent=71 // pred_check_branch
                %6036 = sbr.rel target = $region98
              $region97: #{generator_forward.1} parent=71 // pred_region
                _
              $region98: #{generator_forward.1} parent=71 // pred_fallthru
                _
            $region72: #{generator_forward.1} parent=67 // pred_fallthru
              _
            // Predicated region
            $region73: #{generator_forward.1} parent=67 // pred_check
              _
            $region74: #{generator_forward.1} parent=67 // pred_check_branch
              %4991 = sbr.rel target = $region76
            $region75: #{generator_forward.1} parent=67 // pred_region
              loop: start=0, step=1, limit=1
              $region77: #{generator_forward.1} parent=75 // loop_pre_header
                _
              $region78: #{generator_forward.1} parent=75 // loop_header
                %s4994 = sphi 0, %s4998
                %p4995 = scmp.ge.s32.totalorder %s4994, 1
                %s4999 = sphi %s4979, %s4979
                %s5000 = sphi %s4985, %s4985
              $region79: #{generator_forward.1} parent=75 // loop_header_branch
                %4997 = sbr.rel (%p4995) target = $region83
              $region80: #{generator_forward.1} parent=75 // loop_body
                %v5001 = vld [vmem:[%s4999] sm:$0xff]
                %5002 = vst [vmem:[%s5000] sm:$0xff] %v5001
                %v5003 = vld [vmem:[%s4999 + $0x8] sm:$0xff]
                %5004 = vst [vmem:[%s5000 + $0x8] sm:$0xff] %v5003
                %v5005 = vld [vmem:[%s4999 + $0x10] sm:$0xff]
                %5006 = vst [vmem:[%s5000 + $0x10] sm:$0xff] %v5005
                %v5007 = vld [vmem:[%s4999 + $0x18] sm:$0xff]
                %5008 = vst [vmem:[%s5000 + $0x18] sm:$0xff] %v5007
                %v5009 = vld [vmem:[%s4999 + $0x20] sm:$0xff]
                %5010 = vst [vmem:[%s5000 + $0x20] sm:$0xff] %v5009
                %v5011 = vld [vmem:[%s4999 + $0x28] sm:$0xff]
                %5012 = vst [vmem:[%s5000 + $0x28] sm:$0xff] %v5011
                %v5013 = vld [vmem:[%s4999 + $0x30] sm:$0xff]
                %5014 = vst [vmem:[%s5000 + $0x30] sm:$0xff] %v5013
                %v5015 = vld [vmem:[%s4999 + $0x38] sm:$0xff]
                %5016 = vst [vmem:[%s5000 + $0x38] sm:$0xff] %v5015
                %v5017 = vld [vmem:[%s4999 + $0x40] sm:$0xff]
                %5018 = vst [vmem:[%s5000 + $0x40] sm:$0xff] %v5017
                %v5019 = vld [vmem:[%s4999 + $0x48] sm:$0xff]
                %5020 = vst [vmem:[%s5000 + $0x48] sm:$0xff] %v5019
                %v5021 = vld [vmem:[%s4999 + $0x50] sm:$0xff]
                %5022 = vst [vmem:[%s5000 + $0x50] sm:$0xff] %v5021
                %v5023 = vld [vmem:[%s4999 + $0x58] sm:$0xff]
                %5024 = vst [vmem:[%s5000 + $0x58] sm:$0xff] %v5023
                %v5025 = vld [vmem:[%s4999 + $0x60] sm:$0xff]
                %5026 = vst [vmem:[%s5000 + $0x60] sm:$0xff] %v5025
                %v5027 = vld [vmem:[%s4999 + $0x68] sm:$0xff]
                %5028 = vst [vmem:[%s5000 + $0x68] sm:$0xff] %v5027
                %v5029 = vld [vmem:[%s4999 + $0x70] sm:$0xff]
                %5030 = vst [vmem:[%s5000 + $0x70] sm:$0xff] %v5029
                %v5031 = vld [vmem:[%s4999 + $0x78] sm:$0xff]
                %5032 = vst [vmem:[%s5000 + $0x78] sm:$0xff] %v5031
                %v5033 = vld [vmem:[%s4999 + $0x80] sm:$0xff]
                %5034 = vst [vmem:[%s5000 + $0x80] sm:$0xff] %v5033
                %v5035 = vld [vmem:[%s4999 + $0x88] sm:$0xff]
                %5036 = vst [vmem:[%s5000 + $0x88] sm:$0xff] %v5035
                %v5037 = vld [vmem:[%s4999 + $0x90] sm:$0xff]
                %5038 = vst [vmem:[%s5000 + $0x90] sm:$0xff] %v5037
                %v5039 = vld [vmem:[%s4999 + $0x98] sm:$0xff]
                %5040 = vst [vmem:[%s5000 + $0x98] sm:$0xff] %v5039
                %v5041 = vld [vmem:[%s4999 + $0xa0] sm:$0xff]
                %5042 = vst [vmem:[%s5000 + $0xa0] sm:$0xff] %v5041
                %v5043 = vld [vmem:[%s4999 + $0xa8] sm:$0xff]
                %5044 = vst [vmem:[%s5000 + $0xa8] sm:$0xff] %v5043
                %v5045 = vld [vmem:[%s4999 + $0xb0] sm:$0xff]
                %5046 = vst [vmem:[%s5000 + $0xb0] sm:$0xff] %v5045
                %v5047 = vld [vmem:[%s4999 + $0xb8] sm:$0xff]
                %5048 = vst [vmem:[%s5000 + $0xb8] sm:$0xff] %v5047
                %v5049 = vld [vmem:[%s4999 + $0xc0] sm:$0xff]
                %5050 = vst [vmem:[%s5000 + $0xc0] sm:$0xff] %v5049
                %v5051 = vld [vmem:[%s4999 + $0xc8] sm:$0xff]
                %5052 = vst [vmem:[%s5000 + $0xc8] sm:$0xff] %v5051
                %v5053 = vld [vmem:[%s4999 + $0xd0] sm:$0xff]
                %5054 = vst [vmem:[%s5000 + $0xd0] sm:$0xff] %v5053
                %v5055 = vld [vmem:[%s4999 + $0xd8] sm:$0xff]
                %5056 = vst [vmem:[%s5000 + $0xd8] sm:$0xff] %v5055
                %v5057 = vld [vmem:[%s4999 + $0xe0] sm:$0xff]
                %5058 = vst [vmem:[%s5000 + $0xe0] sm:$0xff] %v5057
                %v5059 = vld [vmem:[%s4999 + $0xe8] sm:$0xff]
                %5060 = vst [vmem:[%s5000 + $0xe8] sm:$0xff] %v5059
                %v5061 = vld [vmem:[%s4999 + $0xf0] sm:$0xff]
                %5062 = vst [vmem:[%s5000 + $0xf0] sm:$0xff] %v5061
                %v5063 = vld [vmem:[%s4999 + $0xf8] sm:$0xff]
                %5064 = vst [vmem:[%s5000 + $0xf8] sm:$0xff] %v5063
                %v5065 = vld [vmem:[%s4999 + $0x100] sm:$0xff]
                %5066 = vst [vmem:[%s5000 + $0x200] sm:$0xff] %v5065
                %v5067 = vld [vmem:[%s4999 + $0x108] sm:$0xff]
                %5068 = vst [vmem:[%s5000 + $0x208] sm:$0xff] %v5067
                %v5069 = vld [vmem:[%s4999 + $0x110] sm:$0xff]
                %5070 = vst [vmem:[%s5000 + $0x210] sm:$0xff] %v5069
                %v5071 = vld [vmem:[%s4999 + $0x118] sm:$0xff]
                %5072 = vst [vmem:[%s5000 + $0x218] sm:$0xff] %v5071
                %v5073 = vld [vmem:[%s4999 + $0x120] sm:$0xff]
                %5074 = vst [vmem:[%s5000 + $0x220] sm:$0xff] %v5073
                %v5075 = vld [vmem:[%s4999 + $0x128] sm:$0xff]
                %5076 = vst [vmem:[%s5000 + $0x228] sm:$0xff] %v5075
                %v5077 = vld [vmem:[%s4999 + $0x130] sm:$0xff]
                %5078 = vst [vmem:[%s5000 + $0x230] sm:$0xff] %v5077
                %v5079 = vld [vmem:[%s4999 + $0x138] sm:$0xff]
                %5080 = vst [vmem:[%s5000 + $0x238] sm:$0xff] %v5079
                %v5081 = vld [vmem:[%s4999 + $0x140] sm:$0xff]
                %5082 = vst [vmem:[%s5000 + $0x240] sm:$0xff] %v5081
                %v5083 = vld [vmem:[%s4999 + $0x148] sm:$0xff]
                %5084 = vst [vmem:[%s5000 + $0x248] sm:$0xff] %v5083
                %v5085 = vld [vmem:[%s4999 + $0x150] sm:$0xff]
                %5086 = vst [vmem:[%s5000 + $0x250] sm:$0xff] %v5085
                %v5087 = vld [vmem:[%s4999 + $0x158] sm:$0xff]
                %5088 = vst [vmem:[%s5000 + $0x258] sm:$0xff] %v5087
                %v5089 = vld [vmem:[%s4999 + $0x160] sm:$0xff]
                %5090 = vst [vmem:[%s5000 + $0x260] sm:$0xff] %v5089
                %v5091 = vld [vmem:[%s4999 + $0x168] sm:$0xff]
                %5092 = vst [vmem:[%s5000 + $0x268] sm:$0xff] %v5091
                %v5093 = vld [vmem:[%s4999 + $0x170] sm:$0xff]
                %5094 = vst [vmem:[%s5000 + $0x270] sm:$0xff] %v5093
                %v5095 = vld [vmem:[%s4999 + $0x178] sm:$0xff]
                %5096 = vst [vmem:[%s5000 + $0x278] sm:$0xff] %v5095
                %v5097 = vld [vmem:[%s4999 + $0x180] sm:$0xff]
                %5098 = vst [vmem:[%s5000 + $0x280] sm:$0xff] %v5097
                %v5099 = vld [vmem:[%s4999 + $0x188] sm:$0xff]
                %5100 = vst [vmem:[%s5000 + $0x288] sm:$0xff] %v5099
                %v5101 = vld [vmem:[%s4999 + $0x190] sm:$0xff]
                %5102 = vst [vmem:[%s5000 + $0x290] sm:$0xff] %v5101
                %v5103 = vld [vmem:[%s4999 + $0x198] sm:$0xff]
                %5104 = vst [vmem:[%s5000 + $0x298] sm:$0xff] %v5103
                %v5105 = vld [vmem:[%s4999 + $0x1a0] sm:$0xff]
                %5106 = vst [vmem:[%s5000 + $0x2a0] sm:$0xff] %v5105
                %v5107 = vld [vmem:[%s4999 + $0x1a8] sm:$0xff]
                %5108 = vst [vmem:[%s5000 + $0x2a8] sm:$0xff] %v5107
                %v5109 = vld [vmem:[%s4999 + $0x1b0] sm:$0xff]
                %5110 = vst [vmem:[%s5000 + $0x2b0] sm:$0xff] %v5109
                %v5111 = vld [vmem:[%s4999 + $0x1b8] sm:$0xff]
                %5112 = vst [vmem:[%s5000 + $0x2b8] sm:$0xff] %v5111
                %v5113 = vld [vmem:[%s4999 + $0x1c0] sm:$0xff]
                %5114 = vst [vmem:[%s5000 + $0x2c0] sm:$0xff] %v5113
                %v5115 = vld [vmem:[%s4999 + $0x1c8] sm:$0xff]
                %5116 = vst [vmem:[%s5000 + $0x2c8] sm:$0xff] %v5115
                %v5117 = vld [vmem:[%s4999 + $0x1d0] sm:$0xff]
                %5118 = vst [vmem:[%s5000 + $0x2d0] sm:$0xff] %v5117
                %v5119 = vld [vmem:[%s4999 + $0x1d8] sm:$0xff]
                %5120 = vst [vmem:[%s5000 + $0x2d8] sm:$0xff] %v5119
                %v5121 = vld [vmem:[%s4999 + $0x1e0] sm:$0xff]
                %5122 = vst [vmem:[%s5000 + $0x2e0] sm:$0xff] %v5121
                %v5123 = vld [vmem:[%s4999 + $0x1e8] sm:$0xff]
                %5124 = vst [vmem:[%s5000 + $0x2e8] sm:$0xff] %v5123
                %v5125 = vld [vmem:[%s4999 + $0x1f0] sm:$0xff]
                %5126 = vst [vmem:[%s5000 + $0x2f0] sm:$0xff] %v5125
                %v5127 = vld [vmem:[%s4999 + $0x1f8] sm:$0xff]
                %5128 = vst [vmem:[%s5000 + $0x2f8] sm:$0xff] %v5127
                %v5129 = vld [vmem:[%s4999 + $0x200] sm:$0xff]
                %5130 = vst [vmem:[%s5000 + $0x400] sm:$0xff] %v5129
                %v5131 = vld [vmem:[%s4999 + $0x208] sm:$0xff]
                %5132 = vst [vmem:[%s5000 + $0x408] sm:$0xff] %v5131
                %v5133 = vld [vmem:[%s4999 + $0x210] sm:$0xff]
                %5134 = vst [vmem:[%s5000 + $0x410] sm:$0xff] %v5133
                %v5135 = vld [vmem:[%s4999 + $0x218] sm:$0xff]
                %5136 = vst [vmem:[%s5000 + $0x418] sm:$0xff] %v5135
                %v5137 = vld [vmem:[%s4999 + $0x220] sm:$0xff]
                %5138 = vst [vmem:[%s5000 + $0x420] sm:$0xff] %v5137
                %v5139 = vld [vmem:[%s4999 + $0x228] sm:$0xff]
                %5140 = vst [vmem:[%s5000 + $0x428] sm:$0xff] %v5139
                %v5141 = vld [vmem:[%s4999 + $0x230] sm:$0xff]
                %5142 = vst [vmem:[%s5000 + $0x430] sm:$0xff] %v5141
                %v5143 = vld [vmem:[%s4999 + $0x238] sm:$0xff]
                %5144 = vst [vmem:[%s5000 + $0x438] sm:$0xff] %v5143
                %v5145 = vld [vmem:[%s4999 + $0x240] sm:$0xff]
                %5146 = vst [vmem:[%s5000 + $0x440] sm:$0xff] %v5145
                %v5147 = vld [vmem:[%s4999 + $0x248] sm:$0xff]
                %5148 = vst [vmem:[%s5000 + $0x448] sm:$0xff] %v5147
                %v5149 = vld [vmem:[%s4999 + $0x250] sm:$0xff]
                %5150 = vst [vmem:[%s5000 + $0x450] sm:$0xff] %v5149
                %v5151 = vld [vmem:[%s4999 + $0x258] sm:$0xff]
                %5152 = vst [vmem:[%s5000 + $0x458] sm:$0xff] %v5151
                %v5153 = vld [vmem:[%s4999 + $0x260] sm:$0xff]
                %5154 = vst [vmem:[%s5000 + $0x460] sm:$0xff] %v5153
                %v5155 = vld [vmem:[%s4999 + $0x268] sm:$0xff]
                %5156 = vst [vmem:[%s5000 + $0x468] sm:$0xff] %v5155
                %v5157 = vld [vmem:[%s4999 + $0x270] sm:$0xff]
                %5158 = vst [vmem:[%s5000 + $0x470] sm:$0xff] %v5157
                %v5159 = vld [vmem:[%s4999 + $0x278] sm:$0xff]
                %5160 = vst [vmem:[%s5000 + $0x478] sm:$0xff] %v5159
                %v5161 = vld [vmem:[%s4999 + $0x280] sm:$0xff]
                %5162 = vst [vmem:[%s5000 + $0x480] sm:$0xff] %v5161
                %v5163 = vld [vmem:[%s4999 + $0x288] sm:$0xff]
                %5164 = vst [vmem:[%s5000 + $0x488] sm:$0xff] %v5163
                %v5165 = vld [vmem:[%s4999 + $0x290] sm:$0xff]
                %5166 = vst [vmem:[%s5000 + $0x490] sm:$0xff] %v5165
                %v5167 = vld [vmem:[%s4999 + $0x298] sm:$0xff]
                %5168 = vst [vmem:[%s5000 + $0x498] sm:$0xff] %v5167
                %v5169 = vld [vmem:[%s4999 + $0x2a0] sm:$0xff]
                %5170 = vst [vmem:[%s5000 + $0x4a0] sm:$0xff] %v5169
                %v5171 = vld [vmem:[%s4999 + $0x2a8] sm:$0xff]
                %5172 = vst [vmem:[%s5000 + $0x4a8] sm:$0xff] %v5171
                %v5173 = vld [vmem:[%s4999 + $0x2b0] sm:$0xff]
                %5174 = vst [vmem:[%s5000 + $0x4b0] sm:$0xff] %v5173
                %v5175 = vld [vmem:[%s4999 + $0x2b8] sm:$0xff]
                %5176 = vst [vmem:[%s5000 + $0x4b8] sm:$0xff] %v5175
                %v5177 = vld [vmem:[%s4999 + $0x2c0] sm:$0xff]
                %5178 = vst [vmem:[%s5000 + $0x4c0] sm:$0xff] %v5177
                %v5179 = vld [vmem:[%s4999 + $0x2c8] sm:$0xff]
                %5180 = vst [vmem:[%s5000 + $0x4c8] sm:$0xff] %v5179
                %v5181 = vld [vmem:[%s4999 + $0x2d0] sm:$0xff]
                %5182 = vst [vmem:[%s5000 + $0x4d0] sm:$0xff] %v5181
                %v5183 = vld [vmem:[%s4999 + $0x2d8] sm:$0xff]
                %5184 = vst [vmem:[%s5000 + $0x4d8] sm:$0xff] %v5183
                %v5185 = vld [vmem:[%s4999 + $0x2e0] sm:$0xff]
                %5186 = vst [vmem:[%s5000 + $0x4e0] sm:$0xff] %v5185
                %v5187 = vld [vmem:[%s4999 + $0x2e8] sm:$0xff]
                %5188 = vst [vmem:[%s5000 + $0x4e8] sm:$0xff] %v5187
                %v5189 = vld [vmem:[%s4999 + $0x2f0] sm:$0xff]
                %5190 = vst [vmem:[%s5000 + $0x4f0] sm:$0xff] %v5189
                %v5191 = vld [vmem:[%s4999 + $0x2f8] sm:$0xff]
                %5192 = vst [vmem:[%s5000 + $0x4f8] sm:$0xff] %v5191
                %v5193 = vld [vmem:[%s4999 + $0x300] sm:$0xff]
                %5194 = vst [vmem:[%s5000 + $0x600] sm:$0xff] %v5193
                %v5195 = vld [vmem:[%s4999 + $0x308] sm:$0xff]
                %5196 = vst [vmem:[%s5000 + $0x608] sm:$0xff] %v5195
                %v5197 = vld [vmem:[%s4999 + $0x310] sm:$0xff]
                %5198 = vst [vmem:[%s5000 + $0x610] sm:$0xff] %v5197
                %v5199 = vld [vmem:[%s4999 + $0x318] sm:$0xff]
                %5200 = vst [vmem:[%s5000 + $0x618] sm:$0xff] %v5199
                %v5201 = vld [vmem:[%s4999 + $0x320] sm:$0xff]
                %5202 = vst [vmem:[%s5000 + $0x620] sm:$0xff] %v5201
                %v5203 = vld [vmem:[%s4999 + $0x328] sm:$0xff]
                %5204 = vst [vmem:[%s5000 + $0x628] sm:$0xff] %v5203
                %v5205 = vld [vmem:[%s4999 + $0x330] sm:$0xff]
                %5206 = vst [vmem:[%s5000 + $0x630] sm:$0xff] %v5205
                %v5207 = vld [vmem:[%s4999 + $0x338] sm:$0xff]
                %5208 = vst [vmem:[%s5000 + $0x638] sm:$0xff] %v5207
                %v5209 = vld [vmem:[%s4999 + $0x340] sm:$0xff]
                %5210 = vst [vmem:[%s5000 + $0x640] sm:$0xff] %v5209
                %v5211 = vld [vmem:[%s4999 + $0x348] sm:$0xff]
                %5212 = vst [vmem:[%s5000 + $0x648] sm:$0xff] %v5211
                %v5213 = vld [vmem:[%s4999 + $0x350] sm:$0xff]
                %5214 = vst [vmem:[%s5000 + $0x650] sm:$0xff] %v5213
                %v5215 = vld [vmem:[%s4999 + $0x358] sm:$0xff]
                %5216 = vst [vmem:[%s5000 + $0x658] sm:$0xff] %v5215
                %v5217 = vld [vmem:[%s4999 + $0x360] sm:$0xff]
                %5218 = vst [vmem:[%s5000 + $0x660] sm:$0xff] %v5217
                %v5219 = vld [vmem:[%s4999 + $0x368] sm:$0xff]
                %5220 = vst [vmem:[%s5000 + $0x668] sm:$0xff] %v5219
                %v5221 = vld [vmem:[%s4999 + $0x370] sm:$0xff]
                %5222 = vst [vmem:[%s5000 + $0x670] sm:$0xff] %v5221
                %v5223 = vld [vmem:[%s4999 + $0x378] sm:$0xff]
                %5224 = vst [vmem:[%s5000 + $0x678] sm:$0xff] %v5223
                %v5225 = vld [vmem:[%s4999 + $0x380] sm:$0xff]
                %5226 = vst [vmem:[%s5000 + $0x680] sm:$0xff] %v5225
                %v5227 = vld [vmem:[%s4999 + $0x388] sm:$0xff]
                %5228 = vst [vmem:[%s5000 + $0x688] sm:$0xff] %v5227
                %v5229 = vld [vmem:[%s4999 + $0x390] sm:$0xff]
                %5230 = vst [vmem:[%s5000 + $0x690] sm:$0xff] %v5229
                %v5231 = vld [vmem:[%s4999 + $0x398] sm:$0xff]
                %5232 = vst [vmem:[%s5000 + $0x698] sm:$0xff] %v5231
                %v5233 = vld [vmem:[%s4999 + $0x3a0] sm:$0xff]
                %5234 = vst [vmem:[%s5000 + $0x6a0] sm:$0xff] %v5233
                %v5235 = vld [vmem:[%s4999 + $0x3a8] sm:$0xff]
                %5236 = vst [vmem:[%s5000 + $0x6a8] sm:$0xff] %v5235
                %v5237 = vld [vmem:[%s4999 + $0x3b0] sm:$0xff]
                %5238 = vst [vmem:[%s5000 + $0x6b0] sm:$0xff] %v5237
                %v5239 = vld [vmem:[%s4999 + $0x3b8] sm:$0xff]
                %5240 = vst [vmem:[%s5000 + $0x6b8] sm:$0xff] %v5239
                %v5241 = vld [vmem:[%s4999 + $0x3c0] sm:$0xff]
                %5242 = vst [vmem:[%s5000 + $0x6c0] sm:$0xff] %v5241
                %v5243 = vld [vmem:[%s4999 + $0x3c8] sm:$0xff]
                %5244 = vst [vmem:[%s5000 + $0x6c8] sm:$0xff] %v5243
                %v5245 = vld [vmem:[%s4999 + $0x3d0] sm:$0xff]
                %5246 = vst [vmem:[%s5000 + $0x6d0] sm:$0xff] %v5245
                %v5247 = vld [vmem:[%s4999 + $0x3d8] sm:$0xff]
                %5248 = vst [vmem:[%s5000 + $0x6d8] sm:$0xff] %v5247
                %v5249 = vld [vmem:[%s4999 + $0x3e0] sm:$0xff]
                %5250 = vst [vmem:[%s5000 + $0x6e0] sm:$0xff] %v5249
                %v5251 = vld [vmem:[%s4999 + $0x3e8] sm:$0xff]
                %5252 = vst [vmem:[%s5000 + $0x6e8] sm:$0xff] %v5251
                %v5253 = vld [vmem:[%s4999 + $0x3f0] sm:$0xff]
                %5254 = vst [vmem:[%s5000 + $0x6f0] sm:$0xff] %v5253
                %v5255 = vld [vmem:[%s4999 + $0x3f8] sm:$0xff]
                %5256 = vst [vmem:[%s5000 + $0x6f8] sm:$0xff] %v5255
                %v5257 = vld [vmem:[%s4999 + $0x400] sm:$0xff]
                %5258 = vst [vmem:[%s5000 + $0x800] sm:$0xff] %v5257
                %v5259 = vld [vmem:[%s4999 + $0x408] sm:$0xff]
                %5260 = vst [vmem:[%s5000 + $0x808] sm:$0xff] %v5259
                %v5261 = vld [vmem:[%s4999 + $0x410] sm:$0xff]
                %5262 = vst [vmem:[%s5000 + $0x810] sm:$0xff] %v5261
                %v5263 = vld [vmem:[%s4999 + $0x418] sm:$0xff]
                %5264 = vst [vmem:[%s5000 + $0x818] sm:$0xff] %v5263
                %v5265 = vld [vmem:[%s4999 + $0x420] sm:$0xff]
                %5266 = vst [vmem:[%s5000 + $0x820] sm:$0xff] %v5265
                %v5267 = vld [vmem:[%s4999 + $0x428] sm:$0xff]
                %5268 = vst [vmem:[%s5000 + $0x828] sm:$0xff] %v5267
                %v5269 = vld [vmem:[%s4999 + $0x430] sm:$0xff]
                %5270 = vst [vmem:[%s5000 + $0x830] sm:$0xff] %v5269
                %v5271 = vld [vmem:[%s4999 + $0x438] sm:$0xff]
                %5272 = vst [vmem:[%s5000 + $0x838] sm:$0xff] %v5271
                %v5273 = vld [vmem:[%s4999 + $0x440] sm:$0xff]
                %5274 = vst [vmem:[%s5000 + $0x840] sm:$0xff] %v5273
                %v5275 = vld [vmem:[%s4999 + $0x448] sm:$0xff]
                %5276 = vst [vmem:[%s5000 + $0x848] sm:$0xff] %v5275
                %v5277 = vld [vmem:[%s4999 + $0x450] sm:$0xff]
                %5278 = vst [vmem:[%s5000 + $0x850] sm:$0xff] %v5277
                %v5279 = vld [vmem:[%s4999 + $0x458] sm:$0xff]
                %5280 = vst [vmem:[%s5000 + $0x858] sm:$0xff] %v5279
                %v5281 = vld [vmem:[%s4999 + $0x460] sm:$0xff]
                %5282 = vst [vmem:[%s5000 + $0x860] sm:$0xff] %v5281
                %v5283 = vld [vmem:[%s4999 + $0x468] sm:$0xff]
                %5284 = vst [vmem:[%s5000 + $0x868] sm:$0xff] %v5283
                %v5285 = vld [vmem:[%s4999 + $0x470] sm:$0xff]
                %5286 = vst [vmem:[%s5000 + $0x870] sm:$0xff] %v5285
                %v5287 = vld [vmem:[%s4999 + $0x478] sm:$0xff]
                %5288 = vst [vmem:[%s5000 + $0x878] sm:$0xff] %v5287
                %v5289 = vld [vmem:[%s4999 + $0x480] sm:$0xff]
                %5290 = vst [vmem:[%s5000 + $0x880] sm:$0xff] %v5289
                %v5291 = vld [vmem:[%s4999 + $0x488] sm:$0xff]
                %5292 = vst [vmem:[%s5000 + $0x888] sm:$0xff] %v5291
                %v5293 = vld [vmem:[%s4999 + $0x490] sm:$0xff]
                %5294 = vst [vmem:[%s5000 + $0x890] sm:$0xff] %v5293
                %v5295 = vld [vmem:[%s4999 + $0x498] sm:$0xff]
                %5296 = vst [vmem:[%s5000 + $0x898] sm:$0xff] %v5295
                %v5297 = vld [vmem:[%s4999 + $0x4a0] sm:$0xff]
                %5298 = vst [vmem:[%s5000 + $0x8a0] sm:$0xff] %v5297
                %v5299 = vld [vmem:[%s4999 + $0x4a8] sm:$0xff]
                %5300 = vst [vmem:[%s5000 + $0x8a8] sm:$0xff] %v5299
                %v5301 = vld [vmem:[%s4999 + $0x4b0] sm:$0xff]
                %5302 = vst [vmem:[%s5000 + $0x8b0] sm:$0xff] %v5301
                %v5303 = vld [vmem:[%s4999 + $0x4b8] sm:$0xff]
                %5304 = vst [vmem:[%s5000 + $0x8b8] sm:$0xff] %v5303
                %v5305 = vld [vmem:[%s4999 + $0x4c0] sm:$0xff]
                %5306 = vst [vmem:[%s5000 + $0x8c0] sm:$0xff] %v5305
                %v5307 = vld [vmem:[%s4999 + $0x4c8] sm:$0xff]
                %5308 = vst [vmem:[%s5000 + $0x8c8] sm:$0xff] %v5307
                %v5309 = vld [vmem:[%s4999 + $0x4d0] sm:$0xff]
                %5310 = vst [vmem:[%s5000 + $0x8d0] sm:$0xff] %v5309
                %v5311 = vld [vmem:[%s4999 + $0x4d8] sm:$0xff]
                %5312 = vst [vmem:[%s5000 + $0x8d8] sm:$0xff] %v5311
                %v5313 = vld [vmem:[%s4999 + $0x4e0] sm:$0xff]
                %5314 = vst [vmem:[%s5000 + $0x8e0] sm:$0xff] %v5313
                %v5315 = vld [vmem:[%s4999 + $0x4e8] sm:$0xff]
                %5316 = vst [vmem:[%s5000 + $0x8e8] sm:$0xff] %v5315
                %v5317 = vld [vmem:[%s4999 + $0x4f0] sm:$0xff]
                %5318 = vst [vmem:[%s5000 + $0x8f0] sm:$0xff] %v5317
                %v5319 = vld [vmem:[%s4999 + $0x4f8] sm:$0xff]
                %5320 = vst [vmem:[%s5000 + $0x8f8] sm:$0xff] %v5319
                %v5321 = vld [vmem:[%s4999 + $0x500] sm:$0xff]
                %5322 = vst [vmem:[%s5000 + $0xa00] sm:$0xff] %v5321
                %v5323 = vld [vmem:[%s4999 + $0x508] sm:$0xff]
                %5324 = vst [vmem:[%s5000 + $0xa08] sm:$0xff] %v5323
                %v5325 = vld [vmem:[%s4999 + $0x510] sm:$0xff]
                %5326 = vst [vmem:[%s5000 + $0xa10] sm:$0xff] %v5325
                %v5327 = vld [vmem:[%s4999 + $0x518] sm:$0xff]
                %5328 = vst [vmem:[%s5000 + $0xa18] sm:$0xff] %v5327
                %v5329 = vld [vmem:[%s4999 + $0x520] sm:$0xff]
                %5330 = vst [vmem:[%s5000 + $0xa20] sm:$0xff] %v5329
                %v5331 = vld [vmem:[%s4999 + $0x528] sm:$0xff]
                %5332 = vst [vmem:[%s5000 + $0xa28] sm:$0xff] %v5331
                %v5333 = vld [vmem:[%s4999 + $0x530] sm:$0xff]
                %5334 = vst [vmem:[%s5000 + $0xa30] sm:$0xff] %v5333
                %v5335 = vld [vmem:[%s4999 + $0x538] sm:$0xff]
                %5336 = vst [vmem:[%s5000 + $0xa38] sm:$0xff] %v5335
                %v5337 = vld [vmem:[%s4999 + $0x540] sm:$0xff]
                %5338 = vst [vmem:[%s5000 + $0xa40] sm:$0xff] %v5337
                %v5339 = vld [vmem:[%s4999 + $0x548] sm:$0xff]
                %5340 = vst [vmem:[%s5000 + $0xa48] sm:$0xff] %v5339
                %v5341 = vld [vmem:[%s4999 + $0x550] sm:$0xff]
                %5342 = vst [vmem:[%s5000 + $0xa50] sm:$0xff] %v5341
                %v5343 = vld [vmem:[%s4999 + $0x558] sm:$0xff]
                %5344 = vst [vmem:[%s5000 + $0xa58] sm:$0xff] %v5343
                %v5345 = vld [vmem:[%s4999 + $0x560] sm:$0xff]
                %5346 = vst [vmem:[%s5000 + $0xa60] sm:$0xff] %v5345
                %v5347 = vld [vmem:[%s4999 + $0x568] sm:$0xff]
                %5348 = vst [vmem:[%s5000 + $0xa68] sm:$0xff] %v5347
                %v5349 = vld [vmem:[%s4999 + $0x570] sm:$0xff]
                %5350 = vst [vmem:[%s5000 + $0xa70] sm:$0xff] %v5349
                %v5351 = vld [vmem:[%s4999 + $0x578] sm:$0xff]
                %5352 = vst [vmem:[%s5000 + $0xa78] sm:$0xff] %v5351
                %v5353 = vld [vmem:[%s4999 + $0x580] sm:$0xff]
                %5354 = vst [vmem:[%s5000 + $0xa80] sm:$0xff] %v5353
                %v5355 = vld [vmem:[%s4999 + $0x588] sm:$0xff]
                %5356 = vst [vmem:[%s5000 + $0xa88] sm:$0xff] %v5355
                %v5357 = vld [vmem:[%s4999 + $0x590] sm:$0xff]
                %5358 = vst [vmem:[%s5000 + $0xa90] sm:$0xff] %v5357
                %v5359 = vld [vmem:[%s4999 + $0x598] sm:$0xff]
                %5360 = vst [vmem:[%s5000 + $0xa98] sm:$0xff] %v5359
                %v5361 = vld [vmem:[%s4999 + $0x5a0] sm:$0xff]
                %5362 = vst [vmem:[%s5000 + $0xaa0] sm:$0xff] %v5361
                %v5363 = vld [vmem:[%s4999 + $0x5a8] sm:$0xff]
                %5364 = vst [vmem:[%s5000 + $0xaa8] sm:$0xff] %v5363
                %v5365 = vld [vmem:[%s4999 + $0x5b0] sm:$0xff]
                %5366 = vst [vmem:[%s5000 + $0xab0] sm:$0xff] %v5365
                %v5367 = vld [vmem:[%s4999 + $0x5b8] sm:$0xff]
                %5368 = vst [vmem:[%s5000 + $0xab8] sm:$0xff] %v5367
                %v5369 = vld [vmem:[%s4999 + $0x5c0] sm:$0xff]
                %5370 = vst [vmem:[%s5000 + $0xac0] sm:$0xff] %v5369
                %v5371 = vld [vmem:[%s4999 + $0x5c8] sm:$0xff]
                %5372 = vst [vmem:[%s5000 + $0xac8] sm:$0xff] %v5371
                %v5373 = vld [vmem:[%s4999 + $0x5d0] sm:$0xff]
                %5374 = vst [vmem:[%s5000 + $0xad0] sm:$0xff] %v5373
                %v5375 = vld [vmem:[%s4999 + $0x5d8] sm:$0xff]
                %5376 = vst [vmem:[%s5000 + $0xad8] sm:$0xff] %v5375
                %v5377 = vld [vmem:[%s4999 + $0x5e0] sm:$0xff]
                %5378 = vst [vmem:[%s5000 + $0xae0] sm:$0xff] %v5377
                %v5379 = vld [vmem:[%s4999 + $0x5e8] sm:$0xff]
                %5380 = vst [vmem:[%s5000 + $0xae8] sm:$0xff] %v5379
                %v5381 = vld [vmem:[%s4999 + $0x5f0] sm:$0xff]
                %5382 = vst [vmem:[%s5000 + $0xaf0] sm:$0xff] %v5381
                %v5383 = vld [vmem:[%s4999 + $0x5f8] sm:$0xff]
                %5384 = vst [vmem:[%s5000 + $0xaf8] sm:$0xff] %v5383
                %v5385 = vld [vmem:[%s4999 + $0x600] sm:$0xff]
                %5386 = vst [vmem:[%s5000 + $0xc00] sm:$0xff] %v5385
                %v5387 = vld [vmem:[%s4999 + $0x608] sm:$0xff]
                %5388 = vst [vmem:[%s5000 + $0xc08] sm:$0xff] %v5387
                %v5389 = vld [vmem:[%s4999 + $0x610] sm:$0xff]
                %5390 = vst [vmem:[%s5000 + $0xc10] sm:$0xff] %v5389
                %v5391 = vld [vmem:[%s4999 + $0x618] sm:$0xff]
                %5392 = vst [vmem:[%s5000 + $0xc18] sm:$0xff] %v5391
                %v5393 = vld [vmem:[%s4999 + $0x620] sm:$0xff]
                %5394 = vst [vmem:[%s5000 + $0xc20] sm:$0xff] %v5393
                %v5395 = vld [vmem:[%s4999 + $0x628] sm:$0xff]
                %5396 = vst [vmem:[%s5000 + $0xc28] sm:$0xff] %v5395
                %v5397 = vld [vmem:[%s4999 + $0x630] sm:$0xff]
                %5398 = vst [vmem:[%s5000 + $0xc30] sm:$0xff] %v5397
                %v5399 = vld [vmem:[%s4999 + $0x638] sm:$0xff]
                %5400 = vst [vmem:[%s5000 + $0xc38] sm:$0xff] %v5399
                %v5401 = vld [vmem:[%s4999 + $0x640] sm:$0xff]
                %5402 = vst [vmem:[%s5000 + $0xc40] sm:$0xff] %v5401
                %v5403 = vld [vmem:[%s4999 + $0x648] sm:$0xff]
                %5404 = vst [vmem:[%s5000 + $0xc48] sm:$0xff] %v5403
                %v5405 = vld [vmem:[%s4999 + $0x650] sm:$0xff]
                %5406 = vst [vmem:[%s5000 + $0xc50] sm:$0xff] %v5405
                %v5407 = vld [vmem:[%s4999 + $0x658] sm:$0xff]
                %5408 = vst [vmem:[%s5000 + $0xc58] sm:$0xff] %v5407
                %v5409 = vld [vmem:[%s4999 + $0x660] sm:$0xff]
                %5410 = vst [vmem:[%s5000 + $0xc60] sm:$0xff] %v5409
                %v5411 = vld [vmem:[%s4999 + $0x668] sm:$0xff]
                %5412 = vst [vmem:[%s5000 + $0xc68] sm:$0xff] %v5411
                %v5413 = vld [vmem:[%s4999 + $0x670] sm:$0xff]
                %5414 = vst [vmem:[%s5000 + $0xc70] sm:$0xff] %v5413
                %v5415 = vld [vmem:[%s4999 + $0x678] sm:$0xff]
                %5416 = vst [vmem:[%s5000 + $0xc78] sm:$0xff] %v5415
                %v5417 = vld [vmem:[%s4999 + $0x680] sm:$0xff]
                %5418 = vst [vmem:[%s5000 + $0xc80] sm:$0xff] %v5417
                %v5419 = vld [vmem:[%s4999 + $0x688] sm:$0xff]
                %5420 = vst [vmem:[%s5000 + $0xc88] sm:$0xff] %v5419
                %v5421 = vld [vmem:[%s4999 + $0x690] sm:$0xff]
                %5422 = vst [vmem:[%s5000 + $0xc90] sm:$0xff] %v5421
                %v5423 = vld [vmem:[%s4999 + $0x698] sm:$0xff]
                %5424 = vst [vmem:[%s5000 + $0xc98] sm:$0xff] %v5423
                %v5425 = vld [vmem:[%s4999 + $0x6a0] sm:$0xff]
                %5426 = vst [vmem:[%s5000 + $0xca0] sm:$0xff] %v5425
                %v5427 = vld [vmem:[%s4999 + $0x6a8] sm:$0xff]
                %5428 = vst [vmem:[%s5000 + $0xca8] sm:$0xff] %v5427
                %v5429 = vld [vmem:[%s4999 + $0x6b0] sm:$0xff]
                %5430 = vst [vmem:[%s5000 + $0xcb0] sm:$0xff] %v5429
                %v5431 = vld [vmem:[%s4999 + $0x6b8] sm:$0xff]
                %5432 = vst [vmem:[%s5000 + $0xcb8] sm:$0xff] %v5431
                %v5433 = vld [vmem:[%s4999 + $0x6c0] sm:$0xff]
                %5434 = vst [vmem:[%s5000 + $0xcc0] sm:$0xff] %v5433
                %v5435 = vld [vmem:[%s4999 + $0x6c8] sm:$0xff]
                %5436 = vst [vmem:[%s5000 + $0xcc8] sm:$0xff] %v5435
                %v5437 = vld [vmem:[%s4999 + $0x6d0] sm:$0xff]
                %5438 = vst [vmem:[%s5000 + $0xcd0] sm:$0xff] %v5437
                %v5439 = vld [vmem:[%s4999 + $0x6d8] sm:$0xff]
                %5440 = vst [vmem:[%s5000 + $0xcd8] sm:$0xff] %v5439
                %v5441 = vld [vmem:[%s4999 + $0x6e0] sm:$0xff]
                %5442 = vst [vmem:[%s5000 + $0xce0] sm:$0xff] %v5441
                %v5443 = vld [vmem:[%s4999 + $0x6e8] sm:$0xff]
                %5444 = vst [vmem:[%s5000 + $0xce8] sm:$0xff] %v5443
                %v5445 = vld [vmem:[%s4999 + $0x6f0] sm:$0xff]
                %5446 = vst [vmem:[%s5000 + $0xcf0] sm:$0xff] %v5445
                %v5447 = vld [vmem:[%s4999 + $0x6f8] sm:$0xff]
                %5448 = vst [vmem:[%s5000 + $0xcf8] sm:$0xff] %v5447
                %v5449 = vld [vmem:[%s4999 + $0x700] sm:$0xff]
                %5450 = vst [vmem:[%s5000 + $0xe00] sm:$0xff] %v5449
                %v5451 = vld [vmem:[%s4999 + $0x708] sm:$0xff]
                %5452 = vst [vmem:[%s5000 + $0xe08] sm:$0xff] %v5451
                %v5453 = vld [vmem:[%s4999 + $0x710] sm:$0xff]
                %5454 = vst [vmem:[%s5000 + $0xe10] sm:$0xff] %v5453
                %v5455 = vld [vmem:[%s4999 + $0x718] sm:$0xff]
                %5456 = vst [vmem:[%s5000 + $0xe18] sm:$0xff] %v5455
                %v5457 = vld [vmem:[%s4999 + $0x720] sm:$0xff]
                %5458 = vst [vmem:[%s5000 + $0xe20] sm:$0xff] %v5457
                %v5459 = vld [vmem:[%s4999 + $0x728] sm:$0xff]
                %5460 = vst [vmem:[%s5000 + $0xe28] sm:$0xff] %v5459
                %v5461 = vld [vmem:[%s4999 + $0x730] sm:$0xff]
                %5462 = vst [vmem:[%s5000 + $0xe30] sm:$0xff] %v5461
                %v5463 = vld [vmem:[%s4999 + $0x738] sm:$0xff]
                %5464 = vst [vmem:[%s5000 + $0xe38] sm:$0xff] %v5463
                %v5465 = vld [vmem:[%s4999 + $0x740] sm:$0xff]
                %5466 = vst [vmem:[%s5000 + $0xe40] sm:$0xff] %v5465
                %v5467 = vld [vmem:[%s4999 + $0x748] sm:$0xff]
                %5468 = vst [vmem:[%s5000 + $0xe48] sm:$0xff] %v5467
                %v5469 = vld [vmem:[%s4999 + $0x750] sm:$0xff]
                %5470 = vst [vmem:[%s5000 + $0xe50] sm:$0xff] %v5469
                %v5471 = vld [vmem:[%s4999 + $0x758] sm:$0xff]
                %5472 = vst [vmem:[%s5000 + $0xe58] sm:$0xff] %v5471
                %v5473 = vld [vmem:[%s4999 + $0x760] sm:$0xff]
                %5474 = vst [vmem:[%s5000 + $0xe60] sm:$0xff] %v5473
                %v5475 = vld [vmem:[%s4999 + $0x768] sm:$0xff]
                %5476 = vst [vmem:[%s5000 + $0xe68] sm:$0xff] %v5475
                %v5477 = vld [vmem:[%s4999 + $0x770] sm:$0xff]
                %5478 = vst [vmem:[%s5000 + $0xe70] sm:$0xff] %v5477
                %v5479 = vld [vmem:[%s4999 + $0x778] sm:$0xff]
                %5480 = vst [vmem:[%s5000 + $0xe78] sm:$0xff] %v5479
                %v5481 = vld [vmem:[%s4999 + $0x780] sm:$0xff]
                %5482 = vst [vmem:[%s5000 + $0xe80] sm:$0xff] %v5481
                %v5483 = vld [vmem:[%s4999 + $0x788] sm:$0xff]
                %5484 = vst [vmem:[%s5000 + $0xe88] sm:$0xff] %v5483
                %v5485 = vld [vmem:[%s4999 + $0x790] sm:$0xff]
                %5486 = vst [vmem:[%s5000 + $0xe90] sm:$0xff] %v5485
                %v5487 = vld [vmem:[%s4999 + $0x798] sm:$0xff]
                %5488 = vst [vmem:[%s5000 + $0xe98] sm:$0xff] %v5487
                %v5489 = vld [vmem:[%s4999 + $0x7a0] sm:$0xff]
                %5490 = vst [vmem:[%s5000 + $0xea0] sm:$0xff] %v5489
                %v5491 = vld [vmem:[%s4999 + $0x7a8] sm:$0xff]
                %5492 = vst [vmem:[%s5000 + $0xea8] sm:$0xff] %v5491
                %v5493 = vld [vmem:[%s4999 + $0x7b0] sm:$0xff]
                %5494 = vst [vmem:[%s5000 + $0xeb0] sm:$0xff] %v5493
                %v5495 = vld [vmem:[%s4999 + $0x7b8] sm:$0xff]
                %5496 = vst [vmem:[%s5000 + $0xeb8] sm:$0xff] %v5495
                %v5497 = vld [vmem:[%s4999 + $0x7c0] sm:$0xff]
                %5498 = vst [vmem:[%s5000 + $0xec0] sm:$0xff] %v5497
                %v5499 = vld [vmem:[%s4999 + $0x7c8] sm:$0xff]
                %5500 = vst [vmem:[%s5000 + $0xec8] sm:$0xff] %v5499
                %v5501 = vld [vmem:[%s4999 + $0x7d0] sm:$0xff]
                %5502 = vst [vmem:[%s5000 + $0xed0] sm:$0xff] %v5501
                %v5503 = vld [vmem:[%s4999 + $0x7d8] sm:$0xff]
                %5504 = vst [vmem:[%s5000 + $0xed8] sm:$0xff] %v5503
                %v5505 = vld [vmem:[%s4999 + $0x7e0] sm:$0xff]
                %5506 = vst [vmem:[%s5000 + $0xee0] sm:$0xff] %v5505
                %v5507 = vld [vmem:[%s4999 + $0x7e8] sm:$0xff]
                %5508 = vst [vmem:[%s5000 + $0xee8] sm:$0xff] %v5507
                %v5509 = vld [vmem:[%s4999 + $0x7f0] sm:$0xff]
                %5510 = vst [vmem:[%s5000 + $0xef0] sm:$0xff] %v5509
                %v5511 = vld [vmem:[%s4999 + $0x7f8] sm:$0xff]
                %5512 = vst [vmem:[%s5000 + $0xef8] sm:$0xff] %v5511
              $region81: #{generator_forward.1} parent=75 // loop_footer
                %s4998 = sadd.s32 1, %s4994
              $region82: #{generator_forward.1} parent=75 // loop_footer_branch
                %4993 = sbr.rel target = $region78
              $region83: #{generator_forward.1} parent=75 // loop_exit
                _
            $region76: #{generator_forward.1} parent=67 // pred_fallthru
              _
          $region68: #{generator_forward.1} parent=63 // pred_fallthru
            _
          %6037 = vnop
        $region64: #{generator_forward.1} parent=59 // pred_fallthru
          _
      $region60: #{generator_forward.1} parent=5 // pred_fallthru
        _
      %p6038 = scmp.le.s32.totalorder 2, %s16
      // Predicated region
      $region99: #{generator_forward.1} parent=5 // pred_check
        %p6039 = pneg %p6038
      $region100: #{generator_forward.1} parent=5 // pred_check_branch
        %6041 = sbr.rel (%p6039) target = $region102
      $region101: #{generator_forward.1} parent=5 // pred_region
        %s6042 = ssub.s32 %s16, 2
        // Predicated region
        $region103: #{generator_forward.1} parent=101 // pred_check
          %p6043 = pneg %p265
        $region104: #{generator_forward.1} parent=101 // pred_check_branch
          %6045 = sbr.rel (%p6043) target = $region106
        $region105: #{generator_forward.1} parent=101 // pred_region
          %s6046 = sand.u32 %s250, 1
          %s6047 = sand.u32 %s250, 1
          %s6048 = smul.addr %s6047, 2048
          %s6049 = scalar_lea.vmem [#allocation2], %s6048
        $region106: #{generator_forward.1} parent=101 // pred_fallthru
          _
      $region102: #{generator_forward.1} parent=5 // pred_fallthru
        _
    $region6: #{generator_forward.1} parent=1 // loop_footer
      %s20 = sadd.s32 1, %s16
    $region7: #{generator_forward.1} parent=1 // loop_footer_branch
      %15 = sbr.rel target = $region3
    $region8: #{generator_forward.1} parent=1 // loop_exit
      _

</llo_original>
